<compile_context>
chip_gen: v6e
topology: v6e:2x2x1
jax: 0.10.0
libtpu: 0.0.40
codegen_flags: <defaults>
</compile_context>

<pallas_src>
import functools

import jax
import jax.numpy as jnp
from jax import lax
from jax.experimental import pallas as pl
from jax.experimental.pallas import tpu as pltpu

EPS = 1e-5  # nn.InstanceNorm2d default eps (affine=False, biased variance)


def _pick_chunk_rows(h, w, target_positions=1024):
    """Largest divisor of `h` with chunk_rows * w <= target (at least 1 row)."""
    best = 1
    for r in range(1, h + 1):
        if h % r == 0 and r * w <= target_positions:
            best = r
    return best


def _residual_block_kernel(x_ref, w1_ref, b1_ref, w2_ref, b2_ref, o_ref,
                           pad_ref, acc_ref, *, ch_rows):
    # x_ref  : (1, H, W, C)  f32   one batch element, channels-last
    # w*_ref : (9, Cin, Cout) bf16 conv taps, tap index t = dy*3 + dx
    # b*_ref : (1, Cout)     f32   conv bias
    # o_ref  : (1, H, W, C)  f32
    # pad_ref: (H+2, W+2, C) bf16  VMEM scratch, reflection-padded activation
    # acc_ref: (H*W, C)      f32   VMEM scratch, pre-norm conv output
    _, H, W, C = x_ref.shape
    HW = H * W
    chw = ch_rows * W
    n_chunks = H // ch_rows

    def fix_borders():
        # ReflectionPad2d(1) border fixup, reading the already-written interior
        # (pad row 0 <- image row 1 == pad row 2, etc.; corners via columns).
        pad_ref[0:1, 1:W + 1, :] = pad_ref[2:3, 1:W + 1, :]
        pad_ref[H + 1:H + 2, 1:W + 1, :] = pad_ref[H - 1:H, 1:W + 1, :]
        pad_ref[:, 0:1, :] = pad_ref[:, 2:3, :]
        pad_ref[:, W + 1:W + 2, :] = pad_ref[:, W - 1:W, :]

    def conv3x3_stats(w_ref, b_ref):
        """3x3 conv (+bias) of pad_ref -> acc_ref; returns (mean, inv_std)."""
        s = jnp.zeros((1, C), jnp.float32)
        ss = jnp.zeros((1, C), jnp.float32)
        for ci in range(n_chunks):
            r0 = ci * ch_rows
            # 9 bf16 tap matmuls on the MXU, f32 accumulation held in vregs.
            acc = jnp.zeros((chw, C), jnp.float32)
            for t in range(9):
                dy, dx = divmod(t, 3)
                patch = pad_ref[r0 + dy:r0 + dy + ch_rows,
                                dx:dx + W, :].reshape(chw, C)        # bf16
                acc = acc + jnp.dot(patch, w_ref[t],
                                    preferred_element_type=jnp.float32)
            acc = acc + b_ref[...]                                   # (chw,C)+(1,C)
            acc_ref[r0 * W:r0 * W + chw, :] = acc                    # one store/chunk
            # fused instance-norm partial statistics (f32)
            s = s + jnp.sum(acc, axis=0, keepdims=True)
            ss = ss + jnp.sum(acc * acc, axis=0, keepdims=True)
        mean = s * (1.0 / HW)
        # biased variance; f32 sum/sumsq, guarded against tiny cancellation.
        var = jnp.maximum(ss * (1.0 / HW) - mean * mean, 0.0)
        return mean, lax.rsqrt(var + EPS)

    # ---- first sub-block: pad -> conv -> IN -> ReLU -------------------------
    # Fill pad interior from x (single transient read; cast once to bf16).
    pad_ref[1:H + 1, 1:W + 1, :] = (
        x_ref[...].reshape(H, W, C).astype(pad_ref.dtype))
    fix_borders()
    mean1, inv1 = conv3x3_stats(w1_ref, b1_ref)

    # Normalize + ReLU chunkwise, writing straight into pad_ref for conv #2.
    for ci in range(n_chunks):
        r0 = ci * ch_rows
        h = (acc_ref[r0 * W:r0 * W + chw, :] - mean1) * inv1
        h = jnp.maximum(h, 0.0)                                      # ReLU (f32)
        pad_ref[1 + r0:1 + r0 + ch_rows, 1:W + 1, :] = (
            h.reshape(ch_rows, W, C).astype(pad_ref.dtype))
    fix_borders()

    # ---- second sub-block: pad -> conv -> IN, fused with residual add -------
    mean2, inv2 = conv3x3_stats(w2_ref, b2_ref)
    for ci in range(n_chunks):
        r0 = ci * ch_rows
        h = (acc_ref[r0 * W:r0 * W + chw, :] - mean2) * inv2
        x_chunk = x_ref[:, r0:r0 + ch_rows, :, :].reshape(chw, C)    # re-read x
        o_ref[:, r0:r0 + ch_rows, :, :] = (
            (x_chunk + h).astype(o_ref.dtype).reshape(1, ch_rows, W, C))


def residual_block(x_nchw, w1_oihw, b1, w2_oihw, b2):
    """PyTorch-semantics wrapper: NCHW activations, OIHW weights."""
    N, C, H, W = x_nchw.shape
    ch_rows = _pick_chunk_rows(H, W)

    x = jnp.transpose(x_nchw, (0, 2, 3, 1)).astype(jnp.float32)      # NCHW -> NHWC
    # OIHW -> (tap, Cin, Cout), tap = dy*3 + dx; bf16 for the MXU.
    w1 = jnp.transpose(w1_oihw, (2, 3, 1, 0)).reshape(9, C, C).astype(jnp.bfloat16)
    w2 = jnp.transpose(w2_oihw, (2, 3, 1, 0)).reshape(9, C, C).astype(jnp.bfloat16)

    kernel = functools.partial(_residual_block_kernel, ch_rows=ch_rows)

    out_nhwc = pl.pallas_call(
        kernel,
        out_shape=jax.ShapeDtypeStruct((N, H, W, C), jnp.float32),
        grid_spec=pltpu.PrefetchScalarGridSpec(
            num_scalar_prefetch=0,
            grid=(N,),
            in_specs=[
                pl.BlockSpec((1, H, W, C), lambda n: (n, 0, 0, 0)),  # x
                pl.BlockSpec((9, C, C), lambda n: (0, 0, 0)),        # w1 taps (bf16)
                pl.BlockSpec((1, C), lambda n: (0, 0)),              # b1
                pl.BlockSpec((9, C, C), lambda n: (0, 0, 0)),        # w2 taps (bf16)
                pl.BlockSpec((1, C), lambda n: (0, 0)),              # b2
            ],
            out_specs=pl.BlockSpec((1, H, W, C), lambda n: (n, 0, 0, 0)),
            scratch_shapes=[
                pltpu.VMEM((H + 2, W + 2, C), jnp.bfloat16),         # reflect-pad scratch
                pltpu.VMEM((H * W, C), jnp.float32),                 # pre-norm conv output
            ]),
        compiler_params=pltpu.CompilerParams(
            dimension_semantics=("parallel",),                       # batch elems independent
            vmem_limit_bytes=64 * 1024 * 1024),
    )(x, w1, b1.reshape(1, C).astype(jnp.float32),
      w2, b2.reshape(1, C).astype(jnp.float32))

    return jnp.transpose(out_nhwc, (0, 3, 1, 2))                     # NHWC -> NCHW


def residual_block_reference(x_nchw, w1_oihw, b1, w2_oihw, b2):
    """Pure-JAX f32 reference matching the PyTorch module."""
    x = jnp.transpose(x_nchw, (0, 2, 3, 1))
    w1 = jnp.transpose(w1_oihw, (2, 3, 1, 0))
    w2 = jnp.transpose(w2_oihw, (2, 3, 1, 0))

    def conv(h, w, b):
        hp = jnp.pad(h, ((0, 0), (1, 1), (1, 1), (0, 0)), mode="reflect")
        y = jax.lax.conv_general_dilated(
            hp, w, window_strides=(1, 1), padding="VALID",
            dimension_numbers=("NHWC", "HWIO", "NHWC"))
        return y + b.reshape(1, 1, 1, -1)

    def inorm(h):
        m = jnp.mean(h, axis=(1, 2), keepdims=True)
        v = jnp.mean((h - m) ** 2, axis=(1, 2), keepdims=True)
        return (h - m) / jnp.sqrt(v + EPS)

    h = jax.nn.relu(inorm(conv(x, w1, b1)))
    h = inorm(conv(h, w2, b2))
    return jnp.transpose(x + h, (0, 3, 1, 2))


if __name__ == "__main__":
    N, C, H, W = 2, 4, 16, 16
    key = jax.random.PRNGKey(0)
    kx, k1, k2, k3, k4 = jax.random.split(key, 5)

    # Synthetic params (Conv2d: weight (C, C, 3, 3), bias (C,))
    x = jax.random.normal(kx, (N, C, H, W), jnp.float32)
    w1 = jax.random.normal(k1, (C, C, 3, 3), jnp.float32) * 0.2
    b1 = jax.random.normal(k2, (C,), jnp.float32) * 0.1
    w2 = jax.random.normal(k3, (C, C, 3, 3), jnp.float32) * 0.2
    b2 = jax.random.normal(k4, (C,), jnp.float32) * 0.1

    out = jax.block_until_ready(residual_block(x, w1, b1, w2, b2))

    ref = residual_block_reference(x, w1, b1, w2, b2)
    assert out.shape == (N, C, H, W)
    # Tolerance loosened vs. the f32 reference because the conv operands run
    # in bf16 on the MXU (f32 accumulation / IN statistics).
    assert jnp.allclose(out, ref, rtol=3e-2, atol=3e-2), float(
        jnp.max(jnp.abs(out - ref)))
    print("KERNEL_OK")
</pallas_src>

<mosaic_0001>
module attributes {stable_mosaic.version = 11 : i64} {
  func.func @_residual_block_kernel(%arg0: i32, %arg1: memref<1x16x16x4xf32, #tpu.memory_space<vmem>>, %arg2: memref<9x4x4xbf16, #tpu.memory_space<vmem>>, %arg3: memref<1x4xf32, #tpu.memory_space<vmem>>, %arg4: memref<9x4x4xbf16, #tpu.memory_space<vmem>>, %arg5: memref<1x4xf32, #tpu.memory_space<vmem>>, %arg6: memref<1x16x16x4xf32, #tpu.memory_space<vmem>>, %arg7: memref<18x18x4xbf16, #tpu.memory_space<vmem>>, %arg8: memref<256x4xf32, #tpu.memory_space<vmem>>) attributes {dimension_semantics = [#tpu.dimension_semantics<parallel>], iteration_bounds = array<i64: 2>, scalar_prefetch = 0 : i64, scratch_operands = 2 : i64, tpu.core_type = #tpu.core_type<tc>, window_params = [{transform_indices = @transform_0, window_bounds = array<i64: 1, 16, 16, 4>}, {pipeline_mode = #tpu.pipeline_mode<synchronous>, transform_indices = @transform_1, window_bounds = array<i64: 9, 4, 4>}, {pipeline_mode = #tpu.pipeline_mode<synchronous>, transform_indices = @transform_2, window_bounds = array<i64: 1, 4>}, {pipeline_mode = #tpu.pipeline_mode<synchronous>, transform_indices = @transform_3, window_bounds = array<i64: 9, 4, 4>}, {pipeline_mode = #tpu.pipeline_mode<synchronous>, transform_indices = @transform_4, window_bounds = array<i64: 1, 4>}, {transform_indices = @transform_5, window_bounds = array<i64: 1, 16, 16, 4>}]} {
    %c0 = arith.constant 0 : index
    %c0_0 = arith.constant 0 : index
    %c0_1 = arith.constant 0 : index
    %c0_2 = arith.constant 0 : index
    %0 = vector.load %arg1[%c0, %c0_0, %c0_1, %c0_2] : memref<1x16x16x4xf32, #tpu.memory_space<vmem>>, vector<1x16x16x4xf32>
    %1 = vector.shape_cast %0 : vector<1x16x16x4xf32> to vector<16x16x4xf32>
    %2 = arith.truncf %1 : vector<16x16x4xf32> to vector<16x16x4xbf16>
    %c1 = arith.constant 1 : index
    %c1_3 = arith.constant 1 : index
    %c0_4 = arith.constant 0 : index
    %3 = vector.load %arg7[%c1, %c1_3, %c0_4] : memref<18x18x4xbf16, #tpu.memory_space<vmem>>, vector<16x16x4xbf16>
    tpu.vector_store %arg7[%c1, %c1_3, %c0_4], %2 {strides = array<i32>} : memref<18x18x4xbf16, #tpu.memory_space<vmem>>, vector<16x16x4xbf16>,
    %c2 = arith.constant 2 : index
    %c1_5 = arith.constant 1 : index
    %c0_6 = arith.constant 0 : index
    %4 = vector.load %arg7[%c2, %c1_5, %c0_6] : memref<18x18x4xbf16, #tpu.memory_space<vmem>>, vector<1x16x4xbf16>
    %c0_7 = arith.constant 0 : index
    %c1_8 = arith.constant 1 : index
    %c0_9 = arith.constant 0 : index
    %5 = vector.load %arg7[%c0_7, %c1_8, %c0_9] : memref<18x18x4xbf16, #tpu.memory_space<vmem>>, vector<1x16x4xbf16>
    tpu.vector_store %arg7[%c0_7, %c1_8, %c0_9], %4 {strides = array<i32>} : memref<18x18x4xbf16, #tpu.memory_space<vmem>>, vector<1x16x4xbf16>,
    %c15 = arith.constant 15 : index
    %c1_10 = arith.constant 1 : index
    %c0_11 = arith.constant 0 : index
    %6 = vector.load %arg7[%c15, %c1_10, %c0_11] : memref<18x18x4xbf16, #tpu.memory_space<vmem>>, vector<1x16x4xbf16>
    %c17 = arith.constant 17 : index
    %c1_12 = arith.constant 1 : index
    %c0_13 = arith.constant 0 : index
    %7 = vector.load %arg7[%c17, %c1_12, %c0_13] : memref<18x18x4xbf16, #tpu.memory_space<vmem>>, vector<1x16x4xbf16>
    tpu.vector_store %arg7[%c17, %c1_12, %c0_13], %6 {strides = array<i32>} : memref<18x18x4xbf16, #tpu.memory_space<vmem>>, vector<1x16x4xbf16>,
    %c0_14 = arith.constant 0 : index
    %c2_15 = arith.constant 2 : index
    %c0_16 = arith.constant 0 : index
    %8 = vector.load %arg7[%c0_14, %c2_15, %c0_16] : memref<18x18x4xbf16, #tpu.memory_space<vmem>>, vector<18x1x4xbf16>
    %c0_17 = arith.constant 0 : index
    %c0_18 = arith.constant 0 : index
    %c0_19 = arith.constant 0 : index
    %9 = vector.load %arg7[%c0_17, %c0_18, %c0_19] : memref<18x18x4xbf16, #tpu.memory_space<vmem>>, vector<18x1x4xbf16>
    tpu.vector_store %arg7[%c0_17, %c0_18, %c0_19], %8 {strides = array<i32>} : memref<18x18x4xbf16, #tpu.memory_space<vmem>>, vector<18x1x4xbf16>,
    %c0_20 = arith.constant 0 : index
    %c15_21 = arith.constant 15 : index
    %c0_22 = arith.constant 0 : index
    %10 = vector.load %arg7[%c0_20, %c15_21, %c0_22] : memref<18x18x4xbf16, #tpu.memory_space<vmem>>, vector<18x1x4xbf16>
    %c0_23 = arith.constant 0 : index
    %c17_24 = arith.constant 17 : index
    %c0_25 = arith.constant 0 : index
    %11 = vector.load %arg7[%c0_23, %c17_24, %c0_25] : memref<18x18x4xbf16, #tpu.memory_space<vmem>>, vector<18x1x4xbf16>
    tpu.vector_store %arg7[%c0_23, %c17_24, %c0_25], %10 {strides = array<i32>} : memref<18x18x4xbf16, #tpu.memory_space<vmem>>, vector<18x1x4xbf16>,
    %cst = arith.constant 0.000000e+00 : f32
    %12 = vector.broadcast %cst : f32 to vector<1x4xf32>
    %cst_26 = arith.constant 0.000000e+00 : f32
    %13 = vector.broadcast %cst_26 : f32 to vector<1x4xf32>
    %cst_27 = arith.constant 0.000000e+00 : f32
    %14 = vector.broadcast %cst_27 : f32 to vector<256x4xf32>
    %c0_28 = arith.constant 0 : index
    %c0_29 = arith.constant 0 : index
    %c0_30 = arith.constant 0 : index
    %15 = vector.load %arg7[%c0_28, %c0_29, %c0_30] : memref<18x18x4xbf16, #tpu.memory_space<vmem>>, vector<16x16x4xbf16>
    %16 = vector.shape_cast %15 : vector<16x16x4xbf16> to vector<256x4xbf16>
    %c0_31 = arith.constant 0 : index
    %c0_32 = arith.constant 0 : index
    %c0_33 = arith.constant 0 : index
    %17 = vector.load %arg2[%c0_31, %c0_32, %c0_33] : memref<9x4x4xbf16, #tpu.memory_space<vmem>>, vector<1x4x4xbf16>
    %18 = vector.shape_cast %17 : vector<1x4x4xbf16> to vector<4x4xbf16>
    %cst_34 = arith.constant dense<0.000000e+00> : vector<256x4xf32>
    %19 = tpu.matmul %16, %18, %cst_34 {dimension_numbers = #tpu.dot_dimension_numbers<[1], [0], [0], [1], [0, 0, 1, 1], [], []>} : vector<256x4xbf16>, vector<4x4xbf16>, vector<256x4xf32> -> vector<256x4xf32>
    %20 = arith.addf %14, %19 : vector<256x4xf32>
    %c0_35 = arith.constant 0 : index
    %c1_36 = arith.constant 1 : index
    %c0_37 = arith.constant 0 : index
    %21 = vector.load %arg7[%c0_35, %c1_36, %c0_37] : memref<18x18x4xbf16, #tpu.memory_space<vmem>>, vector<16x16x4xbf16>
    %22 = vector.shape_cast %21 : vector<16x16x4xbf16> to vector<256x4xbf16>
    %c1_38 = arith.constant 1 : index
    %c0_39 = arith.constant 0 : index
    %c0_40 = arith.constant 0 : index
    %23 = vector.load %arg2[%c1_38, %c0_39, %c0_40] : memref<9x4x4xbf16, #tpu.memory_space<vmem>>, vector<1x4x4xbf16>
    %24 = vector.shape_cast %23 : vector<1x4x4xbf16> to vector<4x4xbf16>
    %cst_41 = arith.constant dense<0.000000e+00> : vector<256x4xf32>
    %25 = tpu.matmul %22, %24, %cst_41 {dimension_numbers = #tpu.dot_dimension_numbers<[1], [0], [0], [1], [0, 0, 1, 1], [], []>} : vector<256x4xbf16>, vector<4x4xbf16>, vector<256x4xf32> -> vector<256x4xf32>
    %26 = arith.addf %20, %25 : vector<256x4xf32>
    %c0_42 = arith.constant 0 : index
    %c2_43 = arith.constant 2 : index
    %c0_44 = arith.constant 0 : index
    %27 = vector.load %arg7[%c0_42, %c2_43, %c0_44] : memref<18x18x4xbf16, #tpu.memory_space<vmem>>, vector<16x16x4xbf16>
    %28 = vector.shape_cast %27 : vector<16x16x4xbf16> to vector<256x4xbf16>
    %c2_45 = arith.constant 2 : index
    %c0_46 = arith.constant 0 : index
    %c0_47 = arith.constant 0 : index
    %29 = vector.load %arg2[%c2_45, %c0_46, %c0_47] : memref<9x4x4xbf16, #tpu.memory_space<vmem>>, vector<1x4x4xbf16>
    %30 = vector.shape_cast %29 : vector<1x4x4xbf16> to vector<4x4xbf16>
    %cst_48 = arith.constant dense<0.000000e+00> : vector<256x4xf32>
    %31 = tpu.matmul %28, %30, %cst_48 {dimension_numbers = #tpu.dot_dimension_numbers<[1], [0], [0], [1], [0, 0, 1, 1], [], []>} : vector<256x4xbf16>, vector<4x4xbf16>, vector<256x4xf32> -> vector<256x4xf32>
    %32 = arith.addf %26, %31 : vector<256x4xf32>
    %c1_49 = arith.constant 1 : index
    %c0_50 = arith.constant 0 : index
    %c0_51 = arith.constant 0 : index
    %33 = vector.load %arg7[%c1_49, %c0_50, %c0_51] : memref<18x18x4xbf16, #tpu.memory_space<vmem>>, vector<16x16x4xbf16>
    %34 = vector.shape_cast %33 : vector<16x16x4xbf16> to vector<256x4xbf16>
    %c3 = arith.constant 3 : index
    %c0_52 = arith.constant 0 : index
    %c0_53 = arith.constant 0 : index
    %35 = vector.load %arg2[%c3, %c0_52, %c0_53] : memref<9x4x4xbf16, #tpu.memory_space<vmem>>, vector<1x4x4xbf16>
    %36 = vector.shape_cast %35 : vector<1x4x4xbf16> to vector<4x4xbf16>
    %cst_54 = arith.constant dense<0.000000e+00> : vector<256x4xf32>
    %37 = tpu.matmul %34, %36, %cst_54 {dimension_numbers = #tpu.dot_dimension_numbers<[1], [0], [0], [1], [0, 0, 1, 1], [], []>} : vector<256x4xbf16>, vector<4x4xbf16>, vector<256x4xf32> -> vector<256x4xf32>
    %38 = arith.addf %32, %37 : vector<256x4xf32>
    %c1_55 = arith.constant 1 : index
    %c1_56 = arith.constant 1 : index
    %c0_57 = arith.constant 0 : index
    %39 = vector.load %arg7[%c1_55, %c1_56, %c0_57] : memref<18x18x4xbf16, #tpu.memory_space<vmem>>, vector<16x16x4xbf16>
    %40 = vector.shape_cast %39 : vector<16x16x4xbf16> to vector<256x4xbf16>
    %c4 = arith.constant 4 : index
    %c0_58 = arith.constant 0 : index
    %c0_59 = arith.constant 0 : index
    %41 = vector.load %arg2[%c4, %c0_58, %c0_59] : memref<9x4x4xbf16, #tpu.memory_space<vmem>>, vector<1x4x4xbf16>
    %42 = vector.shape_cast %41 : vector<1x4x4xbf16> to vector<4x4xbf16>
    %cst_60 = arith.constant dense<0.000000e+00> : vector<256x4xf32>
    %43 = tpu.matmul %40, %42, %cst_60 {dimension_numbers = #tpu.dot_dimension_numbers<[1], [0], [0], [1], [0, 0, 1, 1], [], []>} : vector<256x4xbf16>, vector<4x4xbf16>, vector<256x4xf32> -> vector<256x4xf32>
    %44 = arith.addf %38, %43 : vector<256x4xf32>
    %c1_61 = arith.constant 1 : index
    %c2_62 = arith.constant 2 : index
    %c0_63 = arith.constant 0 : index
    %45 = vector.load %arg7[%c1_61, %c2_62, %c0_63] : memref<18x18x4xbf16, #tpu.memory_space<vmem>>, vector<16x16x4xbf16>
    %46 = vector.shape_cast %45 : vector<16x16x4xbf16> to vector<256x4xbf16>
    %c5 = arith.constant 5 : index
    %c0_64 = arith.constant 0 : index
    %c0_65 = arith.constant 0 : index
    %47 = vector.load %arg2[%c5, %c0_64, %c0_65] : memref<9x4x4xbf16, #tpu.memory_space<vmem>>, vector<1x4x4xbf16>
    %48 = vector.shape_cast %47 : vector<1x4x4xbf16> to vector<4x4xbf16>
    %cst_66 = arith.constant dense<0.000000e+00> : vector<256x4xf32>
    %49 = tpu.matmul %46, %48, %cst_66 {dimension_numbers = #tpu.dot_dimension_numbers<[1], [0], [0], [1], [0, 0, 1, 1], [], []>} : vector<256x4xbf16>, vector<4x4xbf16>, vector<256x4xf32> -> vector<256x4xf32>
    %50 = arith.addf %44, %49 : vector<256x4xf32>
    %c2_67 = arith.constant 2 : index
    %c0_68 = arith.constant 0 : index
    %c0_69 = arith.constant 0 : index
    %51 = vector.load %arg7[%c2_67, %c0_68, %c0_69] : memref<18x18x4xbf16, #tpu.memory_space<vmem>>, vector<16x16x4xbf16>
    %52 = vector.shape_cast %51 : vector<16x16x4xbf16> to vector<256x4xbf16>
    %c6 = arith.constant 6 : index
    %c0_70 = arith.constant 0 : index
    %c0_71 = arith.constant 0 : index
    %53 = vector.load %arg2[%c6, %c0_70, %c0_71] : memref<9x4x4xbf16, #tpu.memory_space<vmem>>, vector<1x4x4xbf16>
    %54 = vector.shape_cast %53 : vector<1x4x4xbf16> to vector<4x4xbf16>
    %cst_72 = arith.constant dense<0.000000e+00> : vector<256x4xf32>
    %55 = tpu.matmul %52, %54, %cst_72 {dimension_numbers = #tpu.dot_dimension_numbers<[1], [0], [0], [1], [0, 0, 1, 1], [], []>} : vector<256x4xbf16>, vector<4x4xbf16>, vector<256x4xf32> -> vector<256x4xf32>
    %56 = arith.addf %50, %55 : vector<256x4xf32>
    %c2_73 = arith.constant 2 : index
    %c1_74 = arith.constant 1 : index
    %c0_75 = arith.constant 0 : index
    %57 = vector.load %arg7[%c2_73, %c1_74, %c0_75] : memref<18x18x4xbf16, #tpu.memory_space<vmem>>, vector<16x16x4xbf16>
    %58 = vector.shape_cast %57 : vector<16x16x4xbf16> to vector<256x4xbf16>
    %c7 = arith.constant 7 : index
    %c0_76 = arith.constant 0 : index
    %c0_77 = arith.constant 0 : index
    %59 = vector.load %arg2[%c7, %c0_76, %c0_77] : memref<9x4x4xbf16, #tpu.memory_space<vmem>>, vector<1x4x4xbf16>
    %60 = vector.shape_cast %59 : vector<1x4x4xbf16> to vector<4x4xbf16>
    %cst_78 = arith.constant dense<0.000000e+00> : vector<256x4xf32>
    %61 = tpu.matmul %58, %60, %cst_78 {dimension_numbers = #tpu.dot_dimension_numbers<[1], [0], [0], [1], [0, 0, 1, 1], [], []>} : vector<256x4xbf16>, vector<4x4xbf16>, vector<256x4xf32> -> vector<256x4xf32>
    %62 = arith.addf %56, %61 : vector<256x4xf32>
    %c2_79 = arith.constant 2 : index
    %c2_80 = arith.constant 2 : index
    %c0_81 = arith.constant 0 : index
    %63 = vector.load %arg7[%c2_79, %c2_80, %c0_81] : memref<18x18x4xbf16, #tpu.memory_space<vmem>>, vector<16x16x4xbf16>
    %64 = vector.shape_cast %63 : vector<16x16x4xbf16> to vector<256x4xbf16>
    %c8 = arith.constant 8 : index
    %c0_82 = arith.constant 0 : index
    %c0_83 = arith.constant 0 : index
    %65 = vector.load %arg2[%c8, %c0_82, %c0_83] : memref<9x4x4xbf16, #tpu.memory_space<vmem>>, vector<1x4x4xbf16>
    %66 = vector.shape_cast %65 : vector<1x4x4xbf16> to vector<4x4xbf16>
    %cst_84 = arith.constant dense<0.000000e+00> : vector<256x4xf32>
    %67 = tpu.matmul %64, %66, %cst_84 {dimension_numbers = #tpu.dot_dimension_numbers<[1], [0], [0], [1], [0, 0, 1, 1], [], []>} : vector<256x4xbf16>, vector<4x4xbf16>, vector<256x4xf32> -> vector<256x4xf32>
    %68 = arith.addf %62, %67 : vector<256x4xf32>
    %c0_85 = arith.constant 0 : index
    %c0_86 = arith.constant 0 : index
    %69 = vector.load %arg3[%c0_85, %c0_86] : memref<1x4xf32, #tpu.memory_space<vmem>>, vector<1x4xf32>
    %70 = vector.broadcast %69 : vector<1x4xf32> to vector<256x4xf32>
    %71 = arith.addf %68, %70 : vector<256x4xf32>
    %c0_87 = arith.constant 0 : index
    %c0_88 = arith.constant 0 : index
    %72 = vector.load %arg8[%c0_87, %c0_88] : memref<256x4xf32, #tpu.memory_space<vmem>>, vector<256x4xf32>
    tpu.vector_store %arg8[%c0_87, %c0_88], %71 {strides = array<i32>} : memref<256x4xf32, #tpu.memory_space<vmem>>, vector<256x4xf32>,
    %cst_89 = arith.constant dense<0.000000e+00> : vector<4xf32>
    %73 = vector.multi_reduction <add>, %71, %cst_89 [0] : vector<256x4xf32> to vector<4xf32>
    %74 = vector.shape_cast %73 : vector<4xf32> to vector<1x4xf32>
    %75 = arith.addf %12, %74 : vector<1x4xf32>
    %76 = arith.mulf %71, %71 : vector<256x4xf32>
    %cst_90 = arith.constant dense<0.000000e+00> : vector<4xf32>
    %77 = vector.multi_reduction <add>, %76, %cst_90 [0] : vector<256x4xf32> to vector<4xf32>
    %78 = vector.shape_cast %77 : vector<4xf32> to vector<1x4xf32>
    %79 = arith.addf %13, %78 : vector<1x4xf32>
    %cst_91 = arith.constant 3.906250e-03 : f32
    %80 = vector.broadcast %cst_91 : f32 to vector<1x4xf32>
    %81 = arith.mulf %75, %80 : vector<1x4xf32>
    %cst_92 = arith.constant 3.906250e-03 : f32
    %82 = vector.broadcast %cst_92 : f32 to vector<1x4xf32>
    %83 = arith.mulf %79, %82 : vector<1x4xf32>
    %84 = arith.mulf %81, %81 : vector<1x4xf32>
    %85 = arith.subf %83, %84 : vector<1x4xf32>
    %cst_93 = arith.constant 0.000000e+00 : f32
    %86 = vector.broadcast %cst_93 : f32 to vector<1x4xf32>
    %87 = arith.maximumf %85, %86 : vector<1x4xf32>
    %cst_94 = arith.constant 9.99999974E-6 : f32
    %88 = vector.broadcast %cst_94 : f32 to vector<1x4xf32>
    %89 = arith.addf %87, %88 : vector<1x4xf32>
    %90 = math.rsqrt %89 : vector<1x4xf32>
    %c0_95 = arith.constant 0 : index
    %c0_96 = arith.constant 0 : index
    %91 = vector.load %arg8[%c0_95, %c0_96] : memref<256x4xf32, #tpu.memory_space<vmem>>, vector<256x4xf32>
    %92 = vector.broadcast %81 : vector<1x4xf32> to vector<256x4xf32>
    %93 = arith.subf %91, %92 : vector<256x4xf32>
    %94 = vector.broadcast %90 : vector<1x4xf32> to vector<256x4xf32>
    %95 = arith.mulf %93, %94 : vector<256x4xf32>
    %cst_97 = arith.constant 0.000000e+00 : f32
    %96 = vector.broadcast %cst_97 : f32 to vector<256x4xf32>
    %97 = arith.maximumf %95, %96 : vector<256x4xf32>
    %98 = vector.shape_cast %97 : vector<256x4xf32> to vector<16x16x4xf32>
    %99 = arith.truncf %98 : vector<16x16x4xf32> to vector<16x16x4xbf16>
    %c1_98 = arith.constant 1 : index
    %c1_99 = arith.constant 1 : index
    %c0_100 = arith.constant 0 : index
    %100 = vector.load %arg7[%c1_98, %c1_99, %c0_100] : memref<18x18x4xbf16, #tpu.memory_space<vmem>>, vector<16x16x4xbf16>
    tpu.vector_store %arg7[%c1_98, %c1_99, %c0_100], %99 {strides = array<i32>} : memref<18x18x4xbf16, #tpu.memory_space<vmem>>, vector<16x16x4xbf16>,
    %c2_101 = arith.constant 2 : index
    %c1_102 = arith.constant 1 : index
    %c0_103 = arith.constant 0 : index
    %101 = vector.load %arg7[%c2_101, %c1_102, %c0_103] : memref<18x18x4xbf16, #tpu.memory_space<vmem>>, vector<1x16x4xbf16>
    %c0_104 = arith.constant 0 : index
    %c1_105 = arith.constant 1 : index
    %c0_106 = arith.constant 0 : index
    %102 = vector.load %arg7[%c0_104, %c1_105, %c0_106] : memref<18x18x4xbf16, #tpu.memory_space<vmem>>, vector<1x16x4xbf16>
    tpu.vector_store %arg7[%c0_104, %c1_105, %c0_106], %101 {strides = array<i32>} : memref<18x18x4xbf16, #tpu.memory_space<vmem>>, vector<1x16x4xbf16>,
    %c15_107 = arith.constant 15 : index
    %c1_108 = arith.constant 1 : index
    %c0_109 = arith.constant 0 : index
    %103 = vector.load %arg7[%c15_107, %c1_108, %c0_109] : memref<18x18x4xbf16, #tpu.memory_space<vmem>>, vector<1x16x4xbf16>
    %c17_110 = arith.constant 17 : index
    %c1_111 = arith.constant 1 : index
    %c0_112 = arith.constant 0 : index
    %104 = vector.load %arg7[%c17_110, %c1_111, %c0_112] : memref<18x18x4xbf16, #tpu.memory_space<vmem>>, vector<1x16x4xbf16>
    tpu.vector_store %arg7[%c17_110, %c1_111, %c0_112], %103 {strides = array<i32>} : memref<18x18x4xbf16, #tpu.memory_space<vmem>>, vector<1x16x4xbf16>,
    %c0_113 = arith.constant 0 : index
    %c2_114 = arith.constant 2 : index
    %c0_115 = arith.constant 0 : index
    %105 = vector.load %arg7[%c0_113, %c2_114, %c0_115] : memref<18x18x4xbf16, #tpu.memory_space<vmem>>, vector<18x1x4xbf16>
    %c0_116 = arith.constant 0 : index
    %c0_117 = arith.constant 0 : index
    %c0_118 = arith.constant 0 : index
    %106 = vector.load %arg7[%c0_116, %c0_117, %c0_118] : memref<18x18x4xbf16, #tpu.memory_space<vmem>>, vector<18x1x4xbf16>
    tpu.vector_store %arg7[%c0_116, %c0_117, %c0_118], %105 {strides = array<i32>} : memref<18x18x4xbf16, #tpu.memory_space<vmem>>, vector<18x1x4xbf16>,
    %c0_119 = arith.constant 0 : index
    %c15_120 = arith.constant 15 : index
    %c0_121 = arith.constant 0 : index
    %107 = vector.load %arg7[%c0_119, %c15_120, %c0_121] : memref<18x18x4xbf16, #tpu.memory_space<vmem>>, vector<18x1x4xbf16>
    %c0_122 = arith.constant 0 : index
    %c17_123 = arith.constant 17 : index
    %c0_124 = arith.constant 0 : index
    %108 = vector.load %arg7[%c0_122, %c17_123, %c0_124] : memref<18x18x4xbf16, #tpu.memory_space<vmem>>, vector<18x1x4xbf16>
    tpu.vector_store %arg7[%c0_122, %c17_123, %c0_124], %107 {strides = array<i32>} : memref<18x18x4xbf16, #tpu.memory_space<vmem>>, vector<18x1x4xbf16>,
    %cst_125 = arith.constant 0.000000e+00 : f32
    %109 = vector.broadcast %cst_125 : f32 to vector<1x4xf32>
    %cst_126 = arith.constant 0.000000e+00 : f32
    %110 = vector.broadcast %cst_126 : f32 to vector<1x4xf32>
    %cst_127 = arith.constant 0.000000e+00 : f32
    %111 = vector.broadcast %cst_127 : f32 to vector<256x4xf32>
    %c0_128 = arith.constant 0 : index
    %c0_129 = arith.constant 0 : index
    %c0_130 = arith.constant 0 : index
    %112 = vector.load %arg7[%c0_128, %c0_129, %c0_130] : memref<18x18x4xbf16, #tpu.memory_space<vmem>>, vector<16x16x4xbf16>
    %113 = vector.shape_cast %112 : vector<16x16x4xbf16> to vector<256x4xbf16>
    %c0_131 = arith.constant 0 : index
    %c0_132 = arith.constant 0 : index
    %c0_133 = arith.constant 0 : index
    %114 = vector.load %arg4[%c0_131, %c0_132, %c0_133] : memref<9x4x4xbf16, #tpu.memory_space<vmem>>, vector<1x4x4xbf16>
    %115 = vector.shape_cast %114 : vector<1x4x4xbf16> to vector<4x4xbf16>
    %cst_134 = arith.constant dense<0.000000e+00> : vector<256x4xf32>
    %116 = tpu.matmul %113, %115, %cst_134 {dimension_numbers = #tpu.dot_dimension_numbers<[1], [0], [0], [1], [0, 0, 1, 1], [], []>} : vector<256x4xbf16>, vector<4x4xbf16>, vector<256x4xf32> -> vector<256x4xf32>
    %117 = arith.addf %111, %116 : vector<256x4xf32>
    %c0_135 = arith.constant 0 : index
    %c1_136 = arith.constant 1 : index
    %c0_137 = arith.constant 0 : index
    %118 = vector.load %arg7[%c0_135, %c1_136, %c0_137] : memref<18x18x4xbf16, #tpu.memory_space<vmem>>, vector<16x16x4xbf16>
    %119 = vector.shape_cast %118 : vector<16x16x4xbf16> to vector<256x4xbf16>
    %c1_138 = arith.constant 1 : index
    %c0_139 = arith.constant 0 : index
    %c0_140 = arith.constant 0 : index
    %120 = vector.load %arg4[%c1_138, %c0_139, %c0_140] : memref<9x4x4xbf16, #tpu.memory_space<vmem>>, vector<1x4x4xbf16>
    %121 = vector.shape_cast %120 : vector<1x4x4xbf16> to vector<4x4xbf16>
    %cst_141 = arith.constant dense<0.000000e+00> : vector<256x4xf32>
    %122 = tpu.matmul %119, %121, %cst_141 {dimension_numbers = #tpu.dot_dimension_numbers<[1], [0], [0], [1], [0, 0, 1, 1], [], []>} : vector<256x4xbf16>, vector<4x4xbf16>, vector<256x4xf32> -> vector<256x4xf32>
    %123 = arith.addf %117, %122 : vector<256x4xf32>
    %c0_142 = arith.constant 0 : index
    %c2_143 = arith.constant 2 : index
    %c0_144 = arith.constant 0 : index
    %124 = vector.load %arg7[%c0_142, %c2_143, %c0_144] : memref<18x18x4xbf16, #tpu.memory_space<vmem>>, vector<16x16x4xbf16>
    %125 = vector.shape_cast %124 : vector<16x16x4xbf16> to vector<256x4xbf16>
    %c2_145 = arith.constant 2 : index
    %c0_146 = arith.constant 0 : index
    %c0_147 = arith.constant 0 : index
    %126 = vector.load %arg4[%c2_145, %c0_146, %c0_147] : memref<9x4x4xbf16, #tpu.memory_space<vmem>>, vector<1x4x4xbf16>
    %127 = vector.shape_cast %126 : vector<1x4x4xbf16> to vector<4x4xbf16>
    %cst_148 = arith.constant dense<0.000000e+00> : vector<256x4xf32>
    %128 = tpu.matmul %125, %127, %cst_148 {dimension_numbers = #tpu.dot_dimension_numbers<[1], [0], [0], [1], [0, 0, 1, 1], [], []>} : vector<256x4xbf16>, vector<4x4xbf16>, vector<256x4xf32> -> vector<256x4xf32>
    %129 = arith.addf %123, %128 : vector<256x4xf32>
    %c1_149 = arith.constant 1 : index
    %c0_150 = arith.constant 0 : index
    %c0_151 = arith.constant 0 : index
    %130 = vector.load %arg7[%c1_149, %c0_150, %c0_151] : memref<18x18x4xbf16, #tpu.memory_space<vmem>>, vector<16x16x4xbf16>
    %131 = vector.shape_cast %130 : vector<16x16x4xbf16> to vector<256x4xbf16>
    %c3_152 = arith.constant 3 : index
    %c0_153 = arith.constant 0 : index
    %c0_154 = arith.constant 0 : index
    %132 = vector.load %arg4[%c3_152, %c0_153, %c0_154] : memref<9x4x4xbf16, #tpu.memory_space<vmem>>, vector<1x4x4xbf16>
    %133 = vector.shape_cast %132 : vector<1x4x4xbf16> to vector<4x4xbf16>
    %cst_155 = arith.constant dense<0.000000e+00> : vector<256x4xf32>
    %134 = tpu.matmul %131, %133, %cst_155 {dimension_numbers = #tpu.dot_dimension_numbers<[1], [0], [0], [1], [0, 0, 1, 1], [], []>} : vector<256x4xbf16>, vector<4x4xbf16>, vector<256x4xf32> -> vector<256x4xf32>
    %135 = arith.addf %129, %134 : vector<256x4xf32>
    %c1_156 = arith.constant 1 : index
    %c1_157 = arith.constant 1 : index
    %c0_158 = arith.constant 0 : index
    %136 = vector.load %arg7[%c1_156, %c1_157, %c0_158] : memref<18x18x4xbf16, #tpu.memory_space<vmem>>, vector<16x16x4xbf16>
    %137 = vector.shape_cast %136 : vector<16x16x4xbf16> to vector<256x4xbf16>
    %c4_159 = arith.constant 4 : index
    %c0_160 = arith.constant 0 : index
    %c0_161 = arith.constant 0 : index
    %138 = vector.load %arg4[%c4_159, %c0_160, %c0_161] : memref<9x4x4xbf16, #tpu.memory_space<vmem>>, vector<1x4x4xbf16>
    %139 = vector.shape_cast %138 : vector<1x4x4xbf16> to vector<4x4xbf16>
    %cst_162 = arith.constant dense<0.000000e+00> : vector<256x4xf32>
    %140 = tpu.matmul %137, %139, %cst_162 {dimension_numbers = #tpu.dot_dimension_numbers<[1], [0], [0], [1], [0, 0, 1, 1], [], []>} : vector<256x4xbf16>, vector<4x4xbf16>, vector<256x4xf32> -> vector<256x4xf32>
    %141 = arith.addf %135, %140 : vector<256x4xf32>
    %c1_163 = arith.constant 1 : index
    %c2_164 = arith.constant 2 : index
    %c0_165 = arith.constant 0 : index
    %142 = vector.load %arg7[%c1_163, %c2_164, %c0_165] : memref<18x18x4xbf16, #tpu.memory_space<vmem>>, vector<16x16x4xbf16>
    %143 = vector.shape_cast %142 : vector<16x16x4xbf16> to vector<256x4xbf16>
    %c5_166 = arith.constant 5 : index
    %c0_167 = arith.constant 0 : index
    %c0_168 = arith.constant 0 : index
    %144 = vector.load %arg4[%c5_166, %c0_167, %c0_168] : memref<9x4x4xbf16, #tpu.memory_space<vmem>>, vector<1x4x4xbf16>
    %145 = vector.shape_cast %144 : vector<1x4x4xbf16> to vector<4x4xbf16>
    %cst_169 = arith.constant dense<0.000000e+00> : vector<256x4xf32>
    %146 = tpu.matmul %143, %145, %cst_169 {dimension_numbers = #tpu.dot_dimension_numbers<[1], [0], [0], [1], [0, 0, 1, 1], [], []>} : vector<256x4xbf16>, vector<4x4xbf16>, vector<256x4xf32> -> vector<256x4xf32>
    %147 = arith.addf %141, %146 : vector<256x4xf32>
    %c2_170 = arith.constant 2 : index
    %c0_171 = arith.constant 0 : index
    %c0_172 = arith.constant 0 : index
    %148 = vector.load %arg7[%c2_170, %c0_171, %c0_172] : memref<18x18x4xbf16, #tpu.memory_space<vmem>>, vector<16x16x4xbf16>
    %149 = vector.shape_cast %148 : vector<16x16x4xbf16> to vector<256x4xbf16>
    %c6_173 = arith.constant 6 : index
    %c0_174 = arith.constant 0 : index
    %c0_175 = arith.constant 0 : index
    %150 = vector.load %arg4[%c6_173, %c0_174, %c0_175] : memref<9x4x4xbf16, #tpu.memory_space<vmem>>, vector<1x4x4xbf16>
    %151 = vector.shape_cast %150 : vector<1x4x4xbf16> to vector<4x4xbf16>
    %cst_176 = arith.constant dense<0.000000e+00> : vector<256x4xf32>
    %152 = tpu.matmul %149, %151, %cst_176 {dimension_numbers = #tpu.dot_dimension_numbers<[1], [0], [0], [1], [0, 0, 1, 1], [], []>} : vector<256x4xbf16>, vector<4x4xbf16>, vector<256x4xf32> -> vector<256x4xf32>
    %153 = arith.addf %147, %152 : vector<256x4xf32>
    %c2_177 = arith.constant 2 : index
    %c1_178 = arith.constant 1 : index
    %c0_179 = arith.constant 0 : index
    %154 = vector.load %arg7[%c2_177, %c1_178, %c0_179] : memref<18x18x4xbf16, #tpu.memory_space<vmem>>, vector<16x16x4xbf16>
    %155 = vector.shape_cast %154 : vector<16x16x4xbf16> to vector<256x4xbf16>
    %c7_180 = arith.constant 7 : index
    %c0_181 = arith.constant 0 : index
    %c0_182 = arith.constant 0 : index
    %156 = vector.load %arg4[%c7_180, %c0_181, %c0_182] : memref<9x4x4xbf16, #tpu.memory_space<vmem>>, vector<1x4x4xbf16>
    %157 = vector.shape_cast %156 : vector<1x4x4xbf16> to vector<4x4xbf16>
    %cst_183 = arith.constant dense<0.000000e+00> : vector<256x4xf32>
    %158 = tpu.matmul %155, %157, %cst_183 {dimension_numbers = #tpu.dot_dimension_numbers<[1], [0], [0], [1], [0, 0, 1, 1], [], []>} : vector<256x4xbf16>, vector<4x4xbf16>, vector<256x4xf32> -> vector<256x4xf32>
    %159 = arith.addf %153, %158 : vector<256x4xf32>
    %c2_184 = arith.constant 2 : index
    %c2_185 = arith.constant 2 : index
    %c0_186 = arith.constant 0 : index
    %160 = vector.load %arg7[%c2_184, %c2_185, %c0_186] : memref<18x18x4xbf16, #tpu.memory_space<vmem>>, vector<16x16x4xbf16>
    %161 = vector.shape_cast %160 : vector<16x16x4xbf16> to vector<256x4xbf16>
    %c8_187 = arith.constant 8 : index
    %c0_188 = arith.constant 0 : index
    %c0_189 = arith.constant 0 : index
    %162 = vector.load %arg4[%c8_187, %c0_188, %c0_189] : memref<9x4x4xbf16, #tpu.memory_space<vmem>>, vector<1x4x4xbf16>
    %163 = vector.shape_cast %162 : vector<1x4x4xbf16> to vector<4x4xbf16>
    %cst_190 = arith.constant dense<0.000000e+00> : vector<256x4xf32>
    %164 = tpu.matmul %161, %163, %cst_190 {dimension_numbers = #tpu.dot_dimension_numbers<[1], [0], [0], [1], [0, 0, 1, 1], [], []>} : vector<256x4xbf16>, vector<4x4xbf16>, vector<256x4xf32> -> vector<256x4xf32>
    %165 = arith.addf %159, %164 : vector<256x4xf32>
    %c0_191 = arith.constant 0 : index
    %c0_192 = arith.constant 0 : index
    %166 = vector.load %arg5[%c0_191, %c0_192] : memref<1x4xf32, #tpu.memory_space<vmem>>, vector<1x4xf32>
    %167 = vector.broadcast %166 : vector<1x4xf32> to vector<256x4xf32>
    %168 = arith.addf %165, %167 : vector<256x4xf32>
    %c0_193 = arith.constant 0 : index
    %c0_194 = arith.constant 0 : index
    %169 = vector.load %arg8[%c0_193, %c0_194] : memref<256x4xf32, #tpu.memory_space<vmem>>, vector<256x4xf32>
    tpu.vector_store %arg8[%c0_193, %c0_194], %168 {strides = array<i32>} : memref<256x4xf32, #tpu.memory_space<vmem>>, vector<256x4xf32>,
    %cst_195 = arith.constant dense<0.000000e+00> : vector<4xf32>
    %170 = vector.multi_reduction <add>, %168, %cst_195 [0] : vector<256x4xf32> to vector<4xf32>
    %171 = vector.shape_cast %170 : vector<4xf32> to vector<1x4xf32>
    %172 = arith.addf %109, %171 : vector<1x4xf32>
    %173 = arith.mulf %168, %168 : vector<256x4xf32>
    %cst_196 = arith.constant dense<0.000000e+00> : vector<4xf32>
    %174 = vector.multi_reduction <add>, %173, %cst_196 [0] : vector<256x4xf32> to vector<4xf32>
    %175 = vector.shape_cast %174 : vector<4xf32> to vector<1x4xf32>
    %176 = arith.addf %110, %175 : vector<1x4xf32>
    %cst_197 = arith.constant 3.906250e-03 : f32
    %177 = vector.broadcast %cst_197 : f32 to vector<1x4xf32>
    %178 = arith.mulf %172, %177 : vector<1x4xf32>
    %cst_198 = arith.constant 3.906250e-03 : f32
    %179 = vector.broadcast %cst_198 : f32 to vector<1x4xf32>
    %180 = arith.mulf %176, %179 : vector<1x4xf32>
    %181 = arith.mulf %178, %178 : vector<1x4xf32>
    %182 = arith.subf %180, %181 : vector<1x4xf32>
    %cst_199 = arith.constant 0.000000e+00 : f32
    %183 = vector.broadcast %cst_199 : f32 to vector<1x4xf32>
    %184 = arith.maximumf %182, %183 : vector<1x4xf32>
    %cst_200 = arith.constant 9.99999974E-6 : f32
    %185 = vector.broadcast %cst_200 : f32 to vector<1x4xf32>
    %186 = arith.addf %184, %185 : vector<1x4xf32>
    %187 = math.rsqrt %186 : vector<1x4xf32>
    %c0_201 = arith.constant 0 : index
    %c0_202 = arith.constant 0 : index
    %188 = vector.load %arg8[%c0_201, %c0_202] : memref<256x4xf32, #tpu.memory_space<vmem>>, vector<256x4xf32>
    %189 = vector.broadcast %178 : vector<1x4xf32> to vector<256x4xf32>
    %190 = arith.subf %188, %189 : vector<256x4xf32>
    %191 = vector.broadcast %187 : vector<1x4xf32> to vector<256x4xf32>
    %192 = arith.mulf %190, %191 : vector<256x4xf32>
    %c0_203 = arith.constant 0 : index
    %c0_204 = arith.constant 0 : index
    %c0_205 = arith.constant 0 : index
    %c0_206 = arith.constant 0 : index
    %193 = vector.load %arg1[%c0_203, %c0_204, %c0_205, %c0_206] : memref<1x16x16x4xf32, #tpu.memory_space<vmem>>, vector<1x16x16x4xf32>
    %194 = vector.shape_cast %193 : vector<1x16x16x4xf32> to vector<256x4xf32>
    %195 = arith.addf %194, %192 : vector<256x4xf32>
    %196 = vector.shape_cast %195 : vector<256x4xf32> to vector<1x16x16x4xf32>
    %c0_207 = arith.constant 0 : index
    %c0_208 = arith.constant 0 : index
    %c0_209 = arith.constant 0 : index
    %c0_210 = arith.constant 0 : index
    %197 = vector.load %arg6[%c0_207, %c0_208, %c0_209, %c0_210] : memref<1x16x16x4xf32, #tpu.memory_space<vmem>>, vector<1x16x16x4xf32>
    tpu.vector_store %arg6[%c0_207, %c0_208, %c0_209, %c0_210], %196 {strides = array<i32>} : memref<1x16x16x4xf32, #tpu.memory_space<vmem>>, vector<1x16x16x4xf32>,
    return
  }
  func.func @transform_0(%arg0: i32) -> (i32, i32, i32, i32) {
    %c0_i32 = arith.constant 0 : i32
    %c0_i32_0 = arith.constant 0 : i32
    %c0_i32_1 = arith.constant 0 : i32
    %c0_i32_2 = arith.constant 0 : i32
    return %arg0, %c0_i32, %c0_i32_0, %c0_i32_1 : i32, i32, i32, i32
  }
  func.func @transform_1(%arg0: i32) -> (i32, i32, i32) {
    %c0_i32 = arith.constant 0 : i32
    %c0_i32_0 = arith.constant 0 : i32
    %c0_i32_1 = arith.constant 0 : i32
    %c0_i32_2 = arith.constant 0 : i32
    return %c0_i32, %c0_i32_0, %c0_i32_1 : i32, i32, i32
  }
  func.func @transform_2(%arg0: i32) -> (i32, i32) {
    %c0_i32 = arith.constant 0 : i32
    %c0_i32_0 = arith.constant 0 : i32
    %c0_i32_1 = arith.constant 0 : i32
    return %c0_i32, %c0_i32_0 : i32, i32
  }
  func.func @transform_3(%arg0: i32) -> (i32, i32, i32) {
    %c0_i32 = arith.constant 0 : i32
    %c0_i32_0 = arith.constant 0 : i32
    %c0_i32_1 = arith.constant 0 : i32
    %c0_i32_2 = arith.constant 0 : i32
    return %c0_i32, %c0_i32_0, %c0_i32_1 : i32, i32, i32
  }
  func.func @transform_4(%arg0: i32) -> (i32, i32) {
    %c0_i32 = arith.constant 0 : i32
    %c0_i32_0 = arith.constant 0 : i32
    %c0_i32_1 = arith.constant 0 : i32
    return %c0_i32, %c0_i32_0 : i32, i32
  }
  func.func @transform_5(%arg0: i32) -> (i32, i32, i32, i32) {
    %c0_i32 = arith.constant 0 : i32
    %c0_i32_0 = arith.constant 0 : i32
    %c0_i32_1 = arith.constant 0 : i32
    %c0_i32_2 = arith.constant 0 : i32
    return %arg0, %c0_i32, %c0_i32_0, %c0_i32_1 : i32, i32, i32, i32
  }
}

</mosaic_0001>

<llo_original>
// kernel: tpu_custom_call.1
$region0: #{tpu_custom_call.1}
  #allocation0 [shape = 'u32[]', space=smem, size = 0x4, offset = 0x4, fixed_abs, tag = 'smem constant byte address 0x4 - core index']
  #allocation1 [shape = 'u32[144,128]{1,0:T(1,128)}', space=vmem, size = 0x12000, scoped, tag = 'internal scratch']
  #allocation2 [shape = 'bf16[18,18,4]{2,1,0:T(8,128)(2,1)}', space=vmem, size = 0x1b000, scoped, tag = 'scratch operand']
  #allocation3 [shape = 'f32[256,4]{1,0:T(8,128)}', space=vmem, size = 0x20000, scoped, tag = 'scratch operand']
  %s0 = inlined_call_operand.vmem [shape: f32[2,16,16,4], index: 0, kind: input, shape index: {}]
  %s1 = inlined_call_operand.vmem [shape: bf16[9,4,4], index: 1, kind: input, shape index: {}]
  %s2 = inlined_call_operand.vmem [shape: f32[1,4], index: 2, kind: input, shape index: {}]
  %s3 = inlined_call_operand.vmem [shape: bf16[9,4,4], index: 3, kind: input, shape index: {}]
  %s4 = inlined_call_operand.vmem [shape: f32[1,4], index: 4, kind: input, shape index: {}]
  %s5 = inlined_call_operand.vmem [shape: f32[2,16,16,4], index: 5, kind: output, shape index: {}]
  %s6 = sld [smem:[#allocation0]]
  $region53: #{tpu_custom_call.1} parent=0
    _
  %s8 = ssub.s32 1, %s6
  %s9 = scalar_select 0, %s8, %s6
  loop: start=0, step=1, limit=4
  $region2: #{tpu_custom_call.1} parent=0 // loop_pre_header
    _
  $region3: #{tpu_custom_call.1} parent=0 // loop_header
    %s11 = sphi 0, %s15
    %p12 = scmp.ge.s32.totalorder %s11, 4
    %s21 = sphi 0, %s23
    %s24 = sphi 0, %s21
    %s25 = sphi 0, %s24
    %s41 = sphi 0, %s25
    %s45 = sphi 0, %s45
    %s47 = sphi 0, %s45
    %s48 = sphi 0, %s47
    %s62 = sphi 0, %s48
    %s66 = sphi 0, %s66
    %s68 = sphi 0, %s66
    %s69 = sphi 0, %s68
    %s83 = sphi 0, %s69
    %s87 = sphi 0, %s87
    %s89 = sphi 0, %s87
    %s90 = sphi 0, %s89
    %s104 = sphi 0, %s90
    %s108 = sphi 0, %s108
    %s110 = sphi 0, %s108
    %s111 = sphi 0, %s110
    %s125 = sphi 0, %s111
    %s131 = sphi 0, %s133
    %s134 = sphi 0, %s131
    %s135 = sphi 0, %s134
    %s151 = sphi 0, %s135
  $region4: #{tpu_custom_call.1} parent=0 // loop_header_branch
    %14 = sbr.rel (%p12) target = $region8
  $region5: #{tpu_custom_call.1} parent=0 // loop_body
    %s16 = ssub.s32 %s11, 1
    %s17 = ssub.s32 %s11, 2
    %s18 = sadd.s32 %s11, 1
    %s19 = ssub.s32 %s11, %s18
    %p20 = scmp.eq.s32.totalorder %s19, 0
    %s22 = sadd.s32 %s21, 1
    %s23 = scalar_select %p20, %s21, %s22
    %p26 = pneg %p20
    %p27 = scmp.eq.s32.totalorder %s11, 1
    %p28 = por %p26, %p27
    %p29 = scmp.ne.s32.totalorder %s21, %s24
    %p30 = scmp.eq.s32.totalorder %s11, 0
    %p31 = por %p29, %p30
    %p32 = scmp.ne.s32.totalorder %s21, %s24
    %p33 = scmp.eq.s32.totalorder %s16, 1
    %p34 = por %p32, %p33
    %p35 = scmp.ne.s32.totalorder %s24, %s25
    %p36 = scmp.eq.s32.totalorder %s16, 0
    %p37 = por %p35, %p36
    %p38 = scmp.ne.s32.totalorder %s24, %s25
    %p39 = scmp.eq.s32.totalorder %s17, 1
    %p40 = por %p38, %p39
    %p42 = scmp.ne.s32.totalorder %s25, %s41
    %p43 = scmp.eq.s32.totalorder %s17, 0
    %p44 = por %p42, %p43
    %s46 = sadd.s32 %s45, 1
    %p49 = scmp.eq.s32.totalorder %s11, 1
    %p50 = scmp.ne.s32.totalorder %s45, %s47
    %p51 = scmp.eq.s32.totalorder %s11, 0
    %p52 = por %p50, %p51
    %p53 = scmp.ne.s32.totalorder %s45, %s47
    %p54 = scmp.eq.s32.totalorder %s16, 1
    %p55 = por %p53, %p54
    %p56 = scmp.ne.s32.totalorder %s47, %s48
    %p57 = scmp.eq.s32.totalorder %s16, 0
    %p58 = por %p56, %p57
    %p59 = scmp.ne.s32.totalorder %s47, %s48
    %p60 = scmp.eq.s32.totalorder %s17, 1
    %p61 = por %p59, %p60
    %p63 = scmp.ne.s32.totalorder %s48, %s62
    %p64 = scmp.eq.s32.totalorder %s17, 0
    %p65 = por %p63, %p64
    %s67 = sadd.s32 %s66, 1
    %p70 = scmp.eq.s32.totalorder %s11, 1
    %p71 = scmp.ne.s32.totalorder %s66, %s68
    %p72 = scmp.eq.s32.totalorder %s11, 0
    %p73 = por %p71, %p72
    %p74 = scmp.ne.s32.totalorder %s66, %s68
    %p75 = scmp.eq.s32.totalorder %s16, 1
    %p76 = por %p74, %p75
    %p77 = scmp.ne.s32.totalorder %s68, %s69
    %p78 = scmp.eq.s32.totalorder %s16, 0
    %p79 = por %p77, %p78
    %p80 = scmp.ne.s32.totalorder %s68, %s69
    %p81 = scmp.eq.s32.totalorder %s17, 1
    %p82 = por %p80, %p81
    %p84 = scmp.ne.s32.totalorder %s69, %s83
    %p85 = scmp.eq.s32.totalorder %s17, 0
    %p86 = por %p84, %p85
    %s88 = sadd.s32 %s87, 1
    %p91 = scmp.eq.s32.totalorder %s11, 1
    %p92 = scmp.ne.s32.totalorder %s87, %s89
    %p93 = scmp.eq.s32.totalorder %s11, 0
    %p94 = por %p92, %p93
    %p95 = scmp.ne.s32.totalorder %s87, %s89
    %p96 = scmp.eq.s32.totalorder %s16, 1
    %p97 = por %p95, %p96
    %p98 = scmp.ne.s32.totalorder %s89, %s90
    %p99 = scmp.eq.s32.totalorder %s16, 0
    %p100 = por %p98, %p99
    %p101 = scmp.ne.s32.totalorder %s89, %s90
    %p102 = scmp.eq.s32.totalorder %s17, 1
    %p103 = por %p101, %p102
    %p105 = scmp.ne.s32.totalorder %s90, %s104
    %p106 = scmp.eq.s32.totalorder %s17, 0
    %p107 = por %p105, %p106
    %s109 = sadd.s32 %s108, 1
    %p112 = scmp.eq.s32.totalorder %s11, 1
    %p113 = scmp.ne.s32.totalorder %s108, %s110
    %p114 = scmp.eq.s32.totalorder %s11, 0
    %p115 = por %p113, %p114
    %p116 = scmp.ne.s32.totalorder %s108, %s110
    %p117 = scmp.eq.s32.totalorder %s16, 1
    %p118 = por %p116, %p117
    %p119 = scmp.ne.s32.totalorder %s110, %s111
    %p120 = scmp.eq.s32.totalorder %s16, 0
    %p121 = por %p119, %p120
    %p122 = scmp.ne.s32.totalorder %s110, %s111
    %p123 = scmp.eq.s32.totalorder %s17, 1
    %p124 = por %p122, %p123
    %p126 = scmp.ne.s32.totalorder %s111, %s125
    %p127 = scmp.eq.s32.totalorder %s17, 0
    %p128 = por %p126, %p127
    %s129 = ssub.s32 %s11, %s18
    %p130 = scmp.eq.s32.totalorder %s129, 0
    %s132 = sadd.s32 %s131, 1
    %s133 = scalar_select %p130, %s131, %s132
    %p136 = pneg %p130
    %p137 = scmp.eq.s32.totalorder %s11, 1
    %p138 = por %p136, %p137
    %p139 = scmp.ne.s32.totalorder %s131, %s134
    %p140 = scmp.eq.s32.totalorder %s11, 0
    %p141 = por %p139, %p140
    %p142 = scmp.ne.s32.totalorder %s131, %s134
    %p143 = scmp.eq.s32.totalorder %s16, 1
    %p144 = por %p142, %p143
    %p145 = scmp.ne.s32.totalorder %s134, %s135
    %p146 = scmp.eq.s32.totalorder %s16, 0
    %p147 = por %p145, %p146
    %p148 = scmp.ne.s32.totalorder %s134, %s135
    %p149 = scmp.eq.s32.totalorder %s17, 1
    %p150 = por %p148, %p149
    %p152 = scmp.ne.s32.totalorder %s135, %s151
    %p153 = scmp.eq.s32.totalorder %s17, 0
    %p154 = por %p152, %p153
    %p155 = scmp.le.s32.totalorder 1, %s11
    %p156 = scmp.lt.s32.totalorder %s11, 3
    %p157 = pnand %p155, %p156
    %p158 = pneg %p157
    // Predicated region
    $region9: #{tpu_custom_call.1} parent=5 // pred_check
      _
    $region10: #{tpu_custom_call.1} parent=5 // pred_check_branch
      %160 = sbr.rel (%p157) target = $region12
    $region11: #{tpu_custom_call.1} parent=5 // pred_region
      %s161 = ssub.s32 %s11, 1
      // Predicated region
      $region13: #{tpu_custom_call.1} parent=11 // pred_check
        %p162 = pneg %p58
      $region14: #{tpu_custom_call.1} parent=11 // pred_check_branch
        %164 = sbr.rel (%p162) target = $region16
      $region15: #{tpu_custom_call.1} parent=11 // pred_region
        _
      $region16: #{tpu_custom_call.1} parent=11 // pred_fallthru
        _
      // Predicated region
      $region17: #{tpu_custom_call.1} parent=11 // pred_check
        %p165 = pneg %p79
      $region18: #{tpu_custom_call.1} parent=11 // pred_check_branch
        %167 = sbr.rel (%p165) target = $region20
      $region19: #{tpu_custom_call.1} parent=11 // pred_region
        _
      $region20: #{tpu_custom_call.1} parent=11 // pred_fallthru
        _
      // Predicated region
      $region21: #{tpu_custom_call.1} parent=11 // pred_check
        %p168 = pneg %p100
      $region22: #{tpu_custom_call.1} parent=11 // pred_check_branch
        %170 = sbr.rel (%p168) target = $region24
      $region23: #{tpu_custom_call.1} parent=11 // pred_region
        _
      $region24: #{tpu_custom_call.1} parent=11 // pred_fallthru
        _
      // Predicated region
      $region25: #{tpu_custom_call.1} parent=11 // pred_check
        %p171 = pneg %p121
      $region26: #{tpu_custom_call.1} parent=11 // pred_check_branch
        %173 = sbr.rel (%p171) target = $region28
      $region27: #{tpu_custom_call.1} parent=11 // pred_region
        _
      $region28: #{tpu_custom_call.1} parent=11 // pred_fallthru
        _
    $region12: #{tpu_custom_call.1} parent=5 // pred_fallthru
      _
    %p174 = scmp.lt.s32.totalorder %s11, 2
    // Predicated region
    $region29: #{tpu_custom_call.1} parent=5 // pred_check
      %p175 = pneg %p174
    $region30: #{tpu_custom_call.1} parent=5 // pred_check_branch
      %177 = sbr.rel (%p175) target = $region32
    $region31: #{tpu_custom_call.1} parent=5 // pred_region
      // Predicated region
      $region33: #{tpu_custom_call.1} parent=31 // pred_check
        %p178 = pneg %p31
      $region34: #{tpu_custom_call.1} parent=31 // pred_check_branch
        %180 = sbr.rel (%p178) target = $region36
      $region35: #{tpu_custom_call.1} parent=31 // pred_region
        %p181 = scmp.lt.s32.totalorder %s11, 1
        %s182 = scalar_select %p181, %s11, 1
        %s183 = smul.addr %s182, 32
        %s184 = smul.addr %s183, 8
        %s185 = scalar_lea.vmem %s0, %s184
      $region36: #{tpu_custom_call.1} parent=31 // pred_fallthru
        _
    $region32: #{tpu_custom_call.1} parent=5 // pred_fallthru
      _
    %p186 = scmp.le.s32.totalorder 1, %s11
    %p187 = scmp.lt.s32.totalorder %s11, 3
    %p188 = pnand %p186, %p187
    %p189 = pneg %p188
    // Predicated region
    $region37: #{tpu_custom_call.1} parent=5 // pred_check
      _
    $region38: #{tpu_custom_call.1} parent=5 // pred_check_branch
      %191 = sbr.rel (%p188) target = $region40
    $region39: #{tpu_custom_call.1} parent=5 // pred_region
      %s192 = ssub.s32 %s11, 1
      %p193 = scmp.lt.s32.totalorder %s16, 1
      %s194 = scalar_select %p193, %s16, 1
      %s195 = smul.addr %s194, 32
      %s196 = smul.addr %s195, 8
      %s197 = scalar_lea.vmem %s0, %s196
      %p198 = pneg %p37
      %p199 = pneg %p34
      %p200 = pneg %p58
      %p201 = pneg %p55
      %p202 = pneg %p79
      %p203 = pneg %p76
      %p204 = pneg %p100
      %p205 = pneg %p97
      %p206 = pneg %p121
      %p207 = pneg %p118
      %p208 = pneg %p147
      %p209 = pneg %p144
      %p210 = scmp.lt.s32.totalorder %s16, 1
      %s211 = scalar_select %p210, %s16, 1
      %s212 = smul.addr %s211, 32
      %s213 = smul.addr %s212, 8
      %s214 = scalar_lea.vmem %s5, %s213
      %p215 = scmp.lt.s32.totalorder %s16, 1
      %s216 = scalar_select %p215, %s16, 1
      %s217 = smul.addr %s216, 32
      %s218 = smul.addr %s217, 8
      %s219 = scalar_lea.vmem %s0, %s218
      %p220 = scmp.lt.s32.totalorder %s16, 1
      %s221 = scalar_select %p220, %s16, 1
      %s222 = smul.addr %s221, 32
      %s223 = smul.addr %s222, 8
      %s224 = scalar_lea.vmem %s5, %s223
      %v226 = vld [vmem:[%s219] sm:$0xff]
      %v227 = vld [vmem:[%s219 + $0x8] sm:$0xff]
      %v228 = vld [vmem:[%s219 + $0x10] sm:$0xff]
      %v229 = vld [vmem:[%s219 + $0x18] sm:$0xff]
      %v230 = vld [vmem:[%s219 + $0x20] sm:$0xff]
      %v231 = vld [vmem:[%s219 + $0x28] sm:$0xff]
      %v232 = vld [vmem:[%s219 + $0x30] sm:$0xff]
      %v233 = vld [vmem:[%s219 + $0x38] sm:$0xff]
      %v234 = vld [vmem:[%s219 + $0x40] sm:$0xff]
      %v235 = vld [vmem:[%s219 + $0x48] sm:$0xff]
      %v236 = vld [vmem:[%s219 + $0x50] sm:$0xff]
      %v237 = vld [vmem:[%s219 + $0x58] sm:$0xff]
      %v238 = vld [vmem:[%s219 + $0x60] sm:$0xff]
      %v239 = vld [vmem:[%s219 + $0x68] sm:$0xff]
      %v240 = vld [vmem:[%s219 + $0x70] sm:$0xff]
      %v241 = vld [vmem:[%s219 + $0x78] sm:$0xff]
      %v242 = vld [vmem:[%s219 + $0x80] sm:$0xff]
      %v243 = vld [vmem:[%s219 + $0x88] sm:$0xff]
      %v244 = vld [vmem:[%s219 + $0x90] sm:$0xff]
      %v245 = vld [vmem:[%s219 + $0x98] sm:$0xff]
      %v246 = vld [vmem:[%s219 + $0xa0] sm:$0xff]
      %v247 = vld [vmem:[%s219 + $0xa8] sm:$0xff]
      %v248 = vld [vmem:[%s219 + $0xb0] sm:$0xff]
      %v249 = vld [vmem:[%s219 + $0xb8] sm:$0xff]
      %v250 = vld [vmem:[%s219 + $0xc0] sm:$0xff]
      %v251 = vld [vmem:[%s219 + $0xc8] sm:$0xff]
      %v252 = vld [vmem:[%s219 + $0xd0] sm:$0xff]
      %v253 = vld [vmem:[%s219 + $0xd8] sm:$0xff]
      %v254 = vld [vmem:[%s219 + $0xe0] sm:$0xff]
      %v255 = vld [vmem:[%s219 + $0xe8] sm:$0xff]
      %v256 = vld [vmem:[%s219 + $0xf0] sm:$0xff]
      %v257 = vld [vmem:[%s219 + $0xf8] sm:$0xff]
      %v258 = vpack.c.bf16 %v227, %v226
      %v259 = vpack.c.bf16 %v229, %v228
      %v260 = vpack.c.bf16 %v231, %v230
      %v261 = vpack.c.bf16 %v233, %v232
      %v262 = vpack.c.bf16 %v235, %v234
      %v263 = vpack.c.bf16 %v237, %v236
      %v264 = vpack.c.bf16 %v239, %v238
      %v265 = vpack.c.bf16 %v241, %v240
      %v266 = vpack.c.bf16 %v243, %v242
      %v267 = vpack.c.bf16 %v245, %v244
      %v268 = vpack.c.bf16 %v247, %v246
      %v269 = vpack.c.bf16 %v249, %v248
      %v270 = vpack.c.bf16 %v251, %v250
      %v271 = vpack.c.bf16 %v253, %v252
      %v272 = vpack.c.bf16 %v255, %v254
      %v273 = vpack.c.bf16 %v257, %v256
      %v290 = vunpack.c.l.b16 %v258
      %v291 = vunpack.c.h.b16 %v258
      %v292 = vunpack.c.l.b16 %v259
      %v293 = vunpack.c.h.b16 %v259
      %v294 = vunpack.c.l.b16 %v260
      %v295 = vunpack.c.h.b16 %v260
      %v296 = vunpack.c.l.b16 %v261
      %v297 = vunpack.c.h.b16 %v261
      %v298 = vunpack.c.l.b16 %v262
      %v299 = vunpack.c.h.b16 %v262
      %v300 = vunpack.c.l.b16 %v263
      %v301 = vunpack.c.h.b16 %v263
      %v302 = vunpack.c.l.b16 %v264
      %v303 = vunpack.c.h.b16 %v264
      %v304 = vunpack.c.l.b16 %v265
      %v305 = vunpack.c.h.b16 %v265
      %v306 = vunpack.c.l.b16 %v266
      %v307 = vunpack.c.h.b16 %v266
      %v308 = vunpack.c.l.b16 %v267
      %v309 = vunpack.c.h.b16 %v267
      %v310 = vunpack.c.l.b16 %v268
      %v311 = vunpack.c.h.b16 %v268
      %v312 = vunpack.c.l.b16 %v269
      %v313 = vunpack.c.h.b16 %v269
      %v314 = vunpack.c.l.b16 %v270
      %v315 = vunpack.c.h.b16 %v270
      %v316 = vunpack.c.l.b16 %v271
      %v317 = vunpack.c.h.b16 %v271
      %v318 = vunpack.c.l.b16 %v272
      %v319 = vunpack.c.h.b16 %v272
      %v320 = vunpack.c.l.b16 %v273
      %v321 = vunpack.c.h.b16 %v273
      %v322 = vpack.c.b16 %v290, %v290
      %v323 = vpack.c.b16 %v291, %v291
      %v324 = vpack.c.b16 %v292, %v292
      %v325 = vpack.c.b16 %v293, %v293
      %v326 = vpack.c.b16 %v294, %v294
      %v327 = vpack.c.b16 %v295, %v295
      %v328 = vpack.c.b16 %v296, %v296
      %v329 = vpack.c.b16 %v297, %v297
      %v330 = vpack.c.b16 %v298, %v298
      %v331 = vpack.c.b16 %v299, %v299
      %v332 = vpack.c.b16 %v300, %v300
      %v333 = vpack.c.b16 %v301, %v301
      %v334 = vpack.c.b16 %v302, %v302
      %v335 = vpack.c.b16 %v303, %v303
      %v336 = vpack.c.b16 %v304, %v304
      %v337 = vpack.c.b16 %v305, %v305
      %v338 = vpack.c.b16 %v306, %v306
      %v339 = vpack.c.b16 %v307, %v307
      %v340 = vpack.c.b16 %v308, %v308
      %v341 = vpack.c.b16 %v309, %v309
      %v342 = vpack.c.b16 %v310, %v310
      %v343 = vpack.c.b16 %v311, %v311
      %v344 = vpack.c.b16 %v312, %v312
      %v345 = vpack.c.b16 %v313, %v313
      %v346 = vpack.c.b16 %v314, %v314
      %v347 = vpack.c.b16 %v315, %v315
      %v348 = vpack.c.b16 %v316, %v316
      %v349 = vpack.c.b16 %v317, %v317
      %v350 = vpack.c.b16 %v318, %v318
      %v351 = vpack.c.b16 %v319, %v319
      %v352 = vpack.c.b16 %v320, %v320
      %v353 = vpack.c.b16 %v321, %v321
      %vm354 = vsmask.f32 256
      %vm355 = vsmask.f32 4368
      %vm356 = vmor %vm354, %vm355
      %v358 = vshrl.u32 %v322, 16
      %v360 = vrot.slane %v358, 7
      %v361 = vshll.u32 %v322, 16
      %v363 = vor.u32 %v360, %v361
      %v364 = vrot.slane %v360, 4
      %v366 = vshrl.u32 %v323, 16
      %v368 = vrot.slane %v366, 7
      %v369 = vshll.u32 %v323, 16
      %v371 = vor.u32 %v368, %v369
      %v372 = vsel %vm356, %v364, %v371
      %v373 = vrot.slane %v368, 4
      %v375 = vshrl.u32 %v324, 16
      %v377 = vrot.slane %v375, 7
      %v378 = vshll.u32 %v324, 16
      %v380 = vor.u32 %v377, %v378
      %v381 = vrot.slane %v377, 4
      %v383 = vshrl.u32 %v325, 16
      %v385 = vrot.slane %v383, 7
      %v386 = vshll.u32 %v325, 16
      %v388 = vor.u32 %v385, %v386
      %v389 = vsel %vm356, %v381, %v388
      %v390 = vrot.slane %v385, 4
      %v392 = vshrl.u32 %v326, 16
      %v394 = vrot.slane %v392, 7
      %v395 = vshll.u32 %v326, 16
      %v397 = vor.u32 %v394, %v395
      %v398 = vrot.slane %v394, 4
      %v400 = vshrl.u32 %v327, 16
      %v402 = vrot.slane %v400, 7
      %v403 = vshll.u32 %v327, 16
      %v405 = vor.u32 %v402, %v403
      %v406 = vsel %vm356, %v398, %v405
      %v407 = vrot.slane %v402, 4
      %v409 = vshrl.u32 %v328, 16
      %v411 = vrot.slane %v409, 7
      %v412 = vshll.u32 %v328, 16
      %v414 = vor.u32 %v411, %v412
      %v415 = vrot.slane %v411, 4
      %v417 = vshrl.u32 %v329, 16
      %v419 = vrot.slane %v417, 7
      %v420 = vshll.u32 %v329, 16
      %v422 = vor.u32 %v419, %v420
      %v423 = vsel %vm356, %v415, %v422
      %v424 = vrot.slane %v419, 4
      %v426 = vshrl.u32 %v330, 16
      %v428 = vrot.slane %v426, 7
      %v429 = vshll.u32 %v330, 16
      %v431 = vor.u32 %v428, %v429
      %v432 = vrot.slane %v428, 4
      %v434 = vshrl.u32 %v331, 16
      %v436 = vrot.slane %v434, 7
      %v437 = vshll.u32 %v331, 16
      %v439 = vor.u32 %v436, %v437
      %v440 = vsel %vm356, %v432, %v439
      %v441 = vrot.slane %v436, 4
      %v443 = vshrl.u32 %v332, 16
      %v445 = vrot.slane %v443, 7
      %v446 = vshll.u32 %v332, 16
      %v448 = vor.u32 %v445, %v446
      %v449 = vrot.slane %v445, 4
      %v451 = vshrl.u32 %v333, 16
      %v453 = vrot.slane %v451, 7
      %v454 = vshll.u32 %v333, 16
      %v456 = vor.u32 %v453, %v454
      %v457 = vsel %vm356, %v449, %v456
      %v458 = vrot.slane %v453, 4
      %v460 = vshrl.u32 %v334, 16
      %v462 = vrot.slane %v460, 7
      %v463 = vshll.u32 %v334, 16
      %v465 = vor.u32 %v462, %v463
      %v466 = vrot.slane %v462, 4
      %v468 = vshrl.u32 %v335, 16
      %v470 = vrot.slane %v468, 7
      %v471 = vshll.u32 %v335, 16
      %v473 = vor.u32 %v470, %v471
      %v474 = vsel %vm356, %v466, %v473
      %v475 = vrot.slane %v470, 4
      %v477 = vshrl.u32 %v336, 16
      %v479 = vrot.slane %v477, 7
      %v480 = vshll.u32 %v336, 16
      %v482 = vor.u32 %v479, %v480
      %v483 = vrot.slane %v479, 4
      %v485 = vshrl.u32 %v337, 16
      %v487 = vrot.slane %v485, 7
      %v488 = vshll.u32 %v337, 16
      %v490 = vor.u32 %v487, %v488
      %v491 = vsel %vm356, %v483, %v490
      %v492 = vrot.slane %v487, 4
      %v494 = vshrl.u32 %v338, 16
      %v496 = vrot.slane %v494, 7
      %v497 = vshll.u32 %v338, 16
      %v499 = vor.u32 %v496, %v497
      %v500 = vrot.slane %v496, 4
      %v502 = vshrl.u32 %v339, 16
      %v504 = vrot.slane %v502, 7
      %v505 = vshll.u32 %v339, 16
      %v507 = vor.u32 %v504, %v505
      %v508 = vsel %vm356, %v500, %v507
      %v509 = vrot.slane %v504, 4
      %v511 = vshrl.u32 %v340, 16
      %v513 = vrot.slane %v511, 7
      %v514 = vshll.u32 %v340, 16
      %v516 = vor.u32 %v513, %v514
      %v517 = vrot.slane %v513, 4
      %v519 = vshrl.u32 %v341, 16
      %v521 = vrot.slane %v519, 7
      %v522 = vshll.u32 %v341, 16
      %v524 = vor.u32 %v521, %v522
      %v525 = vsel %vm356, %v517, %v524
      %v526 = vrot.slane %v521, 4
      %v528 = vshrl.u32 %v342, 16
      %v530 = vrot.slane %v528, 7
      %v531 = vshll.u32 %v342, 16
      %v533 = vor.u32 %v530, %v531
      %v534 = vrot.slane %v530, 4
      %v536 = vshrl.u32 %v343, 16
      %v538 = vrot.slane %v536, 7
      %v539 = vshll.u32 %v343, 16
      %v541 = vor.u32 %v538, %v539
      %v542 = vsel %vm356, %v534, %v541
      %v543 = vrot.slane %v538, 4
      %v545 = vshrl.u32 %v344, 16
      %v547 = vrot.slane %v545, 7
      %v548 = vshll.u32 %v344, 16
      %v550 = vor.u32 %v547, %v548
      %v551 = vrot.slane %v547, 4
      %v553 = vshrl.u32 %v345, 16
      %v555 = vrot.slane %v553, 7
      %v556 = vshll.u32 %v345, 16
      %v558 = vor.u32 %v555, %v556
      %v559 = vsel %vm356, %v551, %v558
      %v560 = vrot.slane %v555, 4
      %v562 = vshrl.u32 %v346, 16
      %v564 = vrot.slane %v562, 7
      %v565 = vshll.u32 %v346, 16
      %v567 = vor.u32 %v564, %v565
      %v568 = vrot.slane %v564, 4
      %v570 = vshrl.u32 %v347, 16
      %v572 = vrot.slane %v570, 7
      %v573 = vshll.u32 %v347, 16
      %v575 = vor.u32 %v572, %v573
      %v576 = vsel %vm356, %v568, %v575
      %v577 = vrot.slane %v572, 4
      %v579 = vshrl.u32 %v348, 16
      %v581 = vrot.slane %v579, 7
      %v582 = vshll.u32 %v348, 16
      %v584 = vor.u32 %v581, %v582
      %v585 = vrot.slane %v581, 4
      %v587 = vshrl.u32 %v349, 16
      %v589 = vrot.slane %v587, 7
      %v590 = vshll.u32 %v349, 16
      %v592 = vor.u32 %v589, %v590
      %v593 = vsel %vm356, %v585, %v592
      %v594 = vrot.slane %v589, 4
      %v596 = vshrl.u32 %v350, 16
      %v598 = vrot.slane %v596, 7
      %v599 = vshll.u32 %v350, 16
      %v601 = vor.u32 %v598, %v599
      %v602 = vrot.slane %v598, 4
      %v604 = vshrl.u32 %v351, 16
      %v606 = vrot.slane %v604, 7
      %v607 = vshll.u32 %v351, 16
      %v609 = vor.u32 %v606, %v607
      %v610 = vsel %vm356, %v602, %v609
      %v611 = vrot.slane %v606, 4
      %v613 = vshrl.u32 %v352, 16
      %v615 = vrot.slane %v613, 7
      %v616 = vshll.u32 %v352, 16
      %v618 = vor.u32 %v615, %v616
      %v619 = vrot.slane %v615, 4
      %v621 = vshrl.u32 %v353, 16
      %v623 = vrot.slane %v621, 7
      %v624 = vshll.u32 %v353, 16
      %v626 = vor.u32 %v623, %v624
      %v627 = vsel %vm356, %v619, %v626
      %v628 = vrot.slane %v623, 4
      %s677 = scalar_lea.vmem [#allocation2], 12
      %vm678 = vcmask 27648
      %vm679 = vsmask.f32 7938
      %vm680 = vmand %vm678, %vm679
      %v681 = vld [vmem:[%s677] sm:$0xf]
      %v682 = vsel %vm680, %v363, %v681
      %683 = vst [vmem:[%s677] sm:$0xf] %v682
      %vm684 = vcmask 27648
      %685 = vst.msk [vmem:[%s677 + $0x4] sm:$0xf] %vm684, %v372
      %vm686 = vcmask 24576
      %vm687 = vmand %vm686, %vm354
      %v688 = vld [vmem:[%s677 + $0x8] sm:$0x1]
      %v689 = vsel %vm687, %v373, %v688
      %690 = vst [vmem:[%s677 + $0x8] sm:$0x1] %v689
      %v691 = vld [vmem:[%s677 + $0xc] sm:$0xf]
      %v692 = vsel %vm680, %v380, %v691
      %693 = vst [vmem:[%s677 + $0xc] sm:$0xf] %v692
      %694 = vst.msk [vmem:[%s677 + $0x10] sm:$0xf] %vm684, %v389
      %v695 = vld [vmem:[%s677 + $0x14] sm:$0x1]
      %v696 = vsel %vm687, %v390, %v695
      %697 = vst [vmem:[%s677 + $0x14] sm:$0x1] %v696
      %v698 = vld [vmem:[%s677 + $0x18] sm:$0xf]
      %v699 = vsel %vm680, %v397, %v698
      %700 = vst [vmem:[%s677 + $0x18] sm:$0xf] %v699
      %701 = vst.msk [vmem:[%s677 + $0x1c] sm:$0xf] %vm684, %v406
      %v702 = vld [vmem:[%s677 + $0x20] sm:$0x1]
      %v703 = vsel %vm687, %v407, %v702
      %704 = vst [vmem:[%s677 + $0x20] sm:$0x1] %v703
      %v705 = vld [vmem:[%s677 + $0x24] sm:$0xf]
      %v706 = vsel %vm680, %v414, %v705
      %707 = vst [vmem:[%s677 + $0x24] sm:$0xf] %v706
      %708 = vst.msk [vmem:[%s677 + $0x28] sm:$0xf] %vm684, %v423
      %v709 = vld [vmem:[%s677 + $0x2c] sm:$0x1]
      %v710 = vsel %vm687, %v424, %v709
      %711 = vst [vmem:[%s677 + $0x2c] sm:$0x1] %v710
      %v712 = vld [vmem:[%s677 + $0x30] sm:$0xf]
      %v713 = vsel %vm680, %v431, %v712
      %714 = vst [vmem:[%s677 + $0x30] sm:$0xf] %v713
      %715 = vst.msk [vmem:[%s677 + $0x34] sm:$0xf] %vm684, %v440
      %v716 = vld [vmem:[%s677 + $0x38] sm:$0x1]
      %v717 = vsel %vm687, %v441, %v716
      %718 = vst [vmem:[%s677 + $0x38] sm:$0x1] %v717
      %v719 = vld [vmem:[%s677 + $0x3c] sm:$0xf]
      %v720 = vsel %vm680, %v448, %v719
      %721 = vst [vmem:[%s677 + $0x3c] sm:$0xf] %v720
      %722 = vst.msk [vmem:[%s677 + $0x40] sm:$0xf] %vm684, %v457
      %v723 = vld [vmem:[%s677 + $0x44] sm:$0x1]
      %v724 = vsel %vm687, %v458, %v723
      %725 = vst [vmem:[%s677 + $0x44] sm:$0x1] %v724
      %v726 = vld [vmem:[%s677 + $0x48] sm:$0xf]
      %v727 = vsel %vm680, %v465, %v726
      %728 = vst [vmem:[%s677 + $0x48] sm:$0xf] %v727
      %729 = vst.msk [vmem:[%s677 + $0x4c] sm:$0xf] %vm684, %v474
      %v730 = vld [vmem:[%s677 + $0x50] sm:$0x1]
      %v731 = vsel %vm687, %v475, %v730
      %732 = vst [vmem:[%s677 + $0x50] sm:$0x1] %v731
      %v733 = vld [vmem:[%s677 + $0x54] sm:$0xf]
      %v734 = vsel %vm680, %v482, %v733
      %735 = vst [vmem:[%s677 + $0x54] sm:$0xf] %v734
      %736 = vst.msk [vmem:[%s677 + $0x58] sm:$0xf] %vm684, %v491
      %v737 = vld [vmem:[%s677 + $0x5c] sm:$0x1]
      %v738 = vsel %vm687, %v492, %v737
      %739 = vst [vmem:[%s677 + $0x5c] sm:$0x1] %v738
      %v740 = vld [vmem:[%s677 + $0x60] sm:$0xf]
      %v741 = vsel %vm680, %v499, %v740
      %742 = vst [vmem:[%s677 + $0x60] sm:$0xf] %v741
      %743 = vst.msk [vmem:[%s677 + $0x64] sm:$0xf] %vm684, %v508
      %v744 = vld [vmem:[%s677 + $0x68] sm:$0x1]
      %v745 = vsel %vm687, %v509, %v744
      %746 = vst [vmem:[%s677 + $0x68] sm:$0x1] %v745
      %v747 = vld [vmem:[%s677 + $0x6c] sm:$0xf]
      %v748 = vsel %vm680, %v516, %v747
      %749 = vst [vmem:[%s677 + $0x6c] sm:$0xf] %v748
      %750 = vst.msk [vmem:[%s677 + $0x70] sm:$0xf] %vm684, %v525
      %v751 = vld [vmem:[%s677 + $0x74] sm:$0x1]
      %v752 = vsel %vm687, %v526, %v751
      %753 = vst [vmem:[%s677 + $0x74] sm:$0x1] %v752
      %v754 = vld [vmem:[%s677 + $0x78] sm:$0xf]
      %v755 = vsel %vm680, %v533, %v754
      %756 = vst [vmem:[%s677 + $0x78] sm:$0xf] %v755
      %757 = vst.msk [vmem:[%s677 + $0x7c] sm:$0xf] %vm684, %v542
      %v758 = vld [vmem:[%s677 + $0x80] sm:$0x1]
      %v759 = vsel %vm687, %v543, %v758
      %760 = vst [vmem:[%s677 + $0x80] sm:$0x1] %v759
      %v761 = vld [vmem:[%s677 + $0x84] sm:$0xf]
      %v762 = vsel %vm680, %v550, %v761
      %763 = vst [vmem:[%s677 + $0x84] sm:$0xf] %v762
      %764 = vst.msk [vmem:[%s677 + $0x88] sm:$0xf] %vm684, %v559
      %v765 = vld [vmem:[%s677 + $0x8c] sm:$0x1]
      %v766 = vsel %vm687, %v560, %v765
      %767 = vst [vmem:[%s677 + $0x8c] sm:$0x1] %v766
      %v768 = vld [vmem:[%s677 + $0x90] sm:$0xf]
      %v769 = vsel %vm680, %v567, %v768
      %770 = vst [vmem:[%s677 + $0x90] sm:$0xf] %v769
      %771 = vst.msk [vmem:[%s677 + $0x94] sm:$0xf] %vm684, %v576
      %v772 = vld [vmem:[%s677 + $0x98] sm:$0x1]
      %v773 = vsel %vm687, %v577, %v772
      %774 = vst [vmem:[%s677 + $0x98] sm:$0x1] %v773
      %v775 = vld [vmem:[%s677 + $0x9c] sm:$0xf]
      %v776 = vsel %vm680, %v584, %v775
      %777 = vst [vmem:[%s677 + $0x9c] sm:$0xf] %v776
      %778 = vst.msk [vmem:[%s677 + $0xa0] sm:$0xf] %vm684, %v593
      %v779 = vld [vmem:[%s677 + $0xa4] sm:$0x1]
      %v780 = vsel %vm687, %v594, %v779
      %781 = vst [vmem:[%s677 + $0xa4] sm:$0x1] %v780
      %v782 = vld [vmem:[%s677 + $0xa8] sm:$0xf]
      %v783 = vsel %vm680, %v601, %v782
      %784 = vst [vmem:[%s677 + $0xa8] sm:$0xf] %v783
      %785 = vst.msk [vmem:[%s677 + $0xac] sm:$0xf] %vm684, %v610
      %v786 = vld [vmem:[%s677 + $0xb0] sm:$0x1]
      %v787 = vsel %vm687, %v611, %v786
      %788 = vst [vmem:[%s677 + $0xb0] sm:$0x1] %v787
      %v789 = vld [vmem:[%s677 + $0xb4] sm:$0xf]
      %v790 = vsel %vm680, %v618, %v789
      %791 = vst [vmem:[%s677 + $0xb4] sm:$0xf] %v790
      %792 = vst.msk [vmem:[%s677 + $0xb8] sm:$0xf] %vm684, %v627
      %v793 = vld [vmem:[%s677 + $0xbc] sm:$0x1]
      %v794 = vsel %vm687, %v628, %v793
      %795 = vst [vmem:[%s677 + $0xbc] sm:$0x1] %v794
      %s796 = scalar_lea.vmem [#allocation2], 24
      %v797 = vld [vmem:[%s796] sm:$0xf]
      %v798 = vld [vmem:[%s796 + $0x4] sm:$0xf]
      %v799 = vld [vmem:[%s796 + $0x8] sm:$0x1]
      %v800 = vld [vmem:[#allocation2] sm:$0xf]
      %v801 = vsel %vm680, %v797, %v800
      %802 = vst [vmem:[#allocation2] sm:$0xf] %v801
      %803 = vst.msk [vmem:[#allocation2 + $0x4] sm:$0xf] %vm684, %v798
      %v804 = vld [vmem:[#allocation2 + $0x8] sm:$0x1]
      %v805 = vsel %vm687, %v799, %v804
      %806 = vst [vmem:[#allocation2 + $0x8] sm:$0x1] %v805
      %s807 = scalar_lea.vmem [#allocation2], 180
      %v808 = vld [vmem:[%s807] sm:$0xf]
      %v809 = vld [vmem:[%s807 + $0x4] sm:$0xf]
      %v810 = vld [vmem:[%s807 + $0x8] sm:$0x1]
      %s811 = scalar_lea.vmem [#allocation2], 204
      %v812 = vld [vmem:[%s811] sm:$0xf]
      %v813 = vsel %vm680, %v808, %v812
      %814 = vst [vmem:[%s811] sm:$0xf] %v813
      %815 = vst.msk [vmem:[%s811 + $0x4] sm:$0xf] %vm684, %v809
      %v816 = vld [vmem:[%s811 + $0x8] sm:$0x1]
      %v817 = vsel %vm687, %v810, %v816
      %818 = vst [vmem:[%s811 + $0x8] sm:$0x1] %v817
      %v819 = vld [vmem:[#allocation2] sm:$0x2]
      %v820 = vld [vmem:[#allocation2 + $0xc] sm:$0x2]
      %v821 = vld [vmem:[#allocation2 + $0x18] sm:$0x2]
      %v822 = vld [vmem:[#allocation2 + $0x24] sm:$0x2]
      %v823 = vld [vmem:[#allocation2 + $0x30] sm:$0x2]
      %v824 = vld [vmem:[#allocation2 + $0x3c] sm:$0x2]
      %v825 = vld [vmem:[#allocation2 + $0x48] sm:$0x2]
      %v826 = vld [vmem:[#allocation2 + $0x54] sm:$0x2]
      %v827 = vld [vmem:[#allocation2 + $0x60] sm:$0x2]
      %v828 = vld [vmem:[#allocation2 + $0x6c] sm:$0x2]
      %v829 = vld [vmem:[#allocation2 + $0x78] sm:$0x2]
      %v830 = vld [vmem:[#allocation2 + $0x84] sm:$0x2]
      %v831 = vld [vmem:[#allocation2 + $0x90] sm:$0x2]
      %v832 = vld [vmem:[#allocation2 + $0x9c] sm:$0x2]
      %v833 = vld [vmem:[#allocation2 + $0xa8] sm:$0x2]
      %v834 = vld [vmem:[#allocation2 + $0xb4] sm:$0x2]
      %v835 = vld [vmem:[#allocation2 + $0xc0] sm:$0x2]
      %v836 = vld [vmem:[#allocation2 + $0xcc] sm:$0x2]
      %v855 = vrot.slane %v819, 5
      %v856 = vrot.slane %v855, 4
      %v857 = vrot.slane %v820, 5
      %v858 = vrot.slane %v857, 4
      %v859 = vrot.slane %v821, 5
      %v860 = vrot.slane %v859, 4
      %v861 = vrot.slane %v822, 5
      %v862 = vrot.slane %v861, 4
      %v863 = vrot.slane %v823, 5
      %v864 = vrot.slane %v863, 4
      %v865 = vrot.slane %v824, 5
      %v866 = vrot.slane %v865, 4
      %v867 = vrot.slane %v825, 5
      %v868 = vrot.slane %v867, 4
      %v869 = vrot.slane %v826, 5
      %v870 = vrot.slane %v869, 4
      %v871 = vrot.slane %v827, 5
      %v872 = vrot.slane %v871, 4
      %v873 = vrot.slane %v828, 5
      %v874 = vrot.slane %v873, 4
      %v875 = vrot.slane %v829, 5
      %v876 = vrot.slane %v875, 4
      %v877 = vrot.slane %v830, 5
      %v878 = vrot.slane %v877, 4
      %v879 = vrot.slane %v831, 5
      %v880 = vrot.slane %v879, 4
      %v881 = vrot.slane %v832, 5
      %v882 = vrot.slane %v881, 4
      %v883 = vrot.slane %v833, 5
      %v884 = vrot.slane %v883, 4
      %v885 = vrot.slane %v834, 5
      %v886 = vrot.slane %v885, 4
      %v887 = vrot.slane %v835, 5
      %v888 = vrot.slane %v887, 4
      %v889 = vrot.slane %v836, 5
      %v890 = vrot.slane %v889, 4
      %v909 = vld [vmem:[#allocation2] sm:$0x1]
      %v910 = vsel %vm687, %v856, %v909
      %911 = vst [vmem:[#allocation2] sm:$0x1] %v910
      %v912 = vld [vmem:[#allocation2 + $0xc] sm:$0x1]
      %v913 = vsel %vm687, %v858, %v912
      %914 = vst [vmem:[#allocation2 + $0xc] sm:$0x1] %v913
      %v915 = vld [vmem:[#allocation2 + $0x18] sm:$0x1]
      %v916 = vsel %vm687, %v860, %v915
      %917 = vst [vmem:[#allocation2 + $0x18] sm:$0x1] %v916
      %v918 = vld [vmem:[#allocation2 + $0x24] sm:$0x1]
      %v919 = vsel %vm687, %v862, %v918
      %920 = vst [vmem:[#allocation2 + $0x24] sm:$0x1] %v919
      %v921 = vld [vmem:[#allocation2 + $0x30] sm:$0x1]
      %v922 = vsel %vm687, %v864, %v921
      %923 = vst [vmem:[#allocation2 + $0x30] sm:$0x1] %v922
      %v924 = vld [vmem:[#allocation2 + $0x3c] sm:$0x1]
      %v925 = vsel %vm687, %v866, %v924
      %926 = vst [vmem:[#allocation2 + $0x3c] sm:$0x1] %v925
      %v927 = vld [vmem:[#allocation2 + $0x48] sm:$0x1]
      %v928 = vsel %vm687, %v868, %v927
      %929 = vst [vmem:[#allocation2 + $0x48] sm:$0x1] %v928
      %v930 = vld [vmem:[#allocation2 + $0x54] sm:$0x1]
      %v931 = vsel %vm687, %v870, %v930
      %932 = vst [vmem:[#allocation2 + $0x54] sm:$0x1] %v931
      %v933 = vld [vmem:[#allocation2 + $0x60] sm:$0x1]
      %v934 = vsel %vm687, %v872, %v933
      %935 = vst [vmem:[#allocation2 + $0x60] sm:$0x1] %v934
      %v936 = vld [vmem:[#allocation2 + $0x6c] sm:$0x1]
      %v937 = vsel %vm687, %v874, %v936
      %938 = vst [vmem:[#allocation2 + $0x6c] sm:$0x1] %v937
      %v939 = vld [vmem:[#allocation2 + $0x78] sm:$0x1]
      %v940 = vsel %vm687, %v876, %v939
      %941 = vst [vmem:[#allocation2 + $0x78] sm:$0x1] %v940
      %v942 = vld [vmem:[#allocation2 + $0x84] sm:$0x1]
      %v943 = vsel %vm687, %v878, %v942
      %944 = vst [vmem:[#allocation2 + $0x84] sm:$0x1] %v943
      %v945 = vld [vmem:[#allocation2 + $0x90] sm:$0x1]
      %v946 = vsel %vm687, %v880, %v945
      %947 = vst [vmem:[#allocation2 + $0x90] sm:$0x1] %v946
      %v948 = vld [vmem:[#allocation2 + $0x9c] sm:$0x1]
      %v949 = vsel %vm687, %v882, %v948
      %950 = vst [vmem:[#allocation2 + $0x9c] sm:$0x1] %v949
      %v951 = vld [vmem:[#allocation2 + $0xa8] sm:$0x1]
      %v952 = vsel %vm687, %v884, %v951
      %953 = vst [vmem:[#allocation2 + $0xa8] sm:$0x1] %v952
      %v954 = vld [vmem:[#allocation2 + $0xb4] sm:$0x1]
      %v955 = vsel %vm687, %v886, %v954
      %956 = vst [vmem:[#allocation2 + $0xb4] sm:$0x1] %v955
      %v957 = vld [vmem:[#allocation2 + $0xc0] sm:$0x1]
      %v958 = vsel %vm687, %v888, %v957
      %959 = vst [vmem:[#allocation2 + $0xc0] sm:$0x1] %v958
      %v960 = vld [vmem:[#allocation2 + $0xcc] sm:$0x1]
      %v961 = vsel %vm687, %v890, %v960
      %962 = vst [vmem:[#allocation2 + $0xcc] sm:$0x1] %v961
      %v963 = vld [vmem:[#allocation2 + $0x4] sm:$0x8]
      %v964 = vld [vmem:[#allocation2 + $0x10] sm:$0x8]
      %v965 = vld [vmem:[#allocation2 + $0x1c] sm:$0x8]
      %v966 = vld [vmem:[#allocation2 + $0x28] sm:$0x8]
      %v967 = vld [vmem:[#allocation2 + $0x34] sm:$0x8]
      %v968 = vld [vmem:[#allocation2 + $0x40] sm:$0x8]
      %v969 = vld [vmem:[#allocation2 + $0x4c] sm:$0x8]
      %v970 = vld [vmem:[#allocation2 + $0x58] sm:$0x8]
      %v971 = vld [vmem:[#allocation2 + $0x64] sm:$0x8]
      %v972 = vld [vmem:[#allocation2 + $0x70] sm:$0x8]
      %v973 = vld [vmem:[#allocation2 + $0x7c] sm:$0x8]
      %v974 = vld [vmem:[#allocation2 + $0x88] sm:$0x8]
      %v975 = vld [vmem:[#allocation2 + $0x94] sm:$0x8]
      %v976 = vld [vmem:[#allocation2 + $0xa0] sm:$0x8]
      %v977 = vld [vmem:[#allocation2 + $0xac] sm:$0x8]
      %v978 = vld [vmem:[#allocation2 + $0xb8] sm:$0x8]
      %v979 = vld [vmem:[#allocation2 + $0xc4] sm:$0x8]
      %v980 = vld [vmem:[#allocation2 + $0xd0] sm:$0x8]
      %v999 = vrot.slane %v963, 7
      %v1000 = vrot.slane %v999, 4
      %v1001 = vrot.slane %v964, 7
      %v1002 = vrot.slane %v1001, 4
      %v1003 = vrot.slane %v965, 7
      %v1004 = vrot.slane %v1003, 4
      %v1005 = vrot.slane %v966, 7
      %v1006 = vrot.slane %v1005, 4
      %v1007 = vrot.slane %v967, 7
      %v1008 = vrot.slane %v1007, 4
      %v1009 = vrot.slane %v968, 7
      %v1010 = vrot.slane %v1009, 4
      %v1011 = vrot.slane %v969, 7
      %v1012 = vrot.slane %v1011, 4
      %v1013 = vrot.slane %v970, 7
      %v1014 = vrot.slane %v1013, 4
      %v1015 = vrot.slane %v971, 7
      %v1016 = vrot.slane %v1015, 4
      %v1017 = vrot.slane %v972, 7
      %v1018 = vrot.slane %v1017, 4
      %v1019 = vrot.slane %v973, 7
      %v1020 = vrot.slane %v1019, 4
      %v1021 = vrot.slane %v974, 7
      %v1022 = vrot.slane %v1021, 4
      %v1023 = vrot.slane %v975, 7
      %v1024 = vrot.slane %v1023, 4
      %v1025 = vrot.slane %v976, 7
      %v1026 = vrot.slane %v1025, 4
      %v1027 = vrot.slane %v977, 7
      %v1028 = vrot.slane %v1027, 4
      %v1029 = vrot.slane %v978, 7
      %v1030 = vrot.slane %v1029, 4
      %v1031 = vrot.slane %v979, 7
      %v1032 = vrot.slane %v1031, 4
      %v1033 = vrot.slane %v980, 7
      %v1034 = vrot.slane %v1033, 4
      %vm1053 = vmand %vm686, %vm679
      %v1054 = vld [vmem:[#allocation2 + $0x8] sm:$0x1]
      %v1055 = vsel %vm1053, %v1000, %v1054
      %1056 = vst [vmem:[#allocation2 + $0x8] sm:$0x1] %v1055
      %v1057 = vld [vmem:[#allocation2 + $0x14] sm:$0x1]
      %v1058 = vsel %vm1053, %v1002, %v1057
      %1059 = vst [vmem:[#allocation2 + $0x14] sm:$0x1] %v1058
      %v1060 = vld [vmem:[#allocation2 + $0x20] sm:$0x1]
      %v1061 = vsel %vm1053, %v1004, %v1060
      %1062 = vst [vmem:[#allocation2 + $0x20] sm:$0x1] %v1061
      %v1063 = vld [vmem:[#allocation2 + $0x2c] sm:$0x1]
      %v1064 = vsel %vm1053, %v1006, %v1063
      %1065 = vst [vmem:[#allocation2 + $0x2c] sm:$0x1] %v1064
      %v1066 = vld [vmem:[#allocation2 + $0x38] sm:$0x1]
      %v1067 = vsel %vm1053, %v1008, %v1066
      %1068 = vst [vmem:[#allocation2 + $0x38] sm:$0x1] %v1067
      %v1069 = vld [vmem:[#allocation2 + $0x44] sm:$0x1]
      %v1070 = vsel %vm1053, %v1010, %v1069
      %1071 = vst [vmem:[#allocation2 + $0x44] sm:$0x1] %v1070
      %v1072 = vld [vmem:[#allocation2 + $0x50] sm:$0x1]
      %v1073 = vsel %vm1053, %v1012, %v1072
      %1074 = vst [vmem:[#allocation2 + $0x50] sm:$0x1] %v1073
      %v1075 = vld [vmem:[#allocation2 + $0x5c] sm:$0x1]
      %v1076 = vsel %vm1053, %v1014, %v1075
      %1077 = vst [vmem:[#allocation2 + $0x5c] sm:$0x1] %v1076
      %v1078 = vld [vmem:[#allocation2 + $0x68] sm:$0x1]
      %v1079 = vsel %vm1053, %v1016, %v1078
      %1080 = vst [vmem:[#allocation2 + $0x68] sm:$0x1] %v1079
      %v1081 = vld [vmem:[#allocation2 + $0x74] sm:$0x1]
      %v1082 = vsel %vm1053, %v1018, %v1081
      %1083 = vst [vmem:[#allocation2 + $0x74] sm:$0x1] %v1082
      %v1084 = vld [vmem:[#allocation2 + $0x80] sm:$0x1]
      %v1085 = vsel %vm1053, %v1020, %v1084
      %1086 = vst [vmem:[#allocation2 + $0x80] sm:$0x1] %v1085
      %v1087 = vld [vmem:[#allocation2 + $0x8c] sm:$0x1]
      %v1088 = vsel %vm1053, %v1022, %v1087
      %1089 = vst [vmem:[#allocation2 + $0x8c] sm:$0x1] %v1088
      %v1090 = vld [vmem:[#allocation2 + $0x98] sm:$0x1]
      %v1091 = vsel %vm1053, %v1024, %v1090
      %1092 = vst [vmem:[#allocation2 + $0x98] sm:$0x1] %v1091
      %v1093 = vld [vmem:[#allocation2 + $0xa4] sm:$0x1]
      %v1094 = vsel %vm1053, %v1026, %v1093
      %1095 = vst [vmem:[#allocation2 + $0xa4] sm:$0x1] %v1094
      %v1096 = vld [vmem:[#allocation2 + $0xb0] sm:$0x1]
      %v1097 = vsel %vm1053, %v1028, %v1096
      %1098 = vst [vmem:[#allocation2 + $0xb0] sm:$0x1] %v1097
      %v1099 = vld [vmem:[#allocation2 + $0xbc] sm:$0x1]
      %v1100 = vsel %vm1053, %v1030, %v1099
      %1101 = vst [vmem:[#allocation2 + $0xbc] sm:$0x1] %v1100
      %v1102 = vld [vmem:[#allocation2 + $0xc8] sm:$0x1]
      %v1103 = vsel %vm1053, %v1032, %v1102
      %1104 = vst [vmem:[#allocation2 + $0xc8] sm:$0x1] %v1103
      %v1105 = vld [vmem:[#allocation2 + $0xd4] sm:$0x1]
      %v1106 = vsel %vm1053, %v1034, %v1105
      %1107 = vst [vmem:[#allocation2 + $0xd4] sm:$0x1] %v1106
      %v1108 = vld [vmem:[#allocation2] sm:$0xf]
      %v1109 = vld [vmem:[#allocation2 + $0x4] sm:$0xf]
      %v1110 = vld [vmem:[#allocation2 + $0xc] sm:$0xf]
      %v1111 = vld [vmem:[#allocation2 + $0x10] sm:$0xf]
      %v1112 = vld [vmem:[#allocation2 + $0x18] sm:$0xf]
      %v1113 = vld [vmem:[#allocation2 + $0x1c] sm:$0xf]
      %v1114 = vld [vmem:[#allocation2 + $0x24] sm:$0xf]
      %v1115 = vld [vmem:[#allocation2 + $0x28] sm:$0xf]
      %v1116 = vld [vmem:[#allocation2 + $0x30] sm:$0xf]
      %v1117 = vld [vmem:[#allocation2 + $0x34] sm:$0xf]
      %v1118 = vld [vmem:[#allocation2 + $0x3c] sm:$0xf]
      %v1119 = vld [vmem:[#allocation2 + $0x40] sm:$0xf]
      %v1120 = vld [vmem:[#allocation2 + $0x48] sm:$0xf]
      %v1121 = vld [vmem:[#allocation2 + $0x4c] sm:$0xf]
      %v1122 = vld [vmem:[#allocation2 + $0x54] sm:$0xf]
      %v1123 = vld [vmem:[#allocation2 + $0x58] sm:$0xf]
      %v1124 = vld [vmem:[#allocation2 + $0x60] sm:$0xf]
      %v1125 = vld [vmem:[#allocation2 + $0x64] sm:$0xf]
      %v1126 = vld [vmem:[#allocation2 + $0x6c] sm:$0xf]
      %v1127 = vld [vmem:[#allocation2 + $0x70] sm:$0xf]
      %v1128 = vld [vmem:[#allocation2 + $0x78] sm:$0xf]
      %v1129 = vld [vmem:[#allocation2 + $0x7c] sm:$0xf]
      %v1130 = vld [vmem:[#allocation2 + $0x84] sm:$0xf]
      %v1131 = vld [vmem:[#allocation2 + $0x88] sm:$0xf]
      %v1132 = vld [vmem:[#allocation2 + $0x90] sm:$0xf]
      %v1133 = vld [vmem:[#allocation2 + $0x94] sm:$0xf]
      %v1134 = vld [vmem:[#allocation2 + $0x9c] sm:$0xf]
      %v1135 = vld [vmem:[#allocation2 + $0xa0] sm:$0xf]
      %v1136 = vld [vmem:[#allocation2 + $0xa8] sm:$0xf]
      %v1137 = vld [vmem:[#allocation2 + $0xac] sm:$0xf]
      %v1138 = vld [vmem:[#allocation2 + $0xb4] sm:$0xf]
      %v1139 = vld [vmem:[#allocation2 + $0xb8] sm:$0xf]
      %v1140 = vld [vmem:[%s1] sm:$0x3]
      %v1141 = vld [vmem:[#allocation2 + $0x8] sm:$0x1]
      %v1142 = vld [vmem:[#allocation2 + $0x14] sm:$0x1]
      %v1143 = vld [vmem:[#allocation2 + $0x20] sm:$0x1]
      %v1144 = vld [vmem:[#allocation2 + $0x2c] sm:$0x1]
      %v1145 = vld [vmem:[#allocation2 + $0x38] sm:$0x1]
      %v1146 = vld [vmem:[#allocation2 + $0x44] sm:$0x1]
      %v1147 = vld [vmem:[#allocation2 + $0x50] sm:$0x1]
      %v1148 = vld [vmem:[#allocation2 + $0x5c] sm:$0x1]
      %v1149 = vld [vmem:[#allocation2 + $0x68] sm:$0x1]
      %v1150 = vld [vmem:[#allocation2 + $0x74] sm:$0x1]
      %v1151 = vld [vmem:[#allocation2 + $0x80] sm:$0x1]
      %v1152 = vld [vmem:[#allocation2 + $0x8c] sm:$0x1]
      %v1153 = vld [vmem:[#allocation2 + $0x98] sm:$0x1]
      %v1154 = vld [vmem:[#allocation2 + $0xa4] sm:$0x1]
      %v1155 = vld [vmem:[#allocation2 + $0xb0] sm:$0x1]
      %v1156 = vld [vmem:[#allocation2 + $0xbc] sm:$0x1]
      %vm1157 = vsmask.f32 3328
      %vm1158 = vsmask.f32 7440
      %vm1159 = vmor %vm1157, %vm1158
      %v1161 = vshrl.u32 %v1108, 16
      %v1163 = vrot.slane %v1161, 4
      %v1164 = vshll.u32 %v1108, 16
      %v1166 = vrot.slane %v1164, 5
      %v1167 = vor.u32 %v1163, %v1166
      %v1168 = vrot.slane %v1167, 4
      %v1170 = vshll.u32 %v1109, 16
      %v1172 = vrot.slane %v1170, 5
      %v1173 = vsel %vm1159, %v1168, %v1172
      %v1174 = vshrl.u32 %v1109, 16
      %v1176 = vrot.slane %v1174, 4
      %v1177 = vor.u32 %v1176, %v1172
      %v1178 = vrot.slane %v1177, 4
      %v1180 = vshll.u32 %v1141, 16
      %v1182 = vrot.slane %v1180, 5
      %v1183 = vsel %vm1159, %v1178, %v1182
      %v1185 = vshrl.u32 %v1110, 16
      %v1187 = vrot.slane %v1185, 4
      %v1188 = vshll.u32 %v1110, 16
      %v1190 = vrot.slane %v1188, 5
      %v1191 = vor.u32 %v1187, %v1190
      %v1192 = vrot.slane %v1191, 4
      %v1194 = vshll.u32 %v1111, 16
      %v1196 = vrot.slane %v1194, 5
      %v1197 = vsel %vm1159, %v1192, %v1196
      %v1198 = vshrl.u32 %v1111, 16
      %v1200 = vrot.slane %v1198, 4
      %v1201 = vor.u32 %v1200, %v1196
      %v1202 = vrot.slane %v1201, 4
      %v1204 = vshll.u32 %v1142, 16
      %v1206 = vrot.slane %v1204, 5
      %v1207 = vsel %vm1159, %v1202, %v1206
      %v1209 = vshrl.u32 %v1112, 16
      %v1211 = vrot.slane %v1209, 4
      %v1212 = vshll.u32 %v1112, 16
      %v1214 = vrot.slane %v1212, 5
      %v1215 = vor.u32 %v1211, %v1214
      %v1216 = vrot.slane %v1215, 4
      %v1218 = vshll.u32 %v1113, 16
      %v1220 = vrot.slane %v1218, 5
      %v1221 = vsel %vm1159, %v1216, %v1220
      %v1222 = vshrl.u32 %v1113, 16
      %v1224 = vrot.slane %v1222, 4
      %v1225 = vor.u32 %v1224, %v1220
      %v1226 = vrot.slane %v1225, 4
      %v1228 = vshll.u32 %v1143, 16
      %v1230 = vrot.slane %v1228, 5
      %v1231 = vsel %vm1159, %v1226, %v1230
      %v1233 = vshrl.u32 %v1114, 16
      %v1235 = vrot.slane %v1233, 4
      %v1236 = vshll.u32 %v1114, 16
      %v1238 = vrot.slane %v1236, 5
      %v1239 = vor.u32 %v1235, %v1238
      %v1240 = vrot.slane %v1239, 4
      %v1242 = vshll.u32 %v1115, 16
      %v1244 = vrot.slane %v1242, 5
      %v1245 = vsel %vm1159, %v1240, %v1244
      %v1246 = vshrl.u32 %v1115, 16
      %v1248 = vrot.slane %v1246, 4
      %v1249 = vor.u32 %v1248, %v1244
      %v1250 = vrot.slane %v1249, 4
      %v1252 = vshll.u32 %v1144, 16
      %v1254 = vrot.slane %v1252, 5
      %v1255 = vsel %vm1159, %v1250, %v1254
      %v1257 = vshrl.u32 %v1116, 16
      %v1259 = vrot.slane %v1257, 4
      %v1260 = vshll.u32 %v1116, 16
      %v1262 = vrot.slane %v1260, 5
      %v1263 = vor.u32 %v1259, %v1262
      %v1264 = vrot.slane %v1263, 4
      %v1266 = vshll.u32 %v1117, 16
      %v1268 = vrot.slane %v1266, 5
      %v1269 = vsel %vm1159, %v1264, %v1268
      %v1270 = vshrl.u32 %v1117, 16
      %v1272 = vrot.slane %v1270, 4
      %v1273 = vor.u32 %v1272, %v1268
      %v1274 = vrot.slane %v1273, 4
      %v1276 = vshll.u32 %v1145, 16
      %v1278 = vrot.slane %v1276, 5
      %v1279 = vsel %vm1159, %v1274, %v1278
      %v1281 = vshrl.u32 %v1118, 16
      %v1283 = vrot.slane %v1281, 4
      %v1284 = vshll.u32 %v1118, 16
      %v1286 = vrot.slane %v1284, 5
      %v1287 = vor.u32 %v1283, %v1286
      %v1288 = vrot.slane %v1287, 4
      %v1290 = vshll.u32 %v1119, 16
      %v1292 = vrot.slane %v1290, 5
      %v1293 = vsel %vm1159, %v1288, %v1292
      %v1294 = vshrl.u32 %v1119, 16
      %v1296 = vrot.slane %v1294, 4
      %v1297 = vor.u32 %v1296, %v1292
      %v1298 = vrot.slane %v1297, 4
      %v1300 = vshll.u32 %v1146, 16
      %v1302 = vrot.slane %v1300, 5
      %v1303 = vsel %vm1159, %v1298, %v1302
      %v1305 = vshrl.u32 %v1120, 16
      %v1307 = vrot.slane %v1305, 4
      %v1308 = vshll.u32 %v1120, 16
      %v1310 = vrot.slane %v1308, 5
      %v1311 = vor.u32 %v1307, %v1310
      %v1312 = vrot.slane %v1311, 4
      %v1314 = vshll.u32 %v1121, 16
      %v1316 = vrot.slane %v1314, 5
      %v1317 = vsel %vm1159, %v1312, %v1316
      %v1318 = vshrl.u32 %v1121, 16
      %v1320 = vrot.slane %v1318, 4
      %v1321 = vor.u32 %v1320, %v1316
      %v1322 = vrot.slane %v1321, 4
      %v1324 = vshll.u32 %v1147, 16
      %v1326 = vrot.slane %v1324, 5
      %v1327 = vsel %vm1159, %v1322, %v1326
      %v1329 = vshrl.u32 %v1122, 16
      %v1331 = vrot.slane %v1329, 4
      %v1332 = vshll.u32 %v1122, 16
      %v1334 = vrot.slane %v1332, 5
      %v1335 = vor.u32 %v1331, %v1334
      %v1336 = vrot.slane %v1335, 4
      %v1338 = vshll.u32 %v1123, 16
      %v1340 = vrot.slane %v1338, 5
      %v1341 = vsel %vm1159, %v1336, %v1340
      %v1342 = vshrl.u32 %v1123, 16
      %v1344 = vrot.slane %v1342, 4
      %v1345 = vor.u32 %v1344, %v1340
      %v1346 = vrot.slane %v1345, 4
      %v1348 = vshll.u32 %v1148, 16
      %v1350 = vrot.slane %v1348, 5
      %v1351 = vsel %vm1159, %v1346, %v1350
      %v1353 = vshrl.u32 %v1124, 16
      %v1355 = vrot.slane %v1353, 4
      %v1356 = vshll.u32 %v1124, 16
      %v1358 = vrot.slane %v1356, 5
      %v1359 = vor.u32 %v1355, %v1358
      %v1360 = vrot.slane %v1359, 4
      %v1362 = vshll.u32 %v1125, 16
      %v1364 = vrot.slane %v1362, 5
      %v1365 = vsel %vm1159, %v1360, %v1364
      %v1366 = vshrl.u32 %v1125, 16
      %v1368 = vrot.slane %v1366, 4
      %v1369 = vor.u32 %v1368, %v1364
      %v1370 = vrot.slane %v1369, 4
      %v1372 = vshll.u32 %v1149, 16
      %v1374 = vrot.slane %v1372, 5
      %v1375 = vsel %vm1159, %v1370, %v1374
      %v1377 = vshrl.u32 %v1126, 16
      %v1379 = vrot.slane %v1377, 4
      %v1380 = vshll.u32 %v1126, 16
      %v1382 = vrot.slane %v1380, 5
      %v1383 = vor.u32 %v1379, %v1382
      %v1384 = vrot.slane %v1383, 4
      %v1386 = vshll.u32 %v1127, 16
      %v1388 = vrot.slane %v1386, 5
      %v1389 = vsel %vm1159, %v1384, %v1388
      %v1390 = vshrl.u32 %v1127, 16
      %v1392 = vrot.slane %v1390, 4
      %v1393 = vor.u32 %v1392, %v1388
      %v1394 = vrot.slane %v1393, 4
      %v1396 = vshll.u32 %v1150, 16
      %v1398 = vrot.slane %v1396, 5
      %v1399 = vsel %vm1159, %v1394, %v1398
      %v1401 = vshrl.u32 %v1128, 16
      %v1403 = vrot.slane %v1401, 4
      %v1404 = vshll.u32 %v1128, 16
      %v1406 = vrot.slane %v1404, 5
      %v1407 = vor.u32 %v1403, %v1406
      %v1408 = vrot.slane %v1407, 4
      %v1410 = vshll.u32 %v1129, 16
      %v1412 = vrot.slane %v1410, 5
      %v1413 = vsel %vm1159, %v1408, %v1412
      %v1414 = vshrl.u32 %v1129, 16
      %v1416 = vrot.slane %v1414, 4
      %v1417 = vor.u32 %v1416, %v1412
      %v1418 = vrot.slane %v1417, 4
      %v1420 = vshll.u32 %v1151, 16
      %v1422 = vrot.slane %v1420, 5
      %v1423 = vsel %vm1159, %v1418, %v1422
      %v1425 = vshrl.u32 %v1130, 16
      %v1427 = vrot.slane %v1425, 4
      %v1428 = vshll.u32 %v1130, 16
      %v1430 = vrot.slane %v1428, 5
      %v1431 = vor.u32 %v1427, %v1430
      %v1432 = vrot.slane %v1431, 4
      %v1434 = vshll.u32 %v1131, 16
      %v1436 = vrot.slane %v1434, 5
      %v1437 = vsel %vm1159, %v1432, %v1436
      %v1438 = vshrl.u32 %v1131, 16
      %v1440 = vrot.slane %v1438, 4
      %v1441 = vor.u32 %v1440, %v1436
      %v1442 = vrot.slane %v1441, 4
      %v1444 = vshll.u32 %v1152, 16
      %v1446 = vrot.slane %v1444, 5
      %v1447 = vsel %vm1159, %v1442, %v1446
      %v1449 = vshrl.u32 %v1132, 16
      %v1451 = vrot.slane %v1449, 4
      %v1452 = vshll.u32 %v1132, 16
      %v1454 = vrot.slane %v1452, 5
      %v1455 = vor.u32 %v1451, %v1454
      %v1456 = vrot.slane %v1455, 4
      %v1458 = vshll.u32 %v1133, 16
      %v1460 = vrot.slane %v1458, 5
      %v1461 = vsel %vm1159, %v1456, %v1460
      %v1462 = vshrl.u32 %v1133, 16
      %v1464 = vrot.slane %v1462, 4
      %v1465 = vor.u32 %v1464, %v1460
      %v1466 = vrot.slane %v1465, 4
      %v1468 = vshll.u32 %v1153, 16
      %v1470 = vrot.slane %v1468, 5
      %v1471 = vsel %vm1159, %v1466, %v1470
      %v1473 = vshrl.u32 %v1134, 16
      %v1475 = vrot.slane %v1473, 4
      %v1476 = vshll.u32 %v1134, 16
      %v1478 = vrot.slane %v1476, 5
      %v1479 = vor.u32 %v1475, %v1478
      %v1480 = vrot.slane %v1479, 4
      %v1482 = vshll.u32 %v1135, 16
      %v1484 = vrot.slane %v1482, 5
      %v1485 = vsel %vm1159, %v1480, %v1484
      %v1486 = vshrl.u32 %v1135, 16
      %v1488 = vrot.slane %v1486, 4
      %v1489 = vor.u32 %v1488, %v1484
      %v1490 = vrot.slane %v1489, 4
      %v1492 = vshll.u32 %v1154, 16
      %v1494 = vrot.slane %v1492, 5
      %v1495 = vsel %vm1159, %v1490, %v1494
      %v1497 = vshrl.u32 %v1136, 16
      %v1499 = vrot.slane %v1497, 4
      %v1500 = vshll.u32 %v1136, 16
      %v1502 = vrot.slane %v1500, 5
      %v1503 = vor.u32 %v1499, %v1502
      %v1504 = vrot.slane %v1503, 4
      %v1506 = vshll.u32 %v1137, 16
      %v1508 = vrot.slane %v1506, 5
      %v1509 = vsel %vm1159, %v1504, %v1508
      %v1510 = vshrl.u32 %v1137, 16
      %v1512 = vrot.slane %v1510, 4
      %v1513 = vor.u32 %v1512, %v1508
      %v1514 = vrot.slane %v1513, 4
      %v1516 = vshll.u32 %v1155, 16
      %v1518 = vrot.slane %v1516, 5
      %v1519 = vsel %vm1159, %v1514, %v1518
      %v1521 = vshrl.u32 %v1138, 16
      %v1523 = vrot.slane %v1521, 4
      %v1524 = vshll.u32 %v1138, 16
      %v1526 = vrot.slane %v1524, 5
      %v1527 = vor.u32 %v1523, %v1526
      %v1528 = vrot.slane %v1527, 4
      %v1530 = vshll.u32 %v1139, 16
      %v1532 = vrot.slane %v1530, 5
      %v1533 = vsel %vm1159, %v1528, %v1532
      %v1534 = vshrl.u32 %v1139, 16
      %v1536 = vrot.slane %v1534, 4
      %v1537 = vor.u32 %v1536, %v1532
      %v1538 = vrot.slane %v1537, 4
      %v1540 = vshll.u32 %v1156, 16
      %v1542 = vrot.slane %v1540, 5
      %v1543 = vsel %vm1159, %v1538, %v1542
      %s1544 = scalar_lea.vmem %s1, 2
      %v1545 = vld [vmem:[%s1544] sm:$0x3]
      %v1546 = vunpack.c.l.b16 %v1173
      %v1547 = vunpack.c.l.b16 %v1183
      %v1548 = vunpack.c.l.b16 %v1197
      %v1549 = vunpack.c.l.b16 %v1207
      %v1550 = vunpack.c.l.b16 %v1221
      %v1551 = vunpack.c.l.b16 %v1231
      %v1552 = vunpack.c.l.b16 %v1245
      %v1553 = vunpack.c.l.b16 %v1255
      %v1554 = vunpack.c.l.b16 %v1269
      %v1555 = vunpack.c.l.b16 %v1279
      %v1556 = vunpack.c.l.b16 %v1293
      %v1557 = vunpack.c.l.b16 %v1303
      %v1558 = vunpack.c.l.b16 %v1317
      %v1559 = vunpack.c.l.b16 %v1327
      %v1560 = vunpack.c.l.b16 %v1341
      %v1561 = vunpack.c.l.b16 %v1351
      %v1562 = vunpack.c.l.b16 %v1365
      %v1563 = vunpack.c.l.b16 %v1375
      %v1564 = vunpack.c.l.b16 %v1389
      %v1565 = vunpack.c.l.b16 %v1399
      %v1566 = vunpack.c.l.b16 %v1413
      %v1567 = vunpack.c.l.b16 %v1423
      %v1568 = vunpack.c.l.b16 %v1437
      %v1569 = vunpack.c.l.b16 %v1447
      %v1570 = vunpack.c.l.b16 %v1461
      %v1571 = vunpack.c.l.b16 %v1471
      %v1572 = vunpack.c.l.b16 %v1485
      %v1573 = vunpack.c.l.b16 %v1495
      %v1574 = vunpack.c.l.b16 %v1509
      %v1575 = vunpack.c.l.b16 %v1519
      %v1576 = vunpack.c.l.b16 %v1533
      %v1577 = vunpack.c.l.b16 %v1543
      %v1578 = vpack.c.b16 %v1547, %v1546
      %v1579 = vpack.c.b16 %v1549, %v1548
      %v1580 = vpack.c.b16 %v1551, %v1550
      %v1581 = vpack.c.b16 %v1553, %v1552
      %v1582 = vpack.c.b16 %v1555, %v1554
      %v1583 = vpack.c.b16 %v1557, %v1556
      %v1584 = vpack.c.b16 %v1559, %v1558
      %v1585 = vpack.c.b16 %v1561, %v1560
      %v1586 = vpack.c.b16 %v1563, %v1562
      %v1587 = vpack.c.b16 %v1565, %v1564
      %v1588 = vpack.c.b16 %v1567, %v1566
      %v1589 = vpack.c.b16 %v1569, %v1568
      %v1590 = vpack.c.b16 %v1571, %v1570
      %v1591 = vpack.c.b16 %v1573, %v1572
      %v1592 = vpack.c.b16 %v1575, %v1574
      %v1593 = vpack.c.b16 %v1577, %v1576
      %vm1594 = vcmask 31744
      %v1596 = vsel %vm1594, %v1578, 0
      %v1599 = vsel %vm1594, %v1579, 0
      %v1602 = vsel %vm1594, %v1580, 0
      %v1605 = vsel %vm1594, %v1581, 0
      %v1608 = vsel %vm1594, %v1582, 0
      %v1611 = vsel %vm1594, %v1583, 0
      %v1614 = vsel %vm1594, %v1584, 0
      %v1617 = vsel %vm1594, %v1585, 0
      %v1620 = vsel %vm1594, %v1586, 0
      %v1623 = vsel %vm1594, %v1587, 0
      %v1626 = vsel %vm1594, %v1588, 0
      %v1629 = vsel %vm1594, %v1589, 0
      %v1632 = vsel %vm1594, %v1590, 0
      %v1635 = vsel %vm1594, %v1591, 0
      %v1638 = vsel %vm1594, %v1592, 0
      %v1641 = vsel %vm1594, %v1593, 0
      %vm1643 = vcmask 1041408
      %v1645 = vsel %vm1643, %v1545, 0
      %1647 = vmatprep.subr.bf16.mxu0 0
      %1648 = vmatpush1.bf16.msra.mxu0 0
      %1649 = vmatprep.subr.bf16.mxu0 0
      %1650 = vmatpush1.bf16.msra.mxu0 0
      %1651 = vmatprep.subr.bf16.mxu0 0
      %1652 = vmatpush1.bf16.msra.mxu0 0
      %1653 = vmatprep.subr.bf16.mxu0 0
      %1654 = vmatpush1.bf16.msra.mxu0 0
      %1655 = vmatprep.subr.bf16.mxu0 0
      %1656 = vmatpush1.bf16.msra.mxu0 0
      %1657 = vmatprep.subr.bf16.mxu0 0
      %1658 = vmatpush1.bf16.msra.mxu0 0
      %1659 = vmatprep.subr.bf16.mxu0 0
      %1660 = vmatpush1.bf16.msra.mxu0 0
      %1661 = vmatprep.subr.bf16.mxu0 0
      %1662 = vmatpush1.bf16.msra.mxu0 %v1645
      %1663 = vmatprep.subr.bf16.mxu0 0
      %1664 = vmatpush2.bf16.msra.mxu0 0
      %1665 = vmatprep.subr.bf16.mxu0 0
      %1666 = vmatpush2.bf16.msra.mxu0 0
      %1667 = vmatprep.subr.bf16.mxu0 0
      %1668 = vmatpush2.bf16.msra.mxu0 0
      %1669 = vmatprep.subr.bf16.mxu0 0
      %1670 = vmatpush2.bf16.msra.mxu0 0
      %1671 = vmatprep.subr.bf16.mxu0 0
      %1672 = vmatpush2.bf16.msra.mxu0 0
      %1673 = vmatprep.subr.bf16.mxu0 0
      %1674 = vmatpush2.bf16.msra.mxu0 0
      %1675 = vmatprep.subr.bf16.mxu0 0
      %1676 = vmatpush2.bf16.msra.mxu0 0
      %1677 = vmatprep.subr.bf16.mxu0 0
      %1678 = vmatpush2.bf16.msra.mxu0 0
      %1679 = vmatprep.mubr.bf16.mxu0 0
      %1680 = vmatmul.mubr.bf16.gmra.mxu0 %v1596
      %v1681 = vpop.f32.mrf.mxu0
      %v1682 = vadd.f32 0.0, %v1681
      %v1683 = vpop.f32.mrf.mxu0
      %v1684 = vpop.f32.mrf.mxu0
      %v1685 = vadd.f32 0.0, %v1684
      %v1686 = vpop.f32.mrf.mxu0
      %1687 = vmatprep.mubr.bf16.mxu0 0
      %1688 = vmatmul.mubr.bf16.gmra.mxu0 %v1599
      %v1689 = vpop.f32.mrf.mxu0
      %v1690 = vadd.f32 0.0, %v1689
      %v1691 = vpop.f32.mrf.mxu0
      %v1692 = vpop.f32.mrf.mxu0
      %v1693 = vadd.f32 0.0, %v1692
      %v1694 = vpop.f32.mrf.mxu0
      %1695 = vmatprep.mubr.bf16.mxu0 0
      %1696 = vmatmul.mubr.bf16.gmra.mxu0 %v1602
      %v1697 = vpop.f32.mrf.mxu0
      %v1698 = vadd.f32 0.0, %v1697
      %v1699 = vpop.f32.mrf.mxu0
      %v1700 = vpop.f32.mrf.mxu0
      %v1701 = vadd.f32 0.0, %v1700
      %v1702 = vpop.f32.mrf.mxu0
      %1703 = vmatprep.mubr.bf16.mxu0 0
      %1704 = vmatmul.mubr.bf16.gmra.mxu0 %v1605
      %v1705 = vpop.f32.mrf.mxu0
      %v1706 = vadd.f32 0.0, %v1705
      %v1707 = vpop.f32.mrf.mxu0
      %v1708 = vpop.f32.mrf.mxu0
      %v1709 = vadd.f32 0.0, %v1708
      %v1710 = vpop.f32.mrf.mxu0
      %1711 = vmatprep.mubr.bf16.mxu0 0
      %1712 = vmatmul.mubr.bf16.gmra.mxu0 %v1608
      %v1713 = vpop.f32.mrf.mxu0
      %v1714 = vadd.f32 0.0, %v1713
      %v1715 = vpop.f32.mrf.mxu0
      %v1716 = vpop.f32.mrf.mxu0
      %v1717 = vadd.f32 0.0, %v1716
      %v1718 = vpop.f32.mrf.mxu0
      %1719 = vmatprep.mubr.bf16.mxu0 0
      %1720 = vmatmul.mubr.bf16.gmra.mxu0 %v1611
      %v1721 = vpop.f32.mrf.mxu0
      %v1722 = vadd.f32 0.0, %v1721
      %v1723 = vpop.f32.mrf.mxu0
      %v1724 = vpop.f32.mrf.mxu0
      %v1725 = vadd.f32 0.0, %v1724
      %v1726 = vpop.f32.mrf.mxu0
      %1727 = vmatprep.mubr.bf16.mxu0 0
      %1728 = vmatmul.mubr.bf16.gmra.mxu0 %v1614
      %v1729 = vpop.f32.mrf.mxu0
      %v1730 = vadd.f32 0.0, %v1729
      %v1731 = vpop.f32.mrf.mxu0
      %v1732 = vpop.f32.mrf.mxu0
      %v1733 = vadd.f32 0.0, %v1732
      %v1734 = vpop.f32.mrf.mxu0
      %1735 = vmatprep.mubr.bf16.mxu0 0
      %1736 = vmatmul.mubr.bf16.gmra.mxu0 %v1617
      %v1737 = vpop.f32.mrf.mxu0
      %v1738 = vadd.f32 0.0, %v1737
      %v1739 = vpop.f32.mrf.mxu0
      %v1740 = vpop.f32.mrf.mxu0
      %v1741 = vadd.f32 0.0, %v1740
      %v1742 = vpop.f32.mrf.mxu0
      %1743 = vmatprep.mubr.bf16.mxu0 0
      %1744 = vmatmul.mubr.bf16.gmra.mxu0 %v1620
      %v1745 = vpop.f32.mrf.mxu0
      %v1746 = vadd.f32 0.0, %v1745
      %v1747 = vpop.f32.mrf.mxu0
      %v1748 = vpop.f32.mrf.mxu0
      %v1749 = vadd.f32 0.0, %v1748
      %v1750 = vpop.f32.mrf.mxu0
      %1751 = vmatprep.mubr.bf16.mxu0 0
      %1752 = vmatmul.mubr.bf16.gmra.mxu0 %v1623
      %v1753 = vpop.f32.mrf.mxu0
      %v1754 = vadd.f32 0.0, %v1753
      %v1755 = vpop.f32.mrf.mxu0
      %v1756 = vpop.f32.mrf.mxu0
      %v1757 = vadd.f32 0.0, %v1756
      %v1758 = vpop.f32.mrf.mxu0
      %1759 = vmatprep.mubr.bf16.mxu0 0
      %1760 = vmatmul.mubr.bf16.gmra.mxu0 %v1626
      %v1761 = vpop.f32.mrf.mxu0
      %v1762 = vadd.f32 0.0, %v1761
      %v1763 = vpop.f32.mrf.mxu0
      %v1764 = vpop.f32.mrf.mxu0
      %v1765 = vadd.f32 0.0, %v1764
      %v1766 = vpop.f32.mrf.mxu0
      %1767 = vmatprep.mubr.bf16.mxu0 0
      %1768 = vmatmul.mubr.bf16.gmra.mxu0 %v1629
      %v1769 = vpop.f32.mrf.mxu0
      %v1770 = vadd.f32 0.0, %v1769
      %v1771 = vpop.f32.mrf.mxu0
      %v1772 = vpop.f32.mrf.mxu0
      %v1773 = vadd.f32 0.0, %v1772
      %v1774 = vpop.f32.mrf.mxu0
      %1775 = vmatprep.mubr.bf16.mxu0 0
      %1776 = vmatmul.mubr.bf16.gmra.mxu0 %v1632
      %v1777 = vpop.f32.mrf.mxu0
      %v1778 = vadd.f32 0.0, %v1777
      %v1779 = vpop.f32.mrf.mxu0
      %v1780 = vpop.f32.mrf.mxu0
      %v1781 = vadd.f32 0.0, %v1780
      %v1782 = vpop.f32.mrf.mxu0
      %1783 = vmatprep.mubr.bf16.mxu0 0
      %1784 = vmatmul.mubr.bf16.gmra.mxu0 %v1635
      %v1785 = vpop.f32.mrf.mxu0
      %v1786 = vadd.f32 0.0, %v1785
      %v1787 = vpop.f32.mrf.mxu0
      %v1788 = vpop.f32.mrf.mxu0
      %v1789 = vadd.f32 0.0, %v1788
      %v1790 = vpop.f32.mrf.mxu0
      %1791 = vmatprep.mubr.bf16.mxu0 0
      %1792 = vmatmul.mubr.bf16.gmra.mxu0 %v1638
      %v1793 = vpop.f32.mrf.mxu0
      %v1794 = vadd.f32 0.0, %v1793
      %v1795 = vpop.f32.mrf.mxu0
      %v1796 = vpop.f32.mrf.mxu0
      %v1797 = vadd.f32 0.0, %v1796
      %v1798 = vpop.f32.mrf.mxu0
      %1799 = vmatprep.mubr.bf16.mxu0 0
      %1800 = vmatmul.mubr.bf16.gmra.mxu0 %v1641
      %v1801 = vpop.f32.mrf.mxu0
      %v1802 = vadd.f32 0.0, %v1801
      %v1803 = vpop.f32.mrf.mxu0
      %v1804 = vpop.f32.mrf.mxu0
      %v1805 = vadd.f32 0.0, %v1804
      %v1806 = vpop.f32.mrf.mxu0
      %1807 = vdwg.mxu0
      %v1840 = vunpack.c.l.b16 %v1108
      %v1841 = vunpack.c.l.b16 %v1109
      %v1842 = vunpack.c.l.b16 %v1110
      %v1843 = vunpack.c.l.b16 %v1111
      %v1844 = vunpack.c.l.b16 %v1112
      %v1845 = vunpack.c.l.b16 %v1113
      %v1846 = vunpack.c.l.b16 %v1114
      %v1847 = vunpack.c.l.b16 %v1115
      %v1848 = vunpack.c.l.b16 %v1116
      %v1849 = vunpack.c.l.b16 %v1117
      %v1850 = vunpack.c.l.b16 %v1118
      %v1851 = vunpack.c.l.b16 %v1119
      %v1852 = vunpack.c.l.b16 %v1120
      %v1853 = vunpack.c.l.b16 %v1121
      %v1854 = vunpack.c.l.b16 %v1122
      %v1855 = vunpack.c.l.b16 %v1123
      %v1856 = vunpack.c.l.b16 %v1124
      %v1857 = vunpack.c.l.b16 %v1125
      %v1858 = vunpack.c.l.b16 %v1126
      %v1859 = vunpack.c.l.b16 %v1127
      %v1860 = vunpack.c.l.b16 %v1128
      %v1861 = vunpack.c.l.b16 %v1129
      %v1862 = vunpack.c.l.b16 %v1130
      %v1863 = vunpack.c.l.b16 %v1131
      %v1864 = vunpack.c.l.b16 %v1132
      %v1865 = vunpack.c.l.b16 %v1133
      %v1866 = vunpack.c.l.b16 %v1134
      %v1867 = vunpack.c.l.b16 %v1135
      %v1868 = vunpack.c.l.b16 %v1136
      %v1869 = vunpack.c.l.b16 %v1137
      %v1870 = vunpack.c.l.b16 %v1138
      %v1871 = vunpack.c.l.b16 %v1139
      %v1872 = vpack.c.b16 %v1841, %v1840
      %v1873 = vpack.c.b16 %v1843, %v1842
      %v1874 = vpack.c.b16 %v1845, %v1844
      %v1875 = vpack.c.b16 %v1847, %v1846
      %v1876 = vpack.c.b16 %v1849, %v1848
      %v1877 = vpack.c.b16 %v1851, %v1850
      %v1878 = vpack.c.b16 %v1853, %v1852
      %v1879 = vpack.c.b16 %v1855, %v1854
      %v1880 = vpack.c.b16 %v1857, %v1856
      %v1881 = vpack.c.b16 %v1859, %v1858
      %v1882 = vpack.c.b16 %v1861, %v1860
      %v1883 = vpack.c.b16 %v1863, %v1862
      %v1884 = vpack.c.b16 %v1865, %v1864
      %v1885 = vpack.c.b16 %v1867, %v1866
      %v1886 = vpack.c.b16 %v1869, %v1868
      %v1887 = vpack.c.b16 %v1871, %v1870
      %v1889 = vsel %vm1594, %v1872, 0
      %v1892 = vsel %vm1594, %v1873, 0
      %v1895 = vsel %vm1594, %v1874, 0
      %v1898 = vsel %vm1594, %v1875, 0
      %v1901 = vsel %vm1594, %v1876, 0
      %v1904 = vsel %vm1594, %v1877, 0
      %v1907 = vsel %vm1594, %v1878, 0
      %v1910 = vsel %vm1594, %v1879, 0
      %v1913 = vsel %vm1594, %v1880, 0
      %v1916 = vsel %vm1594, %v1881, 0
      %v1919 = vsel %vm1594, %v1882, 0
      %v1922 = vsel %vm1594, %v1883, 0
      %v1925 = vsel %vm1594, %v1884, 0
      %v1928 = vsel %vm1594, %v1885, 0
      %v1931 = vsel %vm1594, %v1886, 0
      %v1934 = vsel %vm1594, %v1887, 0
      %v1937 = vsel %vm1643, %v1140, 0
      %1939 = vmatprep.subr.bf16.mxu0 0
      %1940 = vmatpush1.bf16.msra.mxu0 0
      %1941 = vmatprep.subr.bf16.mxu0 0
      %1942 = vmatpush1.bf16.msra.mxu0 0
      %1943 = vmatprep.subr.bf16.mxu0 0
      %1944 = vmatpush1.bf16.msra.mxu0 0
      %1945 = vmatprep.subr.bf16.mxu0 0
      %1946 = vmatpush1.bf16.msra.mxu0 0
      %1947 = vmatprep.subr.bf16.mxu0 0
      %1948 = vmatpush1.bf16.msra.mxu0 0
      %1949 = vmatprep.subr.bf16.mxu0 0
      %1950 = vmatpush1.bf16.msra.mxu0 0
      %1951 = vmatprep.subr.bf16.mxu0 0
      %1952 = vmatpush1.bf16.msra.mxu0 0
      %1953 = vmatprep.subr.bf16.mxu0 0
      %1954 = vmatpush1.bf16.msra.mxu0 %v1937
      %1955 = vmatprep.subr.bf16.mxu0 0
      %1956 = vmatpush2.bf16.msra.mxu0 0
      %1957 = vmatprep.subr.bf16.mxu0 0
      %1958 = vmatpush2.bf16.msra.mxu0 0
      %1959 = vmatprep.subr.bf16.mxu0 0
      %1960 = vmatpush2.bf16.msra.mxu0 0
      %1961 = vmatprep.subr.bf16.mxu0 0
      %1962 = vmatpush2.bf16.msra.mxu0 0
      %1963 = vmatprep.subr.bf16.mxu0 0
      %1964 = vmatpush2.bf16.msra.mxu0 0
      %1965 = vmatprep.subr.bf16.mxu0 0
      %1966 = vmatpush2.bf16.msra.mxu0 0
      %1967 = vmatprep.subr.bf16.mxu0 0
      %1968 = vmatpush2.bf16.msra.mxu0 0
      %1969 = vmatprep.subr.bf16.mxu0 0
      %1970 = vmatpush2.bf16.msra.mxu0 0
      %1971 = vmatprep.mubr.bf16.mxu0 0
      %1972 = vmatmul.mubr.bf16.gmra.mxu0 %v1889
      %v1973 = vpop.f32.mrf.mxu0
      %v1974 = vadd.f32 %v1682, %v1973
      %v1975 = vpop.f32.mrf.mxu0
      %v1976 = vpop.f32.mrf.mxu0
      %v1977 = vadd.f32 %v1685, %v1976
      %v1978 = vpop.f32.mrf.mxu0
      %1979 = vmatprep.mubr.bf16.mxu0 0
      %1980 = vmatmul.mubr.bf16.gmra.mxu0 %v1892
      %v1981 = vpop.f32.mrf.mxu0
      %v1982 = vadd.f32 %v1690, %v1981
      %v1983 = vpop.f32.mrf.mxu0
      %v1984 = vpop.f32.mrf.mxu0
      %v1985 = vadd.f32 %v1693, %v1984
      %v1986 = vpop.f32.mrf.mxu0
      %1987 = vmatprep.mubr.bf16.mxu0 0
      %1988 = vmatmul.mubr.bf16.gmra.mxu0 %v1895
      %v1989 = vpop.f32.mrf.mxu0
      %v1990 = vadd.f32 %v1698, %v1989
      %v1991 = vpop.f32.mrf.mxu0
      %v1992 = vpop.f32.mrf.mxu0
      %v1993 = vadd.f32 %v1701, %v1992
      %v1994 = vpop.f32.mrf.mxu0
      %1995 = vmatprep.mubr.bf16.mxu0 0
      %1996 = vmatmul.mubr.bf16.gmra.mxu0 %v1898
      %v1997 = vpop.f32.mrf.mxu0
      %v1998 = vadd.f32 %v1706, %v1997
      %v1999 = vpop.f32.mrf.mxu0
      %v2000 = vpop.f32.mrf.mxu0
      %v2001 = vadd.f32 %v1709, %v2000
      %v2002 = vpop.f32.mrf.mxu0
      %2003 = vmatprep.mubr.bf16.mxu0 0
      %2004 = vmatmul.mubr.bf16.gmra.mxu0 %v1901
      %v2005 = vpop.f32.mrf.mxu0
      %v2006 = vadd.f32 %v1714, %v2005
      %v2007 = vpop.f32.mrf.mxu0
      %v2008 = vpop.f32.mrf.mxu0
      %v2009 = vadd.f32 %v1717, %v2008
      %v2010 = vpop.f32.mrf.mxu0
      %2011 = vmatprep.mubr.bf16.mxu0 0
      %2012 = vmatmul.mubr.bf16.gmra.mxu0 %v1904
      %v2013 = vpop.f32.mrf.mxu0
      %v2014 = vadd.f32 %v1722, %v2013
      %v2015 = vpop.f32.mrf.mxu0
      %v2016 = vpop.f32.mrf.mxu0
      %v2017 = vadd.f32 %v1725, %v2016
      %v2018 = vpop.f32.mrf.mxu0
      %2019 = vmatprep.mubr.bf16.mxu0 0
      %2020 = vmatmul.mubr.bf16.gmra.mxu0 %v1907
      %v2021 = vpop.f32.mrf.mxu0
      %v2022 = vadd.f32 %v1730, %v2021
      %v2023 = vpop.f32.mrf.mxu0
      %v2024 = vpop.f32.mrf.mxu0
      %v2025 = vadd.f32 %v1733, %v2024
      %v2026 = vpop.f32.mrf.mxu0
      %2027 = vmatprep.mubr.bf16.mxu0 0
      %2028 = vmatmul.mubr.bf16.gmra.mxu0 %v1910
      %v2029 = vpop.f32.mrf.mxu0
      %v2030 = vadd.f32 %v1738, %v2029
      %v2031 = vpop.f32.mrf.mxu0
      %v2032 = vpop.f32.mrf.mxu0
      %v2033 = vadd.f32 %v1741, %v2032
      %v2034 = vpop.f32.mrf.mxu0
      %2035 = vmatprep.mubr.bf16.mxu0 0
      %2036 = vmatmul.mubr.bf16.gmra.mxu0 %v1913
      %v2037 = vpop.f32.mrf.mxu0
      %v2038 = vadd.f32 %v1746, %v2037
      %v2039 = vpop.f32.mrf.mxu0
      %v2040 = vpop.f32.mrf.mxu0
      %v2041 = vadd.f32 %v1749, %v2040
      %v2042 = vpop.f32.mrf.mxu0
      %2043 = vmatprep.mubr.bf16.mxu0 0
      %2044 = vmatmul.mubr.bf16.gmra.mxu0 %v1916
      %v2045 = vpop.f32.mrf.mxu0
      %v2046 = vadd.f32 %v1754, %v2045
      %v2047 = vpop.f32.mrf.mxu0
      %v2048 = vpop.f32.mrf.mxu0
      %v2049 = vadd.f32 %v1757, %v2048
      %v2050 = vpop.f32.mrf.mxu0
      %2051 = vmatprep.mubr.bf16.mxu0 0
      %2052 = vmatmul.mubr.bf16.gmra.mxu0 %v1919
      %v2053 = vpop.f32.mrf.mxu0
      %v2054 = vadd.f32 %v1762, %v2053
      %v2055 = vpop.f32.mrf.mxu0
      %v2056 = vpop.f32.mrf.mxu0
      %v2057 = vadd.f32 %v1765, %v2056
      %v2058 = vpop.f32.mrf.mxu0
      %2059 = vmatprep.mubr.bf16.mxu0 0
      %2060 = vmatmul.mubr.bf16.gmra.mxu0 %v1922
      %v2061 = vpop.f32.mrf.mxu0
      %v2062 = vadd.f32 %v1770, %v2061
      %v2063 = vpop.f32.mrf.mxu0
      %v2064 = vpop.f32.mrf.mxu0
      %v2065 = vadd.f32 %v1773, %v2064
      %v2066 = vpop.f32.mrf.mxu0
      %2067 = vmatprep.mubr.bf16.mxu0 0
      %2068 = vmatmul.mubr.bf16.gmra.mxu0 %v1925
      %v2069 = vpop.f32.mrf.mxu0
      %v2070 = vadd.f32 %v1778, %v2069
      %v2071 = vpop.f32.mrf.mxu0
      %v2072 = vpop.f32.mrf.mxu0
      %v2073 = vadd.f32 %v1781, %v2072
      %v2074 = vpop.f32.mrf.mxu0
      %2075 = vmatprep.mubr.bf16.mxu0 0
      %2076 = vmatmul.mubr.bf16.gmra.mxu0 %v1928
      %v2077 = vpop.f32.mrf.mxu0
      %v2078 = vadd.f32 %v1786, %v2077
      %v2079 = vpop.f32.mrf.mxu0
      %v2080 = vpop.f32.mrf.mxu0
      %v2081 = vadd.f32 %v1789, %v2080
      %v2082 = vpop.f32.mrf.mxu0
      %2083 = vmatprep.mubr.bf16.mxu0 0
      %2084 = vmatmul.mubr.bf16.gmra.mxu0 %v1931
      %v2085 = vpop.f32.mrf.mxu0
      %v2086 = vadd.f32 %v1794, %v2085
      %v2087 = vpop.f32.mrf.mxu0
      %v2088 = vpop.f32.mrf.mxu0
      %v2089 = vadd.f32 %v1797, %v2088
      %v2090 = vpop.f32.mrf.mxu0
      %2091 = vmatprep.mubr.bf16.mxu0 0
      %2092 = vmatmul.mubr.bf16.gmra.mxu0 %v1934
      %v2093 = vpop.f32.mrf.mxu0
      %v2094 = vadd.f32 %v1802, %v2093
      %v2095 = vpop.f32.mrf.mxu0
      %v2096 = vpop.f32.mrf.mxu0
      %v2097 = vadd.f32 %v1805, %v2096
      %v2098 = vpop.f32.mrf.mxu0
      %2099 = vdwg.mxu0
      %v2100 = vld [vmem:[#allocation2] sm:$0xe]
      %v2101 = vld [vmem:[#allocation2 + $0xc] sm:$0xe]
      %v2102 = vld [vmem:[#allocation2 + $0x18] sm:$0xe]
      %v2103 = vld [vmem:[#allocation2 + $0x24] sm:$0xe]
      %v2104 = vld [vmem:[#allocation2 + $0x30] sm:$0xe]
      %v2105 = vld [vmem:[#allocation2 + $0x3c] sm:$0xe]
      %v2106 = vld [vmem:[#allocation2 + $0x48] sm:$0xe]
      %v2107 = vld [vmem:[#allocation2 + $0x54] sm:$0xe]
      %v2108 = vld [vmem:[#allocation2 + $0x60] sm:$0xe]
      %v2109 = vld [vmem:[#allocation2 + $0x6c] sm:$0xe]
      %v2110 = vld [vmem:[#allocation2 + $0x78] sm:$0xe]
      %v2111 = vld [vmem:[#allocation2 + $0x84] sm:$0xe]
      %v2112 = vld [vmem:[#allocation2 + $0x90] sm:$0xe]
      %v2113 = vld [vmem:[#allocation2 + $0x9c] sm:$0xe]
      %v2114 = vld [vmem:[#allocation2 + $0xa8] sm:$0xe]
      %v2115 = vld [vmem:[#allocation2 + $0xb4] sm:$0xe]
      %vm2148 = vcmask 1042432
      %vm2149 = vcmask 1046532
      %vm2150 = vmor %vm2148, %vm2149
      %v2151 = vrot.slane %v2100, 5
      %v2152 = vrot.slane %v2151, 4
      %v2153 = vrot.slane %v1109, 5
      %v2154 = vsel %vm2150, %v2152, %v2153
      %v2155 = vrot.slane %v2153, 4
      %v2156 = vrot.slane %v1141, 5
      %v2157 = vsel %vm2150, %v2155, %v2156
      %v2158 = vrot.slane %v2101, 5
      %v2159 = vrot.slane %v2158, 4
      %v2160 = vrot.slane %v1111, 5
      %v2161 = vsel %vm2150, %v2159, %v2160
      %v2162 = vrot.slane %v2160, 4
      %v2163 = vrot.slane %v1142, 5
      %v2164 = vsel %vm2150, %v2162, %v2163
      %v2165 = vrot.slane %v2102, 5
      %v2166 = vrot.slane %v2165, 4
      %v2167 = vrot.slane %v1113, 5
      %v2168 = vsel %vm2150, %v2166, %v2167
      %v2169 = vrot.slane %v2167, 4
      %v2170 = vrot.slane %v1143, 5
      %v2171 = vsel %vm2150, %v2169, %v2170
      %v2172 = vrot.slane %v2103, 5
      %v2173 = vrot.slane %v2172, 4
      %v2174 = vrot.slane %v1115, 5
      %v2175 = vsel %vm2150, %v2173, %v2174
      %v2176 = vrot.slane %v2174, 4
      %v2177 = vrot.slane %v1144, 5
      %v2178 = vsel %vm2150, %v2176, %v2177
      %v2179 = vrot.slane %v2104, 5
      %v2180 = vrot.slane %v2179, 4
      %v2181 = vrot.slane %v1117, 5
      %v2182 = vsel %vm2150, %v2180, %v2181
      %v2183 = vrot.slane %v2181, 4
      %v2184 = vrot.slane %v1145, 5
      %v2185 = vsel %vm2150, %v2183, %v2184
      %v2186 = vrot.slane %v2105, 5
      %v2187 = vrot.slane %v2186, 4
      %v2188 = vrot.slane %v1119, 5
      %v2189 = vsel %vm2150, %v2187, %v2188
      %v2190 = vrot.slane %v2188, 4
      %v2191 = vrot.slane %v1146, 5
      %v2192 = vsel %vm2150, %v2190, %v2191
      %v2193 = vrot.slane %v2106, 5
      %v2194 = vrot.slane %v2193, 4
      %v2195 = vrot.slane %v1121, 5
      %v2196 = vsel %vm2150, %v2194, %v2195
      %v2197 = vrot.slane %v2195, 4
      %v2198 = vrot.slane %v1147, 5
      %v2199 = vsel %vm2150, %v2197, %v2198
      %v2200 = vrot.slane %v2107, 5
      %v2201 = vrot.slane %v2200, 4
      %v2202 = vrot.slane %v1123, 5
      %v2203 = vsel %vm2150, %v2201, %v2202
      %v2204 = vrot.slane %v2202, 4
      %v2205 = vrot.slane %v1148, 5
      %v2206 = vsel %vm2150, %v2204, %v2205
      %v2207 = vrot.slane %v2108, 5
      %v2208 = vrot.slane %v2207, 4
      %v2209 = vrot.slane %v1125, 5
      %v2210 = vsel %vm2150, %v2208, %v2209
      %v2211 = vrot.slane %v2209, 4
      %v2212 = vrot.slane %v1149, 5
      %v2213 = vsel %vm2150, %v2211, %v2212
      %v2214 = vrot.slane %v2109, 5
      %v2215 = vrot.slane %v2214, 4
      %v2216 = vrot.slane %v1127, 5
      %v2217 = vsel %vm2150, %v2215, %v2216
      %v2218 = vrot.slane %v2216, 4
      %v2219 = vrot.slane %v1150, 5
      %v2220 = vsel %vm2150, %v2218, %v2219
      %v2221 = vrot.slane %v2110, 5
      %v2222 = vrot.slane %v2221, 4
      %v2223 = vrot.slane %v1129, 5
      %v2224 = vsel %vm2150, %v2222, %v2223
      %v2225 = vrot.slane %v2223, 4
      %v2226 = vrot.slane %v1151, 5
      %v2227 = vsel %vm2150, %v2225, %v2226
      %v2228 = vrot.slane %v2111, 5
      %v2229 = vrot.slane %v2228, 4
      %v2230 = vrot.slane %v1131, 5
      %v2231 = vsel %vm2150, %v2229, %v2230
      %v2232 = vrot.slane %v2230, 4
      %v2233 = vrot.slane %v1152, 5
      %v2234 = vsel %vm2150, %v2232, %v2233
      %v2235 = vrot.slane %v2112, 5
      %v2236 = vrot.slane %v2235, 4
      %v2237 = vrot.slane %v1133, 5
      %v2238 = vsel %vm2150, %v2236, %v2237
      %v2239 = vrot.slane %v2237, 4
      %v2240 = vrot.slane %v1153, 5
      %v2241 = vsel %vm2150, %v2239, %v2240
      %v2242 = vrot.slane %v2113, 5
      %v2243 = vrot.slane %v2242, 4
      %v2244 = vrot.slane %v1135, 5
      %v2245 = vsel %vm2150, %v2243, %v2244
      %v2246 = vrot.slane %v2244, 4
      %v2247 = vrot.slane %v1154, 5
      %v2248 = vsel %vm2150, %v2246, %v2247
      %v2249 = vrot.slane %v2114, 5
      %v2250 = vrot.slane %v2249, 4
      %v2251 = vrot.slane %v1137, 5
      %v2252 = vsel %vm2150, %v2250, %v2251
      %v2253 = vrot.slane %v2251, 4
      %v2254 = vrot.slane %v1155, 5
      %v2255 = vsel %vm2150, %v2253, %v2254
      %v2256 = vrot.slane %v2115, 5
      %v2257 = vrot.slane %v2256, 4
      %v2258 = vrot.slane %v1139, 5
      %v2259 = vsel %vm2150, %v2257, %v2258
      %v2260 = vrot.slane %v2258, 4
      %v2261 = vrot.slane %v1156, 5
      %v2262 = vsel %vm2150, %v2260, %v2261
      %s2263 = scalar_lea.vmem %s1, 4
      %v2264 = vld [vmem:[%s2263] sm:$0x3]
      %v2265 = vunpack.c.l.b16 %v2154
      %v2266 = vunpack.c.l.b16 %v2157
      %v2267 = vunpack.c.l.b16 %v2161
      %v2268 = vunpack.c.l.b16 %v2164
      %v2269 = vunpack.c.l.b16 %v2168
      %v2270 = vunpack.c.l.b16 %v2171
      %v2271 = vunpack.c.l.b16 %v2175
      %v2272 = vunpack.c.l.b16 %v2178
      %v2273 = vunpack.c.l.b16 %v2182
      %v2274 = vunpack.c.l.b16 %v2185
      %v2275 = vunpack.c.l.b16 %v2189
      %v2276 = vunpack.c.l.b16 %v2192
      %v2277 = vunpack.c.l.b16 %v2196
      %v2278 = vunpack.c.l.b16 %v2199
      %v2279 = vunpack.c.l.b16 %v2203
      %v2280 = vunpack.c.l.b16 %v2206
      %v2281 = vunpack.c.l.b16 %v2210
      %v2282 = vunpack.c.l.b16 %v2213
      %v2283 = vunpack.c.l.b16 %v2217
      %v2284 = vunpack.c.l.b16 %v2220
      %v2285 = vunpack.c.l.b16 %v2224
      %v2286 = vunpack.c.l.b16 %v2227
      %v2287 = vunpack.c.l.b16 %v2231
      %v2288 = vunpack.c.l.b16 %v2234
      %v2289 = vunpack.c.l.b16 %v2238
      %v2290 = vunpack.c.l.b16 %v2241
      %v2291 = vunpack.c.l.b16 %v2245
      %v2292 = vunpack.c.l.b16 %v2248
      %v2293 = vunpack.c.l.b16 %v2252
      %v2294 = vunpack.c.l.b16 %v2255
      %v2295 = vunpack.c.l.b16 %v2259
      %v2296 = vunpack.c.l.b16 %v2262
      %v2297 = vpack.c.b16 %v2266, %v2265
      %v2298 = vpack.c.b16 %v2268, %v2267
      %v2299 = vpack.c.b16 %v2270, %v2269
      %v2300 = vpack.c.b16 %v2272, %v2271
      %v2301 = vpack.c.b16 %v2274, %v2273
      %v2302 = vpack.c.b16 %v2276, %v2275
      %v2303 = vpack.c.b16 %v2278, %v2277
      %v2304 = vpack.c.b16 %v2280, %v2279
      %v2305 = vpack.c.b16 %v2282, %v2281
      %v2306 = vpack.c.b16 %v2284, %v2283
      %v2307 = vpack.c.b16 %v2286, %v2285
      %v2308 = vpack.c.b16 %v2288, %v2287
      %v2309 = vpack.c.b16 %v2290, %v2289
      %v2310 = vpack.c.b16 %v2292, %v2291
      %v2311 = vpack.c.b16 %v2294, %v2293
      %v2312 = vpack.c.b16 %v2296, %v2295
      %v2314 = vsel %vm1594, %v2297, 0
      %v2317 = vsel %vm1594, %v2298, 0
      %v2320 = vsel %vm1594, %v2299, 0
      %v2323 = vsel %vm1594, %v2300, 0
      %v2326 = vsel %vm1594, %v2301, 0
      %v2329 = vsel %vm1594, %v2302, 0
      %v2332 = vsel %vm1594, %v2303, 0
      %v2335 = vsel %vm1594, %v2304, 0
      %v2338 = vsel %vm1594, %v2305, 0
      %v2341 = vsel %vm1594, %v2306, 0
      %v2344 = vsel %vm1594, %v2307, 0
      %v2347 = vsel %vm1594, %v2308, 0
      %v2350 = vsel %vm1594, %v2309, 0
      %v2353 = vsel %vm1594, %v2310, 0
      %v2356 = vsel %vm1594, %v2311, 0
      %v2359 = vsel %vm1594, %v2312, 0
      %v2362 = vsel %vm1643, %v2264, 0
      %2364 = vmatprep.subr.bf16.mxu0 0
      %2365 = vmatpush1.bf16.msra.mxu0 0
      %2366 = vmatprep.subr.bf16.mxu0 0
      %2367 = vmatpush1.bf16.msra.mxu0 0
      %2368 = vmatprep.subr.bf16.mxu0 0
      %2369 = vmatpush1.bf16.msra.mxu0 0
      %2370 = vmatprep.subr.bf16.mxu0 0
      %2371 = vmatpush1.bf16.msra.mxu0 0
      %2372 = vmatprep.subr.bf16.mxu0 0
      %2373 = vmatpush1.bf16.msra.mxu0 0
      %2374 = vmatprep.subr.bf16.mxu0 0
      %2375 = vmatpush1.bf16.msra.mxu0 0
      %2376 = vmatprep.subr.bf16.mxu0 0
      %2377 = vmatpush1.bf16.msra.mxu0 0
      %2378 = vmatprep.subr.bf16.mxu0 0
      %2379 = vmatpush1.bf16.msra.mxu0 %v2362
      %2380 = vmatprep.subr.bf16.mxu0 0
      %2381 = vmatpush2.bf16.msra.mxu0 0
      %2382 = vmatprep.subr.bf16.mxu0 0
      %2383 = vmatpush2.bf16.msra.mxu0 0
      %2384 = vmatprep.subr.bf16.mxu0 0
      %2385 = vmatpush2.bf16.msra.mxu0 0
      %2386 = vmatprep.subr.bf16.mxu0 0
      %2387 = vmatpush2.bf16.msra.mxu0 0
      %2388 = vmatprep.subr.bf16.mxu0 0
      %2389 = vmatpush2.bf16.msra.mxu0 0
      %2390 = vmatprep.subr.bf16.mxu0 0
      %2391 = vmatpush2.bf16.msra.mxu0 0
      %2392 = vmatprep.subr.bf16.mxu0 0
      %2393 = vmatpush2.bf16.msra.mxu0 0
      %2394 = vmatprep.subr.bf16.mxu0 0
      %2395 = vmatpush2.bf16.msra.mxu0 0
      %2396 = vmatprep.mubr.bf16.mxu0 0
      %2397 = vmatmul.mubr.bf16.gmra.mxu0 %v2314
      %v2398 = vpop.f32.mrf.mxu0
      %v2399 = vadd.f32 0.0, %v2398
      %v2400 = vpop.f32.mrf.mxu0
      %v2401 = vpop.f32.mrf.mxu0
      %v2402 = vadd.f32 0.0, %v2401
      %v2403 = vpop.f32.mrf.mxu0
      %2404 = vmatprep.mubr.bf16.mxu0 0
      %2405 = vmatmul.mubr.bf16.gmra.mxu0 %v2317
      %v2406 = vpop.f32.mrf.mxu0
      %v2407 = vadd.f32 0.0, %v2406
      %v2408 = vpop.f32.mrf.mxu0
      %v2409 = vpop.f32.mrf.mxu0
      %v2410 = vadd.f32 0.0, %v2409
      %v2411 = vpop.f32.mrf.mxu0
      %2412 = vmatprep.mubr.bf16.mxu0 0
      %2413 = vmatmul.mubr.bf16.gmra.mxu0 %v2320
      %v2414 = vpop.f32.mrf.mxu0
      %v2415 = vadd.f32 0.0, %v2414
      %v2416 = vpop.f32.mrf.mxu0
      %v2417 = vpop.f32.mrf.mxu0
      %v2418 = vadd.f32 0.0, %v2417
      %v2419 = vpop.f32.mrf.mxu0
      %2420 = vmatprep.mubr.bf16.mxu0 0
      %2421 = vmatmul.mubr.bf16.gmra.mxu0 %v2323
      %v2422 = vpop.f32.mrf.mxu0
      %v2423 = vadd.f32 0.0, %v2422
      %v2424 = vpop.f32.mrf.mxu0
      %v2425 = vpop.f32.mrf.mxu0
      %v2426 = vadd.f32 0.0, %v2425
      %v2427 = vpop.f32.mrf.mxu0
      %2428 = vmatprep.mubr.bf16.mxu0 0
      %2429 = vmatmul.mubr.bf16.gmra.mxu0 %v2326
      %v2430 = vpop.f32.mrf.mxu0
      %v2431 = vadd.f32 0.0, %v2430
      %v2432 = vpop.f32.mrf.mxu0
      %v2433 = vpop.f32.mrf.mxu0
      %v2434 = vadd.f32 0.0, %v2433
      %v2435 = vpop.f32.mrf.mxu0
      %2436 = vmatprep.mubr.bf16.mxu0 0
      %2437 = vmatmul.mubr.bf16.gmra.mxu0 %v2329
      %v2438 = vpop.f32.mrf.mxu0
      %v2439 = vadd.f32 0.0, %v2438
      %v2440 = vpop.f32.mrf.mxu0
      %v2441 = vpop.f32.mrf.mxu0
      %v2442 = vadd.f32 0.0, %v2441
      %v2443 = vpop.f32.mrf.mxu0
      %2444 = vmatprep.mubr.bf16.mxu0 0
      %2445 = vmatmul.mubr.bf16.gmra.mxu0 %v2332
      %v2446 = vpop.f32.mrf.mxu0
      %v2447 = vadd.f32 0.0, %v2446
      %v2448 = vpop.f32.mrf.mxu0
      %v2449 = vpop.f32.mrf.mxu0
      %v2450 = vadd.f32 0.0, %v2449
      %v2451 = vpop.f32.mrf.mxu0
      %2452 = vmatprep.mubr.bf16.mxu0 0
      %2453 = vmatmul.mubr.bf16.gmra.mxu0 %v2335
      %v2454 = vpop.f32.mrf.mxu0
      %v2455 = vadd.f32 0.0, %v2454
      %v2456 = vpop.f32.mrf.mxu0
      %v2457 = vpop.f32.mrf.mxu0
      %v2458 = vadd.f32 0.0, %v2457
      %v2459 = vpop.f32.mrf.mxu0
      %2460 = vmatprep.mubr.bf16.mxu0 0
      %2461 = vmatmul.mubr.bf16.gmra.mxu0 %v2338
      %v2462 = vpop.f32.mrf.mxu0
      %v2463 = vadd.f32 0.0, %v2462
      %v2464 = vpop.f32.mrf.mxu0
      %v2465 = vpop.f32.mrf.mxu0
      %v2466 = vadd.f32 0.0, %v2465
      %v2467 = vpop.f32.mrf.mxu0
      %2468 = vmatprep.mubr.bf16.mxu0 0
      %2469 = vmatmul.mubr.bf16.gmra.mxu0 %v2341
      %v2470 = vpop.f32.mrf.mxu0
      %v2471 = vadd.f32 0.0, %v2470
      %v2472 = vpop.f32.mrf.mxu0
      %v2473 = vpop.f32.mrf.mxu0
      %v2474 = vadd.f32 0.0, %v2473
      %v2475 = vpop.f32.mrf.mxu0
      %2476 = vmatprep.mubr.bf16.mxu0 0
      %2477 = vmatmul.mubr.bf16.gmra.mxu0 %v2344
      %v2478 = vpop.f32.mrf.mxu0
      %v2479 = vadd.f32 0.0, %v2478
      %v2480 = vpop.f32.mrf.mxu0
      %v2481 = vpop.f32.mrf.mxu0
      %v2482 = vadd.f32 0.0, %v2481
      %v2483 = vpop.f32.mrf.mxu0
      %2484 = vmatprep.mubr.bf16.mxu0 0
      %2485 = vmatmul.mubr.bf16.gmra.mxu0 %v2347
      %v2486 = vpop.f32.mrf.mxu0
      %v2487 = vadd.f32 0.0, %v2486
      %v2488 = vpop.f32.mrf.mxu0
      %v2489 = vpop.f32.mrf.mxu0
      %v2490 = vadd.f32 0.0, %v2489
      %v2491 = vpop.f32.mrf.mxu0
      %2492 = vmatprep.mubr.bf16.mxu0 0
      %2493 = vmatmul.mubr.bf16.gmra.mxu0 %v2350
      %v2494 = vpop.f32.mrf.mxu0
      %v2495 = vadd.f32 0.0, %v2494
      %v2496 = vpop.f32.mrf.mxu0
      %v2497 = vpop.f32.mrf.mxu0
      %v2498 = vadd.f32 0.0, %v2497
      %v2499 = vpop.f32.mrf.mxu0
      %2500 = vmatprep.mubr.bf16.mxu0 0
      %2501 = vmatmul.mubr.bf16.gmra.mxu0 %v2353
      %v2502 = vpop.f32.mrf.mxu0
      %v2503 = vadd.f32 0.0, %v2502
      %v2504 = vpop.f32.mrf.mxu0
      %v2505 = vpop.f32.mrf.mxu0
      %v2506 = vadd.f32 0.0, %v2505
      %v2507 = vpop.f32.mrf.mxu0
      %2508 = vmatprep.mubr.bf16.mxu0 0
      %2509 = vmatmul.mubr.bf16.gmra.mxu0 %v2356
      %v2510 = vpop.f32.mrf.mxu0
      %v2511 = vadd.f32 0.0, %v2510
      %v2512 = vpop.f32.mrf.mxu0
      %v2513 = vpop.f32.mrf.mxu0
      %v2514 = vadd.f32 0.0, %v2513
      %v2515 = vpop.f32.mrf.mxu0
      %2516 = vmatprep.mubr.bf16.mxu0 0
      %2517 = vmatmul.mubr.bf16.gmra.mxu0 %v2359
      %v2518 = vpop.f32.mrf.mxu0
      %v2519 = vadd.f32 0.0, %v2518
      %v2520 = vpop.f32.mrf.mxu0
      %v2521 = vpop.f32.mrf.mxu0
      %v2522 = vadd.f32 0.0, %v2521
      %v2523 = vpop.f32.mrf.mxu0
      %2524 = vdwg.mxu0
      %v2525 = vadd.f32 %v1974, %v2399
      %v2526 = vadd.f32 %v1977, %v2402
      %v2527 = vadd.f32 %v1982, %v2407
      %v2528 = vadd.f32 %v1985, %v2410
      %v2529 = vadd.f32 %v1990, %v2415
      %v2530 = vadd.f32 %v1993, %v2418
      %v2531 = vadd.f32 %v1998, %v2423
      %v2532 = vadd.f32 %v2001, %v2426
      %v2533 = vadd.f32 %v2006, %v2431
      %v2534 = vadd.f32 %v2009, %v2434
      %v2535 = vadd.f32 %v2014, %v2439
      %v2536 = vadd.f32 %v2017, %v2442
      %v2537 = vadd.f32 %v2022, %v2447
      %v2538 = vadd.f32 %v2025, %v2450
      %v2539 = vadd.f32 %v2030, %v2455
      %v2540 = vadd.f32 %v2033, %v2458
      %v2541 = vadd.f32 %v2038, %v2463
      %v2542 = vadd.f32 %v2041, %v2466
      %v2543 = vadd.f32 %v2046, %v2471
      %v2544 = vadd.f32 %v2049, %v2474
      %v2545 = vadd.f32 %v2054, %v2479
      %v2546 = vadd.f32 %v2057, %v2482
      %v2547 = vadd.f32 %v2062, %v2487
      %v2548 = vadd.f32 %v2065, %v2490
      %v2549 = vadd.f32 %v2070, %v2495
      %v2550 = vadd.f32 %v2073, %v2498
      %v2551 = vadd.f32 %v2078, %v2503
      %v2552 = vadd.f32 %v2081, %v2506
      %v2553 = vadd.f32 %v2086, %v2511
      %v2554 = vadd.f32 %v2089, %v2514
      %v2555 = vadd.f32 %v2094, %v2519
      %v2556 = vadd.f32 %v2097, %v2522
      %v2557 = vld [vmem:[%s677] sm:$0xf]
      %v2558 = vld [vmem:[%s677 + $0x4] sm:$0xf]
      %v2559 = vld [vmem:[%s677 + $0xc] sm:$0xf]
      %v2560 = vld [vmem:[%s677 + $0x10] sm:$0xf]
      %v2561 = vld [vmem:[%s677 + $0x18] sm:$0xf]
      %v2562 = vld [vmem:[%s677 + $0x1c] sm:$0xf]
      %v2563 = vld [vmem:[%s677 + $0x24] sm:$0xf]
      %v2564 = vld [vmem:[%s677 + $0x28] sm:$0xf]
      %v2565 = vld [vmem:[%s677 + $0x30] sm:$0xf]
      %v2566 = vld [vmem:[%s677 + $0x34] sm:$0xf]
      %v2567 = vld [vmem:[%s677 + $0x3c] sm:$0xf]
      %v2568 = vld [vmem:[%s677 + $0x40] sm:$0xf]
      %v2569 = vld [vmem:[%s677 + $0x48] sm:$0xf]
      %v2570 = vld [vmem:[%s677 + $0x4c] sm:$0xf]
      %v2571 = vld [vmem:[%s677 + $0x54] sm:$0xf]
      %v2572 = vld [vmem:[%s677 + $0x58] sm:$0xf]
      %v2573 = vld [vmem:[%s677 + $0x60] sm:$0xf]
      %v2574 = vld [vmem:[%s677 + $0x64] sm:$0xf]
      %v2575 = vld [vmem:[%s677 + $0x6c] sm:$0xf]
      %v2576 = vld [vmem:[%s677 + $0x70] sm:$0xf]
      %v2577 = vld [vmem:[%s677 + $0x78] sm:$0xf]
      %v2578 = vld [vmem:[%s677 + $0x7c] sm:$0xf]
      %v2579 = vld [vmem:[%s677 + $0x84] sm:$0xf]
      %v2580 = vld [vmem:[%s677 + $0x88] sm:$0xf]
      %v2581 = vld [vmem:[%s677 + $0x90] sm:$0xf]
      %v2582 = vld [vmem:[%s677 + $0x94] sm:$0xf]
      %v2583 = vld [vmem:[%s677 + $0x9c] sm:$0xf]
      %v2584 = vld [vmem:[%s677 + $0xa0] sm:$0xf]
      %v2585 = vld [vmem:[%s677 + $0xa8] sm:$0xf]
      %v2586 = vld [vmem:[%s677 + $0xac] sm:$0xf]
      %v2587 = vld [vmem:[%s677 + $0xb4] sm:$0xf]
      %v2588 = vld [vmem:[%s677 + $0xb8] sm:$0xf]
      %s2589 = scalar_lea.vmem %s1, 6
      %v2590 = vld [vmem:[%s2589] sm:$0x3]
      %v2623 = vunpack.c.l.b16 %v2557
      %v2624 = vunpack.c.l.b16 %v2558
      %v2625 = vunpack.c.l.b16 %v2559
      %v2626 = vunpack.c.l.b16 %v2560
      %v2627 = vunpack.c.l.b16 %v2561
      %v2628 = vunpack.c.l.b16 %v2562
      %v2629 = vunpack.c.l.b16 %v2563
      %v2630 = vunpack.c.l.b16 %v2564
      %v2631 = vunpack.c.l.b16 %v2565
      %v2632 = vunpack.c.l.b16 %v2566
      %v2633 = vunpack.c.l.b16 %v2567
      %v2634 = vunpack.c.l.b16 %v2568
      %v2635 = vunpack.c.l.b16 %v2569
      %v2636 = vunpack.c.l.b16 %v2570
      %v2637 = vunpack.c.l.b16 %v2571
      %v2638 = vunpack.c.l.b16 %v2572
      %v2639 = vunpack.c.l.b16 %v2573
      %v2640 = vunpack.c.l.b16 %v2574
      %v2641 = vunpack.c.l.b16 %v2575
      %v2642 = vunpack.c.l.b16 %v2576
      %v2643 = vunpack.c.l.b16 %v2577
      %v2644 = vunpack.c.l.b16 %v2578
      %v2645 = vunpack.c.l.b16 %v2579
      %v2646 = vunpack.c.l.b16 %v2580
      %v2647 = vunpack.c.l.b16 %v2581
      %v2648 = vunpack.c.l.b16 %v2582
      %v2649 = vunpack.c.l.b16 %v2583
      %v2650 = vunpack.c.l.b16 %v2584
      %v2651 = vunpack.c.l.b16 %v2585
      %v2652 = vunpack.c.l.b16 %v2586
      %v2653 = vunpack.c.l.b16 %v2587
      %v2654 = vunpack.c.l.b16 %v2588
      %v2655 = vpack.c.b16 %v2624, %v2623
      %v2656 = vpack.c.b16 %v2626, %v2625
      %v2657 = vpack.c.b16 %v2628, %v2627
      %v2658 = vpack.c.b16 %v2630, %v2629
      %v2659 = vpack.c.b16 %v2632, %v2631
      %v2660 = vpack.c.b16 %v2634, %v2633
      %v2661 = vpack.c.b16 %v2636, %v2635
      %v2662 = vpack.c.b16 %v2638, %v2637
      %v2663 = vpack.c.b16 %v2640, %v2639
      %v2664 = vpack.c.b16 %v2642, %v2641
      %v2665 = vpack.c.b16 %v2644, %v2643
      %v2666 = vpack.c.b16 %v2646, %v2645
      %v2667 = vpack.c.b16 %v2648, %v2647
      %v2668 = vpack.c.b16 %v2650, %v2649
      %v2669 = vpack.c.b16 %v2652, %v2651
      %v2670 = vpack.c.b16 %v2654, %v2653
      %v2672 = vsel %vm1594, %v2655, 0
      %v2675 = vsel %vm1594, %v2656, 0
      %v2678 = vsel %vm1594, %v2657, 0
      %v2681 = vsel %vm1594, %v2658, 0
      %v2684 = vsel %vm1594, %v2659, 0
      %v2687 = vsel %vm1594, %v2660, 0
      %v2690 = vsel %vm1594, %v2661, 0
      %v2693 = vsel %vm1594, %v2662, 0
      %v2696 = vsel %vm1594, %v2663, 0
      %v2699 = vsel %vm1594, %v2664, 0
      %v2702 = vsel %vm1594, %v2665, 0
      %v2705 = vsel %vm1594, %v2666, 0
      %v2708 = vsel %vm1594, %v2667, 0
      %v2711 = vsel %vm1594, %v2668, 0
      %v2714 = vsel %vm1594, %v2669, 0
      %v2717 = vsel %vm1594, %v2670, 0
      %v2720 = vsel %vm1643, %v2590, 0
      %2722 = vmatprep.subr.bf16.mxu0 0
      %2723 = vmatpush1.bf16.msra.mxu0 0
      %2724 = vmatprep.subr.bf16.mxu0 0
      %2725 = vmatpush1.bf16.msra.mxu0 0
      %2726 = vmatprep.subr.bf16.mxu0 0
      %2727 = vmatpush1.bf16.msra.mxu0 0
      %2728 = vmatprep.subr.bf16.mxu0 0
      %2729 = vmatpush1.bf16.msra.mxu0 0
      %2730 = vmatprep.subr.bf16.mxu0 0
      %2731 = vmatpush1.bf16.msra.mxu0 0
      %2732 = vmatprep.subr.bf16.mxu0 0
      %2733 = vmatpush1.bf16.msra.mxu0 0
      %2734 = vmatprep.subr.bf16.mxu0 0
      %2735 = vmatpush1.bf16.msra.mxu0 0
      %2736 = vmatprep.subr.bf16.mxu0 0
      %2737 = vmatpush1.bf16.msra.mxu0 %v2720
      %2738 = vmatprep.subr.bf16.mxu0 0
      %2739 = vmatpush2.bf16.msra.mxu0 0
      %2740 = vmatprep.subr.bf16.mxu0 0
      %2741 = vmatpush2.bf16.msra.mxu0 0
      %2742 = vmatprep.subr.bf16.mxu0 0
      %2743 = vmatpush2.bf16.msra.mxu0 0
      %2744 = vmatprep.subr.bf16.mxu0 0
      %2745 = vmatpush2.bf16.msra.mxu0 0
      %2746 = vmatprep.subr.bf16.mxu0 0
      %2747 = vmatpush2.bf16.msra.mxu0 0
      %2748 = vmatprep.subr.bf16.mxu0 0
      %2749 = vmatpush2.bf16.msra.mxu0 0
      %2750 = vmatprep.subr.bf16.mxu0 0
      %2751 = vmatpush2.bf16.msra.mxu0 0
      %2752 = vmatprep.subr.bf16.mxu0 0
      %2753 = vmatpush2.bf16.msra.mxu0 0
      %2754 = vmatprep.mubr.bf16.mxu0 0
      %2755 = vmatmul.mubr.bf16.gmra.mxu0 %v2672
      %v2756 = vpop.f32.mrf.mxu0
      %v2757 = vadd.f32 0.0, %v2756
      %v2758 = vpop.f32.mrf.mxu0
      %v2759 = vpop.f32.mrf.mxu0
      %v2760 = vadd.f32 0.0, %v2759
      %v2761 = vpop.f32.mrf.mxu0
      %2762 = vmatprep.mubr.bf16.mxu0 0
      %2763 = vmatmul.mubr.bf16.gmra.mxu0 %v2675
      %v2764 = vpop.f32.mrf.mxu0
      %v2765 = vadd.f32 0.0, %v2764
      %v2766 = vpop.f32.mrf.mxu0
      %v2767 = vpop.f32.mrf.mxu0
      %v2768 = vadd.f32 0.0, %v2767
      %v2769 = vpop.f32.mrf.mxu0
      %2770 = vmatprep.mubr.bf16.mxu0 0
      %2771 = vmatmul.mubr.bf16.gmra.mxu0 %v2678
      %v2772 = vpop.f32.mrf.mxu0
      %v2773 = vadd.f32 0.0, %v2772
      %v2774 = vpop.f32.mrf.mxu0
      %v2775 = vpop.f32.mrf.mxu0
      %v2776 = vadd.f32 0.0, %v2775
      %v2777 = vpop.f32.mrf.mxu0
      %2778 = vmatprep.mubr.bf16.mxu0 0
      %2779 = vmatmul.mubr.bf16.gmra.mxu0 %v2681
      %v2780 = vpop.f32.mrf.mxu0
      %v2781 = vadd.f32 0.0, %v2780
      %v2782 = vpop.f32.mrf.mxu0
      %v2783 = vpop.f32.mrf.mxu0
      %v2784 = vadd.f32 0.0, %v2783
      %v2785 = vpop.f32.mrf.mxu0
      %2786 = vmatprep.mubr.bf16.mxu0 0
      %2787 = vmatmul.mubr.bf16.gmra.mxu0 %v2684
      %v2788 = vpop.f32.mrf.mxu0
      %v2789 = vadd.f32 0.0, %v2788
      %v2790 = vpop.f32.mrf.mxu0
      %v2791 = vpop.f32.mrf.mxu0
      %v2792 = vadd.f32 0.0, %v2791
      %v2793 = vpop.f32.mrf.mxu0
      %2794 = vmatprep.mubr.bf16.mxu0 0
      %2795 = vmatmul.mubr.bf16.gmra.mxu0 %v2687
      %v2796 = vpop.f32.mrf.mxu0
      %v2797 = vadd.f32 0.0, %v2796
      %v2798 = vpop.f32.mrf.mxu0
      %v2799 = vpop.f32.mrf.mxu0
      %v2800 = vadd.f32 0.0, %v2799
      %v2801 = vpop.f32.mrf.mxu0
      %2802 = vmatprep.mubr.bf16.mxu0 0
      %2803 = vmatmul.mubr.bf16.gmra.mxu0 %v2690
      %v2804 = vpop.f32.mrf.mxu0
      %v2805 = vadd.f32 0.0, %v2804
      %v2806 = vpop.f32.mrf.mxu0
      %v2807 = vpop.f32.mrf.mxu0
      %v2808 = vadd.f32 0.0, %v2807
      %v2809 = vpop.f32.mrf.mxu0
      %2810 = vmatprep.mubr.bf16.mxu0 0
      %2811 = vmatmul.mubr.bf16.gmra.mxu0 %v2693
      %v2812 = vpop.f32.mrf.mxu0
      %v2813 = vadd.f32 0.0, %v2812
      %v2814 = vpop.f32.mrf.mxu0
      %v2815 = vpop.f32.mrf.mxu0
      %v2816 = vadd.f32 0.0, %v2815
      %v2817 = vpop.f32.mrf.mxu0
      %2818 = vmatprep.mubr.bf16.mxu0 0
      %2819 = vmatmul.mubr.bf16.gmra.mxu0 %v2696
      %v2820 = vpop.f32.mrf.mxu0
      %v2821 = vadd.f32 0.0, %v2820
      %v2822 = vpop.f32.mrf.mxu0
      %v2823 = vpop.f32.mrf.mxu0
      %v2824 = vadd.f32 0.0, %v2823
      %v2825 = vpop.f32.mrf.mxu0
      %2826 = vmatprep.mubr.bf16.mxu0 0
      %2827 = vmatmul.mubr.bf16.gmra.mxu0 %v2699
      %v2828 = vpop.f32.mrf.mxu0
      %v2829 = vadd.f32 0.0, %v2828
      %v2830 = vpop.f32.mrf.mxu0
      %v2831 = vpop.f32.mrf.mxu0
      %v2832 = vadd.f32 0.0, %v2831
      %v2833 = vpop.f32.mrf.mxu0
      %2834 = vmatprep.mubr.bf16.mxu0 0
      %2835 = vmatmul.mubr.bf16.gmra.mxu0 %v2702
      %v2836 = vpop.f32.mrf.mxu0
      %v2837 = vadd.f32 0.0, %v2836
      %v2838 = vpop.f32.mrf.mxu0
      %v2839 = vpop.f32.mrf.mxu0
      %v2840 = vadd.f32 0.0, %v2839
      %v2841 = vpop.f32.mrf.mxu0
      %2842 = vmatprep.mubr.bf16.mxu0 0
      %2843 = vmatmul.mubr.bf16.gmra.mxu0 %v2705
      %v2844 = vpop.f32.mrf.mxu0
      %v2845 = vadd.f32 0.0, %v2844
      %v2846 = vpop.f32.mrf.mxu0
      %v2847 = vpop.f32.mrf.mxu0
      %v2848 = vadd.f32 0.0, %v2847
      %v2849 = vpop.f32.mrf.mxu0
      %2850 = vmatprep.mubr.bf16.mxu0 0
      %2851 = vmatmul.mubr.bf16.gmra.mxu0 %v2708
      %v2852 = vpop.f32.mrf.mxu0
      %v2853 = vadd.f32 0.0, %v2852
      %v2854 = vpop.f32.mrf.mxu0
      %v2855 = vpop.f32.mrf.mxu0
      %v2856 = vadd.f32 0.0, %v2855
      %v2857 = vpop.f32.mrf.mxu0
      %2858 = vmatprep.mubr.bf16.mxu0 0
      %2859 = vmatmul.mubr.bf16.gmra.mxu0 %v2711
      %v2860 = vpop.f32.mrf.mxu0
      %v2861 = vadd.f32 0.0, %v2860
      %v2862 = vpop.f32.mrf.mxu0
      %v2863 = vpop.f32.mrf.mxu0
      %v2864 = vadd.f32 0.0, %v2863
      %v2865 = vpop.f32.mrf.mxu0
      %2866 = vmatprep.mubr.bf16.mxu0 0
      %2867 = vmatmul.mubr.bf16.gmra.mxu0 %v2714
      %v2868 = vpop.f32.mrf.mxu0
      %v2869 = vadd.f32 0.0, %v2868
      %v2870 = vpop.f32.mrf.mxu0
      %v2871 = vpop.f32.mrf.mxu0
      %v2872 = vadd.f32 0.0, %v2871
      %v2873 = vpop.f32.mrf.mxu0
      %2874 = vmatprep.mubr.bf16.mxu0 0
      %2875 = vmatmul.mubr.bf16.gmra.mxu0 %v2717
      %v2876 = vpop.f32.mrf.mxu0
      %v2877 = vadd.f32 0.0, %v2876
      %v2878 = vpop.f32.mrf.mxu0
      %v2879 = vpop.f32.mrf.mxu0
      %v2880 = vadd.f32 0.0, %v2879
      %v2881 = vpop.f32.mrf.mxu0
      %2882 = vdwg.mxu0
      %v2883 = vadd.f32 %v2525, %v2757
      %v2884 = vadd.f32 %v2526, %v2760
      %v2885 = vadd.f32 %v2527, %v2765
      %v2886 = vadd.f32 %v2528, %v2768
      %v2887 = vadd.f32 %v2529, %v2773
      %v2888 = vadd.f32 %v2530, %v2776
      %v2889 = vadd.f32 %v2531, %v2781
      %v2890 = vadd.f32 %v2532, %v2784
      %v2891 = vadd.f32 %v2533, %v2789
      %v2892 = vadd.f32 %v2534, %v2792
      %v2893 = vadd.f32 %v2535, %v2797
      %v2894 = vadd.f32 %v2536, %v2800
      %v2895 = vadd.f32 %v2537, %v2805
      %v2896 = vadd.f32 %v2538, %v2808
      %v2897 = vadd.f32 %v2539, %v2813
      %v2898 = vadd.f32 %v2540, %v2816
      %v2899 = vadd.f32 %v2541, %v2821
      %v2900 = vadd.f32 %v2542, %v2824
      %v2901 = vadd.f32 %v2543, %v2829
      %v2902 = vadd.f32 %v2544, %v2832
      %v2903 = vadd.f32 %v2545, %v2837
      %v2904 = vadd.f32 %v2546, %v2840
      %v2905 = vadd.f32 %v2547, %v2845
      %v2906 = vadd.f32 %v2548, %v2848
      %v2907 = vadd.f32 %v2549, %v2853
      %v2908 = vadd.f32 %v2550, %v2856
      %v2909 = vadd.f32 %v2551, %v2861
      %v2910 = vadd.f32 %v2552, %v2864
      %v2911 = vadd.f32 %v2553, %v2869
      %v2912 = vadd.f32 %v2554, %v2872
      %v2913 = vadd.f32 %v2555, %v2877
      %v2914 = vadd.f32 %v2556, %v2880
      %v2915 = vld [vmem:[%s677] sm:$0xf]
      %v2916 = vld [vmem:[%s677 + $0x4] sm:$0xf]
      %v2917 = vld [vmem:[%s677 + $0x8] sm:$0x1]
      %v2918 = vld [vmem:[%s677 + $0xc] sm:$0xf]
      %v2919 = vld [vmem:[%s677 + $0x10] sm:$0xf]
      %v2920 = vld [vmem:[%s677 + $0x14] sm:$0x1]
      %v2921 = vld [vmem:[%s677 + $0x18] sm:$0xf]
      %v2922 = vld [vmem:[%s677 + $0x1c] sm:$0xf]
      %v2923 = vld [vmem:[%s677 + $0x20] sm:$0x1]
      %v2924 = vld [vmem:[%s677 + $0x24] sm:$0xf]
      %v2925 = vld [vmem:[%s677 + $0x28] sm:$0xf]
      %v2926 = vld [vmem:[%s677 + $0x2c] sm:$0x1]
      %v2927 = vld [vmem:[%s677 + $0x30] sm:$0xf]
      %v2928 = vld [vmem:[%s677 + $0x34] sm:$0xf]
      %v2929 = vld [vmem:[%s677 + $0x38] sm:$0x1]
      %v2930 = vld [vmem:[%s677 + $0x3c] sm:$0xf]
      %v2931 = vld [vmem:[%s677 + $0x40] sm:$0xf]
      %v2932 = vld [vmem:[%s677 + $0x44] sm:$0x1]
      %v2933 = vld [vmem:[%s677 + $0x48] sm:$0xf]
      %v2934 = vld [vmem:[%s677 + $0x4c] sm:$0xf]
      %v2935 = vld [vmem:[%s677 + $0x50] sm:$0x1]
      %v2936 = vld [vmem:[%s677 + $0x54] sm:$0xf]
      %v2937 = vld [vmem:[%s677 + $0x58] sm:$0xf]
      %v2938 = vld [vmem:[%s677 + $0x5c] sm:$0x1]
      %v2939 = vld [vmem:[%s677 + $0x60] sm:$0xf]
      %v2940 = vld [vmem:[%s677 + $0x64] sm:$0xf]
      %v2941 = vld [vmem:[%s677 + $0x68] sm:$0x1]
      %v2942 = vld [vmem:[%s677 + $0x6c] sm:$0xf]
      %v2943 = vld [vmem:[%s677 + $0x70] sm:$0xf]
      %v2944 = vld [vmem:[%s677 + $0x74] sm:$0x1]
      %v2945 = vld [vmem:[%s677 + $0x78] sm:$0xf]
      %v2946 = vld [vmem:[%s677 + $0x7c] sm:$0xf]
      %v2947 = vld [vmem:[%s677 + $0x80] sm:$0x1]
      %v2948 = vld [vmem:[%s677 + $0x84] sm:$0xf]
      %v2949 = vld [vmem:[%s677 + $0x88] sm:$0xf]
      %v2950 = vld [vmem:[%s677 + $0x8c] sm:$0x1]
      %v2951 = vld [vmem:[%s677 + $0x90] sm:$0xf]
      %v2952 = vld [vmem:[%s677 + $0x94] sm:$0xf]
      %v2953 = vld [vmem:[%s677 + $0x98] sm:$0x1]
      %v2954 = vld [vmem:[%s677 + $0x9c] sm:$0xf]
      %v2955 = vld [vmem:[%s677 + $0xa0] sm:$0xf]
      %v2956 = vld [vmem:[%s677 + $0xa4] sm:$0x1]
      %v2957 = vld [vmem:[%s677 + $0xa8] sm:$0xf]
      %v2958 = vld [vmem:[%s677 + $0xac] sm:$0xf]
      %v2959 = vld [vmem:[%s677 + $0xb0] sm:$0x1]
      %v2960 = vld [vmem:[%s677 + $0xb4] sm:$0xf]
      %v2961 = vld [vmem:[%s677 + $0xb8] sm:$0xf]
      %v2962 = vld [vmem:[%s677 + $0xbc] sm:$0x1]
      %v2964 = vshrl.u32 %v2915, 16
      %v2966 = vrot.slane %v2964, 4
      %v2967 = vshll.u32 %v2915, 16
      %v2969 = vrot.slane %v2967, 5
      %v2970 = vor.u32 %v2966, %v2969
      %v2971 = vrot.slane %v2970, 4
      %v2973 = vshll.u32 %v2916, 16
      %v2975 = vrot.slane %v2973, 5
      %v2976 = vsel %vm1159, %v2971, %v2975
      %v2977 = vshrl.u32 %v2916, 16
      %v2979 = vrot.slane %v2977, 4
      %v2980 = vor.u32 %v2979, %v2975
      %v2981 = vrot.slane %v2980, 4
      %v2983 = vshll.u32 %v2917, 16
      %v2985 = vrot.slane %v2983, 5
      %v2986 = vsel %vm1159, %v2981, %v2985
      %v2988 = vshrl.u32 %v2918, 16
      %v2990 = vrot.slane %v2988, 4
      %v2991 = vshll.u32 %v2918, 16
      %v2993 = vrot.slane %v2991, 5
      %v2994 = vor.u32 %v2990, %v2993
      %v2995 = vrot.slane %v2994, 4
      %v2997 = vshll.u32 %v2919, 16
      %v2999 = vrot.slane %v2997, 5
      %v3000 = vsel %vm1159, %v2995, %v2999
      %v3001 = vshrl.u32 %v2919, 16
      %v3003 = vrot.slane %v3001, 4
      %v3004 = vor.u32 %v3003, %v2999
      %v3005 = vrot.slane %v3004, 4
      %v3007 = vshll.u32 %v2920, 16
      %v3009 = vrot.slane %v3007, 5
      %v3010 = vsel %vm1159, %v3005, %v3009
      %v3012 = vshrl.u32 %v2921, 16
      %v3014 = vrot.slane %v3012, 4
      %v3015 = vshll.u32 %v2921, 16
      %v3017 = vrot.slane %v3015, 5
      %v3018 = vor.u32 %v3014, %v3017
      %v3019 = vrot.slane %v3018, 4
      %v3021 = vshll.u32 %v2922, 16
      %v3023 = vrot.slane %v3021, 5
      %v3024 = vsel %vm1159, %v3019, %v3023
      %v3025 = vshrl.u32 %v2922, 16
      %v3027 = vrot.slane %v3025, 4
      %v3028 = vor.u32 %v3027, %v3023
      %v3029 = vrot.slane %v3028, 4
      %v3031 = vshll.u32 %v2923, 16
      %v3033 = vrot.slane %v3031, 5
      %v3034 = vsel %vm1159, %v3029, %v3033
      %v3036 = vshrl.u32 %v2924, 16
      %v3038 = vrot.slane %v3036, 4
      %v3039 = vshll.u32 %v2924, 16
      %v3041 = vrot.slane %v3039, 5
      %v3042 = vor.u32 %v3038, %v3041
      %v3043 = vrot.slane %v3042, 4
      %v3045 = vshll.u32 %v2925, 16
      %v3047 = vrot.slane %v3045, 5
      %v3048 = vsel %vm1159, %v3043, %v3047
      %v3049 = vshrl.u32 %v2925, 16
      %v3051 = vrot.slane %v3049, 4
      %v3052 = vor.u32 %v3051, %v3047
      %v3053 = vrot.slane %v3052, 4
      %v3055 = vshll.u32 %v2926, 16
      %v3057 = vrot.slane %v3055, 5
      %v3058 = vsel %vm1159, %v3053, %v3057
      %v3060 = vshrl.u32 %v2927, 16
      %v3062 = vrot.slane %v3060, 4
      %v3063 = vshll.u32 %v2927, 16
      %v3065 = vrot.slane %v3063, 5
      %v3066 = vor.u32 %v3062, %v3065
      %v3067 = vrot.slane %v3066, 4
      %v3069 = vshll.u32 %v2928, 16
      %v3071 = vrot.slane %v3069, 5
      %v3072 = vsel %vm1159, %v3067, %v3071
      %v3073 = vshrl.u32 %v2928, 16
      %v3075 = vrot.slane %v3073, 4
      %v3076 = vor.u32 %v3075, %v3071
      %v3077 = vrot.slane %v3076, 4
      %v3079 = vshll.u32 %v2929, 16
      %v3081 = vrot.slane %v3079, 5
      %v3082 = vsel %vm1159, %v3077, %v3081
      %v3084 = vshrl.u32 %v2930, 16
      %v3086 = vrot.slane %v3084, 4
      %v3087 = vshll.u32 %v2930, 16
      %v3089 = vrot.slane %v3087, 5
      %v3090 = vor.u32 %v3086, %v3089
      %v3091 = vrot.slane %v3090, 4
      %v3093 = vshll.u32 %v2931, 16
      %v3095 = vrot.slane %v3093, 5
      %v3096 = vsel %vm1159, %v3091, %v3095
      %v3097 = vshrl.u32 %v2931, 16
      %v3099 = vrot.slane %v3097, 4
      %v3100 = vor.u32 %v3099, %v3095
      %v3101 = vrot.slane %v3100, 4
      %v3103 = vshll.u32 %v2932, 16
      %v3105 = vrot.slane %v3103, 5
      %v3106 = vsel %vm1159, %v3101, %v3105
      %v3108 = vshrl.u32 %v2933, 16
      %v3110 = vrot.slane %v3108, 4
      %v3111 = vshll.u32 %v2933, 16
      %v3113 = vrot.slane %v3111, 5
      %v3114 = vor.u32 %v3110, %v3113
      %v3115 = vrot.slane %v3114, 4
      %v3117 = vshll.u32 %v2934, 16
      %v3119 = vrot.slane %v3117, 5
      %v3120 = vsel %vm1159, %v3115, %v3119
      %v3121 = vshrl.u32 %v2934, 16
      %v3123 = vrot.slane %v3121, 4
      %v3124 = vor.u32 %v3123, %v3119
      %v3125 = vrot.slane %v3124, 4
      %v3127 = vshll.u32 %v2935, 16
      %v3129 = vrot.slane %v3127, 5
      %v3130 = vsel %vm1159, %v3125, %v3129
      %v3132 = vshrl.u32 %v2936, 16
      %v3134 = vrot.slane %v3132, 4
      %v3135 = vshll.u32 %v2936, 16
      %v3137 = vrot.slane %v3135, 5
      %v3138 = vor.u32 %v3134, %v3137
      %v3139 = vrot.slane %v3138, 4
      %v3141 = vshll.u32 %v2937, 16
      %v3143 = vrot.slane %v3141, 5
      %v3144 = vsel %vm1159, %v3139, %v3143
      %v3145 = vshrl.u32 %v2937, 16
      %v3147 = vrot.slane %v3145, 4
      %v3148 = vor.u32 %v3147, %v3143
      %v3149 = vrot.slane %v3148, 4
      %v3151 = vshll.u32 %v2938, 16
      %v3153 = vrot.slane %v3151, 5
      %v3154 = vsel %vm1159, %v3149, %v3153
      %v3156 = vshrl.u32 %v2939, 16
      %v3158 = vrot.slane %v3156, 4
      %v3159 = vshll.u32 %v2939, 16
      %v3161 = vrot.slane %v3159, 5
      %v3162 = vor.u32 %v3158, %v3161
      %v3163 = vrot.slane %v3162, 4
      %v3165 = vshll.u32 %v2940, 16
      %v3167 = vrot.slane %v3165, 5
      %v3168 = vsel %vm1159, %v3163, %v3167
      %v3169 = vshrl.u32 %v2940, 16
      %v3171 = vrot.slane %v3169, 4
      %v3172 = vor.u32 %v3171, %v3167
      %v3173 = vrot.slane %v3172, 4
      %v3175 = vshll.u32 %v2941, 16
      %v3177 = vrot.slane %v3175, 5
      %v3178 = vsel %vm1159, %v3173, %v3177
      %v3180 = vshrl.u32 %v2942, 16
      %v3182 = vrot.slane %v3180, 4
      %v3183 = vshll.u32 %v2942, 16
      %v3185 = vrot.slane %v3183, 5
      %v3186 = vor.u32 %v3182, %v3185
      %v3187 = vrot.slane %v3186, 4
      %v3189 = vshll.u32 %v2943, 16
      %v3191 = vrot.slane %v3189, 5
      %v3192 = vsel %vm1159, %v3187, %v3191
      %v3193 = vshrl.u32 %v2943, 16
      %v3195 = vrot.slane %v3193, 4
      %v3196 = vor.u32 %v3195, %v3191
      %v3197 = vrot.slane %v3196, 4
      %v3199 = vshll.u32 %v2944, 16
      %v3201 = vrot.slane %v3199, 5
      %v3202 = vsel %vm1159, %v3197, %v3201
      %v3204 = vshrl.u32 %v2945, 16
      %v3206 = vrot.slane %v3204, 4
      %v3207 = vshll.u32 %v2945, 16
      %v3209 = vrot.slane %v3207, 5
      %v3210 = vor.u32 %v3206, %v3209
      %v3211 = vrot.slane %v3210, 4
      %v3213 = vshll.u32 %v2946, 16
      %v3215 = vrot.slane %v3213, 5
      %v3216 = vsel %vm1159, %v3211, %v3215
      %v3217 = vshrl.u32 %v2946, 16
      %v3219 = vrot.slane %v3217, 4
      %v3220 = vor.u32 %v3219, %v3215
      %v3221 = vrot.slane %v3220, 4
      %v3223 = vshll.u32 %v2947, 16
      %v3225 = vrot.slane %v3223, 5
      %v3226 = vsel %vm1159, %v3221, %v3225
      %v3228 = vshrl.u32 %v2948, 16
      %v3230 = vrot.slane %v3228, 4
      %v3231 = vshll.u32 %v2948, 16
      %v3233 = vrot.slane %v3231, 5
      %v3234 = vor.u32 %v3230, %v3233
      %v3235 = vrot.slane %v3234, 4
      %v3237 = vshll.u32 %v2949, 16
      %v3239 = vrot.slane %v3237, 5
      %v3240 = vsel %vm1159, %v3235, %v3239
      %v3241 = vshrl.u32 %v2949, 16
      %v3243 = vrot.slane %v3241, 4
      %v3244 = vor.u32 %v3243, %v3239
      %v3245 = vrot.slane %v3244, 4
      %v3247 = vshll.u32 %v2950, 16
      %v3249 = vrot.slane %v3247, 5
      %v3250 = vsel %vm1159, %v3245, %v3249
      %v3252 = vshrl.u32 %v2951, 16
      %v3254 = vrot.slane %v3252, 4
      %v3255 = vshll.u32 %v2951, 16
      %v3257 = vrot.slane %v3255, 5
      %v3258 = vor.u32 %v3254, %v3257
      %v3259 = vrot.slane %v3258, 4
      %v3261 = vshll.u32 %v2952, 16
      %v3263 = vrot.slane %v3261, 5
      %v3264 = vsel %vm1159, %v3259, %v3263
      %v3265 = vshrl.u32 %v2952, 16
      %v3267 = vrot.slane %v3265, 4
      %v3268 = vor.u32 %v3267, %v3263
      %v3269 = vrot.slane %v3268, 4
      %v3271 = vshll.u32 %v2953, 16
      %v3273 = vrot.slane %v3271, 5
      %v3274 = vsel %vm1159, %v3269, %v3273
      %v3276 = vshrl.u32 %v2954, 16
      %v3278 = vrot.slane %v3276, 4
      %v3279 = vshll.u32 %v2954, 16
      %v3281 = vrot.slane %v3279, 5
      %v3282 = vor.u32 %v3278, %v3281
      %v3283 = vrot.slane %v3282, 4
      %v3285 = vshll.u32 %v2955, 16
      %v3287 = vrot.slane %v3285, 5
      %v3288 = vsel %vm1159, %v3283, %v3287
      %v3289 = vshrl.u32 %v2955, 16
      %v3291 = vrot.slane %v3289, 4
      %v3292 = vor.u32 %v3291, %v3287
      %v3293 = vrot.slane %v3292, 4
      %v3295 = vshll.u32 %v2956, 16
      %v3297 = vrot.slane %v3295, 5
      %v3298 = vsel %vm1159, %v3293, %v3297
      %v3300 = vshrl.u32 %v2957, 16
      %v3302 = vrot.slane %v3300, 4
      %v3303 = vshll.u32 %v2957, 16
      %v3305 = vrot.slane %v3303, 5
      %v3306 = vor.u32 %v3302, %v3305
      %v3307 = vrot.slane %v3306, 4
      %v3309 = vshll.u32 %v2958, 16
      %v3311 = vrot.slane %v3309, 5
      %v3312 = vsel %vm1159, %v3307, %v3311
      %v3313 = vshrl.u32 %v2958, 16
      %v3315 = vrot.slane %v3313, 4
      %v3316 = vor.u32 %v3315, %v3311
      %v3317 = vrot.slane %v3316, 4
      %v3319 = vshll.u32 %v2959, 16
      %v3321 = vrot.slane %v3319, 5
      %v3322 = vsel %vm1159, %v3317, %v3321
      %v3324 = vshrl.u32 %v2960, 16
      %v3326 = vrot.slane %v3324, 4
      %v3327 = vshll.u32 %v2960, 16
      %v3329 = vrot.slane %v3327, 5
      %v3330 = vor.u32 %v3326, %v3329
      %v3331 = vrot.slane %v3330, 4
      %v3333 = vshll.u32 %v2961, 16
      %v3335 = vrot.slane %v3333, 5
      %v3336 = vsel %vm1159, %v3331, %v3335
      %v3337 = vshrl.u32 %v2961, 16
      %v3339 = vrot.slane %v3337, 4
      %v3340 = vor.u32 %v3339, %v3335
      %v3341 = vrot.slane %v3340, 4
      %v3343 = vshll.u32 %v2962, 16
      %v3345 = vrot.slane %v3343, 5
      %v3346 = vsel %vm1159, %v3341, %v3345
      %s3347 = scalar_lea.vmem %s1, 8
      %v3348 = vld [vmem:[%s3347] sm:$0x3]
      %v3349 = vunpack.c.l.b16 %v2976
      %v3350 = vunpack.c.l.b16 %v2986
      %v3351 = vunpack.c.l.b16 %v3000
      %v3352 = vunpack.c.l.b16 %v3010
      %v3353 = vunpack.c.l.b16 %v3024
      %v3354 = vunpack.c.l.b16 %v3034
      %v3355 = vunpack.c.l.b16 %v3048
      %v3356 = vunpack.c.l.b16 %v3058
      %v3357 = vunpack.c.l.b16 %v3072
      %v3358 = vunpack.c.l.b16 %v3082
      %v3359 = vunpack.c.l.b16 %v3096
      %v3360 = vunpack.c.l.b16 %v3106
      %v3361 = vunpack.c.l.b16 %v3120
      %v3362 = vunpack.c.l.b16 %v3130
      %v3363 = vunpack.c.l.b16 %v3144
      %v3364 = vunpack.c.l.b16 %v3154
      %v3365 = vunpack.c.l.b16 %v3168
      %v3366 = vunpack.c.l.b16 %v3178
      %v3367 = vunpack.c.l.b16 %v3192
      %v3368 = vunpack.c.l.b16 %v3202
      %v3369 = vunpack.c.l.b16 %v3216
      %v3370 = vunpack.c.l.b16 %v3226
      %v3371 = vunpack.c.l.b16 %v3240
      %v3372 = vunpack.c.l.b16 %v3250
      %v3373 = vunpack.c.l.b16 %v3264
      %v3374 = vunpack.c.l.b16 %v3274
      %v3375 = vunpack.c.l.b16 %v3288
      %v3376 = vunpack.c.l.b16 %v3298
      %v3377 = vunpack.c.l.b16 %v3312
      %v3378 = vunpack.c.l.b16 %v3322
      %v3379 = vunpack.c.l.b16 %v3336
      %v3380 = vunpack.c.l.b16 %v3346
      %v3381 = vpack.c.b16 %v3350, %v3349
      %v3382 = vpack.c.b16 %v3352, %v3351
      %v3383 = vpack.c.b16 %v3354, %v3353
      %v3384 = vpack.c.b16 %v3356, %v3355
      %v3385 = vpack.c.b16 %v3358, %v3357
      %v3386 = vpack.c.b16 %v3360, %v3359
      %v3387 = vpack.c.b16 %v3362, %v3361
      %v3388 = vpack.c.b16 %v3364, %v3363
      %v3389 = vpack.c.b16 %v3366, %v3365
      %v3390 = vpack.c.b16 %v3368, %v3367
      %v3391 = vpack.c.b16 %v3370, %v3369
      %v3392 = vpack.c.b16 %v3372, %v3371
      %v3393 = vpack.c.b16 %v3374, %v3373
      %v3394 = vpack.c.b16 %v3376, %v3375
      %v3395 = vpack.c.b16 %v3378, %v3377
      %v3396 = vpack.c.b16 %v3380, %v3379
      %v3398 = vsel %vm1594, %v3381, 0
      %v3401 = vsel %vm1594, %v3382, 0
      %v3404 = vsel %vm1594, %v3383, 0
      %v3407 = vsel %vm1594, %v3384, 0
      %v3410 = vsel %vm1594, %v3385, 0
      %v3413 = vsel %vm1594, %v3386, 0
      %v3416 = vsel %vm1594, %v3387, 0
      %v3419 = vsel %vm1594, %v3388, 0
      %v3422 = vsel %vm1594, %v3389, 0
      %v3425 = vsel %vm1594, %v3390, 0
      %v3428 = vsel %vm1594, %v3391, 0
      %v3431 = vsel %vm1594, %v3392, 0
      %v3434 = vsel %vm1594, %v3393, 0
      %v3437 = vsel %vm1594, %v3394, 0
      %v3440 = vsel %vm1594, %v3395, 0
      %v3443 = vsel %vm1594, %v3396, 0
      %v3446 = vsel %vm1643, %v3348, 0
      %3448 = vmatprep.subr.bf16.mxu0 0
      %3449 = vmatpush1.bf16.msra.mxu0 0
      %3450 = vmatprep.subr.bf16.mxu0 0
      %3451 = vmatpush1.bf16.msra.mxu0 0
      %3452 = vmatprep.subr.bf16.mxu0 0
      %3453 = vmatpush1.bf16.msra.mxu0 0
      %3454 = vmatprep.subr.bf16.mxu0 0
      %3455 = vmatpush1.bf16.msra.mxu0 0
      %3456 = vmatprep.subr.bf16.mxu0 0
      %3457 = vmatpush1.bf16.msra.mxu0 0
      %3458 = vmatprep.subr.bf16.mxu0 0
      %3459 = vmatpush1.bf16.msra.mxu0 0
      %3460 = vmatprep.subr.bf16.mxu0 0
      %3461 = vmatpush1.bf16.msra.mxu0 0
      %3462 = vmatprep.subr.bf16.mxu0 0
      %3463 = vmatpush1.bf16.msra.mxu0 %v3446
      %3464 = vmatprep.subr.bf16.mxu0 0
      %3465 = vmatpush2.bf16.msra.mxu0 0
      %3466 = vmatprep.subr.bf16.mxu0 0
      %3467 = vmatpush2.bf16.msra.mxu0 0
      %3468 = vmatprep.subr.bf16.mxu0 0
      %3469 = vmatpush2.bf16.msra.mxu0 0
      %3470 = vmatprep.subr.bf16.mxu0 0
      %3471 = vmatpush2.bf16.msra.mxu0 0
      %3472 = vmatprep.subr.bf16.mxu0 0
      %3473 = vmatpush2.bf16.msra.mxu0 0
      %3474 = vmatprep.subr.bf16.mxu0 0
      %3475 = vmatpush2.bf16.msra.mxu0 0
      %3476 = vmatprep.subr.bf16.mxu0 0
      %3477 = vmatpush2.bf16.msra.mxu0 0
      %3478 = vmatprep.subr.bf16.mxu0 0
      %3479 = vmatpush2.bf16.msra.mxu0 0
      %3480 = vmatprep.mubr.bf16.mxu0 0
      %3481 = vmatmul.mubr.bf16.gmra.mxu0 %v3398
      %v3482 = vpop.f32.mrf.mxu0
      %v3483 = vadd.f32 0.0, %v3482
      %v3484 = vpop.f32.mrf.mxu0
      %v3485 = vpop.f32.mrf.mxu0
      %v3486 = vadd.f32 0.0, %v3485
      %v3487 = vpop.f32.mrf.mxu0
      %3488 = vmatprep.mubr.bf16.mxu0 0
      %3489 = vmatmul.mubr.bf16.gmra.mxu0 %v3401
      %v3490 = vpop.f32.mrf.mxu0
      %v3491 = vadd.f32 0.0, %v3490
      %v3492 = vpop.f32.mrf.mxu0
      %v3493 = vpop.f32.mrf.mxu0
      %v3494 = vadd.f32 0.0, %v3493
      %v3495 = vpop.f32.mrf.mxu0
      %3496 = vmatprep.mubr.bf16.mxu0 0
      %3497 = vmatmul.mubr.bf16.gmra.mxu0 %v3404
      %v3498 = vpop.f32.mrf.mxu0
      %v3499 = vadd.f32 0.0, %v3498
      %v3500 = vpop.f32.mrf.mxu0
      %v3501 = vpop.f32.mrf.mxu0
      %v3502 = vadd.f32 0.0, %v3501
      %v3503 = vpop.f32.mrf.mxu0
      %3504 = vmatprep.mubr.bf16.mxu0 0
      %3505 = vmatmul.mubr.bf16.gmra.mxu0 %v3407
      %v3506 = vpop.f32.mrf.mxu0
      %v3507 = vadd.f32 0.0, %v3506
      %v3508 = vpop.f32.mrf.mxu0
      %v3509 = vpop.f32.mrf.mxu0
      %v3510 = vadd.f32 0.0, %v3509
      %v3511 = vpop.f32.mrf.mxu0
      %3512 = vmatprep.mubr.bf16.mxu0 0
      %3513 = vmatmul.mubr.bf16.gmra.mxu0 %v3410
      %v3514 = vpop.f32.mrf.mxu0
      %v3515 = vadd.f32 0.0, %v3514
      %v3516 = vpop.f32.mrf.mxu0
      %v3517 = vpop.f32.mrf.mxu0
      %v3518 = vadd.f32 0.0, %v3517
      %v3519 = vpop.f32.mrf.mxu0
      %3520 = vmatprep.mubr.bf16.mxu0 0
      %3521 = vmatmul.mubr.bf16.gmra.mxu0 %v3413
      %v3522 = vpop.f32.mrf.mxu0
      %v3523 = vadd.f32 0.0, %v3522
      %v3524 = vpop.f32.mrf.mxu0
      %v3525 = vpop.f32.mrf.mxu0
      %v3526 = vadd.f32 0.0, %v3525
      %v3527 = vpop.f32.mrf.mxu0
      %3528 = vmatprep.mubr.bf16.mxu0 0
      %3529 = vmatmul.mubr.bf16.gmra.mxu0 %v3416
      %v3530 = vpop.f32.mrf.mxu0
      %v3531 = vadd.f32 0.0, %v3530
      %v3532 = vpop.f32.mrf.mxu0
      %v3533 = vpop.f32.mrf.mxu0
      %v3534 = vadd.f32 0.0, %v3533
      %v3535 = vpop.f32.mrf.mxu0
      %3536 = vmatprep.mubr.bf16.mxu0 0
      %3537 = vmatmul.mubr.bf16.gmra.mxu0 %v3419
      %v3538 = vpop.f32.mrf.mxu0
      %v3539 = vadd.f32 0.0, %v3538
      %v3540 = vpop.f32.mrf.mxu0
      %v3541 = vpop.f32.mrf.mxu0
      %v3542 = vadd.f32 0.0, %v3541
      %v3543 = vpop.f32.mrf.mxu0
      %3544 = vmatprep.mubr.bf16.mxu0 0
      %3545 = vmatmul.mubr.bf16.gmra.mxu0 %v3422
      %v3546 = vpop.f32.mrf.mxu0
      %v3547 = vadd.f32 0.0, %v3546
      %v3548 = vpop.f32.mrf.mxu0
      %v3549 = vpop.f32.mrf.mxu0
      %v3550 = vadd.f32 0.0, %v3549
      %v3551 = vpop.f32.mrf.mxu0
      %3552 = vmatprep.mubr.bf16.mxu0 0
      %3553 = vmatmul.mubr.bf16.gmra.mxu0 %v3425
      %v3554 = vpop.f32.mrf.mxu0
      %v3555 = vadd.f32 0.0, %v3554
      %v3556 = vpop.f32.mrf.mxu0
      %v3557 = vpop.f32.mrf.mxu0
      %v3558 = vadd.f32 0.0, %v3557
      %v3559 = vpop.f32.mrf.mxu0
      %3560 = vmatprep.mubr.bf16.mxu0 0
      %3561 = vmatmul.mubr.bf16.gmra.mxu0 %v3428
      %v3562 = vpop.f32.mrf.mxu0
      %v3563 = vadd.f32 0.0, %v3562
      %v3564 = vpop.f32.mrf.mxu0
      %v3565 = vpop.f32.mrf.mxu0
      %v3566 = vadd.f32 0.0, %v3565
      %v3567 = vpop.f32.mrf.mxu0
      %3568 = vmatprep.mubr.bf16.mxu0 0
      %3569 = vmatmul.mubr.bf16.gmra.mxu0 %v3431
      %v3570 = vpop.f32.mrf.mxu0
      %v3571 = vadd.f32 0.0, %v3570
      %v3572 = vpop.f32.mrf.mxu0
      %v3573 = vpop.f32.mrf.mxu0
      %v3574 = vadd.f32 0.0, %v3573
      %v3575 = vpop.f32.mrf.mxu0
      %3576 = vmatprep.mubr.bf16.mxu0 0
      %3577 = vmatmul.mubr.bf16.gmra.mxu0 %v3434
      %v3578 = vpop.f32.mrf.mxu0
      %v3579 = vadd.f32 0.0, %v3578
      %v3580 = vpop.f32.mrf.mxu0
      %v3581 = vpop.f32.mrf.mxu0
      %v3582 = vadd.f32 0.0, %v3581
      %v3583 = vpop.f32.mrf.mxu0
      %3584 = vmatprep.mubr.bf16.mxu0 0
      %3585 = vmatmul.mubr.bf16.gmra.mxu0 %v3437
      %v3586 = vpop.f32.mrf.mxu0
      %v3587 = vadd.f32 0.0, %v3586
      %v3588 = vpop.f32.mrf.mxu0
      %v3589 = vpop.f32.mrf.mxu0
      %v3590 = vadd.f32 0.0, %v3589
      %v3591 = vpop.f32.mrf.mxu0
      %3592 = vmatprep.mubr.bf16.mxu0 0
      %3593 = vmatmul.mubr.bf16.gmra.mxu0 %v3440
      %v3594 = vpop.f32.mrf.mxu0
      %v3595 = vadd.f32 0.0, %v3594
      %v3596 = vpop.f32.mrf.mxu0
      %v3597 = vpop.f32.mrf.mxu0
      %v3598 = vadd.f32 0.0, %v3597
      %v3599 = vpop.f32.mrf.mxu0
      %3600 = vmatprep.mubr.bf16.mxu0 0
      %3601 = vmatmul.mubr.bf16.gmra.mxu0 %v3443
      %v3602 = vpop.f32.mrf.mxu0
      %v3603 = vadd.f32 0.0, %v3602
      %v3604 = vpop.f32.mrf.mxu0
      %v3605 = vpop.f32.mrf.mxu0
      %v3606 = vadd.f32 0.0, %v3605
      %v3607 = vpop.f32.mrf.mxu0
      %3608 = vdwg.mxu0
      %v3609 = vadd.f32 %v2883, %v3483
      %v3610 = vadd.f32 %v2884, %v3486
      %v3611 = vadd.f32 %v2885, %v3491
      %v3612 = vadd.f32 %v2886, %v3494
      %v3613 = vadd.f32 %v2887, %v3499
      %v3614 = vadd.f32 %v2888, %v3502
      %v3615 = vadd.f32 %v2889, %v3507
      %v3616 = vadd.f32 %v2890, %v3510
      %v3617 = vadd.f32 %v2891, %v3515
      %v3618 = vadd.f32 %v2892, %v3518
      %v3619 = vadd.f32 %v2893, %v3523
      %v3620 = vadd.f32 %v2894, %v3526
      %v3621 = vadd.f32 %v2895, %v3531
      %v3622 = vadd.f32 %v2896, %v3534
      %v3623 = vadd.f32 %v2897, %v3539
      %v3624 = vadd.f32 %v2898, %v3542
      %v3625 = vadd.f32 %v2899, %v3547
      %v3626 = vadd.f32 %v2900, %v3550
      %v3627 = vadd.f32 %v2901, %v3555
      %v3628 = vadd.f32 %v2902, %v3558
      %v3629 = vadd.f32 %v2903, %v3563
      %v3630 = vadd.f32 %v2904, %v3566
      %v3631 = vadd.f32 %v2905, %v3571
      %v3632 = vadd.f32 %v2906, %v3574
      %v3633 = vadd.f32 %v2907, %v3579
      %v3634 = vadd.f32 %v2908, %v3582
      %v3635 = vadd.f32 %v2909, %v3587
      %v3636 = vadd.f32 %v2910, %v3590
      %v3637 = vadd.f32 %v2911, %v3595
      %v3638 = vadd.f32 %v2912, %v3598
      %v3639 = vadd.f32 %v2913, %v3603
      %v3640 = vadd.f32 %v2914, %v3606
      %v3641 = vld [vmem:[%s677] sm:$0xe]
      %v3642 = vld [vmem:[%s677 + $0xc] sm:$0xe]
      %v3643 = vld [vmem:[%s677 + $0x18] sm:$0xe]
      %v3644 = vld [vmem:[%s677 + $0x24] sm:$0xe]
      %v3645 = vld [vmem:[%s677 + $0x30] sm:$0xe]
      %v3646 = vld [vmem:[%s677 + $0x3c] sm:$0xe]
      %v3647 = vld [vmem:[%s677 + $0x48] sm:$0xe]
      %v3648 = vld [vmem:[%s677 + $0x54] sm:$0xe]
      %v3649 = vld [vmem:[%s677 + $0x60] sm:$0xe]
      %v3650 = vld [vmem:[%s677 + $0x6c] sm:$0xe]
      %v3651 = vld [vmem:[%s677 + $0x78] sm:$0xe]
      %v3652 = vld [vmem:[%s677 + $0x84] sm:$0xe]
      %v3653 = vld [vmem:[%s677 + $0x90] sm:$0xe]
      %v3654 = vld [vmem:[%s677 + $0x9c] sm:$0xe]
      %v3655 = vld [vmem:[%s677 + $0xa8] sm:$0xe]
      %v3656 = vld [vmem:[%s677 + $0xb4] sm:$0xe]
      %v3705 = vrot.slane %v3641, 5
      %v3706 = vrot.slane %v3705, 4
      %v3707 = vrot.slane %v2916, 5
      %v3708 = vsel %vm2150, %v3706, %v3707
      %v3709 = vrot.slane %v3707, 4
      %v3710 = vrot.slane %v2917, 5
      %v3711 = vsel %vm2150, %v3709, %v3710
      %v3712 = vrot.slane %v3642, 5
      %v3713 = vrot.slane %v3712, 4
      %v3714 = vrot.slane %v2919, 5
      %v3715 = vsel %vm2150, %v3713, %v3714
      %v3716 = vrot.slane %v3714, 4
      %v3717 = vrot.slane %v2920, 5
      %v3718 = vsel %vm2150, %v3716, %v3717
      %v3719 = vrot.slane %v3643, 5
      %v3720 = vrot.slane %v3719, 4
      %v3721 = vrot.slane %v2922, 5
      %v3722 = vsel %vm2150, %v3720, %v3721
      %v3723 = vrot.slane %v3721, 4
      %v3724 = vrot.slane %v2923, 5
      %v3725 = vsel %vm2150, %v3723, %v3724
      %v3726 = vrot.slane %v3644, 5
      %v3727 = vrot.slane %v3726, 4
      %v3728 = vrot.slane %v2925, 5
      %v3729 = vsel %vm2150, %v3727, %v3728
      %v3730 = vrot.slane %v3728, 4
      %v3731 = vrot.slane %v2926, 5
      %v3732 = vsel %vm2150, %v3730, %v3731
      %v3733 = vrot.slane %v3645, 5
      %v3734 = vrot.slane %v3733, 4
      %v3735 = vrot.slane %v2928, 5
      %v3736 = vsel %vm2150, %v3734, %v3735
      %v3737 = vrot.slane %v3735, 4
      %v3738 = vrot.slane %v2929, 5
      %v3739 = vsel %vm2150, %v3737, %v3738
      %v3740 = vrot.slane %v3646, 5
      %v3741 = vrot.slane %v3740, 4
      %v3742 = vrot.slane %v2931, 5
      %v3743 = vsel %vm2150, %v3741, %v3742
      %v3744 = vrot.slane %v3742, 4
      %v3745 = vrot.slane %v2932, 5
      %v3746 = vsel %vm2150, %v3744, %v3745
      %v3747 = vrot.slane %v3647, 5
      %v3748 = vrot.slane %v3747, 4
      %v3749 = vrot.slane %v2934, 5
      %v3750 = vsel %vm2150, %v3748, %v3749
      %v3751 = vrot.slane %v3749, 4
      %v3752 = vrot.slane %v2935, 5
      %v3753 = vsel %vm2150, %v3751, %v3752
      %v3754 = vrot.slane %v3648, 5
      %v3755 = vrot.slane %v3754, 4
      %v3756 = vrot.slane %v2937, 5
      %v3757 = vsel %vm2150, %v3755, %v3756
      %v3758 = vrot.slane %v3756, 4
      %v3759 = vrot.slane %v2938, 5
      %v3760 = vsel %vm2150, %v3758, %v3759
      %v3761 = vrot.slane %v3649, 5
      %v3762 = vrot.slane %v3761, 4
      %v3763 = vrot.slane %v2940, 5
      %v3764 = vsel %vm2150, %v3762, %v3763
      %v3765 = vrot.slane %v3763, 4
      %v3766 = vrot.slane %v2941, 5
      %v3767 = vsel %vm2150, %v3765, %v3766
      %v3768 = vrot.slane %v3650, 5
      %v3769 = vrot.slane %v3768, 4
      %v3770 = vrot.slane %v2943, 5
      %v3771 = vsel %vm2150, %v3769, %v3770
      %v3772 = vrot.slane %v3770, 4
      %v3773 = vrot.slane %v2944, 5
      %v3774 = vsel %vm2150, %v3772, %v3773
      %v3775 = vrot.slane %v3651, 5
      %v3776 = vrot.slane %v3775, 4
      %v3777 = vrot.slane %v2946, 5
      %v3778 = vsel %vm2150, %v3776, %v3777
      %v3779 = vrot.slane %v3777, 4
      %v3780 = vrot.slane %v2947, 5
      %v3781 = vsel %vm2150, %v3779, %v3780
      %v3782 = vrot.slane %v3652, 5
      %v3783 = vrot.slane %v3782, 4
      %v3784 = vrot.slane %v2949, 5
      %v3785 = vsel %vm2150, %v3783, %v3784
      %v3786 = vrot.slane %v3784, 4
      %v3787 = vrot.slane %v2950, 5
      %v3788 = vsel %vm2150, %v3786, %v3787
      %v3789 = vrot.slane %v3653, 5
      %v3790 = vrot.slane %v3789, 4
      %v3791 = vrot.slane %v2952, 5
      %v3792 = vsel %vm2150, %v3790, %v3791
      %v3793 = vrot.slane %v3791, 4
      %v3794 = vrot.slane %v2953, 5
      %v3795 = vsel %vm2150, %v3793, %v3794
      %v3796 = vrot.slane %v3654, 5
      %v3797 = vrot.slane %v3796, 4
      %v3798 = vrot.slane %v2955, 5
      %v3799 = vsel %vm2150, %v3797, %v3798
      %v3800 = vrot.slane %v3798, 4
      %v3801 = vrot.slane %v2956, 5
      %v3802 = vsel %vm2150, %v3800, %v3801
      %v3803 = vrot.slane %v3655, 5
      %v3804 = vrot.slane %v3803, 4
      %v3805 = vrot.slane %v2958, 5
      %v3806 = vsel %vm2150, %v3804, %v3805
      %v3807 = vrot.slane %v3805, 4
      %v3808 = vrot.slane %v2959, 5
      %v3809 = vsel %vm2150, %v3807, %v3808
      %v3810 = vrot.slane %v3656, 5
      %v3811 = vrot.slane %v3810, 4
      %v3812 = vrot.slane %v2961, 5
      %v3813 = vsel %vm2150, %v3811, %v3812
      %v3814 = vrot.slane %v3812, 4
      %v3815 = vrot.slane %v2962, 5
      %v3816 = vsel %vm2150, %v3814, %v3815
      %s3817 = scalar_lea.vmem %s1, 10
      %v3818 = vld [vmem:[%s3817] sm:$0x3]
      %v3819 = vunpack.c.l.b16 %v3708
      %v3820 = vunpack.c.l.b16 %v3711
      %v3821 = vunpack.c.l.b16 %v3715
      %v3822 = vunpack.c.l.b16 %v3718
      %v3823 = vunpack.c.l.b16 %v3722
      %v3824 = vunpack.c.l.b16 %v3725
      %v3825 = vunpack.c.l.b16 %v3729
      %v3826 = vunpack.c.l.b16 %v3732
      %v3827 = vunpack.c.l.b16 %v3736
      %v3828 = vunpack.c.l.b16 %v3739
      %v3829 = vunpack.c.l.b16 %v3743
      %v3830 = vunpack.c.l.b16 %v3746
      %v3831 = vunpack.c.l.b16 %v3750
      %v3832 = vunpack.c.l.b16 %v3753
      %v3833 = vunpack.c.l.b16 %v3757
      %v3834 = vunpack.c.l.b16 %v3760
      %v3835 = vunpack.c.l.b16 %v3764
      %v3836 = vunpack.c.l.b16 %v3767
      %v3837 = vunpack.c.l.b16 %v3771
      %v3838 = vunpack.c.l.b16 %v3774
      %v3839 = vunpack.c.l.b16 %v3778
      %v3840 = vunpack.c.l.b16 %v3781
      %v3841 = vunpack.c.l.b16 %v3785
      %v3842 = vunpack.c.l.b16 %v3788
      %v3843 = vunpack.c.l.b16 %v3792
      %v3844 = vunpack.c.l.b16 %v3795
      %v3845 = vunpack.c.l.b16 %v3799
      %v3846 = vunpack.c.l.b16 %v3802
      %v3847 = vunpack.c.l.b16 %v3806
      %v3848 = vunpack.c.l.b16 %v3809
      %v3849 = vunpack.c.l.b16 %v3813
      %v3850 = vunpack.c.l.b16 %v3816
      %v3851 = vpack.c.b16 %v3820, %v3819
      %v3852 = vpack.c.b16 %v3822, %v3821
      %v3853 = vpack.c.b16 %v3824, %v3823
      %v3854 = vpack.c.b16 %v3826, %v3825
      %v3855 = vpack.c.b16 %v3828, %v3827
      %v3856 = vpack.c.b16 %v3830, %v3829
      %v3857 = vpack.c.b16 %v3832, %v3831
      %v3858 = vpack.c.b16 %v3834, %v3833
      %v3859 = vpack.c.b16 %v3836, %v3835
      %v3860 = vpack.c.b16 %v3838, %v3837
      %v3861 = vpack.c.b16 %v3840, %v3839
      %v3862 = vpack.c.b16 %v3842, %v3841
      %v3863 = vpack.c.b16 %v3844, %v3843
      %v3864 = vpack.c.b16 %v3846, %v3845
      %v3865 = vpack.c.b16 %v3848, %v3847
      %v3866 = vpack.c.b16 %v3850, %v3849
      %v3868 = vsel %vm1594, %v3851, 0
      %v3871 = vsel %vm1594, %v3852, 0
      %v3874 = vsel %vm1594, %v3853, 0
      %v3877 = vsel %vm1594, %v3854, 0
      %v3880 = vsel %vm1594, %v3855, 0
      %v3883 = vsel %vm1594, %v3856, 0
      %v3886 = vsel %vm1594, %v3857, 0
      %v3889 = vsel %vm1594, %v3858, 0
      %v3892 = vsel %vm1594, %v3859, 0
      %v3895 = vsel %vm1594, %v3860, 0
      %v3898 = vsel %vm1594, %v3861, 0
      %v3901 = vsel %vm1594, %v3862, 0
      %v3904 = vsel %vm1594, %v3863, 0
      %v3907 = vsel %vm1594, %v3864, 0
      %v3910 = vsel %vm1594, %v3865, 0
      %v3913 = vsel %vm1594, %v3866, 0
      %v3916 = vsel %vm1643, %v3818, 0
      %3918 = vmatprep.subr.bf16.mxu0 0
      %3919 = vmatpush1.bf16.msra.mxu0 0
      %3920 = vmatprep.subr.bf16.mxu0 0
      %3921 = vmatpush1.bf16.msra.mxu0 0
      %3922 = vmatprep.subr.bf16.mxu0 0
      %3923 = vmatpush1.bf16.msra.mxu0 0
      %3924 = vmatprep.subr.bf16.mxu0 0
      %3925 = vmatpush1.bf16.msra.mxu0 0
      %3926 = vmatprep.subr.bf16.mxu0 0
      %3927 = vmatpush1.bf16.msra.mxu0 0
      %3928 = vmatprep.subr.bf16.mxu0 0
      %3929 = vmatpush1.bf16.msra.mxu0 0
      %3930 = vmatprep.subr.bf16.mxu0 0
      %3931 = vmatpush1.bf16.msra.mxu0 0
      %3932 = vmatprep.subr.bf16.mxu0 0
      %3933 = vmatpush1.bf16.msra.mxu0 %v3916
      %3934 = vmatprep.subr.bf16.mxu0 0
      %3935 = vmatpush2.bf16.msra.mxu0 0
      %3936 = vmatprep.subr.bf16.mxu0 0
      %3937 = vmatpush2.bf16.msra.mxu0 0
      %3938 = vmatprep.subr.bf16.mxu0 0
      %3939 = vmatpush2.bf16.msra.mxu0 0
      %3940 = vmatprep.subr.bf16.mxu0 0
      %3941 = vmatpush2.bf16.msra.mxu0 0
      %3942 = vmatprep.subr.bf16.mxu0 0
      %3943 = vmatpush2.bf16.msra.mxu0 0
      %3944 = vmatprep.subr.bf16.mxu0 0
      %3945 = vmatpush2.bf16.msra.mxu0 0
      %3946 = vmatprep.subr.bf16.mxu0 0
      %3947 = vmatpush2.bf16.msra.mxu0 0
      %3948 = vmatprep.subr.bf16.mxu0 0
      %3949 = vmatpush2.bf16.msra.mxu0 0
      %3950 = vmatprep.mubr.bf16.mxu0 0
      %3951 = vmatmul.mubr.bf16.gmra.mxu0 %v3868
      %v3952 = vpop.f32.mrf.mxu0
      %v3953 = vadd.f32 0.0, %v3952
      %v3954 = vpop.f32.mrf.mxu0
      %v3955 = vpop.f32.mrf.mxu0
      %v3956 = vadd.f32 0.0, %v3955
      %v3957 = vpop.f32.mrf.mxu0
      %3958 = vmatprep.mubr.bf16.mxu0 0
      %3959 = vmatmul.mubr.bf16.gmra.mxu0 %v3871
      %v3960 = vpop.f32.mrf.mxu0
      %v3961 = vadd.f32 0.0, %v3960
      %v3962 = vpop.f32.mrf.mxu0
      %v3963 = vpop.f32.mrf.mxu0
      %v3964 = vadd.f32 0.0, %v3963
      %v3965 = vpop.f32.mrf.mxu0
      %3966 = vmatprep.mubr.bf16.mxu0 0
      %3967 = vmatmul.mubr.bf16.gmra.mxu0 %v3874
      %v3968 = vpop.f32.mrf.mxu0
      %v3969 = vadd.f32 0.0, %v3968
      %v3970 = vpop.f32.mrf.mxu0
      %v3971 = vpop.f32.mrf.mxu0
      %v3972 = vadd.f32 0.0, %v3971
      %v3973 = vpop.f32.mrf.mxu0
      %3974 = vmatprep.mubr.bf16.mxu0 0
      %3975 = vmatmul.mubr.bf16.gmra.mxu0 %v3877
      %v3976 = vpop.f32.mrf.mxu0
      %v3977 = vadd.f32 0.0, %v3976
      %v3978 = vpop.f32.mrf.mxu0
      %v3979 = vpop.f32.mrf.mxu0
      %v3980 = vadd.f32 0.0, %v3979
      %v3981 = vpop.f32.mrf.mxu0
      %3982 = vmatprep.mubr.bf16.mxu0 0
      %3983 = vmatmul.mubr.bf16.gmra.mxu0 %v3880
      %v3984 = vpop.f32.mrf.mxu0
      %v3985 = vadd.f32 0.0, %v3984
      %v3986 = vpop.f32.mrf.mxu0
      %v3987 = vpop.f32.mrf.mxu0
      %v3988 = vadd.f32 0.0, %v3987
      %v3989 = vpop.f32.mrf.mxu0
      %3990 = vmatprep.mubr.bf16.mxu0 0
      %3991 = vmatmul.mubr.bf16.gmra.mxu0 %v3883
      %v3992 = vpop.f32.mrf.mxu0
      %v3993 = vadd.f32 0.0, %v3992
      %v3994 = vpop.f32.mrf.mxu0
      %v3995 = vpop.f32.mrf.mxu0
      %v3996 = vadd.f32 0.0, %v3995
      %v3997 = vpop.f32.mrf.mxu0
      %3998 = vmatprep.mubr.bf16.mxu0 0
      %3999 = vmatmul.mubr.bf16.gmra.mxu0 %v3886
      %v4000 = vpop.f32.mrf.mxu0
      %v4001 = vadd.f32 0.0, %v4000
      %v4002 = vpop.f32.mrf.mxu0
      %v4003 = vpop.f32.mrf.mxu0
      %v4004 = vadd.f32 0.0, %v4003
      %v4005 = vpop.f32.mrf.mxu0
      %4006 = vmatprep.mubr.bf16.mxu0 0
      %4007 = vmatmul.mubr.bf16.gmra.mxu0 %v3889
      %v4008 = vpop.f32.mrf.mxu0
      %v4009 = vadd.f32 0.0, %v4008
      %v4010 = vpop.f32.mrf.mxu0
      %v4011 = vpop.f32.mrf.mxu0
      %v4012 = vadd.f32 0.0, %v4011
      %v4013 = vpop.f32.mrf.mxu0
      %4014 = vmatprep.mubr.bf16.mxu0 0
      %4015 = vmatmul.mubr.bf16.gmra.mxu0 %v3892
      %v4016 = vpop.f32.mrf.mxu0
      %v4017 = vadd.f32 0.0, %v4016
      %v4018 = vpop.f32.mrf.mxu0
      %v4019 = vpop.f32.mrf.mxu0
      %v4020 = vadd.f32 0.0, %v4019
      %v4021 = vpop.f32.mrf.mxu0
      %4022 = vmatprep.mubr.bf16.mxu0 0
      %4023 = vmatmul.mubr.bf16.gmra.mxu0 %v3895
      %v4024 = vpop.f32.mrf.mxu0
      %v4025 = vadd.f32 0.0, %v4024
      %v4026 = vpop.f32.mrf.mxu0
      %v4027 = vpop.f32.mrf.mxu0
      %v4028 = vadd.f32 0.0, %v4027
      %v4029 = vpop.f32.mrf.mxu0
      %4030 = vmatprep.mubr.bf16.mxu0 0
      %4031 = vmatmul.mubr.bf16.gmra.mxu0 %v3898
      %v4032 = vpop.f32.mrf.mxu0
      %v4033 = vadd.f32 0.0, %v4032
      %v4034 = vpop.f32.mrf.mxu0
      %v4035 = vpop.f32.mrf.mxu0
      %v4036 = vadd.f32 0.0, %v4035
      %v4037 = vpop.f32.mrf.mxu0
      %4038 = vmatprep.mubr.bf16.mxu0 0
      %4039 = vmatmul.mubr.bf16.gmra.mxu0 %v3901
      %v4040 = vpop.f32.mrf.mxu0
      %v4041 = vadd.f32 0.0, %v4040
      %v4042 = vpop.f32.mrf.mxu0
      %v4043 = vpop.f32.mrf.mxu0
      %v4044 = vadd.f32 0.0, %v4043
      %v4045 = vpop.f32.mrf.mxu0
      %4046 = vmatprep.mubr.bf16.mxu0 0
      %4047 = vmatmul.mubr.bf16.gmra.mxu0 %v3904
      %v4048 = vpop.f32.mrf.mxu0
      %v4049 = vadd.f32 0.0, %v4048
      %v4050 = vpop.f32.mrf.mxu0
      %v4051 = vpop.f32.mrf.mxu0
      %v4052 = vadd.f32 0.0, %v4051
      %v4053 = vpop.f32.mrf.mxu0
      %4054 = vmatprep.mubr.bf16.mxu0 0
      %4055 = vmatmul.mubr.bf16.gmra.mxu0 %v3907
      %v4056 = vpop.f32.mrf.mxu0
      %v4057 = vadd.f32 0.0, %v4056
      %v4058 = vpop.f32.mrf.mxu0
      %v4059 = vpop.f32.mrf.mxu0
      %v4060 = vadd.f32 0.0, %v4059
      %v4061 = vpop.f32.mrf.mxu0
      %4062 = vmatprep.mubr.bf16.mxu0 0
      %4063 = vmatmul.mubr.bf16.gmra.mxu0 %v3910
      %v4064 = vpop.f32.mrf.mxu0
      %v4065 = vadd.f32 0.0, %v4064
      %v4066 = vpop.f32.mrf.mxu0
      %v4067 = vpop.f32.mrf.mxu0
      %v4068 = vadd.f32 0.0, %v4067
      %v4069 = vpop.f32.mrf.mxu0
      %4070 = vmatprep.mubr.bf16.mxu0 0
      %4071 = vmatmul.mubr.bf16.gmra.mxu0 %v3913
      %v4072 = vpop.f32.mrf.mxu0
      %v4073 = vadd.f32 0.0, %v4072
      %v4074 = vpop.f32.mrf.mxu0
      %v4075 = vpop.f32.mrf.mxu0
      %v4076 = vadd.f32 0.0, %v4075
      %v4077 = vpop.f32.mrf.mxu0
      %4078 = vdwg.mxu0
      %v4079 = vadd.f32 %v3609, %v3953
      %v4080 = vadd.f32 %v3610, %v3956
      %v4081 = vadd.f32 %v3611, %v3961
      %v4082 = vadd.f32 %v3612, %v3964
      %v4083 = vadd.f32 %v3613, %v3969
      %v4084 = vadd.f32 %v3614, %v3972
      %v4085 = vadd.f32 %v3615, %v3977
      %v4086 = vadd.f32 %v3616, %v3980
      %v4087 = vadd.f32 %v3617, %v3985
      %v4088 = vadd.f32 %v3618, %v3988
      %v4089 = vadd.f32 %v3619, %v3993
      %v4090 = vadd.f32 %v3620, %v3996
      %v4091 = vadd.f32 %v3621, %v4001
      %v4092 = vadd.f32 %v3622, %v4004
      %v4093 = vadd.f32 %v3623, %v4009
      %v4094 = vadd.f32 %v3624, %v4012
      %v4095 = vadd.f32 %v3625, %v4017
      %v4096 = vadd.f32 %v3626, %v4020
      %v4097 = vadd.f32 %v3627, %v4025
      %v4098 = vadd.f32 %v3628, %v4028
      %v4099 = vadd.f32 %v3629, %v4033
      %v4100 = vadd.f32 %v3630, %v4036
      %v4101 = vadd.f32 %v3631, %v4041
      %v4102 = vadd.f32 %v3632, %v4044
      %v4103 = vadd.f32 %v3633, %v4049
      %v4104 = vadd.f32 %v3634, %v4052
      %v4105 = vadd.f32 %v3635, %v4057
      %v4106 = vadd.f32 %v3636, %v4060
      %v4107 = vadd.f32 %v3637, %v4065
      %v4108 = vadd.f32 %v3638, %v4068
      %v4109 = vadd.f32 %v3639, %v4073
      %v4110 = vadd.f32 %v3640, %v4076
      %v4111 = vld [vmem:[%s796] sm:$0xf]
      %v4112 = vld [vmem:[%s796 + $0x4] sm:$0xf]
      %v4113 = vld [vmem:[%s796 + $0xc] sm:$0xf]
      %v4114 = vld [vmem:[%s796 + $0x10] sm:$0xf]
      %v4115 = vld [vmem:[%s796 + $0x18] sm:$0xf]
      %v4116 = vld [vmem:[%s796 + $0x1c] sm:$0xf]
      %v4117 = vld [vmem:[%s796 + $0x24] sm:$0xf]
      %v4118 = vld [vmem:[%s796 + $0x28] sm:$0xf]
      %v4119 = vld [vmem:[%s796 + $0x30] sm:$0xf]
      %v4120 = vld [vmem:[%s796 + $0x34] sm:$0xf]
      %v4121 = vld [vmem:[%s796 + $0x3c] sm:$0xf]
      %v4122 = vld [vmem:[%s796 + $0x40] sm:$0xf]
      %v4123 = vld [vmem:[%s796 + $0x48] sm:$0xf]
      %v4124 = vld [vmem:[%s796 + $0x4c] sm:$0xf]
      %v4125 = vld [vmem:[%s796 + $0x54] sm:$0xf]
      %v4126 = vld [vmem:[%s796 + $0x58] sm:$0xf]
      %v4127 = vld [vmem:[%s796 + $0x60] sm:$0xf]
      %v4128 = vld [vmem:[%s796 + $0x64] sm:$0xf]
      %v4129 = vld [vmem:[%s796 + $0x6c] sm:$0xf]
      %v4130 = vld [vmem:[%s796 + $0x70] sm:$0xf]
      %v4131 = vld [vmem:[%s796 + $0x78] sm:$0xf]
      %v4132 = vld [vmem:[%s796 + $0x7c] sm:$0xf]
      %v4133 = vld [vmem:[%s796 + $0x84] sm:$0xf]
      %v4134 = vld [vmem:[%s796 + $0x88] sm:$0xf]
      %v4135 = vld [vmem:[%s796 + $0x90] sm:$0xf]
      %v4136 = vld [vmem:[%s796 + $0x94] sm:$0xf]
      %v4137 = vld [vmem:[%s796 + $0x9c] sm:$0xf]
      %v4138 = vld [vmem:[%s796 + $0xa0] sm:$0xf]
      %v4139 = vld [vmem:[%s796 + $0xa8] sm:$0xf]
      %v4140 = vld [vmem:[%s796 + $0xac] sm:$0xf]
      %v4141 = vld [vmem:[%s796 + $0xb4] sm:$0xf]
      %v4142 = vld [vmem:[%s796 + $0xb8] sm:$0xf]
      %s4143 = scalar_lea.vmem %s1, 12
      %v4144 = vld [vmem:[%s4143] sm:$0x3]
      %v4177 = vunpack.c.l.b16 %v4111
      %v4178 = vunpack.c.l.b16 %v4112
      %v4179 = vunpack.c.l.b16 %v4113
      %v4180 = vunpack.c.l.b16 %v4114
      %v4181 = vunpack.c.l.b16 %v4115
      %v4182 = vunpack.c.l.b16 %v4116
      %v4183 = vunpack.c.l.b16 %v4117
      %v4184 = vunpack.c.l.b16 %v4118
      %v4185 = vunpack.c.l.b16 %v4119
      %v4186 = vunpack.c.l.b16 %v4120
      %v4187 = vunpack.c.l.b16 %v4121
      %v4188 = vunpack.c.l.b16 %v4122
      %v4189 = vunpack.c.l.b16 %v4123
      %v4190 = vunpack.c.l.b16 %v4124
      %v4191 = vunpack.c.l.b16 %v4125
      %v4192 = vunpack.c.l.b16 %v4126
      %v4193 = vunpack.c.l.b16 %v4127
      %v4194 = vunpack.c.l.b16 %v4128
      %v4195 = vunpack.c.l.b16 %v4129
      %v4196 = vunpack.c.l.b16 %v4130
      %v4197 = vunpack.c.l.b16 %v4131
      %v4198 = vunpack.c.l.b16 %v4132
      %v4199 = vunpack.c.l.b16 %v4133
      %v4200 = vunpack.c.l.b16 %v4134
      %v4201 = vunpack.c.l.b16 %v4135
      %v4202 = vunpack.c.l.b16 %v4136
      %v4203 = vunpack.c.l.b16 %v4137
      %v4204 = vunpack.c.l.b16 %v4138
      %v4205 = vunpack.c.l.b16 %v4139
      %v4206 = vunpack.c.l.b16 %v4140
      %v4207 = vunpack.c.l.b16 %v4141
      %v4208 = vunpack.c.l.b16 %v4142
      %v4209 = vpack.c.b16 %v4178, %v4177
      %v4210 = vpack.c.b16 %v4180, %v4179
      %v4211 = vpack.c.b16 %v4182, %v4181
      %v4212 = vpack.c.b16 %v4184, %v4183
      %v4213 = vpack.c.b16 %v4186, %v4185
      %v4214 = vpack.c.b16 %v4188, %v4187
      %v4215 = vpack.c.b16 %v4190, %v4189
      %v4216 = vpack.c.b16 %v4192, %v4191
      %v4217 = vpack.c.b16 %v4194, %v4193
      %v4218 = vpack.c.b16 %v4196, %v4195
      %v4219 = vpack.c.b16 %v4198, %v4197
      %v4220 = vpack.c.b16 %v4200, %v4199
      %v4221 = vpack.c.b16 %v4202, %v4201
      %v4222 = vpack.c.b16 %v4204, %v4203
      %v4223 = vpack.c.b16 %v4206, %v4205
      %v4224 = vpack.c.b16 %v4208, %v4207
      %v4226 = vsel %vm1594, %v4209, 0
      %v4229 = vsel %vm1594, %v4210, 0
      %v4232 = vsel %vm1594, %v4211, 0
      %v4235 = vsel %vm1594, %v4212, 0
      %v4238 = vsel %vm1594, %v4213, 0
      %v4241 = vsel %vm1594, %v4214, 0
      %v4244 = vsel %vm1594, %v4215, 0
      %v4247 = vsel %vm1594, %v4216, 0
      %v4250 = vsel %vm1594, %v4217, 0
      %v4253 = vsel %vm1594, %v4218, 0
      %v4256 = vsel %vm1594, %v4219, 0
      %v4259 = vsel %vm1594, %v4220, 0
      %v4262 = vsel %vm1594, %v4221, 0
      %v4265 = vsel %vm1594, %v4222, 0
      %v4268 = vsel %vm1594, %v4223, 0
      %v4271 = vsel %vm1594, %v4224, 0
      %v4274 = vsel %vm1643, %v4144, 0
      %4276 = vmatprep.subr.bf16.mxu0 0
      %4277 = vmatpush1.bf16.msra.mxu0 0
      %4278 = vmatprep.subr.bf16.mxu0 0
      %4279 = vmatpush1.bf16.msra.mxu0 0
      %4280 = vmatprep.subr.bf16.mxu0 0
      %4281 = vmatpush1.bf16.msra.mxu0 0
      %4282 = vmatprep.subr.bf16.mxu0 0
      %4283 = vmatpush1.bf16.msra.mxu0 0
      %4284 = vmatprep.subr.bf16.mxu0 0
      %4285 = vmatpush1.bf16.msra.mxu0 0
      %4286 = vmatprep.subr.bf16.mxu0 0
      %4287 = vmatpush1.bf16.msra.mxu0 0
      %4288 = vmatprep.subr.bf16.mxu0 0
      %4289 = vmatpush1.bf16.msra.mxu0 0
      %4290 = vmatprep.subr.bf16.mxu0 0
      %4291 = vmatpush1.bf16.msra.mxu0 %v4274
      %4292 = vmatprep.subr.bf16.mxu0 0
      %4293 = vmatpush2.bf16.msra.mxu0 0
      %4294 = vmatprep.subr.bf16.mxu0 0
      %4295 = vmatpush2.bf16.msra.mxu0 0
      %4296 = vmatprep.subr.bf16.mxu0 0
      %4297 = vmatpush2.bf16.msra.mxu0 0
      %4298 = vmatprep.subr.bf16.mxu0 0
      %4299 = vmatpush2.bf16.msra.mxu0 0
      %4300 = vmatprep.subr.bf16.mxu0 0
      %4301 = vmatpush2.bf16.msra.mxu0 0
      %4302 = vmatprep.subr.bf16.mxu0 0
      %4303 = vmatpush2.bf16.msra.mxu0 0
      %4304 = vmatprep.subr.bf16.mxu0 0
      %4305 = vmatpush2.bf16.msra.mxu0 0
      %4306 = vmatprep.subr.bf16.mxu0 0
      %4307 = vmatpush2.bf16.msra.mxu0 0
      %4308 = vmatprep.mubr.bf16.mxu0 0
      %4309 = vmatmul.mubr.bf16.gmra.mxu0 %v4226
      %v4310 = vpop.f32.mrf.mxu0
      %v4311 = vadd.f32 0.0, %v4310
      %v4312 = vpop.f32.mrf.mxu0
      %v4313 = vpop.f32.mrf.mxu0
      %v4314 = vadd.f32 0.0, %v4313
      %v4315 = vpop.f32.mrf.mxu0
      %4316 = vmatprep.mubr.bf16.mxu0 0
      %4317 = vmatmul.mubr.bf16.gmra.mxu0 %v4229
      %v4318 = vpop.f32.mrf.mxu0
      %v4319 = vadd.f32 0.0, %v4318
      %v4320 = vpop.f32.mrf.mxu0
      %v4321 = vpop.f32.mrf.mxu0
      %v4322 = vadd.f32 0.0, %v4321
      %v4323 = vpop.f32.mrf.mxu0
      %4324 = vmatprep.mubr.bf16.mxu0 0
      %4325 = vmatmul.mubr.bf16.gmra.mxu0 %v4232
      %v4326 = vpop.f32.mrf.mxu0
      %v4327 = vadd.f32 0.0, %v4326
      %v4328 = vpop.f32.mrf.mxu0
      %v4329 = vpop.f32.mrf.mxu0
      %v4330 = vadd.f32 0.0, %v4329
      %v4331 = vpop.f32.mrf.mxu0
      %4332 = vmatprep.mubr.bf16.mxu0 0
      %4333 = vmatmul.mubr.bf16.gmra.mxu0 %v4235
      %v4334 = vpop.f32.mrf.mxu0
      %v4335 = vadd.f32 0.0, %v4334
      %v4336 = vpop.f32.mrf.mxu0
      %v4337 = vpop.f32.mrf.mxu0
      %v4338 = vadd.f32 0.0, %v4337
      %v4339 = vpop.f32.mrf.mxu0
      %4340 = vmatprep.mubr.bf16.mxu0 0
      %4341 = vmatmul.mubr.bf16.gmra.mxu0 %v4238
      %v4342 = vpop.f32.mrf.mxu0
      %v4343 = vadd.f32 0.0, %v4342
      %v4344 = vpop.f32.mrf.mxu0
      %v4345 = vpop.f32.mrf.mxu0
      %v4346 = vadd.f32 0.0, %v4345
      %v4347 = vpop.f32.mrf.mxu0
      %4348 = vmatprep.mubr.bf16.mxu0 0
      %4349 = vmatmul.mubr.bf16.gmra.mxu0 %v4241
      %v4350 = vpop.f32.mrf.mxu0
      %v4351 = vadd.f32 0.0, %v4350
      %v4352 = vpop.f32.mrf.mxu0
      %v4353 = vpop.f32.mrf.mxu0
      %v4354 = vadd.f32 0.0, %v4353
      %v4355 = vpop.f32.mrf.mxu0
      %4356 = vmatprep.mubr.bf16.mxu0 0
      %4357 = vmatmul.mubr.bf16.gmra.mxu0 %v4244
      %v4358 = vpop.f32.mrf.mxu0
      %v4359 = vadd.f32 0.0, %v4358
      %v4360 = vpop.f32.mrf.mxu0
      %v4361 = vpop.f32.mrf.mxu0
      %v4362 = vadd.f32 0.0, %v4361
      %v4363 = vpop.f32.mrf.mxu0
      %4364 = vmatprep.mubr.bf16.mxu0 0
      %4365 = vmatmul.mubr.bf16.gmra.mxu0 %v4247
      %v4366 = vpop.f32.mrf.mxu0
      %v4367 = vadd.f32 0.0, %v4366
      %v4368 = vpop.f32.mrf.mxu0
      %v4369 = vpop.f32.mrf.mxu0
      %v4370 = vadd.f32 0.0, %v4369
      %v4371 = vpop.f32.mrf.mxu0
      %4372 = vmatprep.mubr.bf16.mxu0 0
      %4373 = vmatmul.mubr.bf16.gmra.mxu0 %v4250
      %v4374 = vpop.f32.mrf.mxu0
      %v4375 = vadd.f32 0.0, %v4374
      %v4376 = vpop.f32.mrf.mxu0
      %v4377 = vpop.f32.mrf.mxu0
      %v4378 = vadd.f32 0.0, %v4377
      %v4379 = vpop.f32.mrf.mxu0
      %4380 = vmatprep.mubr.bf16.mxu0 0
      %4381 = vmatmul.mubr.bf16.gmra.mxu0 %v4253
      %v4382 = vpop.f32.mrf.mxu0
      %v4383 = vadd.f32 0.0, %v4382
      %v4384 = vpop.f32.mrf.mxu0
      %v4385 = vpop.f32.mrf.mxu0
      %v4386 = vadd.f32 0.0, %v4385
      %v4387 = vpop.f32.mrf.mxu0
      %4388 = vmatprep.mubr.bf16.mxu0 0
      %4389 = vmatmul.mubr.bf16.gmra.mxu0 %v4256
      %v4390 = vpop.f32.mrf.mxu0
      %v4391 = vadd.f32 0.0, %v4390
      %v4392 = vpop.f32.mrf.mxu0
      %v4393 = vpop.f32.mrf.mxu0
      %v4394 = vadd.f32 0.0, %v4393
      %v4395 = vpop.f32.mrf.mxu0
      %4396 = vmatprep.mubr.bf16.mxu0 0
      %4397 = vmatmul.mubr.bf16.gmra.mxu0 %v4259
      %v4398 = vpop.f32.mrf.mxu0
      %v4399 = vadd.f32 0.0, %v4398
      %v4400 = vpop.f32.mrf.mxu0
      %v4401 = vpop.f32.mrf.mxu0
      %v4402 = vadd.f32 0.0, %v4401
      %v4403 = vpop.f32.mrf.mxu0
      %4404 = vmatprep.mubr.bf16.mxu0 0
      %4405 = vmatmul.mubr.bf16.gmra.mxu0 %v4262
      %v4406 = vpop.f32.mrf.mxu0
      %v4407 = vadd.f32 0.0, %v4406
      %v4408 = vpop.f32.mrf.mxu0
      %v4409 = vpop.f32.mrf.mxu0
      %v4410 = vadd.f32 0.0, %v4409
      %v4411 = vpop.f32.mrf.mxu0
      %4412 = vmatprep.mubr.bf16.mxu0 0
      %4413 = vmatmul.mubr.bf16.gmra.mxu0 %v4265
      %v4414 = vpop.f32.mrf.mxu0
      %v4415 = vadd.f32 0.0, %v4414
      %v4416 = vpop.f32.mrf.mxu0
      %v4417 = vpop.f32.mrf.mxu0
      %v4418 = vadd.f32 0.0, %v4417
      %v4419 = vpop.f32.mrf.mxu0
      %4420 = vmatprep.mubr.bf16.mxu0 0
      %4421 = vmatmul.mubr.bf16.gmra.mxu0 %v4268
      %v4422 = vpop.f32.mrf.mxu0
      %v4423 = vadd.f32 0.0, %v4422
      %v4424 = vpop.f32.mrf.mxu0
      %v4425 = vpop.f32.mrf.mxu0
      %v4426 = vadd.f32 0.0, %v4425
      %v4427 = vpop.f32.mrf.mxu0
      %4428 = vmatprep.mubr.bf16.mxu0 0
      %4429 = vmatmul.mubr.bf16.gmra.mxu0 %v4271
      %v4430 = vpop.f32.mrf.mxu0
      %v4431 = vadd.f32 0.0, %v4430
      %v4432 = vpop.f32.mrf.mxu0
      %v4433 = vpop.f32.mrf.mxu0
      %v4434 = vadd.f32 0.0, %v4433
      %v4435 = vpop.f32.mrf.mxu0
      %4436 = vdwg.mxu0
      %v4437 = vadd.f32 %v4079, %v4311
      %v4438 = vadd.f32 %v4080, %v4314
      %v4439 = vadd.f32 %v4081, %v4319
      %v4440 = vadd.f32 %v4082, %v4322
      %v4441 = vadd.f32 %v4083, %v4327
      %v4442 = vadd.f32 %v4084, %v4330
      %v4443 = vadd.f32 %v4085, %v4335
      %v4444 = vadd.f32 %v4086, %v4338
      %v4445 = vadd.f32 %v4087, %v4343
      %v4446 = vadd.f32 %v4088, %v4346
      %v4447 = vadd.f32 %v4089, %v4351
      %v4448 = vadd.f32 %v4090, %v4354
      %v4449 = vadd.f32 %v4091, %v4359
      %v4450 = vadd.f32 %v4092, %v4362
      %v4451 = vadd.f32 %v4093, %v4367
      %v4452 = vadd.f32 %v4094, %v4370
      %v4453 = vadd.f32 %v4095, %v4375
      %v4454 = vadd.f32 %v4096, %v4378
      %v4455 = vadd.f32 %v4097, %v4383
      %v4456 = vadd.f32 %v4098, %v4386
      %v4457 = vadd.f32 %v4099, %v4391
      %v4458 = vadd.f32 %v4100, %v4394
      %v4459 = vadd.f32 %v4101, %v4399
      %v4460 = vadd.f32 %v4102, %v4402
      %v4461 = vadd.f32 %v4103, %v4407
      %v4462 = vadd.f32 %v4104, %v4410
      %v4463 = vadd.f32 %v4105, %v4415
      %v4464 = vadd.f32 %v4106, %v4418
      %v4465 = vadd.f32 %v4107, %v4423
      %v4466 = vadd.f32 %v4108, %v4426
      %v4467 = vadd.f32 %v4109, %v4431
      %v4468 = vadd.f32 %v4110, %v4434
      %v4469 = vld [vmem:[%s796] sm:$0xf]
      %v4470 = vld [vmem:[%s796 + $0x4] sm:$0xf]
      %v4471 = vld [vmem:[%s796 + $0x8] sm:$0x1]
      %v4472 = vld [vmem:[%s796 + $0xc] sm:$0xf]
      %v4473 = vld [vmem:[%s796 + $0x10] sm:$0xf]
      %v4474 = vld [vmem:[%s796 + $0x14] sm:$0x1]
      %v4475 = vld [vmem:[%s796 + $0x18] sm:$0xf]
      %v4476 = vld [vmem:[%s796 + $0x1c] sm:$0xf]
      %v4477 = vld [vmem:[%s796 + $0x20] sm:$0x1]
      %v4478 = vld [vmem:[%s796 + $0x24] sm:$0xf]
      %v4479 = vld [vmem:[%s796 + $0x28] sm:$0xf]
      %v4480 = vld [vmem:[%s796 + $0x2c] sm:$0x1]
      %v4481 = vld [vmem:[%s796 + $0x30] sm:$0xf]
      %v4482 = vld [vmem:[%s796 + $0x34] sm:$0xf]
      %v4483 = vld [vmem:[%s796 + $0x38] sm:$0x1]
      %v4484 = vld [vmem:[%s796 + $0x3c] sm:$0xf]
      %v4485 = vld [vmem:[%s796 + $0x40] sm:$0xf]
      %v4486 = vld [vmem:[%s796 + $0x44] sm:$0x1]
      %v4487 = vld [vmem:[%s796 + $0x48] sm:$0xf]
      %v4488 = vld [vmem:[%s796 + $0x4c] sm:$0xf]
      %v4489 = vld [vmem:[%s796 + $0x50] sm:$0x1]
      %v4490 = vld [vmem:[%s796 + $0x54] sm:$0xf]
      %v4491 = vld [vmem:[%s796 + $0x58] sm:$0xf]
      %v4492 = vld [vmem:[%s796 + $0x5c] sm:$0x1]
      %v4493 = vld [vmem:[%s796 + $0x60] sm:$0xf]
      %v4494 = vld [vmem:[%s796 + $0x64] sm:$0xf]
      %v4495 = vld [vmem:[%s796 + $0x68] sm:$0x1]
      %v4496 = vld [vmem:[%s796 + $0x6c] sm:$0xf]
      %v4497 = vld [vmem:[%s796 + $0x70] sm:$0xf]
      %v4498 = vld [vmem:[%s796 + $0x74] sm:$0x1]
      %v4499 = vld [vmem:[%s796 + $0x78] sm:$0xf]
      %v4500 = vld [vmem:[%s796 + $0x7c] sm:$0xf]
      %v4501 = vld [vmem:[%s796 + $0x80] sm:$0x1]
      %v4502 = vld [vmem:[%s796 + $0x84] sm:$0xf]
      %v4503 = vld [vmem:[%s796 + $0x88] sm:$0xf]
      %v4504 = vld [vmem:[%s796 + $0x8c] sm:$0x1]
      %v4505 = vld [vmem:[%s796 + $0x90] sm:$0xf]
      %v4506 = vld [vmem:[%s796 + $0x94] sm:$0xf]
      %v4507 = vld [vmem:[%s796 + $0x98] sm:$0x1]
      %v4508 = vld [vmem:[%s796 + $0x9c] sm:$0xf]
      %v4509 = vld [vmem:[%s796 + $0xa0] sm:$0xf]
      %v4510 = vld [vmem:[%s796 + $0xa4] sm:$0x1]
      %v4511 = vld [vmem:[%s796 + $0xa8] sm:$0xf]
      %v4512 = vld [vmem:[%s796 + $0xac] sm:$0xf]
      %v4513 = vld [vmem:[%s796 + $0xb0] sm:$0x1]
      %v4514 = vld [vmem:[%s796 + $0xb4] sm:$0xf]
      %v4515 = vld [vmem:[%s796 + $0xb8] sm:$0xf]
      %v4516 = vld [vmem:[%s796 + $0xbc] sm:$0x1]
      %v4518 = vshrl.u32 %v4469, 16
      %v4520 = vrot.slane %v4518, 4
      %v4521 = vshll.u32 %v4469, 16
      %v4523 = vrot.slane %v4521, 5
      %v4524 = vor.u32 %v4520, %v4523
      %v4525 = vrot.slane %v4524, 4
      %v4527 = vshll.u32 %v4470, 16
      %v4529 = vrot.slane %v4527, 5
      %v4530 = vsel %vm1159, %v4525, %v4529
      %v4531 = vshrl.u32 %v4470, 16
      %v4533 = vrot.slane %v4531, 4
      %v4534 = vor.u32 %v4533, %v4529
      %v4535 = vrot.slane %v4534, 4
      %v4537 = vshll.u32 %v4471, 16
      %v4539 = vrot.slane %v4537, 5
      %v4540 = vsel %vm1159, %v4535, %v4539
      %v4542 = vshrl.u32 %v4472, 16
      %v4544 = vrot.slane %v4542, 4
      %v4545 = vshll.u32 %v4472, 16
      %v4547 = vrot.slane %v4545, 5
      %v4548 = vor.u32 %v4544, %v4547
      %v4549 = vrot.slane %v4548, 4
      %v4551 = vshll.u32 %v4473, 16
      %v4553 = vrot.slane %v4551, 5
      %v4554 = vsel %vm1159, %v4549, %v4553
      %v4555 = vshrl.u32 %v4473, 16
      %v4557 = vrot.slane %v4555, 4
      %v4558 = vor.u32 %v4557, %v4553
      %v4559 = vrot.slane %v4558, 4
      %v4561 = vshll.u32 %v4474, 16
      %v4563 = vrot.slane %v4561, 5
      %v4564 = vsel %vm1159, %v4559, %v4563
      %v4566 = vshrl.u32 %v4475, 16
      %v4568 = vrot.slane %v4566, 4
      %v4569 = vshll.u32 %v4475, 16
      %v4571 = vrot.slane %v4569, 5
      %v4572 = vor.u32 %v4568, %v4571
      %v4573 = vrot.slane %v4572, 4
      %v4575 = vshll.u32 %v4476, 16
      %v4577 = vrot.slane %v4575, 5
      %v4578 = vsel %vm1159, %v4573, %v4577
      %v4579 = vshrl.u32 %v4476, 16
      %v4581 = vrot.slane %v4579, 4
      %v4582 = vor.u32 %v4581, %v4577
      %v4583 = vrot.slane %v4582, 4
      %v4585 = vshll.u32 %v4477, 16
      %v4587 = vrot.slane %v4585, 5
      %v4588 = vsel %vm1159, %v4583, %v4587
      %v4590 = vshrl.u32 %v4478, 16
      %v4592 = vrot.slane %v4590, 4
      %v4593 = vshll.u32 %v4478, 16
      %v4595 = vrot.slane %v4593, 5
      %v4596 = vor.u32 %v4592, %v4595
      %v4597 = vrot.slane %v4596, 4
      %v4599 = vshll.u32 %v4479, 16
      %v4601 = vrot.slane %v4599, 5
      %v4602 = vsel %vm1159, %v4597, %v4601
      %v4603 = vshrl.u32 %v4479, 16
      %v4605 = vrot.slane %v4603, 4
      %v4606 = vor.u32 %v4605, %v4601
      %v4607 = vrot.slane %v4606, 4
      %v4609 = vshll.u32 %v4480, 16
      %v4611 = vrot.slane %v4609, 5
      %v4612 = vsel %vm1159, %v4607, %v4611
      %v4614 = vshrl.u32 %v4481, 16
      %v4616 = vrot.slane %v4614, 4
      %v4617 = vshll.u32 %v4481, 16
      %v4619 = vrot.slane %v4617, 5
      %v4620 = vor.u32 %v4616, %v4619
      %v4621 = vrot.slane %v4620, 4
      %v4623 = vshll.u32 %v4482, 16
      %v4625 = vrot.slane %v4623, 5
      %v4626 = vsel %vm1159, %v4621, %v4625
      %v4627 = vshrl.u32 %v4482, 16
      %v4629 = vrot.slane %v4627, 4
      %v4630 = vor.u32 %v4629, %v4625
      %v4631 = vrot.slane %v4630, 4
      %v4633 = vshll.u32 %v4483, 16
      %v4635 = vrot.slane %v4633, 5
      %v4636 = vsel %vm1159, %v4631, %v4635
      %v4638 = vshrl.u32 %v4484, 16
      %v4640 = vrot.slane %v4638, 4
      %v4641 = vshll.u32 %v4484, 16
      %v4643 = vrot.slane %v4641, 5
      %v4644 = vor.u32 %v4640, %v4643
      %v4645 = vrot.slane %v4644, 4
      %v4647 = vshll.u32 %v4485, 16
      %v4649 = vrot.slane %v4647, 5
      %v4650 = vsel %vm1159, %v4645, %v4649
      %v4651 = vshrl.u32 %v4485, 16
      %v4653 = vrot.slane %v4651, 4
      %v4654 = vor.u32 %v4653, %v4649
      %v4655 = vrot.slane %v4654, 4
      %v4657 = vshll.u32 %v4486, 16
      %v4659 = vrot.slane %v4657, 5
      %v4660 = vsel %vm1159, %v4655, %v4659
      %v4662 = vshrl.u32 %v4487, 16
      %v4664 = vrot.slane %v4662, 4
      %v4665 = vshll.u32 %v4487, 16
      %v4667 = vrot.slane %v4665, 5
      %v4668 = vor.u32 %v4664, %v4667
      %v4669 = vrot.slane %v4668, 4
      %v4671 = vshll.u32 %v4488, 16
      %v4673 = vrot.slane %v4671, 5
      %v4674 = vsel %vm1159, %v4669, %v4673
      %v4675 = vshrl.u32 %v4488, 16
      %v4677 = vrot.slane %v4675, 4
      %v4678 = vor.u32 %v4677, %v4673
      %v4679 = vrot.slane %v4678, 4
      %v4681 = vshll.u32 %v4489, 16
      %v4683 = vrot.slane %v4681, 5
      %v4684 = vsel %vm1159, %v4679, %v4683
      %v4686 = vshrl.u32 %v4490, 16
      %v4688 = vrot.slane %v4686, 4
      %v4689 = vshll.u32 %v4490, 16
      %v4691 = vrot.slane %v4689, 5
      %v4692 = vor.u32 %v4688, %v4691
      %v4693 = vrot.slane %v4692, 4
      %v4695 = vshll.u32 %v4491, 16
      %v4697 = vrot.slane %v4695, 5
      %v4698 = vsel %vm1159, %v4693, %v4697
      %v4699 = vshrl.u32 %v4491, 16
      %v4701 = vrot.slane %v4699, 4
      %v4702 = vor.u32 %v4701, %v4697
      %v4703 = vrot.slane %v4702, 4
      %v4705 = vshll.u32 %v4492, 16
      %v4707 = vrot.slane %v4705, 5
      %v4708 = vsel %vm1159, %v4703, %v4707
      %v4710 = vshrl.u32 %v4493, 16
      %v4712 = vrot.slane %v4710, 4
      %v4713 = vshll.u32 %v4493, 16
      %v4715 = vrot.slane %v4713, 5
      %v4716 = vor.u32 %v4712, %v4715
      %v4717 = vrot.slane %v4716, 4
      %v4719 = vshll.u32 %v4494, 16
      %v4721 = vrot.slane %v4719, 5
      %v4722 = vsel %vm1159, %v4717, %v4721
      %v4723 = vshrl.u32 %v4494, 16
      %v4725 = vrot.slane %v4723, 4
      %v4726 = vor.u32 %v4725, %v4721
      %v4727 = vrot.slane %v4726, 4
      %v4729 = vshll.u32 %v4495, 16
      %v4731 = vrot.slane %v4729, 5
      %v4732 = vsel %vm1159, %v4727, %v4731
      %v4734 = vshrl.u32 %v4496, 16
      %v4736 = vrot.slane %v4734, 4
      %v4737 = vshll.u32 %v4496, 16
      %v4739 = vrot.slane %v4737, 5
      %v4740 = vor.u32 %v4736, %v4739
      %v4741 = vrot.slane %v4740, 4
      %v4743 = vshll.u32 %v4497, 16
      %v4745 = vrot.slane %v4743, 5
      %v4746 = vsel %vm1159, %v4741, %v4745
      %v4747 = vshrl.u32 %v4497, 16
      %v4749 = vrot.slane %v4747, 4
      %v4750 = vor.u32 %v4749, %v4745
      %v4751 = vrot.slane %v4750, 4
      %v4753 = vshll.u32 %v4498, 16
      %v4755 = vrot.slane %v4753, 5
      %v4756 = vsel %vm1159, %v4751, %v4755
      %v4758 = vshrl.u32 %v4499, 16
      %v4760 = vrot.slane %v4758, 4
      %v4761 = vshll.u32 %v4499, 16
      %v4763 = vrot.slane %v4761, 5
      %v4764 = vor.u32 %v4760, %v4763
      %v4765 = vrot.slane %v4764, 4
      %v4767 = vshll.u32 %v4500, 16
      %v4769 = vrot.slane %v4767, 5
      %v4770 = vsel %vm1159, %v4765, %v4769
      %v4771 = vshrl.u32 %v4500, 16
      %v4773 = vrot.slane %v4771, 4
      %v4774 = vor.u32 %v4773, %v4769
      %v4775 = vrot.slane %v4774, 4
      %v4777 = vshll.u32 %v4501, 16
      %v4779 = vrot.slane %v4777, 5
      %v4780 = vsel %vm1159, %v4775, %v4779
      %v4782 = vshrl.u32 %v4502, 16
      %v4784 = vrot.slane %v4782, 4
      %v4785 = vshll.u32 %v4502, 16
      %v4787 = vrot.slane %v4785, 5
      %v4788 = vor.u32 %v4784, %v4787
      %v4789 = vrot.slane %v4788, 4
      %v4791 = vshll.u32 %v4503, 16
      %v4793 = vrot.slane %v4791, 5
      %v4794 = vsel %vm1159, %v4789, %v4793
      %v4795 = vshrl.u32 %v4503, 16
      %v4797 = vrot.slane %v4795, 4
      %v4798 = vor.u32 %v4797, %v4793
      %v4799 = vrot.slane %v4798, 4
      %v4801 = vshll.u32 %v4504, 16
      %v4803 = vrot.slane %v4801, 5
      %v4804 = vsel %vm1159, %v4799, %v4803
      %v4806 = vshrl.u32 %v4505, 16
      %v4808 = vrot.slane %v4806, 4
      %v4809 = vshll.u32 %v4505, 16
      %v4811 = vrot.slane %v4809, 5
      %v4812 = vor.u32 %v4808, %v4811
      %v4813 = vrot.slane %v4812, 4
      %v4815 = vshll.u32 %v4506, 16
      %v4817 = vrot.slane %v4815, 5
      %v4818 = vsel %vm1159, %v4813, %v4817
      %v4819 = vshrl.u32 %v4506, 16
      %v4821 = vrot.slane %v4819, 4
      %v4822 = vor.u32 %v4821, %v4817
      %v4823 = vrot.slane %v4822, 4
      %v4825 = vshll.u32 %v4507, 16
      %v4827 = vrot.slane %v4825, 5
      %v4828 = vsel %vm1159, %v4823, %v4827
      %v4830 = vshrl.u32 %v4508, 16
      %v4832 = vrot.slane %v4830, 4
      %v4833 = vshll.u32 %v4508, 16
      %v4835 = vrot.slane %v4833, 5
      %v4836 = vor.u32 %v4832, %v4835
      %v4837 = vrot.slane %v4836, 4
      %v4839 = vshll.u32 %v4509, 16
      %v4841 = vrot.slane %v4839, 5
      %v4842 = vsel %vm1159, %v4837, %v4841
      %v4843 = vshrl.u32 %v4509, 16
      %v4845 = vrot.slane %v4843, 4
      %v4846 = vor.u32 %v4845, %v4841
      %v4847 = vrot.slane %v4846, 4
      %v4849 = vshll.u32 %v4510, 16
      %v4851 = vrot.slane %v4849, 5
      %v4852 = vsel %vm1159, %v4847, %v4851
      %v4854 = vshrl.u32 %v4511, 16
      %v4856 = vrot.slane %v4854, 4
      %v4857 = vshll.u32 %v4511, 16
      %v4859 = vrot.slane %v4857, 5
      %v4860 = vor.u32 %v4856, %v4859
      %v4861 = vrot.slane %v4860, 4
      %v4863 = vshll.u32 %v4512, 16
      %v4865 = vrot.slane %v4863, 5
      %v4866 = vsel %vm1159, %v4861, %v4865
      %v4867 = vshrl.u32 %v4512, 16
      %v4869 = vrot.slane %v4867, 4
      %v4870 = vor.u32 %v4869, %v4865
      %v4871 = vrot.slane %v4870, 4
      %v4873 = vshll.u32 %v4513, 16
      %v4875 = vrot.slane %v4873, 5
      %v4876 = vsel %vm1159, %v4871, %v4875
      %v4878 = vshrl.u32 %v4514, 16
      %v4880 = vrot.slane %v4878, 4
      %v4881 = vshll.u32 %v4514, 16
      %v4883 = vrot.slane %v4881, 5
      %v4884 = vor.u32 %v4880, %v4883
      %v4885 = vrot.slane %v4884, 4
      %v4887 = vshll.u32 %v4515, 16
      %v4889 = vrot.slane %v4887, 5
      %v4890 = vsel %vm1159, %v4885, %v4889
      %v4891 = vshrl.u32 %v4515, 16
      %v4893 = vrot.slane %v4891, 4
      %v4894 = vor.u32 %v4893, %v4889
      %v4895 = vrot.slane %v4894, 4
      %v4897 = vshll.u32 %v4516, 16
      %v4899 = vrot.slane %v4897, 5
      %v4900 = vsel %vm1159, %v4895, %v4899
      %s4901 = scalar_lea.vmem %s1, 14
      %v4902 = vld [vmem:[%s4901] sm:$0x3]
      %v4903 = vunpack.c.l.b16 %v4530
      %v4904 = vunpack.c.l.b16 %v4540
      %v4905 = vunpack.c.l.b16 %v4554
      %v4906 = vunpack.c.l.b16 %v4564
      %v4907 = vunpack.c.l.b16 %v4578
      %v4908 = vunpack.c.l.b16 %v4588
      %v4909 = vunpack.c.l.b16 %v4602
      %v4910 = vunpack.c.l.b16 %v4612
      %v4911 = vunpack.c.l.b16 %v4626
      %v4912 = vunpack.c.l.b16 %v4636
      %v4913 = vunpack.c.l.b16 %v4650
      %v4914 = vunpack.c.l.b16 %v4660
      %v4915 = vunpack.c.l.b16 %v4674
      %v4916 = vunpack.c.l.b16 %v4684
      %v4917 = vunpack.c.l.b16 %v4698
      %v4918 = vunpack.c.l.b16 %v4708
      %v4919 = vunpack.c.l.b16 %v4722
      %v4920 = vunpack.c.l.b16 %v4732
      %v4921 = vunpack.c.l.b16 %v4746
      %v4922 = vunpack.c.l.b16 %v4756
      %v4923 = vunpack.c.l.b16 %v4770
      %v4924 = vunpack.c.l.b16 %v4780
      %v4925 = vunpack.c.l.b16 %v4794
      %v4926 = vunpack.c.l.b16 %v4804
      %v4927 = vunpack.c.l.b16 %v4818
      %v4928 = vunpack.c.l.b16 %v4828
      %v4929 = vunpack.c.l.b16 %v4842
      %v4930 = vunpack.c.l.b16 %v4852
      %v4931 = vunpack.c.l.b16 %v4866
      %v4932 = vunpack.c.l.b16 %v4876
      %v4933 = vunpack.c.l.b16 %v4890
      %v4934 = vunpack.c.l.b16 %v4900
      %v4935 = vpack.c.b16 %v4904, %v4903
      %v4936 = vpack.c.b16 %v4906, %v4905
      %v4937 = vpack.c.b16 %v4908, %v4907
      %v4938 = vpack.c.b16 %v4910, %v4909
      %v4939 = vpack.c.b16 %v4912, %v4911
      %v4940 = vpack.c.b16 %v4914, %v4913
      %v4941 = vpack.c.b16 %v4916, %v4915
      %v4942 = vpack.c.b16 %v4918, %v4917
      %v4943 = vpack.c.b16 %v4920, %v4919
      %v4944 = vpack.c.b16 %v4922, %v4921
      %v4945 = vpack.c.b16 %v4924, %v4923
      %v4946 = vpack.c.b16 %v4926, %v4925
      %v4947 = vpack.c.b16 %v4928, %v4927
      %v4948 = vpack.c.b16 %v4930, %v4929
      %v4949 = vpack.c.b16 %v4932, %v4931
      %v4950 = vpack.c.b16 %v4934, %v4933
      %v4952 = vsel %vm1594, %v4935, 0
      %v4955 = vsel %vm1594, %v4936, 0
      %v4958 = vsel %vm1594, %v4937, 0
      %v4961 = vsel %vm1594, %v4938, 0
      %v4964 = vsel %vm1594, %v4939, 0
      %v4967 = vsel %vm1594, %v4940, 0
      %v4970 = vsel %vm1594, %v4941, 0
      %v4973 = vsel %vm1594, %v4942, 0
      %v4976 = vsel %vm1594, %v4943, 0
      %v4979 = vsel %vm1594, %v4944, 0
      %v4982 = vsel %vm1594, %v4945, 0
      %v4985 = vsel %vm1594, %v4946, 0
      %v4988 = vsel %vm1594, %v4947, 0
      %v4991 = vsel %vm1594, %v4948, 0
      %v4994 = vsel %vm1594, %v4949, 0
      %v4997 = vsel %vm1594, %v4950, 0
      %v5000 = vsel %vm1643, %v4902, 0
      %5002 = vmatprep.subr.bf16.mxu0 0
      %5003 = vmatpush1.bf16.msra.mxu0 0
      %5004 = vmatprep.subr.bf16.mxu0 0
      %5005 = vmatpush1.bf16.msra.mxu0 0
      %5006 = vmatprep.subr.bf16.mxu0 0
      %5007 = vmatpush1.bf16.msra.mxu0 0
      %5008 = vmatprep.subr.bf16.mxu0 0
      %5009 = vmatpush1.bf16.msra.mxu0 0
      %5010 = vmatprep.subr.bf16.mxu0 0
      %5011 = vmatpush1.bf16.msra.mxu0 0
      %5012 = vmatprep.subr.bf16.mxu0 0
      %5013 = vmatpush1.bf16.msra.mxu0 0
      %5014 = vmatprep.subr.bf16.mxu0 0
      %5015 = vmatpush1.bf16.msra.mxu0 0
      %5016 = vmatprep.subr.bf16.mxu0 0
      %5017 = vmatpush1.bf16.msra.mxu0 %v5000
      %5018 = vmatprep.subr.bf16.mxu0 0
      %5019 = vmatpush2.bf16.msra.mxu0 0
      %5020 = vmatprep.subr.bf16.mxu0 0
      %5021 = vmatpush2.bf16.msra.mxu0 0
      %5022 = vmatprep.subr.bf16.mxu0 0
      %5023 = vmatpush2.bf16.msra.mxu0 0
      %5024 = vmatprep.subr.bf16.mxu0 0
      %5025 = vmatpush2.bf16.msra.mxu0 0
      %5026 = vmatprep.subr.bf16.mxu0 0
      %5027 = vmatpush2.bf16.msra.mxu0 0
      %5028 = vmatprep.subr.bf16.mxu0 0
      %5029 = vmatpush2.bf16.msra.mxu0 0
      %5030 = vmatprep.subr.bf16.mxu0 0
      %5031 = vmatpush2.bf16.msra.mxu0 0
      %5032 = vmatprep.subr.bf16.mxu0 0
      %5033 = vmatpush2.bf16.msra.mxu0 0
      %5034 = vmatprep.mubr.bf16.mxu0 0
      %5035 = vmatmul.mubr.bf16.gmra.mxu0 %v4952
      %v5036 = vpop.f32.mrf.mxu0
      %v5037 = vadd.f32 0.0, %v5036
      %v5038 = vpop.f32.mrf.mxu0
      %v5039 = vpop.f32.mrf.mxu0
      %v5040 = vadd.f32 0.0, %v5039
      %v5041 = vpop.f32.mrf.mxu0
      %5042 = vmatprep.mubr.bf16.mxu0 0
      %5043 = vmatmul.mubr.bf16.gmra.mxu0 %v4955
      %v5044 = vpop.f32.mrf.mxu0
      %v5045 = vadd.f32 0.0, %v5044
      %v5046 = vpop.f32.mrf.mxu0
      %v5047 = vpop.f32.mrf.mxu0
      %v5048 = vadd.f32 0.0, %v5047
      %v5049 = vpop.f32.mrf.mxu0
      %5050 = vmatprep.mubr.bf16.mxu0 0
      %5051 = vmatmul.mubr.bf16.gmra.mxu0 %v4958
      %v5052 = vpop.f32.mrf.mxu0
      %v5053 = vadd.f32 0.0, %v5052
      %v5054 = vpop.f32.mrf.mxu0
      %v5055 = vpop.f32.mrf.mxu0
      %v5056 = vadd.f32 0.0, %v5055
      %v5057 = vpop.f32.mrf.mxu0
      %5058 = vmatprep.mubr.bf16.mxu0 0
      %5059 = vmatmul.mubr.bf16.gmra.mxu0 %v4961
      %v5060 = vpop.f32.mrf.mxu0
      %v5061 = vadd.f32 0.0, %v5060
      %v5062 = vpop.f32.mrf.mxu0
      %v5063 = vpop.f32.mrf.mxu0
      %v5064 = vadd.f32 0.0, %v5063
      %v5065 = vpop.f32.mrf.mxu0
      %5066 = vmatprep.mubr.bf16.mxu0 0
      %5067 = vmatmul.mubr.bf16.gmra.mxu0 %v4964
      %v5068 = vpop.f32.mrf.mxu0
      %v5069 = vadd.f32 0.0, %v5068
      %v5070 = vpop.f32.mrf.mxu0
      %v5071 = vpop.f32.mrf.mxu0
      %v5072 = vadd.f32 0.0, %v5071
      %v5073 = vpop.f32.mrf.mxu0
      %5074 = vmatprep.mubr.bf16.mxu0 0
      %5075 = vmatmul.mubr.bf16.gmra.mxu0 %v4967
      %v5076 = vpop.f32.mrf.mxu0
      %v5077 = vadd.f32 0.0, %v5076
      %v5078 = vpop.f32.mrf.mxu0
      %v5079 = vpop.f32.mrf.mxu0
      %v5080 = vadd.f32 0.0, %v5079
      %v5081 = vpop.f32.mrf.mxu0
      %5082 = vmatprep.mubr.bf16.mxu0 0
      %5083 = vmatmul.mubr.bf16.gmra.mxu0 %v4970
      %v5084 = vpop.f32.mrf.mxu0
      %v5085 = vadd.f32 0.0, %v5084
      %v5086 = vpop.f32.mrf.mxu0
      %v5087 = vpop.f32.mrf.mxu0
      %v5088 = vadd.f32 0.0, %v5087
      %v5089 = vpop.f32.mrf.mxu0
      %5090 = vmatprep.mubr.bf16.mxu0 0
      %5091 = vmatmul.mubr.bf16.gmra.mxu0 %v4973
      %v5092 = vpop.f32.mrf.mxu0
      %v5093 = vadd.f32 0.0, %v5092
      %v5094 = vpop.f32.mrf.mxu0
      %v5095 = vpop.f32.mrf.mxu0
      %v5096 = vadd.f32 0.0, %v5095
      %v5097 = vpop.f32.mrf.mxu0
      %5098 = vmatprep.mubr.bf16.mxu0 0
      %5099 = vmatmul.mubr.bf16.gmra.mxu0 %v4976
      %v5100 = vpop.f32.mrf.mxu0
      %v5101 = vadd.f32 0.0, %v5100
      %v5102 = vpop.f32.mrf.mxu0
      %v5103 = vpop.f32.mrf.mxu0
      %v5104 = vadd.f32 0.0, %v5103
      %v5105 = vpop.f32.mrf.mxu0
      %5106 = vmatprep.mubr.bf16.mxu0 0
      %5107 = vmatmul.mubr.bf16.gmra.mxu0 %v4979
      %v5108 = vpop.f32.mrf.mxu0
      %v5109 = vadd.f32 0.0, %v5108
      %v5110 = vpop.f32.mrf.mxu0
      %v5111 = vpop.f32.mrf.mxu0
      %v5112 = vadd.f32 0.0, %v5111
      %v5113 = vpop.f32.mrf.mxu0
      %5114 = vmatprep.mubr.bf16.mxu0 0
      %5115 = vmatmul.mubr.bf16.gmra.mxu0 %v4982
      %v5116 = vpop.f32.mrf.mxu0
      %v5117 = vadd.f32 0.0, %v5116
      %v5118 = vpop.f32.mrf.mxu0
      %v5119 = vpop.f32.mrf.mxu0
      %v5120 = vadd.f32 0.0, %v5119
      %v5121 = vpop.f32.mrf.mxu0
      %5122 = vmatprep.mubr.bf16.mxu0 0
      %5123 = vmatmul.mubr.bf16.gmra.mxu0 %v4985
      %v5124 = vpop.f32.mrf.mxu0
      %v5125 = vadd.f32 0.0, %v5124
      %v5126 = vpop.f32.mrf.mxu0
      %v5127 = vpop.f32.mrf.mxu0
      %v5128 = vadd.f32 0.0, %v5127
      %v5129 = vpop.f32.mrf.mxu0
      %5130 = vmatprep.mubr.bf16.mxu0 0
      %5131 = vmatmul.mubr.bf16.gmra.mxu0 %v4988
      %v5132 = vpop.f32.mrf.mxu0
      %v5133 = vadd.f32 0.0, %v5132
      %v5134 = vpop.f32.mrf.mxu0
      %v5135 = vpop.f32.mrf.mxu0
      %v5136 = vadd.f32 0.0, %v5135
      %v5137 = vpop.f32.mrf.mxu0
      %5138 = vmatprep.mubr.bf16.mxu0 0
      %5139 = vmatmul.mubr.bf16.gmra.mxu0 %v4991
      %v5140 = vpop.f32.mrf.mxu0
      %v5141 = vadd.f32 0.0, %v5140
      %v5142 = vpop.f32.mrf.mxu0
      %v5143 = vpop.f32.mrf.mxu0
      %v5144 = vadd.f32 0.0, %v5143
      %v5145 = vpop.f32.mrf.mxu0
      %5146 = vmatprep.mubr.bf16.mxu0 0
      %5147 = vmatmul.mubr.bf16.gmra.mxu0 %v4994
      %v5148 = vpop.f32.mrf.mxu0
      %v5149 = vadd.f32 0.0, %v5148
      %v5150 = vpop.f32.mrf.mxu0
      %v5151 = vpop.f32.mrf.mxu0
      %v5152 = vadd.f32 0.0, %v5151
      %v5153 = vpop.f32.mrf.mxu0
      %5154 = vmatprep.mubr.bf16.mxu0 0
      %5155 = vmatmul.mubr.bf16.gmra.mxu0 %v4997
      %v5156 = vpop.f32.mrf.mxu0
      %v5157 = vadd.f32 0.0, %v5156
      %v5158 = vpop.f32.mrf.mxu0
      %v5159 = vpop.f32.mrf.mxu0
      %v5160 = vadd.f32 0.0, %v5159
      %v5161 = vpop.f32.mrf.mxu0
      %5162 = vdwg.mxu0
      %v5163 = vadd.f32 %v4437, %v5037
      %v5164 = vadd.f32 %v4438, %v5040
      %v5165 = vadd.f32 %v4439, %v5045
      %v5166 = vadd.f32 %v4440, %v5048
      %v5167 = vadd.f32 %v4441, %v5053
      %v5168 = vadd.f32 %v4442, %v5056
      %v5169 = vadd.f32 %v4443, %v5061
      %v5170 = vadd.f32 %v4444, %v5064
      %v5171 = vadd.f32 %v4445, %v5069
      %v5172 = vadd.f32 %v4446, %v5072
      %v5173 = vadd.f32 %v4447, %v5077
      %v5174 = vadd.f32 %v4448, %v5080
      %v5175 = vadd.f32 %v4449, %v5085
      %v5176 = vadd.f32 %v4450, %v5088
      %v5177 = vadd.f32 %v4451, %v5093
      %v5178 = vadd.f32 %v4452, %v5096
      %v5179 = vadd.f32 %v4453, %v5101
      %v5180 = vadd.f32 %v4454, %v5104
      %v5181 = vadd.f32 %v4455, %v5109
      %v5182 = vadd.f32 %v4456, %v5112
      %v5183 = vadd.f32 %v4457, %v5117
      %v5184 = vadd.f32 %v4458, %v5120
      %v5185 = vadd.f32 %v4459, %v5125
      %v5186 = vadd.f32 %v4460, %v5128
      %v5187 = vadd.f32 %v4461, %v5133
      %v5188 = vadd.f32 %v4462, %v5136
      %v5189 = vadd.f32 %v4463, %v5141
      %v5190 = vadd.f32 %v4464, %v5144
      %v5191 = vadd.f32 %v4465, %v5149
      %v5192 = vadd.f32 %v4466, %v5152
      %v5193 = vadd.f32 %v4467, %v5157
      %v5194 = vadd.f32 %v4468, %v5160
      %v5195 = vld [vmem:[%s796] sm:$0xe]
      %v5196 = vld [vmem:[%s796 + $0xc] sm:$0xe]
      %v5197 = vld [vmem:[%s796 + $0x18] sm:$0xe]
      %v5198 = vld [vmem:[%s796 + $0x24] sm:$0xe]
      %v5199 = vld [vmem:[%s796 + $0x30] sm:$0xe]
      %v5200 = vld [vmem:[%s796 + $0x3c] sm:$0xe]
      %v5201 = vld [vmem:[%s796 + $0x48] sm:$0xe]
      %v5202 = vld [vmem:[%s796 + $0x54] sm:$0xe]
      %v5203 = vld [vmem:[%s796 + $0x60] sm:$0xe]
      %v5204 = vld [vmem:[%s796 + $0x6c] sm:$0xe]
      %v5205 = vld [vmem:[%s796 + $0x78] sm:$0xe]
      %v5206 = vld [vmem:[%s796 + $0x84] sm:$0xe]
      %v5207 = vld [vmem:[%s796 + $0x90] sm:$0xe]
      %v5208 = vld [vmem:[%s796 + $0x9c] sm:$0xe]
      %v5209 = vld [vmem:[%s796 + $0xa8] sm:$0xe]
      %v5210 = vld [vmem:[%s796 + $0xb4] sm:$0xe]
      %v5259 = vrot.slane %v5195, 5
      %v5260 = vrot.slane %v5259, 4
      %v5261 = vrot.slane %v4470, 5
      %v5262 = vsel %vm2150, %v5260, %v5261
      %v5263 = vrot.slane %v5261, 4
      %v5264 = vrot.slane %v4471, 5
      %v5265 = vsel %vm2150, %v5263, %v5264
      %v5266 = vrot.slane %v5196, 5
      %v5267 = vrot.slane %v5266, 4
      %v5268 = vrot.slane %v4473, 5
      %v5269 = vsel %vm2150, %v5267, %v5268
      %v5270 = vrot.slane %v5268, 4
      %v5271 = vrot.slane %v4474, 5
      %v5272 = vsel %vm2150, %v5270, %v5271
      %v5273 = vrot.slane %v5197, 5
      %v5274 = vrot.slane %v5273, 4
      %v5275 = vrot.slane %v4476, 5
      %v5276 = vsel %vm2150, %v5274, %v5275
      %v5277 = vrot.slane %v5275, 4
      %v5278 = vrot.slane %v4477, 5
      %v5279 = vsel %vm2150, %v5277, %v5278
      %v5280 = vrot.slane %v5198, 5
      %v5281 = vrot.slane %v5280, 4
      %v5282 = vrot.slane %v4479, 5
      %v5283 = vsel %vm2150, %v5281, %v5282
      %v5284 = vrot.slane %v5282, 4
      %v5285 = vrot.slane %v4480, 5
      %v5286 = vsel %vm2150, %v5284, %v5285
      %v5287 = vrot.slane %v5199, 5
      %v5288 = vrot.slane %v5287, 4
      %v5289 = vrot.slane %v4482, 5
      %v5290 = vsel %vm2150, %v5288, %v5289
      %v5291 = vrot.slane %v5289, 4
      %v5292 = vrot.slane %v4483, 5
      %v5293 = vsel %vm2150, %v5291, %v5292
      %v5294 = vrot.slane %v5200, 5
      %v5295 = vrot.slane %v5294, 4
      %v5296 = vrot.slane %v4485, 5
      %v5297 = vsel %vm2150, %v5295, %v5296
      %v5298 = vrot.slane %v5296, 4
      %v5299 = vrot.slane %v4486, 5
      %v5300 = vsel %vm2150, %v5298, %v5299
      %v5301 = vrot.slane %v5201, 5
      %v5302 = vrot.slane %v5301, 4
      %v5303 = vrot.slane %v4488, 5
      %v5304 = vsel %vm2150, %v5302, %v5303
      %v5305 = vrot.slane %v5303, 4
      %v5306 = vrot.slane %v4489, 5
      %v5307 = vsel %vm2150, %v5305, %v5306
      %v5308 = vrot.slane %v5202, 5
      %v5309 = vrot.slane %v5308, 4
      %v5310 = vrot.slane %v4491, 5
      %v5311 = vsel %vm2150, %v5309, %v5310
      %v5312 = vrot.slane %v5310, 4
      %v5313 = vrot.slane %v4492, 5
      %v5314 = vsel %vm2150, %v5312, %v5313
      %v5315 = vrot.slane %v5203, 5
      %v5316 = vrot.slane %v5315, 4
      %v5317 = vrot.slane %v4494, 5
      %v5318 = vsel %vm2150, %v5316, %v5317
      %v5319 = vrot.slane %v5317, 4
      %v5320 = vrot.slane %v4495, 5
      %v5321 = vsel %vm2150, %v5319, %v5320
      %v5322 = vrot.slane %v5204, 5
      %v5323 = vrot.slane %v5322, 4
      %v5324 = vrot.slane %v4497, 5
      %v5325 = vsel %vm2150, %v5323, %v5324
      %v5326 = vrot.slane %v5324, 4
      %v5327 = vrot.slane %v4498, 5
      %v5328 = vsel %vm2150, %v5326, %v5327
      %v5329 = vrot.slane %v5205, 5
      %v5330 = vrot.slane %v5329, 4
      %v5331 = vrot.slane %v4500, 5
      %v5332 = vsel %vm2150, %v5330, %v5331
      %v5333 = vrot.slane %v5331, 4
      %v5334 = vrot.slane %v4501, 5
      %v5335 = vsel %vm2150, %v5333, %v5334
      %v5336 = vrot.slane %v5206, 5
      %v5337 = vrot.slane %v5336, 4
      %v5338 = vrot.slane %v4503, 5
      %v5339 = vsel %vm2150, %v5337, %v5338
      %v5340 = vrot.slane %v5338, 4
      %v5341 = vrot.slane %v4504, 5
      %v5342 = vsel %vm2150, %v5340, %v5341
      %v5343 = vrot.slane %v5207, 5
      %v5344 = vrot.slane %v5343, 4
      %v5345 = vrot.slane %v4506, 5
      %v5346 = vsel %vm2150, %v5344, %v5345
      %v5347 = vrot.slane %v5345, 4
      %v5348 = vrot.slane %v4507, 5
      %v5349 = vsel %vm2150, %v5347, %v5348
      %v5350 = vrot.slane %v5208, 5
      %v5351 = vrot.slane %v5350, 4
      %v5352 = vrot.slane %v4509, 5
      %v5353 = vsel %vm2150, %v5351, %v5352
      %v5354 = vrot.slane %v5352, 4
      %v5355 = vrot.slane %v4510, 5
      %v5356 = vsel %vm2150, %v5354, %v5355
      %v5357 = vrot.slane %v5209, 5
      %v5358 = vrot.slane %v5357, 4
      %v5359 = vrot.slane %v4512, 5
      %v5360 = vsel %vm2150, %v5358, %v5359
      %v5361 = vrot.slane %v5359, 4
      %v5362 = vrot.slane %v4513, 5
      %v5363 = vsel %vm2150, %v5361, %v5362
      %v5364 = vrot.slane %v5210, 5
      %v5365 = vrot.slane %v5364, 4
      %v5366 = vrot.slane %v4515, 5
      %v5367 = vsel %vm2150, %v5365, %v5366
      %v5368 = vrot.slane %v5366, 4
      %v5369 = vrot.slane %v4516, 5
      %v5370 = vsel %vm2150, %v5368, %v5369
      %s5371 = scalar_lea.vmem %s1, 16
      %v5372 = vld [vmem:[%s5371] sm:$0x3]
      %v5373 = vunpack.c.l.b16 %v5262
      %v5374 = vunpack.c.l.b16 %v5265
      %v5375 = vunpack.c.l.b16 %v5269
      %v5376 = vunpack.c.l.b16 %v5272
      %v5377 = vunpack.c.l.b16 %v5276
      %v5378 = vunpack.c.l.b16 %v5279
      %v5379 = vunpack.c.l.b16 %v5283
      %v5380 = vunpack.c.l.b16 %v5286
      %v5381 = vunpack.c.l.b16 %v5290
      %v5382 = vunpack.c.l.b16 %v5293
      %v5383 = vunpack.c.l.b16 %v5297
      %v5384 = vunpack.c.l.b16 %v5300
      %v5385 = vunpack.c.l.b16 %v5304
      %v5386 = vunpack.c.l.b16 %v5307
      %v5387 = vunpack.c.l.b16 %v5311
      %v5388 = vunpack.c.l.b16 %v5314
      %v5389 = vunpack.c.l.b16 %v5318
      %v5390 = vunpack.c.l.b16 %v5321
      %v5391 = vunpack.c.l.b16 %v5325
      %v5392 = vunpack.c.l.b16 %v5328
      %v5393 = vunpack.c.l.b16 %v5332
      %v5394 = vunpack.c.l.b16 %v5335
      %v5395 = vunpack.c.l.b16 %v5339
      %v5396 = vunpack.c.l.b16 %v5342
      %v5397 = vunpack.c.l.b16 %v5346
      %v5398 = vunpack.c.l.b16 %v5349
      %v5399 = vunpack.c.l.b16 %v5353
      %v5400 = vunpack.c.l.b16 %v5356
      %v5401 = vunpack.c.l.b16 %v5360
      %v5402 = vunpack.c.l.b16 %v5363
      %v5403 = vunpack.c.l.b16 %v5367
      %v5404 = vunpack.c.l.b16 %v5370
      %v5405 = vpack.c.b16 %v5374, %v5373
      %v5406 = vpack.c.b16 %v5376, %v5375
      %v5407 = vpack.c.b16 %v5378, %v5377
      %v5408 = vpack.c.b16 %v5380, %v5379
      %v5409 = vpack.c.b16 %v5382, %v5381
      %v5410 = vpack.c.b16 %v5384, %v5383
      %v5411 = vpack.c.b16 %v5386, %v5385
      %v5412 = vpack.c.b16 %v5388, %v5387
      %v5413 = vpack.c.b16 %v5390, %v5389
      %v5414 = vpack.c.b16 %v5392, %v5391
      %v5415 = vpack.c.b16 %v5394, %v5393
      %v5416 = vpack.c.b16 %v5396, %v5395
      %v5417 = vpack.c.b16 %v5398, %v5397
      %v5418 = vpack.c.b16 %v5400, %v5399
      %v5419 = vpack.c.b16 %v5402, %v5401
      %v5420 = vpack.c.b16 %v5404, %v5403
      %v5422 = vsel %vm1594, %v5405, 0
      %v5425 = vsel %vm1594, %v5406, 0
      %v5428 = vsel %vm1594, %v5407, 0
      %v5431 = vsel %vm1594, %v5408, 0
      %v5434 = vsel %vm1594, %v5409, 0
      %v5437 = vsel %vm1594, %v5410, 0
      %v5440 = vsel %vm1594, %v5411, 0
      %v5443 = vsel %vm1594, %v5412, 0
      %v5446 = vsel %vm1594, %v5413, 0
      %v5449 = vsel %vm1594, %v5414, 0
      %v5452 = vsel %vm1594, %v5415, 0
      %v5455 = vsel %vm1594, %v5416, 0
      %v5458 = vsel %vm1594, %v5417, 0
      %v5461 = vsel %vm1594, %v5418, 0
      %v5464 = vsel %vm1594, %v5419, 0
      %v5467 = vsel %vm1594, %v5420, 0
      %v5470 = vsel %vm1643, %v5372, 0
      %5472 = vmatprep.subr.bf16.mxu0 0
      %5473 = vmatpush1.bf16.msra.mxu0 0
      %5474 = vmatprep.subr.bf16.mxu0 0
      %5475 = vmatpush1.bf16.msra.mxu0 0
      %5476 = vmatprep.subr.bf16.mxu0 0
      %5477 = vmatpush1.bf16.msra.mxu0 0
      %5478 = vmatprep.subr.bf16.mxu0 0
      %5479 = vmatpush1.bf16.msra.mxu0 0
      %5480 = vmatprep.subr.bf16.mxu0 0
      %5481 = vmatpush1.bf16.msra.mxu0 0
      %5482 = vmatprep.subr.bf16.mxu0 0
      %5483 = vmatpush1.bf16.msra.mxu0 0
      %5484 = vmatprep.subr.bf16.mxu0 0
      %5485 = vmatpush1.bf16.msra.mxu0 0
      %5486 = vmatprep.subr.bf16.mxu0 0
      %5487 = vmatpush1.bf16.msra.mxu0 %v5470
      %5488 = vmatprep.subr.bf16.mxu0 0
      %5489 = vmatpush2.bf16.msra.mxu0 0
      %5490 = vmatprep.subr.bf16.mxu0 0
      %5491 = vmatpush2.bf16.msra.mxu0 0
      %5492 = vmatprep.subr.bf16.mxu0 0
      %5493 = vmatpush2.bf16.msra.mxu0 0
      %5494 = vmatprep.subr.bf16.mxu0 0
      %5495 = vmatpush2.bf16.msra.mxu0 0
      %5496 = vmatprep.subr.bf16.mxu0 0
      %5497 = vmatpush2.bf16.msra.mxu0 0
      %5498 = vmatprep.subr.bf16.mxu0 0
      %5499 = vmatpush2.bf16.msra.mxu0 0
      %5500 = vmatprep.subr.bf16.mxu0 0
      %5501 = vmatpush2.bf16.msra.mxu0 0
      %5502 = vmatprep.subr.bf16.mxu0 0
      %5503 = vmatpush2.bf16.msra.mxu0 0
      %5504 = vmatprep.mubr.bf16.mxu0 0
      %5505 = vmatmul.mubr.bf16.gmra.mxu0 %v5422
      %v5506 = vpop.f32.mrf.mxu0
      %v5507 = vadd.f32 0.0, %v5506
      %v5508 = vpop.f32.mrf.mxu0
      %v5509 = vpop.f32.mrf.mxu0
      %v5510 = vadd.f32 0.0, %v5509
      %v5511 = vpop.f32.mrf.mxu0
      %5512 = vmatprep.mubr.bf16.mxu0 0
      %5513 = vmatmul.mubr.bf16.gmra.mxu0 %v5425
      %v5514 = vpop.f32.mrf.mxu0
      %v5515 = vadd.f32 0.0, %v5514
      %v5516 = vpop.f32.mrf.mxu0
      %v5517 = vpop.f32.mrf.mxu0
      %v5518 = vadd.f32 0.0, %v5517
      %v5519 = vpop.f32.mrf.mxu0
      %5520 = vmatprep.mubr.bf16.mxu0 0
      %5521 = vmatmul.mubr.bf16.gmra.mxu0 %v5428
      %v5522 = vpop.f32.mrf.mxu0
      %v5523 = vadd.f32 0.0, %v5522
      %v5524 = vpop.f32.mrf.mxu0
      %v5525 = vpop.f32.mrf.mxu0
      %v5526 = vadd.f32 0.0, %v5525
      %v5527 = vpop.f32.mrf.mxu0
      %5528 = vmatprep.mubr.bf16.mxu0 0
      %5529 = vmatmul.mubr.bf16.gmra.mxu0 %v5431
      %v5530 = vpop.f32.mrf.mxu0
      %v5531 = vadd.f32 0.0, %v5530
      %v5532 = vpop.f32.mrf.mxu0
      %v5533 = vpop.f32.mrf.mxu0
      %v5534 = vadd.f32 0.0, %v5533
      %v5535 = vpop.f32.mrf.mxu0
      %5536 = vmatprep.mubr.bf16.mxu0 0
      %5537 = vmatmul.mubr.bf16.gmra.mxu0 %v5434
      %v5538 = vpop.f32.mrf.mxu0
      %v5539 = vadd.f32 0.0, %v5538
      %v5540 = vpop.f32.mrf.mxu0
      %v5541 = vpop.f32.mrf.mxu0
      %v5542 = vadd.f32 0.0, %v5541
      %v5543 = vpop.f32.mrf.mxu0
      %5544 = vmatprep.mubr.bf16.mxu0 0
      %5545 = vmatmul.mubr.bf16.gmra.mxu0 %v5437
      %v5546 = vpop.f32.mrf.mxu0
      %v5547 = vadd.f32 0.0, %v5546
      %v5548 = vpop.f32.mrf.mxu0
      %v5549 = vpop.f32.mrf.mxu0
      %v5550 = vadd.f32 0.0, %v5549
      %v5551 = vpop.f32.mrf.mxu0
      %5552 = vmatprep.mubr.bf16.mxu0 0
      %5553 = vmatmul.mubr.bf16.gmra.mxu0 %v5440
      %v5554 = vpop.f32.mrf.mxu0
      %v5555 = vadd.f32 0.0, %v5554
      %v5556 = vpop.f32.mrf.mxu0
      %v5557 = vpop.f32.mrf.mxu0
      %v5558 = vadd.f32 0.0, %v5557
      %v5559 = vpop.f32.mrf.mxu0
      %5560 = vmatprep.mubr.bf16.mxu0 0
      %5561 = vmatmul.mubr.bf16.gmra.mxu0 %v5443
      %v5562 = vpop.f32.mrf.mxu0
      %v5563 = vadd.f32 0.0, %v5562
      %v5564 = vpop.f32.mrf.mxu0
      %v5565 = vpop.f32.mrf.mxu0
      %v5566 = vadd.f32 0.0, %v5565
      %v5567 = vpop.f32.mrf.mxu0
      %5568 = vmatprep.mubr.bf16.mxu0 0
      %5569 = vmatmul.mubr.bf16.gmra.mxu0 %v5446
      %v5570 = vpop.f32.mrf.mxu0
      %v5571 = vadd.f32 0.0, %v5570
      %v5572 = vpop.f32.mrf.mxu0
      %v5573 = vpop.f32.mrf.mxu0
      %v5574 = vadd.f32 0.0, %v5573
      %v5575 = vpop.f32.mrf.mxu0
      %5576 = vmatprep.mubr.bf16.mxu0 0
      %5577 = vmatmul.mubr.bf16.gmra.mxu0 %v5449
      %v5578 = vpop.f32.mrf.mxu0
      %v5579 = vadd.f32 0.0, %v5578
      %v5580 = vpop.f32.mrf.mxu0
      %v5581 = vpop.f32.mrf.mxu0
      %v5582 = vadd.f32 0.0, %v5581
      %v5583 = vpop.f32.mrf.mxu0
      %5584 = vmatprep.mubr.bf16.mxu0 0
      %5585 = vmatmul.mubr.bf16.gmra.mxu0 %v5452
      %v5586 = vpop.f32.mrf.mxu0
      %v5587 = vadd.f32 0.0, %v5586
      %v5588 = vpop.f32.mrf.mxu0
      %v5589 = vpop.f32.mrf.mxu0
      %v5590 = vadd.f32 0.0, %v5589
      %v5591 = vpop.f32.mrf.mxu0
      %5592 = vmatprep.mubr.bf16.mxu0 0
      %5593 = vmatmul.mubr.bf16.gmra.mxu0 %v5455
      %v5594 = vpop.f32.mrf.mxu0
      %v5595 = vadd.f32 0.0, %v5594
      %v5596 = vpop.f32.mrf.mxu0
      %v5597 = vpop.f32.mrf.mxu0
      %v5598 = vadd.f32 0.0, %v5597
      %v5599 = vpop.f32.mrf.mxu0
      %5600 = vmatprep.mubr.bf16.mxu0 0
      %5601 = vmatmul.mubr.bf16.gmra.mxu0 %v5458
      %v5602 = vpop.f32.mrf.mxu0
      %v5603 = vadd.f32 0.0, %v5602
      %v5604 = vpop.f32.mrf.mxu0
      %v5605 = vpop.f32.mrf.mxu0
      %v5606 = vadd.f32 0.0, %v5605
      %v5607 = vpop.f32.mrf.mxu0
      %5608 = vmatprep.mubr.bf16.mxu0 0
      %5609 = vmatmul.mubr.bf16.gmra.mxu0 %v5461
      %v5610 = vpop.f32.mrf.mxu0
      %v5611 = vadd.f32 0.0, %v5610
      %v5612 = vpop.f32.mrf.mxu0
      %v5613 = vpop.f32.mrf.mxu0
      %v5614 = vadd.f32 0.0, %v5613
      %v5615 = vpop.f32.mrf.mxu0
      %5616 = vmatprep.mubr.bf16.mxu0 0
      %5617 = vmatmul.mubr.bf16.gmra.mxu0 %v5464
      %v5618 = vpop.f32.mrf.mxu0
      %v5619 = vadd.f32 0.0, %v5618
      %v5620 = vpop.f32.mrf.mxu0
      %v5621 = vpop.f32.mrf.mxu0
      %v5622 = vadd.f32 0.0, %v5621
      %v5623 = vpop.f32.mrf.mxu0
      %5624 = vmatprep.mubr.bf16.mxu0 0
      %5625 = vmatmul.mubr.bf16.gmra.mxu0 %v5467
      %v5626 = vpop.f32.mrf.mxu0
      %v5627 = vadd.f32 0.0, %v5626
      %v5628 = vpop.f32.mrf.mxu0
      %v5629 = vpop.f32.mrf.mxu0
      %v5630 = vadd.f32 0.0, %v5629
      %v5631 = vpop.f32.mrf.mxu0
      %5632 = vdwg.mxu0
      %v5633 = vadd.f32 %v5163, %v5507
      %v5634 = vadd.f32 %v5164, %v5510
      %v5635 = vadd.f32 %v5165, %v5515
      %v5636 = vadd.f32 %v5166, %v5518
      %v5637 = vadd.f32 %v5167, %v5523
      %v5638 = vadd.f32 %v5168, %v5526
      %v5639 = vadd.f32 %v5169, %v5531
      %v5640 = vadd.f32 %v5170, %v5534
      %v5641 = vadd.f32 %v5171, %v5539
      %v5642 = vadd.f32 %v5172, %v5542
      %v5643 = vadd.f32 %v5173, %v5547
      %v5644 = vadd.f32 %v5174, %v5550
      %v5645 = vadd.f32 %v5175, %v5555
      %v5646 = vadd.f32 %v5176, %v5558
      %v5647 = vadd.f32 %v5177, %v5563
      %v5648 = vadd.f32 %v5178, %v5566
      %v5649 = vadd.f32 %v5179, %v5571
      %v5650 = vadd.f32 %v5180, %v5574
      %v5651 = vadd.f32 %v5181, %v5579
      %v5652 = vadd.f32 %v5182, %v5582
      %v5653 = vadd.f32 %v5183, %v5587
      %v5654 = vadd.f32 %v5184, %v5590
      %v5655 = vadd.f32 %v5185, %v5595
      %v5656 = vadd.f32 %v5186, %v5598
      %v5657 = vadd.f32 %v5187, %v5603
      %v5658 = vadd.f32 %v5188, %v5606
      %v5659 = vadd.f32 %v5189, %v5611
      %v5660 = vadd.f32 %v5190, %v5614
      %v5661 = vadd.f32 %v5191, %v5619
      %v5662 = vadd.f32 %v5192, %v5622
      %v5663 = vadd.f32 %v5193, %v5627
      %v5664 = vadd.f32 %v5194, %v5630
      %v5665 = vld [vmem:[%s2] sm:$0x1]
      %v5667 = vlaneseq
      %v5668 = vshrl.u32 %v5667, 7
      %v5669 = vsub.s32 0, %v5668
      %v5670 = vrot.slane %v5665, %v5669
      %v5672 = vadd.f32 %v5633, %v5670
      %v5673 = vadd.f32 %v5634, %v5670
      %v5674 = vadd.f32 %v5635, %v5670
      %v5675 = vadd.f32 %v5636, %v5670
      %v5676 = vadd.f32 %v5637, %v5670
      %v5677 = vadd.f32 %v5638, %v5670
      %v5678 = vadd.f32 %v5639, %v5670
      %v5679 = vadd.f32 %v5640, %v5670
      %v5680 = vadd.f32 %v5641, %v5670
      %v5681 = vadd.f32 %v5642, %v5670
      %v5682 = vadd.f32 %v5643, %v5670
      %v5683 = vadd.f32 %v5644, %v5670
      %v5684 = vadd.f32 %v5645, %v5670
      %v5685 = vadd.f32 %v5646, %v5670
      %v5686 = vadd.f32 %v5647, %v5670
      %v5687 = vadd.f32 %v5648, %v5670
      %v5688 = vadd.f32 %v5649, %v5670
      %v5689 = vadd.f32 %v5650, %v5670
      %v5690 = vadd.f32 %v5651, %v5670
      %v5691 = vadd.f32 %v5652, %v5670
      %v5692 = vadd.f32 %v5653, %v5670
      %v5693 = vadd.f32 %v5654, %v5670
      %v5694 = vadd.f32 %v5655, %v5670
      %v5695 = vadd.f32 %v5656, %v5670
      %v5696 = vadd.f32 %v5657, %v5670
      %v5697 = vadd.f32 %v5658, %v5670
      %v5698 = vadd.f32 %v5659, %v5670
      %v5699 = vadd.f32 %v5660, %v5670
      %v5700 = vadd.f32 %v5661, %v5670
      %v5701 = vadd.f32 %v5662, %v5670
      %v5702 = vadd.f32 %v5663, %v5670
      %v5703 = vadd.f32 %v5664, %v5670
      %5704 = vst.msk [vmem:[#allocation3] sm:$0xff] %vm1594, %v5672
      %5705 = vst.msk [vmem:[#allocation3 + $0x8] sm:$0xff] %vm1594, %v5673
      %5706 = vst.msk [vmem:[#allocation3 + $0x10] sm:$0xff] %vm1594, %v5674
      %5707 = vst.msk [vmem:[#allocation3 + $0x18] sm:$0xff] %vm1594, %v5675
      %5708 = vst.msk [vmem:[#allocation3 + $0x20] sm:$0xff] %vm1594, %v5676
      %5709 = vst.msk [vmem:[#allocation3 + $0x28] sm:$0xff] %vm1594, %v5677
      %5710 = vst.msk [vmem:[#allocation3 + $0x30] sm:$0xff] %vm1594, %v5678
      %5711 = vst.msk [vmem:[#allocation3 + $0x38] sm:$0xff] %vm1594, %v5679
      %5712 = vst.msk [vmem:[#allocation3 + $0x40] sm:$0xff] %vm1594, %v5680
      %5713 = vst.msk [vmem:[#allocation3 + $0x48] sm:$0xff] %vm1594, %v5681
      %5714 = vst.msk [vmem:[#allocation3 + $0x50] sm:$0xff] %vm1594, %v5682
      %5715 = vst.msk [vmem:[#allocation3 + $0x58] sm:$0xff] %vm1594, %v5683
      %5716 = vst.msk [vmem:[#allocation3 + $0x60] sm:$0xff] %vm1594, %v5684
      %5717 = vst.msk [vmem:[#allocation3 + $0x68] sm:$0xff] %vm1594, %v5685
      %5718 = vst.msk [vmem:[#allocation3 + $0x70] sm:$0xff] %vm1594, %v5686
      %5719 = vst.msk [vmem:[#allocation3 + $0x78] sm:$0xff] %vm1594, %v5687
      %5720 = vst.msk [vmem:[#allocation3 + $0x80] sm:$0xff] %vm1594, %v5688
      %5721 = vst.msk [vmem:[#allocation3 + $0x88] sm:$0xff] %vm1594, %v5689
      %5722 = vst.msk [vmem:[#allocation3 + $0x90] sm:$0xff] %vm1594, %v5690
      %5723 = vst.msk [vmem:[#allocation3 + $0x98] sm:$0xff] %vm1594, %v5691
      %5724 = vst.msk [vmem:[#allocation3 + $0xa0] sm:$0xff] %vm1594, %v5692
      %5725 = vst.msk [vmem:[#allocation3 + $0xa8] sm:$0xff] %vm1594, %v5693
      %5726 = vst.msk [vmem:[#allocation3 + $0xb0] sm:$0xff] %vm1594, %v5694
      %5727 = vst.msk [vmem:[#allocation3 + $0xb8] sm:$0xff] %vm1594, %v5695
      %5728 = vst.msk [vmem:[#allocation3 + $0xc0] sm:$0xff] %vm1594, %v5696
      %5729 = vst.msk [vmem:[#allocation3 + $0xc8] sm:$0xff] %vm1594, %v5697
      %5730 = vst.msk [vmem:[#allocation3 + $0xd0] sm:$0xff] %vm1594, %v5698
      %5731 = vst.msk [vmem:[#allocation3 + $0xd8] sm:$0xff] %vm1594, %v5699
      %5732 = vst.msk [vmem:[#allocation3 + $0xe0] sm:$0xff] %vm1594, %v5700
      %5733 = vst.msk [vmem:[#allocation3 + $0xe8] sm:$0xff] %vm1594, %v5701
      %5734 = vst.msk [vmem:[#allocation3 + $0xf0] sm:$0xff] %vm1594, %v5702
      %5735 = vst.msk [vmem:[#allocation3 + $0xf8] sm:$0xff] %vm1594, %v5703
      %v5736 = vsel %vm1594, %v5672, 0.0
      %v5737 = vsel %vm1594, %v5673, 0.0
      %v5738 = vadd.f32 %v5736, %v5737
      %v5739 = vsel %vm1594, %v5674, 0.0
      %v5740 = vadd.f32 %v5738, %v5739
      %v5741 = vsel %vm1594, %v5675, 0.0
      %v5742 = vadd.f32 %v5740, %v5741
      %v5743 = vsel %vm1594, %v5676, 0.0
      %v5744 = vadd.f32 %v5742, %v5743
      %v5745 = vsel %vm1594, %v5677, 0.0
      %v5746 = vadd.f32 %v5744, %v5745
      %v5747 = vsel %vm1594, %v5678, 0.0
      %v5748 = vadd.f32 %v5746, %v5747
      %v5749 = vsel %vm1594, %v5679, 0.0
      %v5750 = vadd.f32 %v5748, %v5749
      %v5751 = vsel %vm1594, %v5680, 0.0
      %v5752 = vadd.f32 %v5750, %v5751
      %v5753 = vsel %vm1594, %v5681, 0.0
      %v5754 = vadd.f32 %v5752, %v5753
      %v5755 = vsel %vm1594, %v5682, 0.0
      %v5756 = vadd.f32 %v5754, %v5755
      %v5757 = vsel %vm1594, %v5683, 0.0
      %v5758 = vadd.f32 %v5756, %v5757
      %v5759 = vsel %vm1594, %v5684, 0.0
      %v5760 = vadd.f32 %v5758, %v5759
      %v5761 = vsel %vm1594, %v5685, 0.0
      %v5762 = vadd.f32 %v5760, %v5761
      %v5763 = vsel %vm1594, %v5686, 0.0
      %v5764 = vadd.f32 %v5762, %v5763
      %v5765 = vsel %vm1594, %v5687, 0.0
      %v5766 = vadd.f32 %v5764, %v5765
      %v5767 = vsel %vm1594, %v5688, 0.0
      %v5768 = vadd.f32 %v5766, %v5767
      %v5769 = vsel %vm1594, %v5689, 0.0
      %v5770 = vadd.f32 %v5768, %v5769
      %v5771 = vsel %vm1594, %v5690, 0.0
      %v5772 = vadd.f32 %v5770, %v5771
      %v5773 = vsel %vm1594, %v5691, 0.0
      %v5774 = vadd.f32 %v5772, %v5773
      %v5775 = vsel %vm1594, %v5692, 0.0
      %v5776 = vadd.f32 %v5774, %v5775
      %v5777 = vsel %vm1594, %v5693, 0.0
      %v5778 = vadd.f32 %v5776, %v5777
      %v5779 = vsel %vm1594, %v5694, 0.0
      %v5780 = vadd.f32 %v5778, %v5779
      %v5781 = vsel %vm1594, %v5695, 0.0
      %v5782 = vadd.f32 %v5780, %v5781
      %v5783 = vsel %vm1594, %v5696, 0.0
      %v5784 = vadd.f32 %v5782, %v5783
      %v5785 = vsel %vm1594, %v5697, 0.0
      %v5786 = vadd.f32 %v5784, %v5785
      %v5787 = vsel %vm1594, %v5698, 0.0
      %v5788 = vadd.f32 %v5786, %v5787
      %v5789 = vsel %vm1594, %v5699, 0.0
      %v5790 = vadd.f32 %v5788, %v5789
      %v5791 = vsel %vm1594, %v5700, 0.0
      %v5792 = vadd.f32 %v5790, %v5791
      %v5793 = vsel %vm1594, %v5701, 0.0
      %v5794 = vadd.f32 %v5792, %v5793
      %v5795 = vsel %vm1594, %v5702, 0.0
      %v5796 = vadd.f32 %v5794, %v5795
      %v5797 = vsel %vm1594, %v5703, 0.0
      %v5798 = vadd.f32 %v5796, %v5797
      %v5799 = vrot.slane %v5798, 4
      %v5800 = vadd.f32 %v5798, %v5799
      %v5801 = vrot.slane %v5800, 2
      %v5802 = vadd.f32 %v5800, %v5801
      %v5803 = vrot.slane %v5802, 1
      %v5804 = vadd.f32 %v5802, %v5803
      %v5805 = vadd.f32 %v5804, 0.0
      %v5806 = vmul.f32 %v5672, %v5672
      %v5807 = vmul.f32 %v5673, %v5673
      %v5808 = vmul.f32 %v5674, %v5674
      %v5809 = vmul.f32 %v5675, %v5675
      %v5810 = vmul.f32 %v5676, %v5676
      %v5811 = vmul.f32 %v5677, %v5677
      %v5812 = vmul.f32 %v5678, %v5678
      %v5813 = vmul.f32 %v5679, %v5679
      %v5814 = vmul.f32 %v5680, %v5680
      %v5815 = vmul.f32 %v5681, %v5681
      %v5816 = vmul.f32 %v5682, %v5682
      %v5817 = vmul.f32 %v5683, %v5683
      %v5818 = vmul.f32 %v5684, %v5684
      %v5819 = vmul.f32 %v5685, %v5685
      %v5820 = vmul.f32 %v5686, %v5686
      %v5821 = vmul.f32 %v5687, %v5687
      %v5822 = vmul.f32 %v5688, %v5688
      %v5823 = vmul.f32 %v5689, %v5689
      %v5824 = vmul.f32 %v5690, %v5690
      %v5825 = vmul.f32 %v5691, %v5691
      %v5826 = vmul.f32 %v5692, %v5692
      %v5827 = vmul.f32 %v5693, %v5693
      %v5828 = vmul.f32 %v5694, %v5694
      %v5829 = vmul.f32 %v5695, %v5695
      %v5830 = vmul.f32 %v5696, %v5696
      %v5831 = vmul.f32 %v5697, %v5697
      %v5832 = vmul.f32 %v5698, %v5698
      %v5833 = vmul.f32 %v5699, %v5699
      %v5834 = vmul.f32 %v5700, %v5700
      %v5835 = vmul.f32 %v5701, %v5701
      %v5836 = vmul.f32 %v5702, %v5702
      %v5837 = vmul.f32 %v5703, %v5703
      %v5838 = vsel %vm1594, %v5806, 0.0
      %v5839 = vsel %vm1594, %v5807, 0.0
      %v5840 = vadd.f32 %v5838, %v5839
      %v5841 = vsel %vm1594, %v5808, 0.0
      %v5842 = vadd.f32 %v5840, %v5841
      %v5843 = vsel %vm1594, %v5809, 0.0
      %v5844 = vadd.f32 %v5842, %v5843
      %v5845 = vsel %vm1594, %v5810, 0.0
      %v5846 = vadd.f32 %v5844, %v5845
      %v5847 = vsel %vm1594, %v5811, 0.0
      %v5848 = vadd.f32 %v5846, %v5847
      %v5849 = vsel %vm1594, %v5812, 0.0
      %v5850 = vadd.f32 %v5848, %v5849
      %v5851 = vsel %vm1594, %v5813, 0.0
      %v5852 = vadd.f32 %v5850, %v5851
      %v5853 = vsel %vm1594, %v5814, 0.0
      %v5854 = vadd.f32 %v5852, %v5853
      %v5855 = vsel %vm1594, %v5815, 0.0
      %v5856 = vadd.f32 %v5854, %v5855
      %v5857 = vsel %vm1594, %v5816, 0.0
      %v5858 = vadd.f32 %v5856, %v5857
      %v5859 = vsel %vm1594, %v5817, 0.0
      %v5860 = vadd.f32 %v5858, %v5859
      %v5861 = vsel %vm1594, %v5818, 0.0
      %v5862 = vadd.f32 %v5860, %v5861
      %v5863 = vsel %vm1594, %v5819, 0.0
      %v5864 = vadd.f32 %v5862, %v5863
      %v5865 = vsel %vm1594, %v5820, 0.0
      %v5866 = vadd.f32 %v5864, %v5865
      %v5867 = vsel %vm1594, %v5821, 0.0
      %v5868 = vadd.f32 %v5866, %v5867
      %v5869 = vsel %vm1594, %v5822, 0.0
      %v5870 = vadd.f32 %v5868, %v5869
      %v5871 = vsel %vm1594, %v5823, 0.0
      %v5872 = vadd.f32 %v5870, %v5871
      %v5873 = vsel %vm1594, %v5824, 0.0
      %v5874 = vadd.f32 %v5872, %v5873
      %v5875 = vsel %vm1594, %v5825, 0.0
      %v5876 = vadd.f32 %v5874, %v5875
      %v5877 = vsel %vm1594, %v5826, 0.0
      %v5878 = vadd.f32 %v5876, %v5877
      %v5879 = vsel %vm1594, %v5827, 0.0
      %v5880 = vadd.f32 %v5878, %v5879
      %v5881 = vsel %vm1594, %v5828, 0.0
      %v5882 = vadd.f32 %v5880, %v5881
      %v5883 = vsel %vm1594, %v5829, 0.0
      %v5884 = vadd.f32 %v5882, %v5883
      %v5885 = vsel %vm1594, %v5830, 0.0
      %v5886 = vadd.f32 %v5884, %v5885
      %v5887 = vsel %vm1594, %v5831, 0.0
      %v5888 = vadd.f32 %v5886, %v5887
      %v5889 = vsel %vm1594, %v5832, 0.0
      %v5890 = vadd.f32 %v5888, %v5889
      %v5891 = vsel %vm1594, %v5833, 0.0
      %v5892 = vadd.f32 %v5890, %v5891
      %v5893 = vsel %vm1594, %v5834, 0.0
      %v5894 = vadd.f32 %v5892, %v5893
      %v5895 = vsel %vm1594, %v5835, 0.0
      %v5896 = vadd.f32 %v5894, %v5895
      %v5897 = vsel %vm1594, %v5836, 0.0
      %v5898 = vadd.f32 %v5896, %v5897
      %v5899 = vsel %vm1594, %v5837, 0.0
      %v5900 = vadd.f32 %v5898, %v5899
      %v5901 = vrot.slane %v5900, 4
      %v5902 = vadd.f32 %v5900, %v5901
      %v5903 = vrot.slane %v5902, 2
      %v5904 = vadd.f32 %v5902, %v5903
      %v5905 = vrot.slane %v5904, 1
      %v5906 = vadd.f32 %v5904, %v5905
      %v5907 = vadd.f32 %v5906, 0.0
      %v5908 = vmul.f32 %v5805, 0.00390625
      %v5909 = vmul.f32 %v5907, 0.00390625
      %v5910 = vmul.f32 %v5908, %v5908
      %v5911 = vsub.f32 %v5909, %v5910
      %v5912 = vmax.f32 %v5911, 0.0
      %v5913 = vadd.f32 %v5912, 1e-05
      %v5914 = vrsqrt.pop %v5913
      %v5915 = vld [vmem:[#allocation3] sm:$0xff]
      %v5916 = vld [vmem:[#allocation3 + $0x8] sm:$0xff]
      %v5917 = vld [vmem:[#allocation3 + $0x10] sm:$0xff]
      %v5918 = vld [vmem:[#allocation3 + $0x18] sm:$0xff]
      %v5919 = vld [vmem:[#allocation3 + $0x20] sm:$0xff]
      %v5920 = vld [vmem:[#allocation3 + $0x28] sm:$0xff]
      %v5921 = vld [vmem:[#allocation3 + $0x30] sm:$0xff]
      %v5922 = vld [vmem:[#allocation3 + $0x38] sm:$0xff]
      %v5923 = vld [vmem:[#allocation3 + $0x40] sm:$0xff]
      %v5924 = vld [vmem:[#allocation3 + $0x48] sm:$0xff]
      %v5925 = vld [vmem:[#allocation3 + $0x50] sm:$0xff]
      %v5926 = vld [vmem:[#allocation3 + $0x58] sm:$0xff]
      %v5927 = vld [vmem:[#allocation3 + $0x60] sm:$0xff]
      %v5928 = vld [vmem:[#allocation3 + $0x68] sm:$0xff]
      %v5929 = vld [vmem:[#allocation3 + $0x70] sm:$0xff]
      %v5930 = vld [vmem:[#allocation3 + $0x78] sm:$0xff]
      %v5931 = vld [vmem:[#allocation3 + $0x80] sm:$0xff]
      %v5932 = vld [vmem:[#allocation3 + $0x88] sm:$0xff]
      %v5933 = vld [vmem:[#allocation3 + $0x90] sm:$0xff]
      %v5934 = vld [vmem:[#allocation3 + $0x98] sm:$0xff]
      %v5935 = vld [vmem:[#allocation3 + $0xa0] sm:$0xff]
      %v5936 = vld [vmem:[#allocation3 + $0xa8] sm:$0xff]
      %v5937 = vld [vmem:[#allocation3 + $0xb0] sm:$0xff]
      %v5938 = vld [vmem:[#allocation3 + $0xb8] sm:$0xff]
      %v5939 = vld [vmem:[#allocation3 + $0xc0] sm:$0xff]
      %v5940 = vld [vmem:[#allocation3 + $0xc8] sm:$0xff]
      %v5941 = vld [vmem:[#allocation3 + $0xd0] sm:$0xff]
      %v5942 = vld [vmem:[#allocation3 + $0xd8] sm:$0xff]
      %v5943 = vld [vmem:[#allocation3 + $0xe0] sm:$0xff]
      %v5944 = vld [vmem:[#allocation3 + $0xe8] sm:$0xff]
      %v5945 = vld [vmem:[#allocation3 + $0xf0] sm:$0xff]
      %v5946 = vld [vmem:[#allocation3 + $0xf8] sm:$0xff]
      %v5947 = vsub.f32 %v5915, %v5908
      %v5948 = vsub.f32 %v5916, %v5908
      %v5949 = vsub.f32 %v5917, %v5908
      %v5950 = vsub.f32 %v5918, %v5908
      %v5951 = vsub.f32 %v5919, %v5908
      %v5952 = vsub.f32 %v5920, %v5908
      %v5953 = vsub.f32 %v5921, %v5908
      %v5954 = vsub.f32 %v5922, %v5908
      %v5955 = vsub.f32 %v5923, %v5908
      %v5956 = vsub.f32 %v5924, %v5908
      %v5957 = vsub.f32 %v5925, %v5908
      %v5958 = vsub.f32 %v5926, %v5908
      %v5959 = vsub.f32 %v5927, %v5908
      %v5960 = vsub.f32 %v5928, %v5908
      %v5961 = vsub.f32 %v5929, %v5908
      %v5962 = vsub.f32 %v5930, %v5908
      %v5963 = vsub.f32 %v5931, %v5908
      %v5964 = vsub.f32 %v5932, %v5908
      %v5965 = vsub.f32 %v5933, %v5908
      %v5966 = vsub.f32 %v5934, %v5908
      %v5967 = vsub.f32 %v5935, %v5908
      %v5968 = vsub.f32 %v5936, %v5908
      %v5969 = vsub.f32 %v5937, %v5908
      %v5970 = vsub.f32 %v5938, %v5908
      %v5971 = vsub.f32 %v5939, %v5908
      %v5972 = vsub.f32 %v5940, %v5908
      %v5973 = vsub.f32 %v5941, %v5908
      %v5974 = vsub.f32 %v5942, %v5908
      %v5975 = vsub.f32 %v5943, %v5908
      %v5976 = vsub.f32 %v5944, %v5908
      %v5977 = vsub.f32 %v5945, %v5908
      %v5978 = vsub.f32 %v5946, %v5908
      %v5979 = vmul.f32 %v5947, %v5914
      %v5980 = vmul.f32 %v5948, %v5914
      %v5981 = vmul.f32 %v5949, %v5914
      %v5982 = vmul.f32 %v5950, %v5914
      %v5983 = vmul.f32 %v5951, %v5914
      %v5984 = vmul.f32 %v5952, %v5914
      %v5985 = vmul.f32 %v5953, %v5914
      %v5986 = vmul.f32 %v5954, %v5914
      %v5987 = vmul.f32 %v5955, %v5914
      %v5988 = vmul.f32 %v5956, %v5914
      %v5989 = vmul.f32 %v5957, %v5914
      %v5990 = vmul.f32 %v5958, %v5914
      %v5991 = vmul.f32 %v5959, %v5914
      %v5992 = vmul.f32 %v5960, %v5914
      %v5993 = vmul.f32 %v5961, %v5914
      %v5994 = vmul.f32 %v5962, %v5914
      %v5995 = vmul.f32 %v5963, %v5914
      %v5996 = vmul.f32 %v5964, %v5914
      %v5997 = vmul.f32 %v5965, %v5914
      %v5998 = vmul.f32 %v5966, %v5914
      %v5999 = vmul.f32 %v5967, %v5914
      %v6000 = vmul.f32 %v5968, %v5914
      %v6001 = vmul.f32 %v5969, %v5914
      %v6002 = vmul.f32 %v5970, %v5914
      %v6003 = vmul.f32 %v5971, %v5914
      %v6004 = vmul.f32 %v5972, %v5914
      %v6005 = vmul.f32 %v5973, %v5914
      %v6006 = vmul.f32 %v5974, %v5914
      %v6007 = vmul.f32 %v5975, %v5914
      %v6008 = vmul.f32 %v5976, %v5914
      %v6009 = vmul.f32 %v5977, %v5914
      %v6010 = vmul.f32 %v5978, %v5914
      %v6011 = vmax.f32 %v5979, 0.0
      %v6012 = vmax.f32 %v5980, 0.0
      %v6013 = vmax.f32 %v5981, 0.0
      %v6014 = vmax.f32 %v5982, 0.0
      %v6015 = vmax.f32 %v5983, 0.0
      %v6016 = vmax.f32 %v5984, 0.0
      %v6017 = vmax.f32 %v5985, 0.0
      %v6018 = vmax.f32 %v5986, 0.0
      %v6019 = vmax.f32 %v5987, 0.0
      %v6020 = vmax.f32 %v5988, 0.0
      %v6021 = vmax.f32 %v5989, 0.0
      %v6022 = vmax.f32 %v5990, 0.0
      %v6023 = vmax.f32 %v5991, 0.0
      %v6024 = vmax.f32 %v5992, 0.0
      %v6025 = vmax.f32 %v5993, 0.0
      %v6026 = vmax.f32 %v5994, 0.0
      %v6027 = vmax.f32 %v5995, 0.0
      %v6028 = vmax.f32 %v5996, 0.0
      %v6029 = vmax.f32 %v5997, 0.0
      %v6030 = vmax.f32 %v5998, 0.0
      %v6031 = vmax.f32 %v5999, 0.0
      %v6032 = vmax.f32 %v6000, 0.0
      %v6033 = vmax.f32 %v6001, 0.0
      %v6034 = vmax.f32 %v6002, 0.0
      %v6035 = vmax.f32 %v6003, 0.0
      %v6036 = vmax.f32 %v6004, 0.0
      %v6037 = vmax.f32 %v6005, 0.0
      %v6038 = vmax.f32 %v6006, 0.0
      %v6039 = vmax.f32 %v6007, 0.0
      %v6040 = vmax.f32 %v6008, 0.0
      %v6041 = vmax.f32 %v6009, 0.0
      %v6042 = vmax.f32 %v6010, 0.0
      %v6043 = vpack.c.bf16 %v6012, %v6011
      %v6044 = vpack.c.bf16 %v6014, %v6013
      %v6045 = vpack.c.bf16 %v6016, %v6015
      %v6046 = vpack.c.bf16 %v6018, %v6017
      %v6047 = vpack.c.bf16 %v6020, %v6019
      %v6048 = vpack.c.bf16 %v6022, %v6021
      %v6049 = vpack.c.bf16 %v6024, %v6023
      %v6050 = vpack.c.bf16 %v6026, %v6025
      %v6051 = vpack.c.bf16 %v6028, %v6027
      %v6052 = vpack.c.bf16 %v6030, %v6029
      %v6053 = vpack.c.bf16 %v6032, %v6031
      %v6054 = vpack.c.bf16 %v6034, %v6033
      %v6055 = vpack.c.bf16 %v6036, %v6035
      %v6056 = vpack.c.bf16 %v6038, %v6037
      %v6057 = vpack.c.bf16 %v6040, %v6039
      %v6058 = vpack.c.bf16 %v6042, %v6041
      %v6075 = vunpack.c.l.b16 %v6043
      %v6076 = vunpack.c.h.b16 %v6043
      %v6077 = vunpack.c.l.b16 %v6044
      %v6078 = vunpack.c.h.b16 %v6044
      %v6079 = vunpack.c.l.b16 %v6045
      %v6080 = vunpack.c.h.b16 %v6045
      %v6081 = vunpack.c.l.b16 %v6046
      %v6082 = vunpack.c.h.b16 %v6046
      %v6083 = vunpack.c.l.b16 %v6047
      %v6084 = vunpack.c.h.b16 %v6047
      %v6085 = vunpack.c.l.b16 %v6048
      %v6086 = vunpack.c.h.b16 %v6048
      %v6087 = vunpack.c.l.b16 %v6049
      %v6088 = vunpack.c.h.b16 %v6049
      %v6089 = vunpack.c.l.b16 %v6050
      %v6090 = vunpack.c.h.b16 %v6050
      %v6091 = vunpack.c.l.b16 %v6051
      %v6092 = vunpack.c.h.b16 %v6051
      %v6093 = vunpack.c.l.b16 %v6052
      %v6094 = vunpack.c.h.b16 %v6052
      %v6095 = vunpack.c.l.b16 %v6053
      %v6096 = vunpack.c.h.b16 %v6053
      %v6097 = vunpack.c.l.b16 %v6054
      %v6098 = vunpack.c.h.b16 %v6054
      %v6099 = vunpack.c.l.b16 %v6055
      %v6100 = vunpack.c.h.b16 %v6055
      %v6101 = vunpack.c.l.b16 %v6056
      %v6102 = vunpack.c.h.b16 %v6056
      %v6103 = vunpack.c.l.b16 %v6057
      %v6104 = vunpack.c.h.b16 %v6057
      %v6105 = vunpack.c.l.b16 %v6058
      %v6106 = vunpack.c.h.b16 %v6058
      %v6107 = vpack.c.b16 %v6075, %v6075
      %v6108 = vpack.c.b16 %v6076, %v6076
      %v6109 = vpack.c.b16 %v6077, %v6077
      %v6110 = vpack.c.b16 %v6078, %v6078
      %v6111 = vpack.c.b16 %v6079, %v6079
      %v6112 = vpack.c.b16 %v6080, %v6080
      %v6113 = vpack.c.b16 %v6081, %v6081
      %v6114 = vpack.c.b16 %v6082, %v6082
      %v6115 = vpack.c.b16 %v6083, %v6083
      %v6116 = vpack.c.b16 %v6084, %v6084
      %v6117 = vpack.c.b16 %v6085, %v6085
      %v6118 = vpack.c.b16 %v6086, %v6086
      %v6119 = vpack.c.b16 %v6087, %v6087
      %v6120 = vpack.c.b16 %v6088, %v6088
      %v6121 = vpack.c.b16 %v6089, %v6089
      %v6122 = vpack.c.b16 %v6090, %v6090
      %v6123 = vpack.c.b16 %v6091, %v6091
      %v6124 = vpack.c.b16 %v6092, %v6092
      %v6125 = vpack.c.b16 %v6093, %v6093
      %v6126 = vpack.c.b16 %v6094, %v6094
      %v6127 = vpack.c.b16 %v6095, %v6095
      %v6128 = vpack.c.b16 %v6096, %v6096
      %v6129 = vpack.c.b16 %v6097, %v6097
      %v6130 = vpack.c.b16 %v6098, %v6098
      %v6131 = vpack.c.b16 %v6099, %v6099
      %v6132 = vpack.c.b16 %v6100, %v6100
      %v6133 = vpack.c.b16 %v6101, %v6101
      %v6134 = vpack.c.b16 %v6102, %v6102
      %v6135 = vpack.c.b16 %v6103, %v6103
      %v6136 = vpack.c.b16 %v6104, %v6104
      %v6137 = vpack.c.b16 %v6105, %v6105
      %v6138 = vpack.c.b16 %v6106, %v6106
      %v6140 = vshrl.u32 %v6107, 16
      %v6142 = vrot.slane %v6140, 7
      %v6143 = vshll.u32 %v6107, 16
      %v6145 = vor.u32 %v6142, %v6143
      %v6146 = vrot.slane %v6142, 4
      %v6148 = vshrl.u32 %v6108, 16
      %v6150 = vrot.slane %v6148, 7
      %v6151 = vshll.u32 %v6108, 16
      %v6153 = vor.u32 %v6150, %v6151
      %v6154 = vsel %vm356, %v6146, %v6153
      %v6155 = vrot.slane %v6150, 4
      %v6157 = vshrl.u32 %v6109, 16
      %v6159 = vrot.slane %v6157, 7
      %v6160 = vshll.u32 %v6109, 16
      %v6162 = vor.u32 %v6159, %v6160
      %v6163 = vrot.slane %v6159, 4
      %v6165 = vshrl.u32 %v6110, 16
      %v6167 = vrot.slane %v6165, 7
      %v6168 = vshll.u32 %v6110, 16
      %v6170 = vor.u32 %v6167, %v6168
      %v6171 = vsel %vm356, %v6163, %v6170
      %v6172 = vrot.slane %v6167, 4
      %v6174 = vshrl.u32 %v6111, 16
      %v6176 = vrot.slane %v6174, 7
      %v6177 = vshll.u32 %v6111, 16
      %v6179 = vor.u32 %v6176, %v6177
      %v6180 = vrot.slane %v6176, 4
      %v6182 = vshrl.u32 %v6112, 16
      %v6184 = vrot.slane %v6182, 7
      %v6185 = vshll.u32 %v6112, 16
      %v6187 = vor.u32 %v6184, %v6185
      %v6188 = vsel %vm356, %v6180, %v6187
      %v6189 = vrot.slane %v6184, 4
      %v6191 = vshrl.u32 %v6113, 16
      %v6193 = vrot.slane %v6191, 7
      %v6194 = vshll.u32 %v6113, 16
      %v6196 = vor.u32 %v6193, %v6194
      %v6197 = vrot.slane %v6193, 4
      %v6199 = vshrl.u32 %v6114, 16
      %v6201 = vrot.slane %v6199, 7
      %v6202 = vshll.u32 %v6114, 16
      %v6204 = vor.u32 %v6201, %v6202
      %v6205 = vsel %vm356, %v6197, %v6204
      %v6206 = vrot.slane %v6201, 4
      %v6208 = vshrl.u32 %v6115, 16
      %v6210 = vrot.slane %v6208, 7
      %v6211 = vshll.u32 %v6115, 16
      %v6213 = vor.u32 %v6210, %v6211
      %v6214 = vrot.slane %v6210, 4
      %v6216 = vshrl.u32 %v6116, 16
      %v6218 = vrot.slane %v6216, 7
      %v6219 = vshll.u32 %v6116, 16
      %v6221 = vor.u32 %v6218, %v6219
      %v6222 = vsel %vm356, %v6214, %v6221
      %v6223 = vrot.slane %v6218, 4
      %v6225 = vshrl.u32 %v6117, 16
      %v6227 = vrot.slane %v6225, 7
      %v6228 = vshll.u32 %v6117, 16
      %v6230 = vor.u32 %v6227, %v6228
      %v6231 = vrot.slane %v6227, 4
      %v6233 = vshrl.u32 %v6118, 16
      %v6235 = vrot.slane %v6233, 7
      %v6236 = vshll.u32 %v6118, 16
      %v6238 = vor.u32 %v6235, %v6236
      %v6239 = vsel %vm356, %v6231, %v6238
      %v6240 = vrot.slane %v6235, 4
      %v6242 = vshrl.u32 %v6119, 16
      %v6244 = vrot.slane %v6242, 7
      %v6245 = vshll.u32 %v6119, 16
      %v6247 = vor.u32 %v6244, %v6245
      %v6248 = vrot.slane %v6244, 4
      %v6250 = vshrl.u32 %v6120, 16
      %v6252 = vrot.slane %v6250, 7
      %v6253 = vshll.u32 %v6120, 16
      %v6255 = vor.u32 %v6252, %v6253
      %v6256 = vsel %vm356, %v6248, %v6255
      %v6257 = vrot.slane %v6252, 4
      %v6259 = vshrl.u32 %v6121, 16
      %v6261 = vrot.slane %v6259, 7
      %v6262 = vshll.u32 %v6121, 16
      %v6264 = vor.u32 %v6261, %v6262
      %v6265 = vrot.slane %v6261, 4
      %v6267 = vshrl.u32 %v6122, 16
      %v6269 = vrot.slane %v6267, 7
      %v6270 = vshll.u32 %v6122, 16
      %v6272 = vor.u32 %v6269, %v6270
      %v6273 = vsel %vm356, %v6265, %v6272
      %v6274 = vrot.slane %v6269, 4
      %v6276 = vshrl.u32 %v6123, 16
      %v6278 = vrot.slane %v6276, 7
      %v6279 = vshll.u32 %v6123, 16
      %v6281 = vor.u32 %v6278, %v6279
      %v6282 = vrot.slane %v6278, 4
      %v6284 = vshrl.u32 %v6124, 16
      %v6286 = vrot.slane %v6284, 7
      %v6287 = vshll.u32 %v6124, 16
      %v6289 = vor.u32 %v6286, %v6287
      %v6290 = vsel %vm356, %v6282, %v6289
      %v6291 = vrot.slane %v6286, 4
      %v6293 = vshrl.u32 %v6125, 16
      %v6295 = vrot.slane %v6293, 7
      %v6296 = vshll.u32 %v6125, 16
      %v6298 = vor.u32 %v6295, %v6296
      %v6299 = vrot.slane %v6295, 4
      %v6301 = vshrl.u32 %v6126, 16
      %v6303 = vrot.slane %v6301, 7
      %v6304 = vshll.u32 %v6126, 16
      %v6306 = vor.u32 %v6303, %v6304
      %v6307 = vsel %vm356, %v6299, %v6306
      %v6308 = vrot.slane %v6303, 4
      %v6310 = vshrl.u32 %v6127, 16
      %v6312 = vrot.slane %v6310, 7
      %v6313 = vshll.u32 %v6127, 16
      %v6315 = vor.u32 %v6312, %v6313
      %v6316 = vrot.slane %v6312, 4
      %v6318 = vshrl.u32 %v6128, 16
      %v6320 = vrot.slane %v6318, 7
      %v6321 = vshll.u32 %v6128, 16
      %v6323 = vor.u32 %v6320, %v6321
      %v6324 = vsel %vm356, %v6316, %v6323
      %v6325 = vrot.slane %v6320, 4
      %v6327 = vshrl.u32 %v6129, 16
      %v6329 = vrot.slane %v6327, 7
      %v6330 = vshll.u32 %v6129, 16
      %v6332 = vor.u32 %v6329, %v6330
      %v6333 = vrot.slane %v6329, 4
      %v6335 = vshrl.u32 %v6130, 16
      %v6337 = vrot.slane %v6335, 7
      %v6338 = vshll.u32 %v6130, 16
      %v6340 = vor.u32 %v6337, %v6338
      %v6341 = vsel %vm356, %v6333, %v6340
      %v6342 = vrot.slane %v6337, 4
      %v6344 = vshrl.u32 %v6131, 16
      %v6346 = vrot.slane %v6344, 7
      %v6347 = vshll.u32 %v6131, 16
      %v6349 = vor.u32 %v6346, %v6347
      %v6350 = vrot.slane %v6346, 4
      %v6352 = vshrl.u32 %v6132, 16
      %v6354 = vrot.slane %v6352, 7
      %v6355 = vshll.u32 %v6132, 16
      %v6357 = vor.u32 %v6354, %v6355
      %v6358 = vsel %vm356, %v6350, %v6357
      %v6359 = vrot.slane %v6354, 4
      %v6361 = vshrl.u32 %v6133, 16
      %v6363 = vrot.slane %v6361, 7
      %v6364 = vshll.u32 %v6133, 16
      %v6366 = vor.u32 %v6363, %v6364
      %v6367 = vrot.slane %v6363, 4
      %v6369 = vshrl.u32 %v6134, 16
      %v6371 = vrot.slane %v6369, 7
      %v6372 = vshll.u32 %v6134, 16
      %v6374 = vor.u32 %v6371, %v6372
      %v6375 = vsel %vm356, %v6367, %v6374
      %v6376 = vrot.slane %v6371, 4
      %v6378 = vshrl.u32 %v6135, 16
      %v6380 = vrot.slane %v6378, 7
      %v6381 = vshll.u32 %v6135, 16
      %v6383 = vor.u32 %v6380, %v6381
      %v6384 = vrot.slane %v6380, 4
      %v6386 = vshrl.u32 %v6136, 16
      %v6388 = vrot.slane %v6386, 7
      %v6389 = vshll.u32 %v6136, 16
      %v6391 = vor.u32 %v6388, %v6389
      %v6392 = vsel %vm356, %v6384, %v6391
      %v6393 = vrot.slane %v6388, 4
      %v6395 = vshrl.u32 %v6137, 16
      %v6397 = vrot.slane %v6395, 7
      %v6398 = vshll.u32 %v6137, 16
      %v6400 = vor.u32 %v6397, %v6398
      %v6401 = vrot.slane %v6397, 4
      %v6403 = vshrl.u32 %v6138, 16
      %v6405 = vrot.slane %v6403, 7
      %v6406 = vshll.u32 %v6138, 16
      %v6408 = vor.u32 %v6405, %v6406
      %v6409 = vsel %vm356, %v6401, %v6408
      %v6410 = vrot.slane %v6405, 4
      %v6459 = vld [vmem:[%s677] sm:$0xf]
      %v6460 = vsel %vm680, %v6145, %v6459
      %6461 = vst [vmem:[%s677] sm:$0xf] %v6460
      %6462 = vst.msk [vmem:[%s677 + $0x4] sm:$0xf] %vm684, %v6154
      %v6463 = vld [vmem:[%s677 + $0x8] sm:$0x1]
      %v6464 = vsel %vm687, %v6155, %v6463
      %6465 = vst [vmem:[%s677 + $0x8] sm:$0x1] %v6464
      %v6466 = vld [vmem:[%s677 + $0xc] sm:$0xf]
      %v6467 = vsel %vm680, %v6162, %v6466
      %6468 = vst [vmem:[%s677 + $0xc] sm:$0xf] %v6467
      %6469 = vst.msk [vmem:[%s677 + $0x10] sm:$0xf] %vm684, %v6171
      %v6470 = vld [vmem:[%s677 + $0x14] sm:$0x1]
      %v6471 = vsel %vm687, %v6172, %v6470
      %6472 = vst [vmem:[%s677 + $0x14] sm:$0x1] %v6471
      %v6473 = vld [vmem:[%s677 + $0x18] sm:$0xf]
      %v6474 = vsel %vm680, %v6179, %v6473
      %6475 = vst [vmem:[%s677 + $0x18] sm:$0xf] %v6474
      %6476 = vst.msk [vmem:[%s677 + $0x1c] sm:$0xf] %vm684, %v6188
      %v6477 = vld [vmem:[%s677 + $0x20] sm:$0x1]
      %v6478 = vsel %vm687, %v6189, %v6477
      %6479 = vst [vmem:[%s677 + $0x20] sm:$0x1] %v6478
      %v6480 = vld [vmem:[%s677 + $0x24] sm:$0xf]
      %v6481 = vsel %vm680, %v6196, %v6480
      %6482 = vst [vmem:[%s677 + $0x24] sm:$0xf] %v6481
      %6483 = vst.msk [vmem:[%s677 + $0x28] sm:$0xf] %vm684, %v6205
      %v6484 = vld [vmem:[%s677 + $0x2c] sm:$0x1]
      %v6485 = vsel %vm687, %v6206, %v6484
      %6486 = vst [vmem:[%s677 + $0x2c] sm:$0x1] %v6485
      %v6487 = vld [vmem:[%s677 + $0x30] sm:$0xf]
      %v6488 = vsel %vm680, %v6213, %v6487
      %6489 = vst [vmem:[%s677 + $0x30] sm:$0xf] %v6488
      %6490 = vst.msk [vmem:[%s677 + $0x34] sm:$0xf] %vm684, %v6222
      %v6491 = vld [vmem:[%s677 + $0x38] sm:$0x1]
      %v6492 = vsel %vm687, %v6223, %v6491
      %6493 = vst [vmem:[%s677 + $0x38] sm:$0x1] %v6492
      %v6494 = vld [vmem:[%s677 + $0x3c] sm:$0xf]
      %v6495 = vsel %vm680, %v6230, %v6494
      %6496 = vst [vmem:[%s677 + $0x3c] sm:$0xf] %v6495
      %6497 = vst.msk [vmem:[%s677 + $0x40] sm:$0xf] %vm684, %v6239
      %v6498 = vld [vmem:[%s677 + $0x44] sm:$0x1]
      %v6499 = vsel %vm687, %v6240, %v6498
      %6500 = vst [vmem:[%s677 + $0x44] sm:$0x1] %v6499
      %v6501 = vld [vmem:[%s677 + $0x48] sm:$0xf]
      %v6502 = vsel %vm680, %v6247, %v6501
      %6503 = vst [vmem:[%s677 + $0x48] sm:$0xf] %v6502
      %6504 = vst.msk [vmem:[%s677 + $0x4c] sm:$0xf] %vm684, %v6256
      %v6505 = vld [vmem:[%s677 + $0x50] sm:$0x1]
      %v6506 = vsel %vm687, %v6257, %v6505
      %6507 = vst [vmem:[%s677 + $0x50] sm:$0x1] %v6506
      %v6508 = vld [vmem:[%s677 + $0x54] sm:$0xf]
      %v6509 = vsel %vm680, %v6264, %v6508
      %6510 = vst [vmem:[%s677 + $0x54] sm:$0xf] %v6509
      %6511 = vst.msk [vmem:[%s677 + $0x58] sm:$0xf] %vm684, %v6273
      %v6512 = vld [vmem:[%s677 + $0x5c] sm:$0x1]
      %v6513 = vsel %vm687, %v6274, %v6512
      %6514 = vst [vmem:[%s677 + $0x5c] sm:$0x1] %v6513
      %v6515 = vld [vmem:[%s677 + $0x60] sm:$0xf]
      %v6516 = vsel %vm680, %v6281, %v6515
      %6517 = vst [vmem:[%s677 + $0x60] sm:$0xf] %v6516
      %6518 = vst.msk [vmem:[%s677 + $0x64] sm:$0xf] %vm684, %v6290
      %v6519 = vld [vmem:[%s677 + $0x68] sm:$0x1]
      %v6520 = vsel %vm687, %v6291, %v6519
      %6521 = vst [vmem:[%s677 + $0x68] sm:$0x1] %v6520
      %v6522 = vld [vmem:[%s677 + $0x6c] sm:$0xf]
      %v6523 = vsel %vm680, %v6298, %v6522
      %6524 = vst [vmem:[%s677 + $0x6c] sm:$0xf] %v6523
      %6525 = vst.msk [vmem:[%s677 + $0x70] sm:$0xf] %vm684, %v6307
      %v6526 = vld [vmem:[%s677 + $0x74] sm:$0x1]
      %v6527 = vsel %vm687, %v6308, %v6526
      %6528 = vst [vmem:[%s677 + $0x74] sm:$0x1] %v6527
      %v6529 = vld [vmem:[%s677 + $0x78] sm:$0xf]
      %v6530 = vsel %vm680, %v6315, %v6529
      %6531 = vst [vmem:[%s677 + $0x78] sm:$0xf] %v6530
      %6532 = vst.msk [vmem:[%s677 + $0x7c] sm:$0xf] %vm684, %v6324
      %v6533 = vld [vmem:[%s677 + $0x80] sm:$0x1]
      %v6534 = vsel %vm687, %v6325, %v6533
      %6535 = vst [vmem:[%s677 + $0x80] sm:$0x1] %v6534
      %v6536 = vld [vmem:[%s677 + $0x84] sm:$0xf]
      %v6537 = vsel %vm680, %v6332, %v6536
      %6538 = vst [vmem:[%s677 + $0x84] sm:$0xf] %v6537
      %6539 = vst.msk [vmem:[%s677 + $0x88] sm:$0xf] %vm684, %v6341
      %v6540 = vld [vmem:[%s677 + $0x8c] sm:$0x1]
      %v6541 = vsel %vm687, %v6342, %v6540
      %6542 = vst [vmem:[%s677 + $0x8c] sm:$0x1] %v6541
      %v6543 = vld [vmem:[%s677 + $0x90] sm:$0xf]
      %v6544 = vsel %vm680, %v6349, %v6543
      %6545 = vst [vmem:[%s677 + $0x90] sm:$0xf] %v6544
      %6546 = vst.msk [vmem:[%s677 + $0x94] sm:$0xf] %vm684, %v6358
      %v6547 = vld [vmem:[%s677 + $0x98] sm:$0x1]
      %v6548 = vsel %vm687, %v6359, %v6547
      %6549 = vst [vmem:[%s677 + $0x98] sm:$0x1] %v6548
      %v6550 = vld [vmem:[%s677 + $0x9c] sm:$0xf]
      %v6551 = vsel %vm680, %v6366, %v6550
      %6552 = vst [vmem:[%s677 + $0x9c] sm:$0xf] %v6551
      %6553 = vst.msk [vmem:[%s677 + $0xa0] sm:$0xf] %vm684, %v6375
      %v6554 = vld [vmem:[%s677 + $0xa4] sm:$0x1]
      %v6555 = vsel %vm687, %v6376, %v6554
      %6556 = vst [vmem:[%s677 + $0xa4] sm:$0x1] %v6555
      %v6557 = vld [vmem:[%s677 + $0xa8] sm:$0xf]
      %v6558 = vsel %vm680, %v6383, %v6557
      %6559 = vst [vmem:[%s677 + $0xa8] sm:$0xf] %v6558
      %6560 = vst.msk [vmem:[%s677 + $0xac] sm:$0xf] %vm684, %v6392
      %v6561 = vld [vmem:[%s677 + $0xb0] sm:$0x1]
      %v6562 = vsel %vm687, %v6393, %v6561
      %6563 = vst [vmem:[%s677 + $0xb0] sm:$0x1] %v6562
      %v6564 = vld [vmem:[%s677 + $0xb4] sm:$0xf]
      %v6565 = vsel %vm680, %v6400, %v6564
      %6566 = vst [vmem:[%s677 + $0xb4] sm:$0xf] %v6565
      %6567 = vst.msk [vmem:[%s677 + $0xb8] sm:$0xf] %vm684, %v6409
      %v6568 = vld [vmem:[%s677 + $0xbc] sm:$0x1]
      %v6569 = vsel %vm687, %v6410, %v6568
      %6570 = vst [vmem:[%s677 + $0xbc] sm:$0x1] %v6569
      %v6571 = vld [vmem:[%s796] sm:$0xf]
      %v6572 = vld [vmem:[%s796 + $0x4] sm:$0xf]
      %v6573 = vld [vmem:[%s796 + $0x8] sm:$0x1]
      %v6574 = vld [vmem:[#allocation2] sm:$0xf]
      %v6575 = vsel %vm680, %v6571, %v6574
      %6576 = vst [vmem:[#allocation2] sm:$0xf] %v6575
      %6577 = vst.msk [vmem:[#allocation2 + $0x4] sm:$0xf] %vm684, %v6572
      %v6578 = vld [vmem:[#allocation2 + $0x8] sm:$0x1]
      %v6579 = vsel %vm687, %v6573, %v6578
      %6580 = vst [vmem:[#allocation2 + $0x8] sm:$0x1] %v6579
      %v6581 = vld [vmem:[%s807] sm:$0xf]
      %v6582 = vld [vmem:[%s807 + $0x4] sm:$0xf]
      %v6583 = vld [vmem:[%s807 + $0x8] sm:$0x1]
      %v6584 = vld [vmem:[%s811] sm:$0xf]
      %v6585 = vsel %vm680, %v6581, %v6584
      %6586 = vst [vmem:[%s811] sm:$0xf] %v6585
      %6587 = vst.msk [vmem:[%s811 + $0x4] sm:$0xf] %vm684, %v6582
      %v6588 = vld [vmem:[%s811 + $0x8] sm:$0x1]
      %v6589 = vsel %vm687, %v6583, %v6588
      %6590 = vst [vmem:[%s811 + $0x8] sm:$0x1] %v6589
      %v6591 = vld [vmem:[#allocation2] sm:$0x2]
      %v6592 = vld [vmem:[#allocation2 + $0xc] sm:$0x2]
      %v6593 = vld [vmem:[#allocation2 + $0x18] sm:$0x2]
      %v6594 = vld [vmem:[#allocation2 + $0x24] sm:$0x2]
      %v6595 = vld [vmem:[#allocation2 + $0x30] sm:$0x2]
      %v6596 = vld [vmem:[#allocation2 + $0x3c] sm:$0x2]
      %v6597 = vld [vmem:[#allocation2 + $0x48] sm:$0x2]
      %v6598 = vld [vmem:[#allocation2 + $0x54] sm:$0x2]
      %v6599 = vld [vmem:[#allocation2 + $0x60] sm:$0x2]
      %v6600 = vld [vmem:[#allocation2 + $0x6c] sm:$0x2]
      %v6601 = vld [vmem:[#allocation2 + $0x78] sm:$0x2]
      %v6602 = vld [vmem:[#allocation2 + $0x84] sm:$0x2]
      %v6603 = vld [vmem:[#allocation2 + $0x90] sm:$0x2]
      %v6604 = vld [vmem:[#allocation2 + $0x9c] sm:$0x2]
      %v6605 = vld [vmem:[#allocation2 + $0xa8] sm:$0x2]
      %v6606 = vld [vmem:[#allocation2 + $0xb4] sm:$0x2]
      %v6607 = vld [vmem:[#allocation2 + $0xc0] sm:$0x2]
      %v6608 = vld [vmem:[#allocation2 + $0xcc] sm:$0x2]
      %v6627 = vrot.slane %v6591, 5
      %v6628 = vrot.slane %v6627, 4
      %v6629 = vrot.slane %v6592, 5
      %v6630 = vrot.slane %v6629, 4
      %v6631 = vrot.slane %v6593, 5
      %v6632 = vrot.slane %v6631, 4
      %v6633 = vrot.slane %v6594, 5
      %v6634 = vrot.slane %v6633, 4
      %v6635 = vrot.slane %v6595, 5
      %v6636 = vrot.slane %v6635, 4
      %v6637 = vrot.slane %v6596, 5
      %v6638 = vrot.slane %v6637, 4
      %v6639 = vrot.slane %v6597, 5
      %v6640 = vrot.slane %v6639, 4
      %v6641 = vrot.slane %v6598, 5
      %v6642 = vrot.slane %v6641, 4
      %v6643 = vrot.slane %v6599, 5
      %v6644 = vrot.slane %v6643, 4
      %v6645 = vrot.slane %v6600, 5
      %v6646 = vrot.slane %v6645, 4
      %v6647 = vrot.slane %v6601, 5
      %v6648 = vrot.slane %v6647, 4
      %v6649 = vrot.slane %v6602, 5
      %v6650 = vrot.slane %v6649, 4
      %v6651 = vrot.slane %v6603, 5
      %v6652 = vrot.slane %v6651, 4
      %v6653 = vrot.slane %v6604, 5
      %v6654 = vrot.slane %v6653, 4
      %v6655 = vrot.slane %v6605, 5
      %v6656 = vrot.slane %v6655, 4
      %v6657 = vrot.slane %v6606, 5
      %v6658 = vrot.slane %v6657, 4
      %v6659 = vrot.slane %v6607, 5
      %v6660 = vrot.slane %v6659, 4
      %v6661 = vrot.slane %v6608, 5
      %v6662 = vrot.slane %v6661, 4
      %v6681 = vld [vmem:[#allocation2] sm:$0x1]
      %v6682 = vsel %vm687, %v6628, %v6681
      %6683 = vst [vmem:[#allocation2] sm:$0x1] %v6682
      %v6684 = vld [vmem:[#allocation2 + $0xc] sm:$0x1]
      %v6685 = vsel %vm687, %v6630, %v6684
      %6686 = vst [vmem:[#allocation2 + $0xc] sm:$0x1] %v6685
      %v6687 = vld [vmem:[#allocation2 + $0x18] sm:$0x1]
      %v6688 = vsel %vm687, %v6632, %v6687
      %6689 = vst [vmem:[#allocation2 + $0x18] sm:$0x1] %v6688
      %v6690 = vld [vmem:[#allocation2 + $0x24] sm:$0x1]
      %v6691 = vsel %vm687, %v6634, %v6690
      %6692 = vst [vmem:[#allocation2 + $0x24] sm:$0x1] %v6691
      %v6693 = vld [vmem:[#allocation2 + $0x30] sm:$0x1]
      %v6694 = vsel %vm687, %v6636, %v6693
      %6695 = vst [vmem:[#allocation2 + $0x30] sm:$0x1] %v6694
      %v6696 = vld [vmem:[#allocation2 + $0x3c] sm:$0x1]
      %v6697 = vsel %vm687, %v6638, %v6696
      %6698 = vst [vmem:[#allocation2 + $0x3c] sm:$0x1] %v6697
      %v6699 = vld [vmem:[#allocation2 + $0x48] sm:$0x1]
      %v6700 = vsel %vm687, %v6640, %v6699
      %6701 = vst [vmem:[#allocation2 + $0x48] sm:$0x1] %v6700
      %v6702 = vld [vmem:[#allocation2 + $0x54] sm:$0x1]
      %v6703 = vsel %vm687, %v6642, %v6702
      %6704 = vst [vmem:[#allocation2 + $0x54] sm:$0x1] %v6703
      %v6705 = vld [vmem:[#allocation2 + $0x60] sm:$0x1]
      %v6706 = vsel %vm687, %v6644, %v6705
      %6707 = vst [vmem:[#allocation2 + $0x60] sm:$0x1] %v6706
      %v6708 = vld [vmem:[#allocation2 + $0x6c] sm:$0x1]
      %v6709 = vsel %vm687, %v6646, %v6708
      %6710 = vst [vmem:[#allocation2 + $0x6c] sm:$0x1] %v6709
      %v6711 = vld [vmem:[#allocation2 + $0x78] sm:$0x1]
      %v6712 = vsel %vm687, %v6648, %v6711
      %6713 = vst [vmem:[#allocation2 + $0x78] sm:$0x1] %v6712
      %v6714 = vld [vmem:[#allocation2 + $0x84] sm:$0x1]
      %v6715 = vsel %vm687, %v6650, %v6714
      %6716 = vst [vmem:[#allocation2 + $0x84] sm:$0x1] %v6715
      %v6717 = vld [vmem:[#allocation2 + $0x90] sm:$0x1]
      %v6718 = vsel %vm687, %v6652, %v6717
      %6719 = vst [vmem:[#allocation2 + $0x90] sm:$0x1] %v6718
      %v6720 = vld [vmem:[#allocation2 + $0x9c] sm:$0x1]
      %v6721 = vsel %vm687, %v6654, %v6720
      %6722 = vst [vmem:[#allocation2 + $0x9c] sm:$0x1] %v6721
      %v6723 = vld [vmem:[#allocation2 + $0xa8] sm:$0x1]
      %v6724 = vsel %vm687, %v6656, %v6723
      %6725 = vst [vmem:[#allocation2 + $0xa8] sm:$0x1] %v6724
      %v6726 = vld [vmem:[#allocation2 + $0xb4] sm:$0x1]
      %v6727 = vsel %vm687, %v6658, %v6726
      %6728 = vst [vmem:[#allocation2 + $0xb4] sm:$0x1] %v6727
      %v6729 = vld [vmem:[#allocation2 + $0xc0] sm:$0x1]
      %v6730 = vsel %vm687, %v6660, %v6729
      %6731 = vst [vmem:[#allocation2 + $0xc0] sm:$0x1] %v6730
      %v6732 = vld [vmem:[#allocation2 + $0xcc] sm:$0x1]
      %v6733 = vsel %vm687, %v6662, %v6732
      %6734 = vst [vmem:[#allocation2 + $0xcc] sm:$0x1] %v6733
      %v6735 = vld [vmem:[#allocation2 + $0x4] sm:$0x8]
      %v6736 = vld [vmem:[#allocation2 + $0x10] sm:$0x8]
      %v6737 = vld [vmem:[#allocation2 + $0x1c] sm:$0x8]
      %v6738 = vld [vmem:[#allocation2 + $0x28] sm:$0x8]
      %v6739 = vld [vmem:[#allocation2 + $0x34] sm:$0x8]
      %v6740 = vld [vmem:[#allocation2 + $0x40] sm:$0x8]
      %v6741 = vld [vmem:[#allocation2 + $0x4c] sm:$0x8]
      %v6742 = vld [vmem:[#allocation2 + $0x58] sm:$0x8]
      %v6743 = vld [vmem:[#allocation2 + $0x64] sm:$0x8]
      %v6744 = vld [vmem:[#allocation2 + $0x70] sm:$0x8]
      %v6745 = vld [vmem:[#allocation2 + $0x7c] sm:$0x8]
      %v6746 = vld [vmem:[#allocation2 + $0x88] sm:$0x8]
      %v6747 = vld [vmem:[#allocation2 + $0x94] sm:$0x8]
      %v6748 = vld [vmem:[#allocation2 + $0xa0] sm:$0x8]
      %v6749 = vld [vmem:[#allocation2 + $0xac] sm:$0x8]
      %v6750 = vld [vmem:[#allocation2 + $0xb8] sm:$0x8]
      %v6751 = vld [vmem:[#allocation2 + $0xc4] sm:$0x8]
      %v6752 = vld [vmem:[#allocation2 + $0xd0] sm:$0x8]
      %v6771 = vrot.slane %v6735, 7
      %v6772 = vrot.slane %v6771, 4
      %v6773 = vrot.slane %v6736, 7
      %v6774 = vrot.slane %v6773, 4
      %v6775 = vrot.slane %v6737, 7
      %v6776 = vrot.slane %v6775, 4
      %v6777 = vrot.slane %v6738, 7
      %v6778 = vrot.slane %v6777, 4
      %v6779 = vrot.slane %v6739, 7
      %v6780 = vrot.slane %v6779, 4
      %v6781 = vrot.slane %v6740, 7
      %v6782 = vrot.slane %v6781, 4
      %v6783 = vrot.slane %v6741, 7
      %v6784 = vrot.slane %v6783, 4
      %v6785 = vrot.slane %v6742, 7
      %v6786 = vrot.slane %v6785, 4
      %v6787 = vrot.slane %v6743, 7
      %v6788 = vrot.slane %v6787, 4
      %v6789 = vrot.slane %v6744, 7
      %v6790 = vrot.slane %v6789, 4
      %v6791 = vrot.slane %v6745, 7
      %v6792 = vrot.slane %v6791, 4
      %v6793 = vrot.slane %v6746, 7
      %v6794 = vrot.slane %v6793, 4
      %v6795 = vrot.slane %v6747, 7
      %v6796 = vrot.slane %v6795, 4
      %v6797 = vrot.slane %v6748, 7
      %v6798 = vrot.slane %v6797, 4
      %v6799 = vrot.slane %v6749, 7
      %v6800 = vrot.slane %v6799, 4
      %v6801 = vrot.slane %v6750, 7
      %v6802 = vrot.slane %v6801, 4
      %v6803 = vrot.slane %v6751, 7
      %v6804 = vrot.slane %v6803, 4
      %v6805 = vrot.slane %v6752, 7
      %v6806 = vrot.slane %v6805, 4
      %v6825 = vld [vmem:[#allocation2 + $0x8] sm:$0x1]
      %v6826 = vsel %vm1053, %v6772, %v6825
      %6827 = vst [vmem:[#allocation2 + $0x8] sm:$0x1] %v6826
      %v6828 = vld [vmem:[#allocation2 + $0x14] sm:$0x1]
      %v6829 = vsel %vm1053, %v6774, %v6828
      %6830 = vst [vmem:[#allocation2 + $0x14] sm:$0x1] %v6829
      %v6831 = vld [vmem:[#allocation2 + $0x20] sm:$0x1]
      %v6832 = vsel %vm1053, %v6776, %v6831
      %6833 = vst [vmem:[#allocation2 + $0x20] sm:$0x1] %v6832
      %v6834 = vld [vmem:[#allocation2 + $0x2c] sm:$0x1]
      %v6835 = vsel %vm1053, %v6778, %v6834
      %6836 = vst [vmem:[#allocation2 + $0x2c] sm:$0x1] %v6835
      %v6837 = vld [vmem:[#allocation2 + $0x38] sm:$0x1]
      %v6838 = vsel %vm1053, %v6780, %v6837
      %6839 = vst [vmem:[#allocation2 + $0x38] sm:$0x1] %v6838
      %v6840 = vld [vmem:[#allocation2 + $0x44] sm:$0x1]
      %v6841 = vsel %vm1053, %v6782, %v6840
      %6842 = vst [vmem:[#allocation2 + $0x44] sm:$0x1] %v6841
      %v6843 = vld [vmem:[#allocation2 + $0x50] sm:$0x1]
      %v6844 = vsel %vm1053, %v6784, %v6843
      %6845 = vst [vmem:[#allocation2 + $0x50] sm:$0x1] %v6844
      %v6846 = vld [vmem:[#allocation2 + $0x5c] sm:$0x1]
      %v6847 = vsel %vm1053, %v6786, %v6846
      %6848 = vst [vmem:[#allocation2 + $0x5c] sm:$0x1] %v6847
      %v6849 = vld [vmem:[#allocation2 + $0x68] sm:$0x1]
      %v6850 = vsel %vm1053, %v6788, %v6849
      %6851 = vst [vmem:[#allocation2 + $0x68] sm:$0x1] %v6850
      %v6852 = vld [vmem:[#allocation2 + $0x74] sm:$0x1]
      %v6853 = vsel %vm1053, %v6790, %v6852
      %6854 = vst [vmem:[#allocation2 + $0x74] sm:$0x1] %v6853
      %v6855 = vld [vmem:[#allocation2 + $0x80] sm:$0x1]
      %v6856 = vsel %vm1053, %v6792, %v6855
      %6857 = vst [vmem:[#allocation2 + $0x80] sm:$0x1] %v6856
      %v6858 = vld [vmem:[#allocation2 + $0x8c] sm:$0x1]
      %v6859 = vsel %vm1053, %v6794, %v6858
      %6860 = vst [vmem:[#allocation2 + $0x8c] sm:$0x1] %v6859
      %v6861 = vld [vmem:[#allocation2 + $0x98] sm:$0x1]
      %v6862 = vsel %vm1053, %v6796, %v6861
      %6863 = vst [vmem:[#allocation2 + $0x98] sm:$0x1] %v6862
      %v6864 = vld [vmem:[#allocation2 + $0xa4] sm:$0x1]
      %v6865 = vsel %vm1053, %v6798, %v6864
      %6866 = vst [vmem:[#allocation2 + $0xa4] sm:$0x1] %v6865
      %v6867 = vld [vmem:[#allocation2 + $0xb0] sm:$0x1]
      %v6868 = vsel %vm1053, %v6800, %v6867
      %6869 = vst [vmem:[#allocation2 + $0xb0] sm:$0x1] %v6868
      %v6870 = vld [vmem:[#allocation2 + $0xbc] sm:$0x1]
      %v6871 = vsel %vm1053, %v6802, %v6870
      %6872 = vst [vmem:[#allocation2 + $0xbc] sm:$0x1] %v6871
      %v6873 = vld [vmem:[#allocation2 + $0xc8] sm:$0x1]
      %v6874 = vsel %vm1053, %v6804, %v6873
      %6875 = vst [vmem:[#allocation2 + $0xc8] sm:$0x1] %v6874
      %v6876 = vld [vmem:[#allocation2 + $0xd4] sm:$0x1]
      %v6877 = vsel %vm1053, %v6806, %v6876
      %6878 = vst [vmem:[#allocation2 + $0xd4] sm:$0x1] %v6877
      %v6879 = vld [vmem:[#allocation2] sm:$0xf]
      %v6880 = vld [vmem:[#allocation2 + $0x4] sm:$0xf]
      %v6881 = vld [vmem:[#allocation2 + $0xc] sm:$0xf]
      %v6882 = vld [vmem:[#allocation2 + $0x10] sm:$0xf]
      %v6883 = vld [vmem:[#allocation2 + $0x18] sm:$0xf]
      %v6884 = vld [vmem:[#allocation2 + $0x1c] sm:$0xf]
      %v6885 = vld [vmem:[#allocation2 + $0x24] sm:$0xf]
      %v6886 = vld [vmem:[#allocation2 + $0x28] sm:$0xf]
      %v6887 = vld [vmem:[#allocation2 + $0x30] sm:$0xf]
      %v6888 = vld [vmem:[#allocation2 + $0x34] sm:$0xf]
      %v6889 = vld [vmem:[#allocation2 + $0x3c] sm:$0xf]
      %v6890 = vld [vmem:[#allocation2 + $0x40] sm:$0xf]
      %v6891 = vld [vmem:[#allocation2 + $0x48] sm:$0xf]
      %v6892 = vld [vmem:[#allocation2 + $0x4c] sm:$0xf]
      %v6893 = vld [vmem:[#allocation2 + $0x54] sm:$0xf]
      %v6894 = vld [vmem:[#allocation2 + $0x58] sm:$0xf]
      %v6895 = vld [vmem:[#allocation2 + $0x60] sm:$0xf]
      %v6896 = vld [vmem:[#allocation2 + $0x64] sm:$0xf]
      %v6897 = vld [vmem:[#allocation2 + $0x6c] sm:$0xf]
      %v6898 = vld [vmem:[#allocation2 + $0x70] sm:$0xf]
      %v6899 = vld [vmem:[#allocation2 + $0x78] sm:$0xf]
      %v6900 = vld [vmem:[#allocation2 + $0x7c] sm:$0xf]
      %v6901 = vld [vmem:[#allocation2 + $0x84] sm:$0xf]
      %v6902 = vld [vmem:[#allocation2 + $0x88] sm:$0xf]
      %v6903 = vld [vmem:[#allocation2 + $0x90] sm:$0xf]
      %v6904 = vld [vmem:[#allocation2 + $0x94] sm:$0xf]
      %v6905 = vld [vmem:[#allocation2 + $0x9c] sm:$0xf]
      %v6906 = vld [vmem:[#allocation2 + $0xa0] sm:$0xf]
      %v6907 = vld [vmem:[#allocation2 + $0xa8] sm:$0xf]
      %v6908 = vld [vmem:[#allocation2 + $0xac] sm:$0xf]
      %v6909 = vld [vmem:[#allocation2 + $0xb4] sm:$0xf]
      %v6910 = vld [vmem:[#allocation2 + $0xb8] sm:$0xf]
      %v6911 = vld [vmem:[%s3] sm:$0x3]
      %v6912 = vld [vmem:[#allocation2 + $0x8] sm:$0x1]
      %v6913 = vld [vmem:[#allocation2 + $0x14] sm:$0x1]
      %v6914 = vld [vmem:[#allocation2 + $0x20] sm:$0x1]
      %v6915 = vld [vmem:[#allocation2 + $0x2c] sm:$0x1]
      %v6916 = vld [vmem:[#allocation2 + $0x38] sm:$0x1]
      %v6917 = vld [vmem:[#allocation2 + $0x44] sm:$0x1]
      %v6918 = vld [vmem:[#allocation2 + $0x50] sm:$0x1]
      %v6919 = vld [vmem:[#allocation2 + $0x5c] sm:$0x1]
      %v6920 = vld [vmem:[#allocation2 + $0x68] sm:$0x1]
      %v6921 = vld [vmem:[#allocation2 + $0x74] sm:$0x1]
      %v6922 = vld [vmem:[#allocation2 + $0x80] sm:$0x1]
      %v6923 = vld [vmem:[#allocation2 + $0x8c] sm:$0x1]
      %v6924 = vld [vmem:[#allocation2 + $0x98] sm:$0x1]
      %v6925 = vld [vmem:[#allocation2 + $0xa4] sm:$0x1]
      %v6926 = vld [vmem:[#allocation2 + $0xb0] sm:$0x1]
      %v6927 = vld [vmem:[#allocation2 + $0xbc] sm:$0x1]
      %v6929 = vshrl.u32 %v6879, 16
      %v6931 = vrot.slane %v6929, 4
      %v6932 = vshll.u32 %v6879, 16
      %v6934 = vrot.slane %v6932, 5
      %v6935 = vor.u32 %v6931, %v6934
      %v6936 = vrot.slane %v6935, 4
      %v6938 = vshll.u32 %v6880, 16
      %v6940 = vrot.slane %v6938, 5
      %v6941 = vsel %vm1159, %v6936, %v6940
      %v6942 = vshrl.u32 %v6880, 16
      %v6944 = vrot.slane %v6942, 4
      %v6945 = vor.u32 %v6944, %v6940
      %v6946 = vrot.slane %v6945, 4
      %v6948 = vshll.u32 %v6912, 16
      %v6950 = vrot.slane %v6948, 5
      %v6951 = vsel %vm1159, %v6946, %v6950
      %v6953 = vshrl.u32 %v6881, 16
      %v6955 = vrot.slane %v6953, 4
      %v6956 = vshll.u32 %v6881, 16
      %v6958 = vrot.slane %v6956, 5
      %v6959 = vor.u32 %v6955, %v6958
      %v6960 = vrot.slane %v6959, 4
      %v6962 = vshll.u32 %v6882, 16
      %v6964 = vrot.slane %v6962, 5
      %v6965 = vsel %vm1159, %v6960, %v6964
      %v6966 = vshrl.u32 %v6882, 16
      %v6968 = vrot.slane %v6966, 4
      %v6969 = vor.u32 %v6968, %v6964
      %v6970 = vrot.slane %v6969, 4
      %v6972 = vshll.u32 %v6913, 16
      %v6974 = vrot.slane %v6972, 5
      %v6975 = vsel %vm1159, %v6970, %v6974
      %v6977 = vshrl.u32 %v6883, 16
      %v6979 = vrot.slane %v6977, 4
      %v6980 = vshll.u32 %v6883, 16
      %v6982 = vrot.slane %v6980, 5
      %v6983 = vor.u32 %v6979, %v6982
      %v6984 = vrot.slane %v6983, 4
      %v6986 = vshll.u32 %v6884, 16
      %v6988 = vrot.slane %v6986, 5
      %v6989 = vsel %vm1159, %v6984, %v6988
      %v6990 = vshrl.u32 %v6884, 16
      %v6992 = vrot.slane %v6990, 4
      %v6993 = vor.u32 %v6992, %v6988
      %v6994 = vrot.slane %v6993, 4
      %v6996 = vshll.u32 %v6914, 16
      %v6998 = vrot.slane %v6996, 5
      %v6999 = vsel %vm1159, %v6994, %v6998
      %v7001 = vshrl.u32 %v6885, 16
      %v7003 = vrot.slane %v7001, 4
      %v7004 = vshll.u32 %v6885, 16
      %v7006 = vrot.slane %v7004, 5
      %v7007 = vor.u32 %v7003, %v7006
      %v7008 = vrot.slane %v7007, 4
      %v7010 = vshll.u32 %v6886, 16
      %v7012 = vrot.slane %v7010, 5
      %v7013 = vsel %vm1159, %v7008, %v7012
      %v7014 = vshrl.u32 %v6886, 16
      %v7016 = vrot.slane %v7014, 4
      %v7017 = vor.u32 %v7016, %v7012
      %v7018 = vrot.slane %v7017, 4
      %v7020 = vshll.u32 %v6915, 16
      %v7022 = vrot.slane %v7020, 5
      %v7023 = vsel %vm1159, %v7018, %v7022
      %v7025 = vshrl.u32 %v6887, 16
      %v7027 = vrot.slane %v7025, 4
      %v7028 = vshll.u32 %v6887, 16
      %v7030 = vrot.slane %v7028, 5
      %v7031 = vor.u32 %v7027, %v7030
      %v7032 = vrot.slane %v7031, 4
      %v7034 = vshll.u32 %v6888, 16
      %v7036 = vrot.slane %v7034, 5
      %v7037 = vsel %vm1159, %v7032, %v7036
      %v7038 = vshrl.u32 %v6888, 16
      %v7040 = vrot.slane %v7038, 4
      %v7041 = vor.u32 %v7040, %v7036
      %v7042 = vrot.slane %v7041, 4
      %v7044 = vshll.u32 %v6916, 16
      %v7046 = vrot.slane %v7044, 5
      %v7047 = vsel %vm1159, %v7042, %v7046
      %v7049 = vshrl.u32 %v6889, 16
      %v7051 = vrot.slane %v7049, 4
      %v7052 = vshll.u32 %v6889, 16
      %v7054 = vrot.slane %v7052, 5
      %v7055 = vor.u32 %v7051, %v7054
      %v7056 = vrot.slane %v7055, 4
      %v7058 = vshll.u32 %v6890, 16
      %v7060 = vrot.slane %v7058, 5
      %v7061 = vsel %vm1159, %v7056, %v7060
      %v7062 = vshrl.u32 %v6890, 16
      %v7064 = vrot.slane %v7062, 4
      %v7065 = vor.u32 %v7064, %v7060
      %v7066 = vrot.slane %v7065, 4
      %v7068 = vshll.u32 %v6917, 16
      %v7070 = vrot.slane %v7068, 5
      %v7071 = vsel %vm1159, %v7066, %v7070
      %v7073 = vshrl.u32 %v6891, 16
      %v7075 = vrot.slane %v7073, 4
      %v7076 = vshll.u32 %v6891, 16
      %v7078 = vrot.slane %v7076, 5
      %v7079 = vor.u32 %v7075, %v7078
      %v7080 = vrot.slane %v7079, 4
      %v7082 = vshll.u32 %v6892, 16
      %v7084 = vrot.slane %v7082, 5
      %v7085 = vsel %vm1159, %v7080, %v7084
      %v7086 = vshrl.u32 %v6892, 16
      %v7088 = vrot.slane %v7086, 4
      %v7089 = vor.u32 %v7088, %v7084
      %v7090 = vrot.slane %v7089, 4
      %v7092 = vshll.u32 %v6918, 16
      %v7094 = vrot.slane %v7092, 5
      %v7095 = vsel %vm1159, %v7090, %v7094
      %v7097 = vshrl.u32 %v6893, 16
      %v7099 = vrot.slane %v7097, 4
      %v7100 = vshll.u32 %v6893, 16
      %v7102 = vrot.slane %v7100, 5
      %v7103 = vor.u32 %v7099, %v7102
      %v7104 = vrot.slane %v7103, 4
      %v7106 = vshll.u32 %v6894, 16
      %v7108 = vrot.slane %v7106, 5
      %v7109 = vsel %vm1159, %v7104, %v7108
      %v7110 = vshrl.u32 %v6894, 16
      %v7112 = vrot.slane %v7110, 4
      %v7113 = vor.u32 %v7112, %v7108
      %v7114 = vrot.slane %v7113, 4
      %v7116 = vshll.u32 %v6919, 16
      %v7118 = vrot.slane %v7116, 5
      %v7119 = vsel %vm1159, %v7114, %v7118
      %v7121 = vshrl.u32 %v6895, 16
      %v7123 = vrot.slane %v7121, 4
      %v7124 = vshll.u32 %v6895, 16
      %v7126 = vrot.slane %v7124, 5
      %v7127 = vor.u32 %v7123, %v7126
      %v7128 = vrot.slane %v7127, 4
      %v7130 = vshll.u32 %v6896, 16
      %v7132 = vrot.slane %v7130, 5
      %v7133 = vsel %vm1159, %v7128, %v7132
      %v7134 = vshrl.u32 %v6896, 16
      %v7136 = vrot.slane %v7134, 4
      %v7137 = vor.u32 %v7136, %v7132
      %v7138 = vrot.slane %v7137, 4
      %v7140 = vshll.u32 %v6920, 16
      %v7142 = vrot.slane %v7140, 5
      %v7143 = vsel %vm1159, %v7138, %v7142
      %v7145 = vshrl.u32 %v6897, 16
      %v7147 = vrot.slane %v7145, 4
      %v7148 = vshll.u32 %v6897, 16
      %v7150 = vrot.slane %v7148, 5
      %v7151 = vor.u32 %v7147, %v7150
      %v7152 = vrot.slane %v7151, 4
      %v7154 = vshll.u32 %v6898, 16
      %v7156 = vrot.slane %v7154, 5
      %v7157 = vsel %vm1159, %v7152, %v7156
      %v7158 = vshrl.u32 %v6898, 16
      %v7160 = vrot.slane %v7158, 4
      %v7161 = vor.u32 %v7160, %v7156
      %v7162 = vrot.slane %v7161, 4
      %v7164 = vshll.u32 %v6921, 16
      %v7166 = vrot.slane %v7164, 5
      %v7167 = vsel %vm1159, %v7162, %v7166
      %v7169 = vshrl.u32 %v6899, 16
      %v7171 = vrot.slane %v7169, 4
      %v7172 = vshll.u32 %v6899, 16
      %v7174 = vrot.slane %v7172, 5
      %v7175 = vor.u32 %v7171, %v7174
      %v7176 = vrot.slane %v7175, 4
      %v7178 = vshll.u32 %v6900, 16
      %v7180 = vrot.slane %v7178, 5
      %v7181 = vsel %vm1159, %v7176, %v7180
      %v7182 = vshrl.u32 %v6900, 16
      %v7184 = vrot.slane %v7182, 4
      %v7185 = vor.u32 %v7184, %v7180
      %v7186 = vrot.slane %v7185, 4
      %v7188 = vshll.u32 %v6922, 16
      %v7190 = vrot.slane %v7188, 5
      %v7191 = vsel %vm1159, %v7186, %v7190
      %v7193 = vshrl.u32 %v6901, 16
      %v7195 = vrot.slane %v7193, 4
      %v7196 = vshll.u32 %v6901, 16
      %v7198 = vrot.slane %v7196, 5
      %v7199 = vor.u32 %v7195, %v7198
      %v7200 = vrot.slane %v7199, 4
      %v7202 = vshll.u32 %v6902, 16
      %v7204 = vrot.slane %v7202, 5
      %v7205 = vsel %vm1159, %v7200, %v7204
      %v7206 = vshrl.u32 %v6902, 16
      %v7208 = vrot.slane %v7206, 4
      %v7209 = vor.u32 %v7208, %v7204
      %v7210 = vrot.slane %v7209, 4
      %v7212 = vshll.u32 %v6923, 16
      %v7214 = vrot.slane %v7212, 5
      %v7215 = vsel %vm1159, %v7210, %v7214
      %v7217 = vshrl.u32 %v6903, 16
      %v7219 = vrot.slane %v7217, 4
      %v7220 = vshll.u32 %v6903, 16
      %v7222 = vrot.slane %v7220, 5
      %v7223 = vor.u32 %v7219, %v7222
      %v7224 = vrot.slane %v7223, 4
      %v7226 = vshll.u32 %v6904, 16
      %v7228 = vrot.slane %v7226, 5
      %v7229 = vsel %vm1159, %v7224, %v7228
      %v7230 = vshrl.u32 %v6904, 16
      %v7232 = vrot.slane %v7230, 4
      %v7233 = vor.u32 %v7232, %v7228
      %v7234 = vrot.slane %v7233, 4
      %v7236 = vshll.u32 %v6924, 16
      %v7238 = vrot.slane %v7236, 5
      %v7239 = vsel %vm1159, %v7234, %v7238
      %v7241 = vshrl.u32 %v6905, 16
      %v7243 = vrot.slane %v7241, 4
      %v7244 = vshll.u32 %v6905, 16
      %v7246 = vrot.slane %v7244, 5
      %v7247 = vor.u32 %v7243, %v7246
      %v7248 = vrot.slane %v7247, 4
      %v7250 = vshll.u32 %v6906, 16
      %v7252 = vrot.slane %v7250, 5
      %v7253 = vsel %vm1159, %v7248, %v7252
      %v7254 = vshrl.u32 %v6906, 16
      %v7256 = vrot.slane %v7254, 4
      %v7257 = vor.u32 %v7256, %v7252
      %v7258 = vrot.slane %v7257, 4
      %v7260 = vshll.u32 %v6925, 16
      %v7262 = vrot.slane %v7260, 5
      %v7263 = vsel %vm1159, %v7258, %v7262
      %v7265 = vshrl.u32 %v6907, 16
      %v7267 = vrot.slane %v7265, 4
      %v7268 = vshll.u32 %v6907, 16
      %v7270 = vrot.slane %v7268, 5
      %v7271 = vor.u32 %v7267, %v7270
      %v7272 = vrot.slane %v7271, 4
      %v7274 = vshll.u32 %v6908, 16
      %v7276 = vrot.slane %v7274, 5
      %v7277 = vsel %vm1159, %v7272, %v7276
      %v7278 = vshrl.u32 %v6908, 16
      %v7280 = vrot.slane %v7278, 4
      %v7281 = vor.u32 %v7280, %v7276
      %v7282 = vrot.slane %v7281, 4
      %v7284 = vshll.u32 %v6926, 16
      %v7286 = vrot.slane %v7284, 5
      %v7287 = vsel %vm1159, %v7282, %v7286
      %v7289 = vshrl.u32 %v6909, 16
      %v7291 = vrot.slane %v7289, 4
      %v7292 = vshll.u32 %v6909, 16
      %v7294 = vrot.slane %v7292, 5
      %v7295 = vor.u32 %v7291, %v7294
      %v7296 = vrot.slane %v7295, 4
      %v7298 = vshll.u32 %v6910, 16
      %v7300 = vrot.slane %v7298, 5
      %v7301 = vsel %vm1159, %v7296, %v7300
      %v7302 = vshrl.u32 %v6910, 16
      %v7304 = vrot.slane %v7302, 4
      %v7305 = vor.u32 %v7304, %v7300
      %v7306 = vrot.slane %v7305, 4
      %v7308 = vshll.u32 %v6927, 16
      %v7310 = vrot.slane %v7308, 5
      %v7311 = vsel %vm1159, %v7306, %v7310
      %s7312 = scalar_lea.vmem %s3, 2
      %v7313 = vld [vmem:[%s7312] sm:$0x3]
      %v7314 = vunpack.c.l.b16 %v6941
      %v7315 = vunpack.c.l.b16 %v6951
      %v7316 = vunpack.c.l.b16 %v6965
      %v7317 = vunpack.c.l.b16 %v6975
      %v7318 = vunpack.c.l.b16 %v6989
      %v7319 = vunpack.c.l.b16 %v6999
      %v7320 = vunpack.c.l.b16 %v7013
      %v7321 = vunpack.c.l.b16 %v7023
      %v7322 = vunpack.c.l.b16 %v7037
      %v7323 = vunpack.c.l.b16 %v7047
      %v7324 = vunpack.c.l.b16 %v7061
      %v7325 = vunpack.c.l.b16 %v7071
      %v7326 = vunpack.c.l.b16 %v7085
      %v7327 = vunpack.c.l.b16 %v7095
      %v7328 = vunpack.c.l.b16 %v7109
      %v7329 = vunpack.c.l.b16 %v7119
      %v7330 = vunpack.c.l.b16 %v7133
      %v7331 = vunpack.c.l.b16 %v7143
      %v7332 = vunpack.c.l.b16 %v7157
      %v7333 = vunpack.c.l.b16 %v7167
      %v7334 = vunpack.c.l.b16 %v7181
      %v7335 = vunpack.c.l.b16 %v7191
      %v7336 = vunpack.c.l.b16 %v7205
      %v7337 = vunpack.c.l.b16 %v7215
      %v7338 = vunpack.c.l.b16 %v7229
      %v7339 = vunpack.c.l.b16 %v7239
      %v7340 = vunpack.c.l.b16 %v7253
      %v7341 = vunpack.c.l.b16 %v7263
      %v7342 = vunpack.c.l.b16 %v7277
      %v7343 = vunpack.c.l.b16 %v7287
      %v7344 = vunpack.c.l.b16 %v7301
      %v7345 = vunpack.c.l.b16 %v7311
      %v7346 = vpack.c.b16 %v7315, %v7314
      %v7347 = vpack.c.b16 %v7317, %v7316
      %v7348 = vpack.c.b16 %v7319, %v7318
      %v7349 = vpack.c.b16 %v7321, %v7320
      %v7350 = vpack.c.b16 %v7323, %v7322
      %v7351 = vpack.c.b16 %v7325, %v7324
      %v7352 = vpack.c.b16 %v7327, %v7326
      %v7353 = vpack.c.b16 %v7329, %v7328
      %v7354 = vpack.c.b16 %v7331, %v7330
      %v7355 = vpack.c.b16 %v7333, %v7332
      %v7356 = vpack.c.b16 %v7335, %v7334
      %v7357 = vpack.c.b16 %v7337, %v7336
      %v7358 = vpack.c.b16 %v7339, %v7338
      %v7359 = vpack.c.b16 %v7341, %v7340
      %v7360 = vpack.c.b16 %v7343, %v7342
      %v7361 = vpack.c.b16 %v7345, %v7344
      %v7363 = vsel %vm1594, %v7346, 0
      %v7366 = vsel %vm1594, %v7347, 0
      %v7369 = vsel %vm1594, %v7348, 0
      %v7372 = vsel %vm1594, %v7349, 0
      %v7375 = vsel %vm1594, %v7350, 0
      %v7378 = vsel %vm1594, %v7351, 0
      %v7381 = vsel %vm1594, %v7352, 0
      %v7384 = vsel %vm1594, %v7353, 0
      %v7387 = vsel %vm1594, %v7354, 0
      %v7390 = vsel %vm1594, %v7355, 0
      %v7393 = vsel %vm1594, %v7356, 0
      %v7396 = vsel %vm1594, %v7357, 0
      %v7399 = vsel %vm1594, %v7358, 0
      %v7402 = vsel %vm1594, %v7359, 0
      %v7405 = vsel %vm1594, %v7360, 0
      %v7408 = vsel %vm1594, %v7361, 0
      %v7411 = vsel %vm1643, %v7313, 0
      %7413 = vmatprep.subr.bf16.mxu0 0
      %7414 = vmatpush1.bf16.msra.mxu0 0
      %7415 = vmatprep.subr.bf16.mxu0 0
      %7416 = vmatpush1.bf16.msra.mxu0 0
      %7417 = vmatprep.subr.bf16.mxu0 0
      %7418 = vmatpush1.bf16.msra.mxu0 0
      %7419 = vmatprep.subr.bf16.mxu0 0
      %7420 = vmatpush1.bf16.msra.mxu0 0
      %7421 = vmatprep.subr.bf16.mxu0 0
      %7422 = vmatpush1.bf16.msra.mxu0 0
      %7423 = vmatprep.subr.bf16.mxu0 0
      %7424 = vmatpush1.bf16.msra.mxu0 0
      %7425 = vmatprep.subr.bf16.mxu0 0
      %7426 = vmatpush1.bf16.msra.mxu0 0
      %7427 = vmatprep.subr.bf16.mxu0 0
      %7428 = vmatpush1.bf16.msra.mxu0 %v7411
      %7429 = vmatprep.subr.bf16.mxu0 0
      %7430 = vmatpush2.bf16.msra.mxu0 0
      %7431 = vmatprep.subr.bf16.mxu0 0
      %7432 = vmatpush2.bf16.msra.mxu0 0
      %7433 = vmatprep.subr.bf16.mxu0 0
      %7434 = vmatpush2.bf16.msra.mxu0 0
      %7435 = vmatprep.subr.bf16.mxu0 0
      %7436 = vmatpush2.bf16.msra.mxu0 0
      %7437 = vmatprep.subr.bf16.mxu0 0
      %7438 = vmatpush2.bf16.msra.mxu0 0
      %7439 = vmatprep.subr.bf16.mxu0 0
      %7440 = vmatpush2.bf16.msra.mxu0 0
      %7441 = vmatprep.subr.bf16.mxu0 0
      %7442 = vmatpush2.bf16.msra.mxu0 0
      %7443 = vmatprep.subr.bf16.mxu0 0
      %7444 = vmatpush2.bf16.msra.mxu0 0
      %7445 = vmatprep.mubr.bf16.mxu0 0
      %7446 = vmatmul.mubr.bf16.gmra.mxu0 %v7363
      %v7447 = vpop.f32.mrf.mxu0
      %v7448 = vadd.f32 0.0, %v7447
      %v7449 = vpop.f32.mrf.mxu0
      %v7450 = vpop.f32.mrf.mxu0
      %v7451 = vadd.f32 0.0, %v7450
      %v7452 = vpop.f32.mrf.mxu0
      %7453 = vmatprep.mubr.bf16.mxu0 0
      %7454 = vmatmul.mubr.bf16.gmra.mxu0 %v7366
      %v7455 = vpop.f32.mrf.mxu0
      %v7456 = vadd.f32 0.0, %v7455
      %v7457 = vpop.f32.mrf.mxu0
      %v7458 = vpop.f32.mrf.mxu0
      %v7459 = vadd.f32 0.0, %v7458
      %v7460 = vpop.f32.mrf.mxu0
      %7461 = vmatprep.mubr.bf16.mxu0 0
      %7462 = vmatmul.mubr.bf16.gmra.mxu0 %v7369
      %v7463 = vpop.f32.mrf.mxu0
      %v7464 = vadd.f32 0.0, %v7463
      %v7465 = vpop.f32.mrf.mxu0
      %v7466 = vpop.f32.mrf.mxu0
      %v7467 = vadd.f32 0.0, %v7466
      %v7468 = vpop.f32.mrf.mxu0
      %7469 = vmatprep.mubr.bf16.mxu0 0
      %7470 = vmatmul.mubr.bf16.gmra.mxu0 %v7372
      %v7471 = vpop.f32.mrf.mxu0
      %v7472 = vadd.f32 0.0, %v7471
      %v7473 = vpop.f32.mrf.mxu0
      %v7474 = vpop.f32.mrf.mxu0
      %v7475 = vadd.f32 0.0, %v7474
      %v7476 = vpop.f32.mrf.mxu0
      %7477 = vmatprep.mubr.bf16.mxu0 0
      %7478 = vmatmul.mubr.bf16.gmra.mxu0 %v7375
      %v7479 = vpop.f32.mrf.mxu0
      %v7480 = vadd.f32 0.0, %v7479
      %v7481 = vpop.f32.mrf.mxu0
      %v7482 = vpop.f32.mrf.mxu0
      %v7483 = vadd.f32 0.0, %v7482
      %v7484 = vpop.f32.mrf.mxu0
      %7485 = vmatprep.mubr.bf16.mxu0 0
      %7486 = vmatmul.mubr.bf16.gmra.mxu0 %v7378
      %v7487 = vpop.f32.mrf.mxu0
      %v7488 = vadd.f32 0.0, %v7487
      %v7489 = vpop.f32.mrf.mxu0
      %v7490 = vpop.f32.mrf.mxu0
      %v7491 = vadd.f32 0.0, %v7490
      %v7492 = vpop.f32.mrf.mxu0
      %7493 = vmatprep.mubr.bf16.mxu0 0
      %7494 = vmatmul.mubr.bf16.gmra.mxu0 %v7381
      %v7495 = vpop.f32.mrf.mxu0
      %v7496 = vadd.f32 0.0, %v7495
      %v7497 = vpop.f32.mrf.mxu0
      %v7498 = vpop.f32.mrf.mxu0
      %v7499 = vadd.f32 0.0, %v7498
      %v7500 = vpop.f32.mrf.mxu0
      %7501 = vmatprep.mubr.bf16.mxu0 0
      %7502 = vmatmul.mubr.bf16.gmra.mxu0 %v7384
      %v7503 = vpop.f32.mrf.mxu0
      %v7504 = vadd.f32 0.0, %v7503
      %v7505 = vpop.f32.mrf.mxu0
      %v7506 = vpop.f32.mrf.mxu0
      %v7507 = vadd.f32 0.0, %v7506
      %v7508 = vpop.f32.mrf.mxu0
      %7509 = vmatprep.mubr.bf16.mxu0 0
      %7510 = vmatmul.mubr.bf16.gmra.mxu0 %v7387
      %v7511 = vpop.f32.mrf.mxu0
      %v7512 = vadd.f32 0.0, %v7511
      %v7513 = vpop.f32.mrf.mxu0
      %v7514 = vpop.f32.mrf.mxu0
      %v7515 = vadd.f32 0.0, %v7514
      %v7516 = vpop.f32.mrf.mxu0
      %7517 = vmatprep.mubr.bf16.mxu0 0
      %7518 = vmatmul.mubr.bf16.gmra.mxu0 %v7390
      %v7519 = vpop.f32.mrf.mxu0
      %v7520 = vadd.f32 0.0, %v7519
      %v7521 = vpop.f32.mrf.mxu0
      %v7522 = vpop.f32.mrf.mxu0
      %v7523 = vadd.f32 0.0, %v7522
      %v7524 = vpop.f32.mrf.mxu0
      %7525 = vmatprep.mubr.bf16.mxu0 0
      %7526 = vmatmul.mubr.bf16.gmra.mxu0 %v7393
      %v7527 = vpop.f32.mrf.mxu0
      %v7528 = vadd.f32 0.0, %v7527
      %v7529 = vpop.f32.mrf.mxu0
      %v7530 = vpop.f32.mrf.mxu0
      %v7531 = vadd.f32 0.0, %v7530
      %v7532 = vpop.f32.mrf.mxu0
      %7533 = vmatprep.mubr.bf16.mxu0 0
      %7534 = vmatmul.mubr.bf16.gmra.mxu0 %v7396
      %v7535 = vpop.f32.mrf.mxu0
      %v7536 = vadd.f32 0.0, %v7535
      %v7537 = vpop.f32.mrf.mxu0
      %v7538 = vpop.f32.mrf.mxu0
      %v7539 = vadd.f32 0.0, %v7538
      %v7540 = vpop.f32.mrf.mxu0
      %7541 = vmatprep.mubr.bf16.mxu0 0
      %7542 = vmatmul.mubr.bf16.gmra.mxu0 %v7399
      %v7543 = vpop.f32.mrf.mxu0
      %v7544 = vadd.f32 0.0, %v7543
      %v7545 = vpop.f32.mrf.mxu0
      %v7546 = vpop.f32.mrf.mxu0
      %v7547 = vadd.f32 0.0, %v7546
      %v7548 = vpop.f32.mrf.mxu0
      %7549 = vmatprep.mubr.bf16.mxu0 0
      %7550 = vmatmul.mubr.bf16.gmra.mxu0 %v7402
      %v7551 = vpop.f32.mrf.mxu0
      %v7552 = vadd.f32 0.0, %v7551
      %v7553 = vpop.f32.mrf.mxu0
      %v7554 = vpop.f32.mrf.mxu0
      %v7555 = vadd.f32 0.0, %v7554
      %v7556 = vpop.f32.mrf.mxu0
      %7557 = vmatprep.mubr.bf16.mxu0 0
      %7558 = vmatmul.mubr.bf16.gmra.mxu0 %v7405
      %v7559 = vpop.f32.mrf.mxu0
      %v7560 = vadd.f32 0.0, %v7559
      %v7561 = vpop.f32.mrf.mxu0
      %v7562 = vpop.f32.mrf.mxu0
      %v7563 = vadd.f32 0.0, %v7562
      %v7564 = vpop.f32.mrf.mxu0
      %7565 = vmatprep.mubr.bf16.mxu0 0
      %7566 = vmatmul.mubr.bf16.gmra.mxu0 %v7408
      %v7567 = vpop.f32.mrf.mxu0
      %v7568 = vadd.f32 0.0, %v7567
      %v7569 = vpop.f32.mrf.mxu0
      %v7570 = vpop.f32.mrf.mxu0
      %v7571 = vadd.f32 0.0, %v7570
      %v7572 = vpop.f32.mrf.mxu0
      %7573 = vdwg.mxu0
      %v7606 = vunpack.c.l.b16 %v6879
      %v7607 = vunpack.c.l.b16 %v6880
      %v7608 = vunpack.c.l.b16 %v6881
      %v7609 = vunpack.c.l.b16 %v6882
      %v7610 = vunpack.c.l.b16 %v6883
      %v7611 = vunpack.c.l.b16 %v6884
      %v7612 = vunpack.c.l.b16 %v6885
      %v7613 = vunpack.c.l.b16 %v6886
      %v7614 = vunpack.c.l.b16 %v6887
      %v7615 = vunpack.c.l.b16 %v6888
      %v7616 = vunpack.c.l.b16 %v6889
      %v7617 = vunpack.c.l.b16 %v6890
      %v7618 = vunpack.c.l.b16 %v6891
      %v7619 = vunpack.c.l.b16 %v6892
      %v7620 = vunpack.c.l.b16 %v6893
      %v7621 = vunpack.c.l.b16 %v6894
      %v7622 = vunpack.c.l.b16 %v6895
      %v7623 = vunpack.c.l.b16 %v6896
      %v7624 = vunpack.c.l.b16 %v6897
      %v7625 = vunpack.c.l.b16 %v6898
      %v7626 = vunpack.c.l.b16 %v6899
      %v7627 = vunpack.c.l.b16 %v6900
      %v7628 = vunpack.c.l.b16 %v6901
      %v7629 = vunpack.c.l.b16 %v6902
      %v7630 = vunpack.c.l.b16 %v6903
      %v7631 = vunpack.c.l.b16 %v6904
      %v7632 = vunpack.c.l.b16 %v6905
      %v7633 = vunpack.c.l.b16 %v6906
      %v7634 = vunpack.c.l.b16 %v6907
      %v7635 = vunpack.c.l.b16 %v6908
      %v7636 = vunpack.c.l.b16 %v6909
      %v7637 = vunpack.c.l.b16 %v6910
      %v7638 = vpack.c.b16 %v7607, %v7606
      %v7639 = vpack.c.b16 %v7609, %v7608
      %v7640 = vpack.c.b16 %v7611, %v7610
      %v7641 = vpack.c.b16 %v7613, %v7612
      %v7642 = vpack.c.b16 %v7615, %v7614
      %v7643 = vpack.c.b16 %v7617, %v7616
      %v7644 = vpack.c.b16 %v7619, %v7618
      %v7645 = vpack.c.b16 %v7621, %v7620
      %v7646 = vpack.c.b16 %v7623, %v7622
      %v7647 = vpack.c.b16 %v7625, %v7624
      %v7648 = vpack.c.b16 %v7627, %v7626
      %v7649 = vpack.c.b16 %v7629, %v7628
      %v7650 = vpack.c.b16 %v7631, %v7630
      %v7651 = vpack.c.b16 %v7633, %v7632
      %v7652 = vpack.c.b16 %v7635, %v7634
      %v7653 = vpack.c.b16 %v7637, %v7636
      %v7655 = vsel %vm1594, %v7638, 0
      %v7658 = vsel %vm1594, %v7639, 0
      %v7661 = vsel %vm1594, %v7640, 0
      %v7664 = vsel %vm1594, %v7641, 0
      %v7667 = vsel %vm1594, %v7642, 0
      %v7670 = vsel %vm1594, %v7643, 0
      %v7673 = vsel %vm1594, %v7644, 0
      %v7676 = vsel %vm1594, %v7645, 0
      %v7679 = vsel %vm1594, %v7646, 0
      %v7682 = vsel %vm1594, %v7647, 0
      %v7685 = vsel %vm1594, %v7648, 0
      %v7688 = vsel %vm1594, %v7649, 0
      %v7691 = vsel %vm1594, %v7650, 0
      %v7694 = vsel %vm1594, %v7651, 0
      %v7697 = vsel %vm1594, %v7652, 0
      %v7700 = vsel %vm1594, %v7653, 0
      %v7703 = vsel %vm1643, %v6911, 0
      %7705 = vmatprep.subr.bf16.mxu0 0
      %7706 = vmatpush1.bf16.msra.mxu0 0
      %7707 = vmatprep.subr.bf16.mxu0 0
      %7708 = vmatpush1.bf16.msra.mxu0 0
      %7709 = vmatprep.subr.bf16.mxu0 0
      %7710 = vmatpush1.bf16.msra.mxu0 0
      %7711 = vmatprep.subr.bf16.mxu0 0
      %7712 = vmatpush1.bf16.msra.mxu0 0
      %7713 = vmatprep.subr.bf16.mxu0 0
      %7714 = vmatpush1.bf16.msra.mxu0 0
      %7715 = vmatprep.subr.bf16.mxu0 0
      %7716 = vmatpush1.bf16.msra.mxu0 0
      %7717 = vmatprep.subr.bf16.mxu0 0
      %7718 = vmatpush1.bf16.msra.mxu0 0
      %7719 = vmatprep.subr.bf16.mxu0 0
      %7720 = vmatpush1.bf16.msra.mxu0 %v7703
      %7721 = vmatprep.subr.bf16.mxu0 0
      %7722 = vmatpush2.bf16.msra.mxu0 0
      %7723 = vmatprep.subr.bf16.mxu0 0
      %7724 = vmatpush2.bf16.msra.mxu0 0
      %7725 = vmatprep.subr.bf16.mxu0 0
      %7726 = vmatpush2.bf16.msra.mxu0 0
      %7727 = vmatprep.subr.bf16.mxu0 0
      %7728 = vmatpush2.bf16.msra.mxu0 0
      %7729 = vmatprep.subr.bf16.mxu0 0
      %7730 = vmatpush2.bf16.msra.mxu0 0
      %7731 = vmatprep.subr.bf16.mxu0 0
      %7732 = vmatpush2.bf16.msra.mxu0 0
      %7733 = vmatprep.subr.bf16.mxu0 0
      %7734 = vmatpush2.bf16.msra.mxu0 0
      %7735 = vmatprep.subr.bf16.mxu0 0
      %7736 = vmatpush2.bf16.msra.mxu0 0
      %7737 = vmatprep.mubr.bf16.mxu0 0
      %7738 = vmatmul.mubr.bf16.gmra.mxu0 %v7655
      %v7739 = vpop.f32.mrf.mxu0
      %v7740 = vadd.f32 %v7448, %v7739
      %v7741 = vpop.f32.mrf.mxu0
      %v7742 = vpop.f32.mrf.mxu0
      %v7743 = vadd.f32 %v7451, %v7742
      %v7744 = vpop.f32.mrf.mxu0
      %7745 = vmatprep.mubr.bf16.mxu0 0
      %7746 = vmatmul.mubr.bf16.gmra.mxu0 %v7658
      %v7747 = vpop.f32.mrf.mxu0
      %v7748 = vadd.f32 %v7456, %v7747
      %v7749 = vpop.f32.mrf.mxu0
      %v7750 = vpop.f32.mrf.mxu0
      %v7751 = vadd.f32 %v7459, %v7750
      %v7752 = vpop.f32.mrf.mxu0
      %7753 = vmatprep.mubr.bf16.mxu0 0
      %7754 = vmatmul.mubr.bf16.gmra.mxu0 %v7661
      %v7755 = vpop.f32.mrf.mxu0
      %v7756 = vadd.f32 %v7464, %v7755
      %v7757 = vpop.f32.mrf.mxu0
      %v7758 = vpop.f32.mrf.mxu0
      %v7759 = vadd.f32 %v7467, %v7758
      %v7760 = vpop.f32.mrf.mxu0
      %7761 = vmatprep.mubr.bf16.mxu0 0
      %7762 = vmatmul.mubr.bf16.gmra.mxu0 %v7664
      %v7763 = vpop.f32.mrf.mxu0
      %v7764 = vadd.f32 %v7472, %v7763
      %v7765 = vpop.f32.mrf.mxu0
      %v7766 = vpop.f32.mrf.mxu0
      %v7767 = vadd.f32 %v7475, %v7766
      %v7768 = vpop.f32.mrf.mxu0
      %7769 = vmatprep.mubr.bf16.mxu0 0
      %7770 = vmatmul.mubr.bf16.gmra.mxu0 %v7667
      %v7771 = vpop.f32.mrf.mxu0
      %v7772 = vadd.f32 %v7480, %v7771
      %v7773 = vpop.f32.mrf.mxu0
      %v7774 = vpop.f32.mrf.mxu0
      %v7775 = vadd.f32 %v7483, %v7774
      %v7776 = vpop.f32.mrf.mxu0
      %7777 = vmatprep.mubr.bf16.mxu0 0
      %7778 = vmatmul.mubr.bf16.gmra.mxu0 %v7670
      %v7779 = vpop.f32.mrf.mxu0
      %v7780 = vadd.f32 %v7488, %v7779
      %v7781 = vpop.f32.mrf.mxu0
      %v7782 = vpop.f32.mrf.mxu0
      %v7783 = vadd.f32 %v7491, %v7782
      %v7784 = vpop.f32.mrf.mxu0
      %7785 = vmatprep.mubr.bf16.mxu0 0
      %7786 = vmatmul.mubr.bf16.gmra.mxu0 %v7673
      %v7787 = vpop.f32.mrf.mxu0
      %v7788 = vadd.f32 %v7496, %v7787
      %v7789 = vpop.f32.mrf.mxu0
      %v7790 = vpop.f32.mrf.mxu0
      %v7791 = vadd.f32 %v7499, %v7790
      %v7792 = vpop.f32.mrf.mxu0
      %7793 = vmatprep.mubr.bf16.mxu0 0
      %7794 = vmatmul.mubr.bf16.gmra.mxu0 %v7676
      %v7795 = vpop.f32.mrf.mxu0
      %v7796 = vadd.f32 %v7504, %v7795
      %v7797 = vpop.f32.mrf.mxu0
      %v7798 = vpop.f32.mrf.mxu0
      %v7799 = vadd.f32 %v7507, %v7798
      %v7800 = vpop.f32.mrf.mxu0
      %7801 = vmatprep.mubr.bf16.mxu0 0
      %7802 = vmatmul.mubr.bf16.gmra.mxu0 %v7679
      %v7803 = vpop.f32.mrf.mxu0
      %v7804 = vadd.f32 %v7512, %v7803
      %v7805 = vpop.f32.mrf.mxu0
      %v7806 = vpop.f32.mrf.mxu0
      %v7807 = vadd.f32 %v7515, %v7806
      %v7808 = vpop.f32.mrf.mxu0
      %7809 = vmatprep.mubr.bf16.mxu0 0
      %7810 = vmatmul.mubr.bf16.gmra.mxu0 %v7682
      %v7811 = vpop.f32.mrf.mxu0
      %v7812 = vadd.f32 %v7520, %v7811
      %v7813 = vpop.f32.mrf.mxu0
      %v7814 = vpop.f32.mrf.mxu0
      %v7815 = vadd.f32 %v7523, %v7814
      %v7816 = vpop.f32.mrf.mxu0
      %7817 = vmatprep.mubr.bf16.mxu0 0
      %7818 = vmatmul.mubr.bf16.gmra.mxu0 %v7685
      %v7819 = vpop.f32.mrf.mxu0
      %v7820 = vadd.f32 %v7528, %v7819
      %v7821 = vpop.f32.mrf.mxu0
      %v7822 = vpop.f32.mrf.mxu0
      %v7823 = vadd.f32 %v7531, %v7822
      %v7824 = vpop.f32.mrf.mxu0
      %7825 = vmatprep.mubr.bf16.mxu0 0
      %7826 = vmatmul.mubr.bf16.gmra.mxu0 %v7688
      %v7827 = vpop.f32.mrf.mxu0
      %v7828 = vadd.f32 %v7536, %v7827
      %v7829 = vpop.f32.mrf.mxu0
      %v7830 = vpop.f32.mrf.mxu0
      %v7831 = vadd.f32 %v7539, %v7830
      %v7832 = vpop.f32.mrf.mxu0
      %7833 = vmatprep.mubr.bf16.mxu0 0
      %7834 = vmatmul.mubr.bf16.gmra.mxu0 %v7691
      %v7835 = vpop.f32.mrf.mxu0
      %v7836 = vadd.f32 %v7544, %v7835
      %v7837 = vpop.f32.mrf.mxu0
      %v7838 = vpop.f32.mrf.mxu0
      %v7839 = vadd.f32 %v7547, %v7838
      %v7840 = vpop.f32.mrf.mxu0
      %7841 = vmatprep.mubr.bf16.mxu0 0
      %7842 = vmatmul.mubr.bf16.gmra.mxu0 %v7694
      %v7843 = vpop.f32.mrf.mxu0
      %v7844 = vadd.f32 %v7552, %v7843
      %v7845 = vpop.f32.mrf.mxu0
      %v7846 = vpop.f32.mrf.mxu0
      %v7847 = vadd.f32 %v7555, %v7846
      %v7848 = vpop.f32.mrf.mxu0
      %7849 = vmatprep.mubr.bf16.mxu0 0
      %7850 = vmatmul.mubr.bf16.gmra.mxu0 %v7697
      %v7851 = vpop.f32.mrf.mxu0
      %v7852 = vadd.f32 %v7560, %v7851
      %v7853 = vpop.f32.mrf.mxu0
      %v7854 = vpop.f32.mrf.mxu0
      %v7855 = vadd.f32 %v7563, %v7854
      %v7856 = vpop.f32.mrf.mxu0
      %7857 = vmatprep.mubr.bf16.mxu0 0
      %7858 = vmatmul.mubr.bf16.gmra.mxu0 %v7700
      %v7859 = vpop.f32.mrf.mxu0
      %v7860 = vadd.f32 %v7568, %v7859
      %v7861 = vpop.f32.mrf.mxu0
      %v7862 = vpop.f32.mrf.mxu0
      %v7863 = vadd.f32 %v7571, %v7862
      %v7864 = vpop.f32.mrf.mxu0
      %7865 = vdwg.mxu0
      %v7866 = vld [vmem:[#allocation2] sm:$0xe]
      %v7867 = vld [vmem:[#allocation2 + $0xc] sm:$0xe]
      %v7868 = vld [vmem:[#allocation2 + $0x18] sm:$0xe]
      %v7869 = vld [vmem:[#allocation2 + $0x24] sm:$0xe]
      %v7870 = vld [vmem:[#allocation2 + $0x30] sm:$0xe]
      %v7871 = vld [vmem:[#allocation2 + $0x3c] sm:$0xe]
      %v7872 = vld [vmem:[#allocation2 + $0x48] sm:$0xe]
      %v7873 = vld [vmem:[#allocation2 + $0x54] sm:$0xe]
      %v7874 = vld [vmem:[#allocation2 + $0x60] sm:$0xe]
      %v7875 = vld [vmem:[#allocation2 + $0x6c] sm:$0xe]
      %v7876 = vld [vmem:[#allocation2 + $0x78] sm:$0xe]
      %v7877 = vld [vmem:[#allocation2 + $0x84] sm:$0xe]
      %v7878 = vld [vmem:[#allocation2 + $0x90] sm:$0xe]
      %v7879 = vld [vmem:[#allocation2 + $0x9c] sm:$0xe]
      %v7880 = vld [vmem:[#allocation2 + $0xa8] sm:$0xe]
      %v7881 = vld [vmem:[#allocation2 + $0xb4] sm:$0xe]
      %v7914 = vrot.slane %v7866, 5
      %v7915 = vrot.slane %v7914, 4
      %v7916 = vrot.slane %v6880, 5
      %v7917 = vsel %vm2150, %v7915, %v7916
      %v7918 = vrot.slane %v7916, 4
      %v7919 = vrot.slane %v6912, 5
      %v7920 = vsel %vm2150, %v7918, %v7919
      %v7921 = vrot.slane %v7867, 5
      %v7922 = vrot.slane %v7921, 4
      %v7923 = vrot.slane %v6882, 5
      %v7924 = vsel %vm2150, %v7922, %v7923
      %v7925 = vrot.slane %v7923, 4
      %v7926 = vrot.slane %v6913, 5
      %v7927 = vsel %vm2150, %v7925, %v7926
      %v7928 = vrot.slane %v7868, 5
      %v7929 = vrot.slane %v7928, 4
      %v7930 = vrot.slane %v6884, 5
      %v7931 = vsel %vm2150, %v7929, %v7930
      %v7932 = vrot.slane %v7930, 4
      %v7933 = vrot.slane %v6914, 5
      %v7934 = vsel %vm2150, %v7932, %v7933
      %v7935 = vrot.slane %v7869, 5
      %v7936 = vrot.slane %v7935, 4
      %v7937 = vrot.slane %v6886, 5
      %v7938 = vsel %vm2150, %v7936, %v7937
      %v7939 = vrot.slane %v7937, 4
      %v7940 = vrot.slane %v6915, 5
      %v7941 = vsel %vm2150, %v7939, %v7940
      %v7942 = vrot.slane %v7870, 5
      %v7943 = vrot.slane %v7942, 4
      %v7944 = vrot.slane %v6888, 5
      %v7945 = vsel %vm2150, %v7943, %v7944
      %v7946 = vrot.slane %v7944, 4
      %v7947 = vrot.slane %v6916, 5
      %v7948 = vsel %vm2150, %v7946, %v7947
      %v7949 = vrot.slane %v7871, 5
      %v7950 = vrot.slane %v7949, 4
      %v7951 = vrot.slane %v6890, 5
      %v7952 = vsel %vm2150, %v7950, %v7951
      %v7953 = vrot.slane %v7951, 4
      %v7954 = vrot.slane %v6917, 5
      %v7955 = vsel %vm2150, %v7953, %v7954
      %v7956 = vrot.slane %v7872, 5
      %v7957 = vrot.slane %v7956, 4
      %v7958 = vrot.slane %v6892, 5
      %v7959 = vsel %vm2150, %v7957, %v7958
      %v7960 = vrot.slane %v7958, 4
      %v7961 = vrot.slane %v6918, 5
      %v7962 = vsel %vm2150, %v7960, %v7961
      %v7963 = vrot.slane %v7873, 5
      %v7964 = vrot.slane %v7963, 4
      %v7965 = vrot.slane %v6894, 5
      %v7966 = vsel %vm2150, %v7964, %v7965
      %v7967 = vrot.slane %v7965, 4
      %v7968 = vrot.slane %v6919, 5
      %v7969 = vsel %vm2150, %v7967, %v7968
      %v7970 = vrot.slane %v7874, 5
      %v7971 = vrot.slane %v7970, 4
      %v7972 = vrot.slane %v6896, 5
      %v7973 = vsel %vm2150, %v7971, %v7972
      %v7974 = vrot.slane %v7972, 4
      %v7975 = vrot.slane %v6920, 5
      %v7976 = vsel %vm2150, %v7974, %v7975
      %v7977 = vrot.slane %v7875, 5
      %v7978 = vrot.slane %v7977, 4
      %v7979 = vrot.slane %v6898, 5
      %v7980 = vsel %vm2150, %v7978, %v7979
      %v7981 = vrot.slane %v7979, 4
      %v7982 = vrot.slane %v6921, 5
      %v7983 = vsel %vm2150, %v7981, %v7982
      %v7984 = vrot.slane %v7876, 5
      %v7985 = vrot.slane %v7984, 4
      %v7986 = vrot.slane %v6900, 5
      %v7987 = vsel %vm2150, %v7985, %v7986
      %v7988 = vrot.slane %v7986, 4
      %v7989 = vrot.slane %v6922, 5
      %v7990 = vsel %vm2150, %v7988, %v7989
      %v7991 = vrot.slane %v7877, 5
      %v7992 = vrot.slane %v7991, 4
      %v7993 = vrot.slane %v6902, 5
      %v7994 = vsel %vm2150, %v7992, %v7993
      %v7995 = vrot.slane %v7993, 4
      %v7996 = vrot.slane %v6923, 5
      %v7997 = vsel %vm2150, %v7995, %v7996
      %v7998 = vrot.slane %v7878, 5
      %v7999 = vrot.slane %v7998, 4
      %v8000 = vrot.slane %v6904, 5
      %v8001 = vsel %vm2150, %v7999, %v8000
      %v8002 = vrot.slane %v8000, 4
      %v8003 = vrot.slane %v6924, 5
      %v8004 = vsel %vm2150, %v8002, %v8003
      %v8005 = vrot.slane %v7879, 5
      %v8006 = vrot.slane %v8005, 4
      %v8007 = vrot.slane %v6906, 5
      %v8008 = vsel %vm2150, %v8006, %v8007
      %v8009 = vrot.slane %v8007, 4
      %v8010 = vrot.slane %v6925, 5
      %v8011 = vsel %vm2150, %v8009, %v8010
      %v8012 = vrot.slane %v7880, 5
      %v8013 = vrot.slane %v8012, 4
      %v8014 = vrot.slane %v6908, 5
      %v8015 = vsel %vm2150, %v8013, %v8014
      %v8016 = vrot.slane %v8014, 4
      %v8017 = vrot.slane %v6926, 5
      %v8018 = vsel %vm2150, %v8016, %v8017
      %v8019 = vrot.slane %v7881, 5
      %v8020 = vrot.slane %v8019, 4
      %v8021 = vrot.slane %v6910, 5
      %v8022 = vsel %vm2150, %v8020, %v8021
      %v8023 = vrot.slane %v8021, 4
      %v8024 = vrot.slane %v6927, 5
      %v8025 = vsel %vm2150, %v8023, %v8024
      %s8026 = scalar_lea.vmem %s3, 4
      %v8027 = vld [vmem:[%s8026] sm:$0x3]
      %v8028 = vunpack.c.l.b16 %v7917
      %v8029 = vunpack.c.l.b16 %v7920
      %v8030 = vunpack.c.l.b16 %v7924
      %v8031 = vunpack.c.l.b16 %v7927
      %v8032 = vunpack.c.l.b16 %v7931
      %v8033 = vunpack.c.l.b16 %v7934
      %v8034 = vunpack.c.l.b16 %v7938
      %v8035 = vunpack.c.l.b16 %v7941
      %v8036 = vunpack.c.l.b16 %v7945
      %v8037 = vunpack.c.l.b16 %v7948
      %v8038 = vunpack.c.l.b16 %v7952
      %v8039 = vunpack.c.l.b16 %v7955
      %v8040 = vunpack.c.l.b16 %v7959
      %v8041 = vunpack.c.l.b16 %v7962
      %v8042 = vunpack.c.l.b16 %v7966
      %v8043 = vunpack.c.l.b16 %v7969
      %v8044 = vunpack.c.l.b16 %v7973
      %v8045 = vunpack.c.l.b16 %v7976
      %v8046 = vunpack.c.l.b16 %v7980
      %v8047 = vunpack.c.l.b16 %v7983
      %v8048 = vunpack.c.l.b16 %v7987
      %v8049 = vunpack.c.l.b16 %v7990
      %v8050 = vunpack.c.l.b16 %v7994
      %v8051 = vunpack.c.l.b16 %v7997
      %v8052 = vunpack.c.l.b16 %v8001
      %v8053 = vunpack.c.l.b16 %v8004
      %v8054 = vunpack.c.l.b16 %v8008
      %v8055 = vunpack.c.l.b16 %v8011
      %v8056 = vunpack.c.l.b16 %v8015
      %v8057 = vunpack.c.l.b16 %v8018
      %v8058 = vunpack.c.l.b16 %v8022
      %v8059 = vunpack.c.l.b16 %v8025
      %v8060 = vpack.c.b16 %v8029, %v8028
      %v8061 = vpack.c.b16 %v8031, %v8030
      %v8062 = vpack.c.b16 %v8033, %v8032
      %v8063 = vpack.c.b16 %v8035, %v8034
      %v8064 = vpack.c.b16 %v8037, %v8036
      %v8065 = vpack.c.b16 %v8039, %v8038
      %v8066 = vpack.c.b16 %v8041, %v8040
      %v8067 = vpack.c.b16 %v8043, %v8042
      %v8068 = vpack.c.b16 %v8045, %v8044
      %v8069 = vpack.c.b16 %v8047, %v8046
      %v8070 = vpack.c.b16 %v8049, %v8048
      %v8071 = vpack.c.b16 %v8051, %v8050
      %v8072 = vpack.c.b16 %v8053, %v8052
      %v8073 = vpack.c.b16 %v8055, %v8054
      %v8074 = vpack.c.b16 %v8057, %v8056
      %v8075 = vpack.c.b16 %v8059, %v8058
      %v8077 = vsel %vm1594, %v8060, 0
      %v8080 = vsel %vm1594, %v8061, 0
      %v8083 = vsel %vm1594, %v8062, 0
      %v8086 = vsel %vm1594, %v8063, 0
      %v8089 = vsel %vm1594, %v8064, 0
      %v8092 = vsel %vm1594, %v8065, 0
      %v8095 = vsel %vm1594, %v8066, 0
      %v8098 = vsel %vm1594, %v8067, 0
      %v8101 = vsel %vm1594, %v8068, 0
      %v8104 = vsel %vm1594, %v8069, 0
      %v8107 = vsel %vm1594, %v8070, 0
      %v8110 = vsel %vm1594, %v8071, 0
      %v8113 = vsel %vm1594, %v8072, 0
      %v8116 = vsel %vm1594, %v8073, 0
      %v8119 = vsel %vm1594, %v8074, 0
      %v8122 = vsel %vm1594, %v8075, 0
      %v8125 = vsel %vm1643, %v8027, 0
      %8127 = vmatprep.subr.bf16.mxu0 0
      %8128 = vmatpush1.bf16.msra.mxu0 0
      %8129 = vmatprep.subr.bf16.mxu0 0
      %8130 = vmatpush1.bf16.msra.mxu0 0
      %8131 = vmatprep.subr.bf16.mxu0 0
      %8132 = vmatpush1.bf16.msra.mxu0 0
      %8133 = vmatprep.subr.bf16.mxu0 0
      %8134 = vmatpush1.bf16.msra.mxu0 0
      %8135 = vmatprep.subr.bf16.mxu0 0
      %8136 = vmatpush1.bf16.msra.mxu0 0
      %8137 = vmatprep.subr.bf16.mxu0 0
      %8138 = vmatpush1.bf16.msra.mxu0 0
      %8139 = vmatprep.subr.bf16.mxu0 0
      %8140 = vmatpush1.bf16.msra.mxu0 0
      %8141 = vmatprep.subr.bf16.mxu0 0
      %8142 = vmatpush1.bf16.msra.mxu0 %v8125
      %8143 = vmatprep.subr.bf16.mxu0 0
      %8144 = vmatpush2.bf16.msra.mxu0 0
      %8145 = vmatprep.subr.bf16.mxu0 0
      %8146 = vmatpush2.bf16.msra.mxu0 0
      %8147 = vmatprep.subr.bf16.mxu0 0
      %8148 = vmatpush2.bf16.msra.mxu0 0
      %8149 = vmatprep.subr.bf16.mxu0 0
      %8150 = vmatpush2.bf16.msra.mxu0 0
      %8151 = vmatprep.subr.bf16.mxu0 0
      %8152 = vmatpush2.bf16.msra.mxu0 0
      %8153 = vmatprep.subr.bf16.mxu0 0
      %8154 = vmatpush2.bf16.msra.mxu0 0
      %8155 = vmatprep.subr.bf16.mxu0 0
      %8156 = vmatpush2.bf16.msra.mxu0 0
      %8157 = vmatprep.subr.bf16.mxu0 0
      %8158 = vmatpush2.bf16.msra.mxu0 0
      %8159 = vmatprep.mubr.bf16.mxu0 0
      %8160 = vmatmul.mubr.bf16.gmra.mxu0 %v8077
      %v8161 = vpop.f32.mrf.mxu0
      %v8162 = vadd.f32 0.0, %v8161
      %v8163 = vpop.f32.mrf.mxu0
      %v8164 = vpop.f32.mrf.mxu0
      %v8165 = vadd.f32 0.0, %v8164
      %v8166 = vpop.f32.mrf.mxu0
      %8167 = vmatprep.mubr.bf16.mxu0 0
      %8168 = vmatmul.mubr.bf16.gmra.mxu0 %v8080
      %v8169 = vpop.f32.mrf.mxu0
      %v8170 = vadd.f32 0.0, %v8169
      %v8171 = vpop.f32.mrf.mxu0
      %v8172 = vpop.f32.mrf.mxu0
      %v8173 = vadd.f32 0.0, %v8172
      %v8174 = vpop.f32.mrf.mxu0
      %8175 = vmatprep.mubr.bf16.mxu0 0
      %8176 = vmatmul.mubr.bf16.gmra.mxu0 %v8083
      %v8177 = vpop.f32.mrf.mxu0
      %v8178 = vadd.f32 0.0, %v8177
      %v8179 = vpop.f32.mrf.mxu0
      %v8180 = vpop.f32.mrf.mxu0
      %v8181 = vadd.f32 0.0, %v8180
      %v8182 = vpop.f32.mrf.mxu0
      %8183 = vmatprep.mubr.bf16.mxu0 0
      %8184 = vmatmul.mubr.bf16.gmra.mxu0 %v8086
      %v8185 = vpop.f32.mrf.mxu0
      %v8186 = vadd.f32 0.0, %v8185
      %v8187 = vpop.f32.mrf.mxu0
      %v8188 = vpop.f32.mrf.mxu0
      %v8189 = vadd.f32 0.0, %v8188
      %v8190 = vpop.f32.mrf.mxu0
      %8191 = vmatprep.mubr.bf16.mxu0 0
      %8192 = vmatmul.mubr.bf16.gmra.mxu0 %v8089
      %v8193 = vpop.f32.mrf.mxu0
      %v8194 = vadd.f32 0.0, %v8193
      %v8195 = vpop.f32.mrf.mxu0
      %v8196 = vpop.f32.mrf.mxu0
      %v8197 = vadd.f32 0.0, %v8196
      %v8198 = vpop.f32.mrf.mxu0
      %8199 = vmatprep.mubr.bf16.mxu0 0
      %8200 = vmatmul.mubr.bf16.gmra.mxu0 %v8092
      %v8201 = vpop.f32.mrf.mxu0
      %v8202 = vadd.f32 0.0, %v8201
      %v8203 = vpop.f32.mrf.mxu0
      %v8204 = vpop.f32.mrf.mxu0
      %v8205 = vadd.f32 0.0, %v8204
      %v8206 = vpop.f32.mrf.mxu0
      %8207 = vmatprep.mubr.bf16.mxu0 0
      %8208 = vmatmul.mubr.bf16.gmra.mxu0 %v8095
      %v8209 = vpop.f32.mrf.mxu0
      %v8210 = vadd.f32 0.0, %v8209
      %v8211 = vpop.f32.mrf.mxu0
      %v8212 = vpop.f32.mrf.mxu0
      %v8213 = vadd.f32 0.0, %v8212
      %v8214 = vpop.f32.mrf.mxu0
      %8215 = vmatprep.mubr.bf16.mxu0 0
      %8216 = vmatmul.mubr.bf16.gmra.mxu0 %v8098
      %v8217 = vpop.f32.mrf.mxu0
      %v8218 = vadd.f32 0.0, %v8217
      %v8219 = vpop.f32.mrf.mxu0
      %v8220 = vpop.f32.mrf.mxu0
      %v8221 = vadd.f32 0.0, %v8220
      %v8222 = vpop.f32.mrf.mxu0
      %8223 = vmatprep.mubr.bf16.mxu0 0
      %8224 = vmatmul.mubr.bf16.gmra.mxu0 %v8101
      %v8225 = vpop.f32.mrf.mxu0
      %v8226 = vadd.f32 0.0, %v8225
      %v8227 = vpop.f32.mrf.mxu0
      %v8228 = vpop.f32.mrf.mxu0
      %v8229 = vadd.f32 0.0, %v8228
      %v8230 = vpop.f32.mrf.mxu0
      %8231 = vmatprep.mubr.bf16.mxu0 0
      %8232 = vmatmul.mubr.bf16.gmra.mxu0 %v8104
      %v8233 = vpop.f32.mrf.mxu0
      %v8234 = vadd.f32 0.0, %v8233
      %v8235 = vpop.f32.mrf.mxu0
      %v8236 = vpop.f32.mrf.mxu0
      %v8237 = vadd.f32 0.0, %v8236
      %v8238 = vpop.f32.mrf.mxu0
      %8239 = vmatprep.mubr.bf16.mxu0 0
      %8240 = vmatmul.mubr.bf16.gmra.mxu0 %v8107
      %v8241 = vpop.f32.mrf.mxu0
      %v8242 = vadd.f32 0.0, %v8241
      %v8243 = vpop.f32.mrf.mxu0
      %v8244 = vpop.f32.mrf.mxu0
      %v8245 = vadd.f32 0.0, %v8244
      %v8246 = vpop.f32.mrf.mxu0
      %8247 = vmatprep.mubr.bf16.mxu0 0
      %8248 = vmatmul.mubr.bf16.gmra.mxu0 %v8110
      %v8249 = vpop.f32.mrf.mxu0
      %v8250 = vadd.f32 0.0, %v8249
      %v8251 = vpop.f32.mrf.mxu0
      %v8252 = vpop.f32.mrf.mxu0
      %v8253 = vadd.f32 0.0, %v8252
      %v8254 = vpop.f32.mrf.mxu0
      %8255 = vmatprep.mubr.bf16.mxu0 0
      %8256 = vmatmul.mubr.bf16.gmra.mxu0 %v8113
      %v8257 = vpop.f32.mrf.mxu0
      %v8258 = vadd.f32 0.0, %v8257
      %v8259 = vpop.f32.mrf.mxu0
      %v8260 = vpop.f32.mrf.mxu0
      %v8261 = vadd.f32 0.0, %v8260
      %v8262 = vpop.f32.mrf.mxu0
      %8263 = vmatprep.mubr.bf16.mxu0 0
      %8264 = vmatmul.mubr.bf16.gmra.mxu0 %v8116
      %v8265 = vpop.f32.mrf.mxu0
      %v8266 = vadd.f32 0.0, %v8265
      %v8267 = vpop.f32.mrf.mxu0
      %v8268 = vpop.f32.mrf.mxu0
      %v8269 = vadd.f32 0.0, %v8268
      %v8270 = vpop.f32.mrf.mxu0
      %8271 = vmatprep.mubr.bf16.mxu0 0
      %8272 = vmatmul.mubr.bf16.gmra.mxu0 %v8119
      %v8273 = vpop.f32.mrf.mxu0
      %v8274 = vadd.f32 0.0, %v8273
      %v8275 = vpop.f32.mrf.mxu0
      %v8276 = vpop.f32.mrf.mxu0
      %v8277 = vadd.f32 0.0, %v8276
      %v8278 = vpop.f32.mrf.mxu0
      %8279 = vmatprep.mubr.bf16.mxu0 0
      %8280 = vmatmul.mubr.bf16.gmra.mxu0 %v8122
      %v8281 = vpop.f32.mrf.mxu0
      %v8282 = vadd.f32 0.0, %v8281
      %v8283 = vpop.f32.mrf.mxu0
      %v8284 = vpop.f32.mrf.mxu0
      %v8285 = vadd.f32 0.0, %v8284
      %v8286 = vpop.f32.mrf.mxu0
      %8287 = vdwg.mxu0
      %v8288 = vadd.f32 %v7740, %v8162
      %v8289 = vadd.f32 %v7743, %v8165
      %v8290 = vadd.f32 %v7748, %v8170
      %v8291 = vadd.f32 %v7751, %v8173
      %v8292 = vadd.f32 %v7756, %v8178
      %v8293 = vadd.f32 %v7759, %v8181
      %v8294 = vadd.f32 %v7764, %v8186
      %v8295 = vadd.f32 %v7767, %v8189
      %v8296 = vadd.f32 %v7772, %v8194
      %v8297 = vadd.f32 %v7775, %v8197
      %v8298 = vadd.f32 %v7780, %v8202
      %v8299 = vadd.f32 %v7783, %v8205
      %v8300 = vadd.f32 %v7788, %v8210
      %v8301 = vadd.f32 %v7791, %v8213
      %v8302 = vadd.f32 %v7796, %v8218
      %v8303 = vadd.f32 %v7799, %v8221
      %v8304 = vadd.f32 %v7804, %v8226
      %v8305 = vadd.f32 %v7807, %v8229
      %v8306 = vadd.f32 %v7812, %v8234
      %v8307 = vadd.f32 %v7815, %v8237
      %v8308 = vadd.f32 %v7820, %v8242
      %v8309 = vadd.f32 %v7823, %v8245
      %v8310 = vadd.f32 %v7828, %v8250
      %v8311 = vadd.f32 %v7831, %v8253
      %v8312 = vadd.f32 %v7836, %v8258
      %v8313 = vadd.f32 %v7839, %v8261
      %v8314 = vadd.f32 %v7844, %v8266
      %v8315 = vadd.f32 %v7847, %v8269
      %v8316 = vadd.f32 %v7852, %v8274
      %v8317 = vadd.f32 %v7855, %v8277
      %v8318 = vadd.f32 %v7860, %v8282
      %v8319 = vadd.f32 %v7863, %v8285
      %v8320 = vld [vmem:[%s677] sm:$0xf]
      %v8321 = vld [vmem:[%s677 + $0x4] sm:$0xf]
      %v8322 = vld [vmem:[%s677 + $0xc] sm:$0xf]
      %v8323 = vld [vmem:[%s677 + $0x10] sm:$0xf]
      %v8324 = vld [vmem:[%s677 + $0x18] sm:$0xf]
      %v8325 = vld [vmem:[%s677 + $0x1c] sm:$0xf]
      %v8326 = vld [vmem:[%s677 + $0x24] sm:$0xf]
      %v8327 = vld [vmem:[%s677 + $0x28] sm:$0xf]
      %v8328 = vld [vmem:[%s677 + $0x30] sm:$0xf]
      %v8329 = vld [vmem:[%s677 + $0x34] sm:$0xf]
      %v8330 = vld [vmem:[%s677 + $0x3c] sm:$0xf]
      %v8331 = vld [vmem:[%s677 + $0x40] sm:$0xf]
      %v8332 = vld [vmem:[%s677 + $0x48] sm:$0xf]
      %v8333 = vld [vmem:[%s677 + $0x4c] sm:$0xf]
      %v8334 = vld [vmem:[%s677 + $0x54] sm:$0xf]
      %v8335 = vld [vmem:[%s677 + $0x58] sm:$0xf]
      %v8336 = vld [vmem:[%s677 + $0x60] sm:$0xf]
      %v8337 = vld [vmem:[%s677 + $0x64] sm:$0xf]
      %v8338 = vld [vmem:[%s677 + $0x6c] sm:$0xf]
      %v8339 = vld [vmem:[%s677 + $0x70] sm:$0xf]
      %v8340 = vld [vmem:[%s677 + $0x78] sm:$0xf]
      %v8341 = vld [vmem:[%s677 + $0x7c] sm:$0xf]
      %v8342 = vld [vmem:[%s677 + $0x84] sm:$0xf]
      %v8343 = vld [vmem:[%s677 + $0x88] sm:$0xf]
      %v8344 = vld [vmem:[%s677 + $0x90] sm:$0xf]
      %v8345 = vld [vmem:[%s677 + $0x94] sm:$0xf]
      %v8346 = vld [vmem:[%s677 + $0x9c] sm:$0xf]
      %v8347 = vld [vmem:[%s677 + $0xa0] sm:$0xf]
      %v8348 = vld [vmem:[%s677 + $0xa8] sm:$0xf]
      %v8349 = vld [vmem:[%s677 + $0xac] sm:$0xf]
      %v8350 = vld [vmem:[%s677 + $0xb4] sm:$0xf]
      %v8351 = vld [vmem:[%s677 + $0xb8] sm:$0xf]
      %s8352 = scalar_lea.vmem %s3, 6
      %v8353 = vld [vmem:[%s8352] sm:$0x3]
      %v8386 = vunpack.c.l.b16 %v8320
      %v8387 = vunpack.c.l.b16 %v8321
      %v8388 = vunpack.c.l.b16 %v8322
      %v8389 = vunpack.c.l.b16 %v8323
      %v8390 = vunpack.c.l.b16 %v8324
      %v8391 = vunpack.c.l.b16 %v8325
      %v8392 = vunpack.c.l.b16 %v8326
      %v8393 = vunpack.c.l.b16 %v8327
      %v8394 = vunpack.c.l.b16 %v8328
      %v8395 = vunpack.c.l.b16 %v8329
      %v8396 = vunpack.c.l.b16 %v8330
      %v8397 = vunpack.c.l.b16 %v8331
      %v8398 = vunpack.c.l.b16 %v8332
      %v8399 = vunpack.c.l.b16 %v8333
      %v8400 = vunpack.c.l.b16 %v8334
      %v8401 = vunpack.c.l.b16 %v8335
      %v8402 = vunpack.c.l.b16 %v8336
      %v8403 = vunpack.c.l.b16 %v8337
      %v8404 = vunpack.c.l.b16 %v8338
      %v8405 = vunpack.c.l.b16 %v8339
      %v8406 = vunpack.c.l.b16 %v8340
      %v8407 = vunpack.c.l.b16 %v8341
      %v8408 = vunpack.c.l.b16 %v8342
      %v8409 = vunpack.c.l.b16 %v8343
      %v8410 = vunpack.c.l.b16 %v8344
      %v8411 = vunpack.c.l.b16 %v8345
      %v8412 = vunpack.c.l.b16 %v8346
      %v8413 = vunpack.c.l.b16 %v8347
      %v8414 = vunpack.c.l.b16 %v8348
      %v8415 = vunpack.c.l.b16 %v8349
      %v8416 = vunpack.c.l.b16 %v8350
      %v8417 = vunpack.c.l.b16 %v8351
      %v8418 = vpack.c.b16 %v8387, %v8386
      %v8419 = vpack.c.b16 %v8389, %v8388
      %v8420 = vpack.c.b16 %v8391, %v8390
      %v8421 = vpack.c.b16 %v8393, %v8392
      %v8422 = vpack.c.b16 %v8395, %v8394
      %v8423 = vpack.c.b16 %v8397, %v8396
      %v8424 = vpack.c.b16 %v8399, %v8398
      %v8425 = vpack.c.b16 %v8401, %v8400
      %v8426 = vpack.c.b16 %v8403, %v8402
      %v8427 = vpack.c.b16 %v8405, %v8404
      %v8428 = vpack.c.b16 %v8407, %v8406
      %v8429 = vpack.c.b16 %v8409, %v8408
      %v8430 = vpack.c.b16 %v8411, %v8410
      %v8431 = vpack.c.b16 %v8413, %v8412
      %v8432 = vpack.c.b16 %v8415, %v8414
      %v8433 = vpack.c.b16 %v8417, %v8416
      %v8435 = vsel %vm1594, %v8418, 0
      %v8438 = vsel %vm1594, %v8419, 0
      %v8441 = vsel %vm1594, %v8420, 0
      %v8444 = vsel %vm1594, %v8421, 0
      %v8447 = vsel %vm1594, %v8422, 0
      %v8450 = vsel %vm1594, %v8423, 0
      %v8453 = vsel %vm1594, %v8424, 0
      %v8456 = vsel %vm1594, %v8425, 0
      %v8459 = vsel %vm1594, %v8426, 0
      %v8462 = vsel %vm1594, %v8427, 0
      %v8465 = vsel %vm1594, %v8428, 0
      %v8468 = vsel %vm1594, %v8429, 0
      %v8471 = vsel %vm1594, %v8430, 0
      %v8474 = vsel %vm1594, %v8431, 0
      %v8477 = vsel %vm1594, %v8432, 0
      %v8480 = vsel %vm1594, %v8433, 0
      %v8483 = vsel %vm1643, %v8353, 0
      %8485 = vmatprep.subr.bf16.mxu0 0
      %8486 = vmatpush1.bf16.msra.mxu0 0
      %8487 = vmatprep.subr.bf16.mxu0 0
      %8488 = vmatpush1.bf16.msra.mxu0 0
      %8489 = vmatprep.subr.bf16.mxu0 0
      %8490 = vmatpush1.bf16.msra.mxu0 0
      %8491 = vmatprep.subr.bf16.mxu0 0
      %8492 = vmatpush1.bf16.msra.mxu0 0
      %8493 = vmatprep.subr.bf16.mxu0 0
      %8494 = vmatpush1.bf16.msra.mxu0 0
      %8495 = vmatprep.subr.bf16.mxu0 0
      %8496 = vmatpush1.bf16.msra.mxu0 0
      %8497 = vmatprep.subr.bf16.mxu0 0
      %8498 = vmatpush1.bf16.msra.mxu0 0
      %8499 = vmatprep.subr.bf16.mxu0 0
      %8500 = vmatpush1.bf16.msra.mxu0 %v8483
      %8501 = vmatprep.subr.bf16.mxu0 0
      %8502 = vmatpush2.bf16.msra.mxu0 0
      %8503 = vmatprep.subr.bf16.mxu0 0
      %8504 = vmatpush2.bf16.msra.mxu0 0
      %8505 = vmatprep.subr.bf16.mxu0 0
      %8506 = vmatpush2.bf16.msra.mxu0 0
      %8507 = vmatprep.subr.bf16.mxu0 0
      %8508 = vmatpush2.bf16.msra.mxu0 0
      %8509 = vmatprep.subr.bf16.mxu0 0
      %8510 = vmatpush2.bf16.msra.mxu0 0
      %8511 = vmatprep.subr.bf16.mxu0 0
      %8512 = vmatpush2.bf16.msra.mxu0 0
      %8513 = vmatprep.subr.bf16.mxu0 0
      %8514 = vmatpush2.bf16.msra.mxu0 0
      %8515 = vmatprep.subr.bf16.mxu0 0
      %8516 = vmatpush2.bf16.msra.mxu0 0
      %8517 = vmatprep.mubr.bf16.mxu0 0
      %8518 = vmatmul.mubr.bf16.gmra.mxu0 %v8435
      %v8519 = vpop.f32.mrf.mxu0
      %v8520 = vadd.f32 0.0, %v8519
      %v8521 = vpop.f32.mrf.mxu0
      %v8522 = vpop.f32.mrf.mxu0
      %v8523 = vadd.f32 0.0, %v8522
      %v8524 = vpop.f32.mrf.mxu0
      %8525 = vmatprep.mubr.bf16.mxu0 0
      %8526 = vmatmul.mubr.bf16.gmra.mxu0 %v8438
      %v8527 = vpop.f32.mrf.mxu0
      %v8528 = vadd.f32 0.0, %v8527
      %v8529 = vpop.f32.mrf.mxu0
      %v8530 = vpop.f32.mrf.mxu0
      %v8531 = vadd.f32 0.0, %v8530
      %v8532 = vpop.f32.mrf.mxu0
      %8533 = vmatprep.mubr.bf16.mxu0 0
      %8534 = vmatmul.mubr.bf16.gmra.mxu0 %v8441
      %v8535 = vpop.f32.mrf.mxu0
      %v8536 = vadd.f32 0.0, %v8535
      %v8537 = vpop.f32.mrf.mxu0
      %v8538 = vpop.f32.mrf.mxu0
      %v8539 = vadd.f32 0.0, %v8538
      %v8540 = vpop.f32.mrf.mxu0
      %8541 = vmatprep.mubr.bf16.mxu0 0
      %8542 = vmatmul.mubr.bf16.gmra.mxu0 %v8444
      %v8543 = vpop.f32.mrf.mxu0
      %v8544 = vadd.f32 0.0, %v8543
      %v8545 = vpop.f32.mrf.mxu0
      %v8546 = vpop.f32.mrf.mxu0
      %v8547 = vadd.f32 0.0, %v8546
      %v8548 = vpop.f32.mrf.mxu0
      %8549 = vmatprep.mubr.bf16.mxu0 0
      %8550 = vmatmul.mubr.bf16.gmra.mxu0 %v8447
      %v8551 = vpop.f32.mrf.mxu0
      %v8552 = vadd.f32 0.0, %v8551
      %v8553 = vpop.f32.mrf.mxu0
      %v8554 = vpop.f32.mrf.mxu0
      %v8555 = vadd.f32 0.0, %v8554
      %v8556 = vpop.f32.mrf.mxu0
      %8557 = vmatprep.mubr.bf16.mxu0 0
      %8558 = vmatmul.mubr.bf16.gmra.mxu0 %v8450
      %v8559 = vpop.f32.mrf.mxu0
      %v8560 = vadd.f32 0.0, %v8559
      %v8561 = vpop.f32.mrf.mxu0
      %v8562 = vpop.f32.mrf.mxu0
      %v8563 = vadd.f32 0.0, %v8562
      %v8564 = vpop.f32.mrf.mxu0
      %8565 = vmatprep.mubr.bf16.mxu0 0
      %8566 = vmatmul.mubr.bf16.gmra.mxu0 %v8453
      %v8567 = vpop.f32.mrf.mxu0
      %v8568 = vadd.f32 0.0, %v8567
      %v8569 = vpop.f32.mrf.mxu0
      %v8570 = vpop.f32.mrf.mxu0
      %v8571 = vadd.f32 0.0, %v8570
      %v8572 = vpop.f32.mrf.mxu0
      %8573 = vmatprep.mubr.bf16.mxu0 0
      %8574 = vmatmul.mubr.bf16.gmra.mxu0 %v8456
      %v8575 = vpop.f32.mrf.mxu0
      %v8576 = vadd.f32 0.0, %v8575
      %v8577 = vpop.f32.mrf.mxu0
      %v8578 = vpop.f32.mrf.mxu0
      %v8579 = vadd.f32 0.0, %v8578
      %v8580 = vpop.f32.mrf.mxu0
      %8581 = vmatprep.mubr.bf16.mxu0 0
      %8582 = vmatmul.mubr.bf16.gmra.mxu0 %v8459
      %v8583 = vpop.f32.mrf.mxu0
      %v8584 = vadd.f32 0.0, %v8583
      %v8585 = vpop.f32.mrf.mxu0
      %v8586 = vpop.f32.mrf.mxu0
      %v8587 = vadd.f32 0.0, %v8586
      %v8588 = vpop.f32.mrf.mxu0
      %8589 = vmatprep.mubr.bf16.mxu0 0
      %8590 = vmatmul.mubr.bf16.gmra.mxu0 %v8462
      %v8591 = vpop.f32.mrf.mxu0
      %v8592 = vadd.f32 0.0, %v8591
      %v8593 = vpop.f32.mrf.mxu0
      %v8594 = vpop.f32.mrf.mxu0
      %v8595 = vadd.f32 0.0, %v8594
      %v8596 = vpop.f32.mrf.mxu0
      %8597 = vmatprep.mubr.bf16.mxu0 0
      %8598 = vmatmul.mubr.bf16.gmra.mxu0 %v8465
      %v8599 = vpop.f32.mrf.mxu0
      %v8600 = vadd.f32 0.0, %v8599
      %v8601 = vpop.f32.mrf.mxu0
      %v8602 = vpop.f32.mrf.mxu0
      %v8603 = vadd.f32 0.0, %v8602
      %v8604 = vpop.f32.mrf.mxu0
      %8605 = vmatprep.mubr.bf16.mxu0 0
      %8606 = vmatmul.mubr.bf16.gmra.mxu0 %v8468
      %v8607 = vpop.f32.mrf.mxu0
      %v8608 = vadd.f32 0.0, %v8607
      %v8609 = vpop.f32.mrf.mxu0
      %v8610 = vpop.f32.mrf.mxu0
      %v8611 = vadd.f32 0.0, %v8610
      %v8612 = vpop.f32.mrf.mxu0
      %8613 = vmatprep.mubr.bf16.mxu0 0
      %8614 = vmatmul.mubr.bf16.gmra.mxu0 %v8471
      %v8615 = vpop.f32.mrf.mxu0
      %v8616 = vadd.f32 0.0, %v8615
      %v8617 = vpop.f32.mrf.mxu0
      %v8618 = vpop.f32.mrf.mxu0
      %v8619 = vadd.f32 0.0, %v8618
      %v8620 = vpop.f32.mrf.mxu0
      %8621 = vmatprep.mubr.bf16.mxu0 0
      %8622 = vmatmul.mubr.bf16.gmra.mxu0 %v8474
      %v8623 = vpop.f32.mrf.mxu0
      %v8624 = vadd.f32 0.0, %v8623
      %v8625 = vpop.f32.mrf.mxu0
      %v8626 = vpop.f32.mrf.mxu0
      %v8627 = vadd.f32 0.0, %v8626
      %v8628 = vpop.f32.mrf.mxu0
      %8629 = vmatprep.mubr.bf16.mxu0 0
      %8630 = vmatmul.mubr.bf16.gmra.mxu0 %v8477
      %v8631 = vpop.f32.mrf.mxu0
      %v8632 = vadd.f32 0.0, %v8631
      %v8633 = vpop.f32.mrf.mxu0
      %v8634 = vpop.f32.mrf.mxu0
      %v8635 = vadd.f32 0.0, %v8634
      %v8636 = vpop.f32.mrf.mxu0
      %8637 = vmatprep.mubr.bf16.mxu0 0
      %8638 = vmatmul.mubr.bf16.gmra.mxu0 %v8480
      %v8639 = vpop.f32.mrf.mxu0
      %v8640 = vadd.f32 0.0, %v8639
      %v8641 = vpop.f32.mrf.mxu0
      %v8642 = vpop.f32.mrf.mxu0
      %v8643 = vadd.f32 0.0, %v8642
      %v8644 = vpop.f32.mrf.mxu0
      %8645 = vdwg.mxu0
      %v8646 = vadd.f32 %v8288, %v8520
      %v8647 = vadd.f32 %v8289, %v8523
      %v8648 = vadd.f32 %v8290, %v8528
      %v8649 = vadd.f32 %v8291, %v8531
      %v8650 = vadd.f32 %v8292, %v8536
      %v8651 = vadd.f32 %v8293, %v8539
      %v8652 = vadd.f32 %v8294, %v8544
      %v8653 = vadd.f32 %v8295, %v8547
      %v8654 = vadd.f32 %v8296, %v8552
      %v8655 = vadd.f32 %v8297, %v8555
      %v8656 = vadd.f32 %v8298, %v8560
      %v8657 = vadd.f32 %v8299, %v8563
      %v8658 = vadd.f32 %v8300, %v8568
      %v8659 = vadd.f32 %v8301, %v8571
      %v8660 = vadd.f32 %v8302, %v8576
      %v8661 = vadd.f32 %v8303, %v8579
      %v8662 = vadd.f32 %v8304, %v8584
      %v8663 = vadd.f32 %v8305, %v8587
      %v8664 = vadd.f32 %v8306, %v8592
      %v8665 = vadd.f32 %v8307, %v8595
      %v8666 = vadd.f32 %v8308, %v8600
      %v8667 = vadd.f32 %v8309, %v8603
      %v8668 = vadd.f32 %v8310, %v8608
      %v8669 = vadd.f32 %v8311, %v8611
      %v8670 = vadd.f32 %v8312, %v8616
      %v8671 = vadd.f32 %v8313, %v8619
      %v8672 = vadd.f32 %v8314, %v8624
      %v8673 = vadd.f32 %v8315, %v8627
      %v8674 = vadd.f32 %v8316, %v8632
      %v8675 = vadd.f32 %v8317, %v8635
      %v8676 = vadd.f32 %v8318, %v8640
      %v8677 = vadd.f32 %v8319, %v8643
      %v8678 = vld [vmem:[%s677] sm:$0xf]
      %v8679 = vld [vmem:[%s677 + $0x4] sm:$0xf]
      %v8680 = vld [vmem:[%s677 + $0x8] sm:$0x1]
      %v8681 = vld [vmem:[%s677 + $0xc] sm:$0xf]
      %v8682 = vld [vmem:[%s677 + $0x10] sm:$0xf]
      %v8683 = vld [vmem:[%s677 + $0x14] sm:$0x1]
      %v8684 = vld [vmem:[%s677 + $0x18] sm:$0xf]
      %v8685 = vld [vmem:[%s677 + $0x1c] sm:$0xf]
      %v8686 = vld [vmem:[%s677 + $0x20] sm:$0x1]
      %v8687 = vld [vmem:[%s677 + $0x24] sm:$0xf]
      %v8688 = vld [vmem:[%s677 + $0x28] sm:$0xf]
      %v8689 = vld [vmem:[%s677 + $0x2c] sm:$0x1]
      %v8690 = vld [vmem:[%s677 + $0x30] sm:$0xf]
      %v8691 = vld [vmem:[%s677 + $0x34] sm:$0xf]
      %v8692 = vld [vmem:[%s677 + $0x38] sm:$0x1]
      %v8693 = vld [vmem:[%s677 + $0x3c] sm:$0xf]
      %v8694 = vld [vmem:[%s677 + $0x40] sm:$0xf]
      %v8695 = vld [vmem:[%s677 + $0x44] sm:$0x1]
      %v8696 = vld [vmem:[%s677 + $0x48] sm:$0xf]
      %v8697 = vld [vmem:[%s677 + $0x4c] sm:$0xf]
      %v8698 = vld [vmem:[%s677 + $0x50] sm:$0x1]
      %v8699 = vld [vmem:[%s677 + $0x54] sm:$0xf]
      %v8700 = vld [vmem:[%s677 + $0x58] sm:$0xf]
      %v8701 = vld [vmem:[%s677 + $0x5c] sm:$0x1]
      %v8702 = vld [vmem:[%s677 + $0x60] sm:$0xf]
      %v8703 = vld [vmem:[%s677 + $0x64] sm:$0xf]
      %v8704 = vld [vmem:[%s677 + $0x68] sm:$0x1]
      %v8705 = vld [vmem:[%s677 + $0x6c] sm:$0xf]
      %v8706 = vld [vmem:[%s677 + $0x70] sm:$0xf]
      %v8707 = vld [vmem:[%s677 + $0x74] sm:$0x1]
      %v8708 = vld [vmem:[%s677 + $0x78] sm:$0xf]
      %v8709 = vld [vmem:[%s677 + $0x7c] sm:$0xf]
      %v8710 = vld [vmem:[%s677 + $0x80] sm:$0x1]
      %v8711 = vld [vmem:[%s677 + $0x84] sm:$0xf]
      %v8712 = vld [vmem:[%s677 + $0x88] sm:$0xf]
      %v8713 = vld [vmem:[%s677 + $0x8c] sm:$0x1]
      %v8714 = vld [vmem:[%s677 + $0x90] sm:$0xf]
      %v8715 = vld [vmem:[%s677 + $0x94] sm:$0xf]
      %v8716 = vld [vmem:[%s677 + $0x98] sm:$0x1]
      %v8717 = vld [vmem:[%s677 + $0x9c] sm:$0xf]
      %v8718 = vld [vmem:[%s677 + $0xa0] sm:$0xf]
      %v8719 = vld [vmem:[%s677 + $0xa4] sm:$0x1]
      %v8720 = vld [vmem:[%s677 + $0xa8] sm:$0xf]
      %v8721 = vld [vmem:[%s677 + $0xac] sm:$0xf]
      %v8722 = vld [vmem:[%s677 + $0xb0] sm:$0x1]
      %v8723 = vld [vmem:[%s677 + $0xb4] sm:$0xf]
      %v8724 = vld [vmem:[%s677 + $0xb8] sm:$0xf]
      %v8725 = vld [vmem:[%s677 + $0xbc] sm:$0x1]
      %v8727 = vshrl.u32 %v8678, 16
      %v8729 = vrot.slane %v8727, 4
      %v8730 = vshll.u32 %v8678, 16
      %v8732 = vrot.slane %v8730, 5
      %v8733 = vor.u32 %v8729, %v8732
      %v8734 = vrot.slane %v8733, 4
      %v8736 = vshll.u32 %v8679, 16
      %v8738 = vrot.slane %v8736, 5
      %v8739 = vsel %vm1159, %v8734, %v8738
      %v8740 = vshrl.u32 %v8679, 16
      %v8742 = vrot.slane %v8740, 4
      %v8743 = vor.u32 %v8742, %v8738
      %v8744 = vrot.slane %v8743, 4
      %v8746 = vshll.u32 %v8680, 16
      %v8748 = vrot.slane %v8746, 5
      %v8749 = vsel %vm1159, %v8744, %v8748
      %v8751 = vshrl.u32 %v8681, 16
      %v8753 = vrot.slane %v8751, 4
      %v8754 = vshll.u32 %v8681, 16
      %v8756 = vrot.slane %v8754, 5
      %v8757 = vor.u32 %v8753, %v8756
      %v8758 = vrot.slane %v8757, 4
      %v8760 = vshll.u32 %v8682, 16
      %v8762 = vrot.slane %v8760, 5
      %v8763 = vsel %vm1159, %v8758, %v8762
      %v8764 = vshrl.u32 %v8682, 16
      %v8766 = vrot.slane %v8764, 4
      %v8767 = vor.u32 %v8766, %v8762
      %v8768 = vrot.slane %v8767, 4
      %v8770 = vshll.u32 %v8683, 16
      %v8772 = vrot.slane %v8770, 5
      %v8773 = vsel %vm1159, %v8768, %v8772
      %v8775 = vshrl.u32 %v8684, 16
      %v8777 = vrot.slane %v8775, 4
      %v8778 = vshll.u32 %v8684, 16
      %v8780 = vrot.slane %v8778, 5
      %v8781 = vor.u32 %v8777, %v8780
      %v8782 = vrot.slane %v8781, 4
      %v8784 = vshll.u32 %v8685, 16
      %v8786 = vrot.slane %v8784, 5
      %v8787 = vsel %vm1159, %v8782, %v8786
      %v8788 = vshrl.u32 %v8685, 16
      %v8790 = vrot.slane %v8788, 4
      %v8791 = vor.u32 %v8790, %v8786
      %v8792 = vrot.slane %v8791, 4
      %v8794 = vshll.u32 %v8686, 16
      %v8796 = vrot.slane %v8794, 5
      %v8797 = vsel %vm1159, %v8792, %v8796
      %v8799 = vshrl.u32 %v8687, 16
      %v8801 = vrot.slane %v8799, 4
      %v8802 = vshll.u32 %v8687, 16
      %v8804 = vrot.slane %v8802, 5
      %v8805 = vor.u32 %v8801, %v8804
      %v8806 = vrot.slane %v8805, 4
      %v8808 = vshll.u32 %v8688, 16
      %v8810 = vrot.slane %v8808, 5
      %v8811 = vsel %vm1159, %v8806, %v8810
      %v8812 = vshrl.u32 %v8688, 16
      %v8814 = vrot.slane %v8812, 4
      %v8815 = vor.u32 %v8814, %v8810
      %v8816 = vrot.slane %v8815, 4
      %v8818 = vshll.u32 %v8689, 16
      %v8820 = vrot.slane %v8818, 5
      %v8821 = vsel %vm1159, %v8816, %v8820
      %v8823 = vshrl.u32 %v8690, 16
      %v8825 = vrot.slane %v8823, 4
      %v8826 = vshll.u32 %v8690, 16
      %v8828 = vrot.slane %v8826, 5
      %v8829 = vor.u32 %v8825, %v8828
      %v8830 = vrot.slane %v8829, 4
      %v8832 = vshll.u32 %v8691, 16
      %v8834 = vrot.slane %v8832, 5
      %v8835 = vsel %vm1159, %v8830, %v8834
      %v8836 = vshrl.u32 %v8691, 16
      %v8838 = vrot.slane %v8836, 4
      %v8839 = vor.u32 %v8838, %v8834
      %v8840 = vrot.slane %v8839, 4
      %v8842 = vshll.u32 %v8692, 16
      %v8844 = vrot.slane %v8842, 5
      %v8845 = vsel %vm1159, %v8840, %v8844
      %v8847 = vshrl.u32 %v8693, 16
      %v8849 = vrot.slane %v8847, 4
      %v8850 = vshll.u32 %v8693, 16
      %v8852 = vrot.slane %v8850, 5
      %v8853 = vor.u32 %v8849, %v8852
      %v8854 = vrot.slane %v8853, 4
      %v8856 = vshll.u32 %v8694, 16
      %v8858 = vrot.slane %v8856, 5
      %v8859 = vsel %vm1159, %v8854, %v8858
      %v8860 = vshrl.u32 %v8694, 16
      %v8862 = vrot.slane %v8860, 4
      %v8863 = vor.u32 %v8862, %v8858
      %v8864 = vrot.slane %v8863, 4
      %v8866 = vshll.u32 %v8695, 16
      %v8868 = vrot.slane %v8866, 5
      %v8869 = vsel %vm1159, %v8864, %v8868
      %v8871 = vshrl.u32 %v8696, 16
      %v8873 = vrot.slane %v8871, 4
      %v8874 = vshll.u32 %v8696, 16
      %v8876 = vrot.slane %v8874, 5
      %v8877 = vor.u32 %v8873, %v8876
      %v8878 = vrot.slane %v8877, 4
      %v8880 = vshll.u32 %v8697, 16
      %v8882 = vrot.slane %v8880, 5
      %v8883 = vsel %vm1159, %v8878, %v8882
      %v8884 = vshrl.u32 %v8697, 16
      %v8886 = vrot.slane %v8884, 4
      %v8887 = vor.u32 %v8886, %v8882
      %v8888 = vrot.slane %v8887, 4
      %v8890 = vshll.u32 %v8698, 16
      %v8892 = vrot.slane %v8890, 5
      %v8893 = vsel %vm1159, %v8888, %v8892
      %v8895 = vshrl.u32 %v8699, 16
      %v8897 = vrot.slane %v8895, 4
      %v8898 = vshll.u32 %v8699, 16
      %v8900 = vrot.slane %v8898, 5
      %v8901 = vor.u32 %v8897, %v8900
      %v8902 = vrot.slane %v8901, 4
      %v8904 = vshll.u32 %v8700, 16
      %v8906 = vrot.slane %v8904, 5
      %v8907 = vsel %vm1159, %v8902, %v8906
      %v8908 = vshrl.u32 %v8700, 16
      %v8910 = vrot.slane %v8908, 4
      %v8911 = vor.u32 %v8910, %v8906
      %v8912 = vrot.slane %v8911, 4
      %v8914 = vshll.u32 %v8701, 16
      %v8916 = vrot.slane %v8914, 5
      %v8917 = vsel %vm1159, %v8912, %v8916
      %v8919 = vshrl.u32 %v8702, 16
      %v8921 = vrot.slane %v8919, 4
      %v8922 = vshll.u32 %v8702, 16
      %v8924 = vrot.slane %v8922, 5
      %v8925 = vor.u32 %v8921, %v8924
      %v8926 = vrot.slane %v8925, 4
      %v8928 = vshll.u32 %v8703, 16
      %v8930 = vrot.slane %v8928, 5
      %v8931 = vsel %vm1159, %v8926, %v8930
      %v8932 = vshrl.u32 %v8703, 16
      %v8934 = vrot.slane %v8932, 4
      %v8935 = vor.u32 %v8934, %v8930
      %v8936 = vrot.slane %v8935, 4
      %v8938 = vshll.u32 %v8704, 16
      %v8940 = vrot.slane %v8938, 5
      %v8941 = vsel %vm1159, %v8936, %v8940
      %v8943 = vshrl.u32 %v8705, 16
      %v8945 = vrot.slane %v8943, 4
      %v8946 = vshll.u32 %v8705, 16
      %v8948 = vrot.slane %v8946, 5
      %v8949 = vor.u32 %v8945, %v8948
      %v8950 = vrot.slane %v8949, 4
      %v8952 = vshll.u32 %v8706, 16
      %v8954 = vrot.slane %v8952, 5
      %v8955 = vsel %vm1159, %v8950, %v8954
      %v8956 = vshrl.u32 %v8706, 16
      %v8958 = vrot.slane %v8956, 4
      %v8959 = vor.u32 %v8958, %v8954
      %v8960 = vrot.slane %v8959, 4
      %v8962 = vshll.u32 %v8707, 16
      %v8964 = vrot.slane %v8962, 5
      %v8965 = vsel %vm1159, %v8960, %v8964
      %v8967 = vshrl.u32 %v8708, 16
      %v8969 = vrot.slane %v8967, 4
      %v8970 = vshll.u32 %v8708, 16
      %v8972 = vrot.slane %v8970, 5
      %v8973 = vor.u32 %v8969, %v8972
      %v8974 = vrot.slane %v8973, 4
      %v8976 = vshll.u32 %v8709, 16
      %v8978 = vrot.slane %v8976, 5
      %v8979 = vsel %vm1159, %v8974, %v8978
      %v8980 = vshrl.u32 %v8709, 16
      %v8982 = vrot.slane %v8980, 4
      %v8983 = vor.u32 %v8982, %v8978
      %v8984 = vrot.slane %v8983, 4
      %v8986 = vshll.u32 %v8710, 16
      %v8988 = vrot.slane %v8986, 5
      %v8989 = vsel %vm1159, %v8984, %v8988
      %v8991 = vshrl.u32 %v8711, 16
      %v8993 = vrot.slane %v8991, 4
      %v8994 = vshll.u32 %v8711, 16
      %v8996 = vrot.slane %v8994, 5
      %v8997 = vor.u32 %v8993, %v8996
      %v8998 = vrot.slane %v8997, 4
      %v9000 = vshll.u32 %v8712, 16
      %v9002 = vrot.slane %v9000, 5
      %v9003 = vsel %vm1159, %v8998, %v9002
      %v9004 = vshrl.u32 %v8712, 16
      %v9006 = vrot.slane %v9004, 4
      %v9007 = vor.u32 %v9006, %v9002
      %v9008 = vrot.slane %v9007, 4
      %v9010 = vshll.u32 %v8713, 16
      %v9012 = vrot.slane %v9010, 5
      %v9013 = vsel %vm1159, %v9008, %v9012
      %v9015 = vshrl.u32 %v8714, 16
      %v9017 = vrot.slane %v9015, 4
      %v9018 = vshll.u32 %v8714, 16
      %v9020 = vrot.slane %v9018, 5
      %v9021 = vor.u32 %v9017, %v9020
      %v9022 = vrot.slane %v9021, 4
      %v9024 = vshll.u32 %v8715, 16
      %v9026 = vrot.slane %v9024, 5
      %v9027 = vsel %vm1159, %v9022, %v9026
      %v9028 = vshrl.u32 %v8715, 16
      %v9030 = vrot.slane %v9028, 4
      %v9031 = vor.u32 %v9030, %v9026
      %v9032 = vrot.slane %v9031, 4
      %v9034 = vshll.u32 %v8716, 16
      %v9036 = vrot.slane %v9034, 5
      %v9037 = vsel %vm1159, %v9032, %v9036
      %v9039 = vshrl.u32 %v8717, 16
      %v9041 = vrot.slane %v9039, 4
      %v9042 = vshll.u32 %v8717, 16
      %v9044 = vrot.slane %v9042, 5
      %v9045 = vor.u32 %v9041, %v9044
      %v9046 = vrot.slane %v9045, 4
      %v9048 = vshll.u32 %v8718, 16
      %v9050 = vrot.slane %v9048, 5
      %v9051 = vsel %vm1159, %v9046, %v9050
      %v9052 = vshrl.u32 %v8718, 16
      %v9054 = vrot.slane %v9052, 4
      %v9055 = vor.u32 %v9054, %v9050
      %v9056 = vrot.slane %v9055, 4
      %v9058 = vshll.u32 %v8719, 16
      %v9060 = vrot.slane %v9058, 5
      %v9061 = vsel %vm1159, %v9056, %v9060
      %v9063 = vshrl.u32 %v8720, 16
      %v9065 = vrot.slane %v9063, 4
      %v9066 = vshll.u32 %v8720, 16
      %v9068 = vrot.slane %v9066, 5
      %v9069 = vor.u32 %v9065, %v9068
      %v9070 = vrot.slane %v9069, 4
      %v9072 = vshll.u32 %v8721, 16
      %v9074 = vrot.slane %v9072, 5
      %v9075 = vsel %vm1159, %v9070, %v9074
      %v9076 = vshrl.u32 %v8721, 16
      %v9078 = vrot.slane %v9076, 4
      %v9079 = vor.u32 %v9078, %v9074
      %v9080 = vrot.slane %v9079, 4
      %v9082 = vshll.u32 %v8722, 16
      %v9084 = vrot.slane %v9082, 5
      %v9085 = vsel %vm1159, %v9080, %v9084
      %v9087 = vshrl.u32 %v8723, 16
      %v9089 = vrot.slane %v9087, 4
      %v9090 = vshll.u32 %v8723, 16
      %v9092 = vrot.slane %v9090, 5
      %v9093 = vor.u32 %v9089, %v9092
      %v9094 = vrot.slane %v9093, 4
      %v9096 = vshll.u32 %v8724, 16
      %v9098 = vrot.slane %v9096, 5
      %v9099 = vsel %vm1159, %v9094, %v9098
      %v9100 = vshrl.u32 %v8724, 16
      %v9102 = vrot.slane %v9100, 4
      %v9103 = vor.u32 %v9102, %v9098
      %v9104 = vrot.slane %v9103, 4
      %v9106 = vshll.u32 %v8725, 16
      %v9108 = vrot.slane %v9106, 5
      %v9109 = vsel %vm1159, %v9104, %v9108
      %s9110 = scalar_lea.vmem %s3, 8
      %v9111 = vld [vmem:[%s9110] sm:$0x3]
      %v9112 = vunpack.c.l.b16 %v8739
      %v9113 = vunpack.c.l.b16 %v8749
      %v9114 = vunpack.c.l.b16 %v8763
      %v9115 = vunpack.c.l.b16 %v8773
      %v9116 = vunpack.c.l.b16 %v8787
      %v9117 = vunpack.c.l.b16 %v8797
      %v9118 = vunpack.c.l.b16 %v8811
      %v9119 = vunpack.c.l.b16 %v8821
      %v9120 = vunpack.c.l.b16 %v8835
      %v9121 = vunpack.c.l.b16 %v8845
      %v9122 = vunpack.c.l.b16 %v8859
      %v9123 = vunpack.c.l.b16 %v8869
      %v9124 = vunpack.c.l.b16 %v8883
      %v9125 = vunpack.c.l.b16 %v8893
      %v9126 = vunpack.c.l.b16 %v8907
      %v9127 = vunpack.c.l.b16 %v8917
      %v9128 = vunpack.c.l.b16 %v8931
      %v9129 = vunpack.c.l.b16 %v8941
      %v9130 = vunpack.c.l.b16 %v8955
      %v9131 = vunpack.c.l.b16 %v8965
      %v9132 = vunpack.c.l.b16 %v8979
      %v9133 = vunpack.c.l.b16 %v8989
      %v9134 = vunpack.c.l.b16 %v9003
      %v9135 = vunpack.c.l.b16 %v9013
      %v9136 = vunpack.c.l.b16 %v9027
      %v9137 = vunpack.c.l.b16 %v9037
      %v9138 = vunpack.c.l.b16 %v9051
      %v9139 = vunpack.c.l.b16 %v9061
      %v9140 = vunpack.c.l.b16 %v9075
      %v9141 = vunpack.c.l.b16 %v9085
      %v9142 = vunpack.c.l.b16 %v9099
      %v9143 = vunpack.c.l.b16 %v9109
      %v9144 = vpack.c.b16 %v9113, %v9112
      %v9145 = vpack.c.b16 %v9115, %v9114
      %v9146 = vpack.c.b16 %v9117, %v9116
      %v9147 = vpack.c.b16 %v9119, %v9118
      %v9148 = vpack.c.b16 %v9121, %v9120
      %v9149 = vpack.c.b16 %v9123, %v9122
      %v9150 = vpack.c.b16 %v9125, %v9124
      %v9151 = vpack.c.b16 %v9127, %v9126
      %v9152 = vpack.c.b16 %v9129, %v9128
      %v9153 = vpack.c.b16 %v9131, %v9130
      %v9154 = vpack.c.b16 %v9133, %v9132
      %v9155 = vpack.c.b16 %v9135, %v9134
      %v9156 = vpack.c.b16 %v9137, %v9136
      %v9157 = vpack.c.b16 %v9139, %v9138
      %v9158 = vpack.c.b16 %v9141, %v9140
      %v9159 = vpack.c.b16 %v9143, %v9142
      %v9161 = vsel %vm1594, %v9144, 0
      %v9164 = vsel %vm1594, %v9145, 0
      %v9167 = vsel %vm1594, %v9146, 0
      %v9170 = vsel %vm1594, %v9147, 0
      %v9173 = vsel %vm1594, %v9148, 0
      %v9176 = vsel %vm1594, %v9149, 0
      %v9179 = vsel %vm1594, %v9150, 0
      %v9182 = vsel %vm1594, %v9151, 0
      %v9185 = vsel %vm1594, %v9152, 0
      %v9188 = vsel %vm1594, %v9153, 0
      %v9191 = vsel %vm1594, %v9154, 0
      %v9194 = vsel %vm1594, %v9155, 0
      %v9197 = vsel %vm1594, %v9156, 0
      %v9200 = vsel %vm1594, %v9157, 0
      %v9203 = vsel %vm1594, %v9158, 0
      %v9206 = vsel %vm1594, %v9159, 0
      %v9209 = vsel %vm1643, %v9111, 0
      %9211 = vmatprep.subr.bf16.mxu0 0
      %9212 = vmatpush1.bf16.msra.mxu0 0
      %9213 = vmatprep.subr.bf16.mxu0 0
      %9214 = vmatpush1.bf16.msra.mxu0 0
      %9215 = vmatprep.subr.bf16.mxu0 0
      %9216 = vmatpush1.bf16.msra.mxu0 0
      %9217 = vmatprep.subr.bf16.mxu0 0
      %9218 = vmatpush1.bf16.msra.mxu0 0
      %9219 = vmatprep.subr.bf16.mxu0 0
      %9220 = vmatpush1.bf16.msra.mxu0 0
      %9221 = vmatprep.subr.bf16.mxu0 0
      %9222 = vmatpush1.bf16.msra.mxu0 0
      %9223 = vmatprep.subr.bf16.mxu0 0
      %9224 = vmatpush1.bf16.msra.mxu0 0
      %9225 = vmatprep.subr.bf16.mxu0 0
      %9226 = vmatpush1.bf16.msra.mxu0 %v9209
      %9227 = vmatprep.subr.bf16.mxu0 0
      %9228 = vmatpush2.bf16.msra.mxu0 0
      %9229 = vmatprep.subr.bf16.mxu0 0
      %9230 = vmatpush2.bf16.msra.mxu0 0
      %9231 = vmatprep.subr.bf16.mxu0 0
      %9232 = vmatpush2.bf16.msra.mxu0 0
      %9233 = vmatprep.subr.bf16.mxu0 0
      %9234 = vmatpush2.bf16.msra.mxu0 0
      %9235 = vmatprep.subr.bf16.mxu0 0
      %9236 = vmatpush2.bf16.msra.mxu0 0
      %9237 = vmatprep.subr.bf16.mxu0 0
      %9238 = vmatpush2.bf16.msra.mxu0 0
      %9239 = vmatprep.subr.bf16.mxu0 0
      %9240 = vmatpush2.bf16.msra.mxu0 0
      %9241 = vmatprep.subr.bf16.mxu0 0
      %9242 = vmatpush2.bf16.msra.mxu0 0
      %9243 = vmatprep.mubr.bf16.mxu0 0
      %9244 = vmatmul.mubr.bf16.gmra.mxu0 %v9161
      %v9245 = vpop.f32.mrf.mxu0
      %v9246 = vadd.f32 0.0, %v9245
      %v9247 = vpop.f32.mrf.mxu0
      %v9248 = vpop.f32.mrf.mxu0
      %v9249 = vadd.f32 0.0, %v9248
      %v9250 = vpop.f32.mrf.mxu0
      %9251 = vmatprep.mubr.bf16.mxu0 0
      %9252 = vmatmul.mubr.bf16.gmra.mxu0 %v9164
      %v9253 = vpop.f32.mrf.mxu0
      %v9254 = vadd.f32 0.0, %v9253
      %v9255 = vpop.f32.mrf.mxu0
      %v9256 = vpop.f32.mrf.mxu0
      %v9257 = vadd.f32 0.0, %v9256
      %v9258 = vpop.f32.mrf.mxu0
      %9259 = vmatprep.mubr.bf16.mxu0 0
      %9260 = vmatmul.mubr.bf16.gmra.mxu0 %v9167
      %v9261 = vpop.f32.mrf.mxu0
      %v9262 = vadd.f32 0.0, %v9261
      %v9263 = vpop.f32.mrf.mxu0
      %v9264 = vpop.f32.mrf.mxu0
      %v9265 = vadd.f32 0.0, %v9264
      %v9266 = vpop.f32.mrf.mxu0
      %9267 = vmatprep.mubr.bf16.mxu0 0
      %9268 = vmatmul.mubr.bf16.gmra.mxu0 %v9170
      %v9269 = vpop.f32.mrf.mxu0
      %v9270 = vadd.f32 0.0, %v9269
      %v9271 = vpop.f32.mrf.mxu0
      %v9272 = vpop.f32.mrf.mxu0
      %v9273 = vadd.f32 0.0, %v9272
      %v9274 = vpop.f32.mrf.mxu0
      %9275 = vmatprep.mubr.bf16.mxu0 0
      %9276 = vmatmul.mubr.bf16.gmra.mxu0 %v9173
      %v9277 = vpop.f32.mrf.mxu0
      %v9278 = vadd.f32 0.0, %v9277
      %v9279 = vpop.f32.mrf.mxu0
      %v9280 = vpop.f32.mrf.mxu0
      %v9281 = vadd.f32 0.0, %v9280
      %v9282 = vpop.f32.mrf.mxu0
      %9283 = vmatprep.mubr.bf16.mxu0 0
      %9284 = vmatmul.mubr.bf16.gmra.mxu0 %v9176
      %v9285 = vpop.f32.mrf.mxu0
      %v9286 = vadd.f32 0.0, %v9285
      %v9287 = vpop.f32.mrf.mxu0
      %v9288 = vpop.f32.mrf.mxu0
      %v9289 = vadd.f32 0.0, %v9288
      %v9290 = vpop.f32.mrf.mxu0
      %9291 = vmatprep.mubr.bf16.mxu0 0
      %9292 = vmatmul.mubr.bf16.gmra.mxu0 %v9179
      %v9293 = vpop.f32.mrf.mxu0
      %v9294 = vadd.f32 0.0, %v9293
      %v9295 = vpop.f32.mrf.mxu0
      %v9296 = vpop.f32.mrf.mxu0
      %v9297 = vadd.f32 0.0, %v9296
      %v9298 = vpop.f32.mrf.mxu0
      %9299 = vmatprep.mubr.bf16.mxu0 0
      %9300 = vmatmul.mubr.bf16.gmra.mxu0 %v9182
      %v9301 = vpop.f32.mrf.mxu0
      %v9302 = vadd.f32 0.0, %v9301
      %v9303 = vpop.f32.mrf.mxu0
      %v9304 = vpop.f32.mrf.mxu0
      %v9305 = vadd.f32 0.0, %v9304
      %v9306 = vpop.f32.mrf.mxu0
      %9307 = vmatprep.mubr.bf16.mxu0 0
      %9308 = vmatmul.mubr.bf16.gmra.mxu0 %v9185
      %v9309 = vpop.f32.mrf.mxu0
      %v9310 = vadd.f32 0.0, %v9309
      %v9311 = vpop.f32.mrf.mxu0
      %v9312 = vpop.f32.mrf.mxu0
      %v9313 = vadd.f32 0.0, %v9312
      %v9314 = vpop.f32.mrf.mxu0
      %9315 = vmatprep.mubr.bf16.mxu0 0
      %9316 = vmatmul.mubr.bf16.gmra.mxu0 %v9188
      %v9317 = vpop.f32.mrf.mxu0
      %v9318 = vadd.f32 0.0, %v9317
      %v9319 = vpop.f32.mrf.mxu0
      %v9320 = vpop.f32.mrf.mxu0
      %v9321 = vadd.f32 0.0, %v9320
      %v9322 = vpop.f32.mrf.mxu0
      %9323 = vmatprep.mubr.bf16.mxu0 0
      %9324 = vmatmul.mubr.bf16.gmra.mxu0 %v9191
      %v9325 = vpop.f32.mrf.mxu0
      %v9326 = vadd.f32 0.0, %v9325
      %v9327 = vpop.f32.mrf.mxu0
      %v9328 = vpop.f32.mrf.mxu0
      %v9329 = vadd.f32 0.0, %v9328
      %v9330 = vpop.f32.mrf.mxu0
      %9331 = vmatprep.mubr.bf16.mxu0 0
      %9332 = vmatmul.mubr.bf16.gmra.mxu0 %v9194
      %v9333 = vpop.f32.mrf.mxu0
      %v9334 = vadd.f32 0.0, %v9333
      %v9335 = vpop.f32.mrf.mxu0
      %v9336 = vpop.f32.mrf.mxu0
      %v9337 = vadd.f32 0.0, %v9336
      %v9338 = vpop.f32.mrf.mxu0
      %9339 = vmatprep.mubr.bf16.mxu0 0
      %9340 = vmatmul.mubr.bf16.gmra.mxu0 %v9197
      %v9341 = vpop.f32.mrf.mxu0
      %v9342 = vadd.f32 0.0, %v9341
      %v9343 = vpop.f32.mrf.mxu0
      %v9344 = vpop.f32.mrf.mxu0
      %v9345 = vadd.f32 0.0, %v9344
      %v9346 = vpop.f32.mrf.mxu0
      %9347 = vmatprep.mubr.bf16.mxu0 0
      %9348 = vmatmul.mubr.bf16.gmra.mxu0 %v9200
      %v9349 = vpop.f32.mrf.mxu0
      %v9350 = vadd.f32 0.0, %v9349
      %v9351 = vpop.f32.mrf.mxu0
      %v9352 = vpop.f32.mrf.mxu0
      %v9353 = vadd.f32 0.0, %v9352
      %v9354 = vpop.f32.mrf.mxu0
      %9355 = vmatprep.mubr.bf16.mxu0 0
      %9356 = vmatmul.mubr.bf16.gmra.mxu0 %v9203
      %v9357 = vpop.f32.mrf.mxu0
      %v9358 = vadd.f32 0.0, %v9357
      %v9359 = vpop.f32.mrf.mxu0
      %v9360 = vpop.f32.mrf.mxu0
      %v9361 = vadd.f32 0.0, %v9360
      %v9362 = vpop.f32.mrf.mxu0
      %9363 = vmatprep.mubr.bf16.mxu0 0
      %9364 = vmatmul.mubr.bf16.gmra.mxu0 %v9206
      %v9365 = vpop.f32.mrf.mxu0
      %v9366 = vadd.f32 0.0, %v9365
      %v9367 = vpop.f32.mrf.mxu0
      %v9368 = vpop.f32.mrf.mxu0
      %v9369 = vadd.f32 0.0, %v9368
      %v9370 = vpop.f32.mrf.mxu0
      %9371 = vdwg.mxu0
      %v9372 = vadd.f32 %v8646, %v9246
      %v9373 = vadd.f32 %v8647, %v9249
      %v9374 = vadd.f32 %v8648, %v9254
      %v9375 = vadd.f32 %v8649, %v9257
      %v9376 = vadd.f32 %v8650, %v9262
      %v9377 = vadd.f32 %v8651, %v9265
      %v9378 = vadd.f32 %v8652, %v9270
      %v9379 = vadd.f32 %v8653, %v9273
      %v9380 = vadd.f32 %v8654, %v9278
      %v9381 = vadd.f32 %v8655, %v9281
      %v9382 = vadd.f32 %v8656, %v9286
      %v9383 = vadd.f32 %v8657, %v9289
      %v9384 = vadd.f32 %v8658, %v9294
      %v9385 = vadd.f32 %v8659, %v9297
      %v9386 = vadd.f32 %v8660, %v9302
      %v9387 = vadd.f32 %v8661, %v9305
      %v9388 = vadd.f32 %v8662, %v9310
      %v9389 = vadd.f32 %v8663, %v9313
      %v9390 = vadd.f32 %v8664, %v9318
      %v9391 = vadd.f32 %v8665, %v9321
      %v9392 = vadd.f32 %v8666, %v9326
      %v9393 = vadd.f32 %v8667, %v9329
      %v9394 = vadd.f32 %v8668, %v9334
      %v9395 = vadd.f32 %v8669, %v9337
      %v9396 = vadd.f32 %v8670, %v9342
      %v9397 = vadd.f32 %v8671, %v9345
      %v9398 = vadd.f32 %v8672, %v9350
      %v9399 = vadd.f32 %v8673, %v9353
      %v9400 = vadd.f32 %v8674, %v9358
      %v9401 = vadd.f32 %v8675, %v9361
      %v9402 = vadd.f32 %v8676, %v9366
      %v9403 = vadd.f32 %v8677, %v9369
      %v9404 = vld [vmem:[%s677] sm:$0xe]
      %v9405 = vld [vmem:[%s677 + $0xc] sm:$0xe]
      %v9406 = vld [vmem:[%s677 + $0x18] sm:$0xe]
      %v9407 = vld [vmem:[%s677 + $0x24] sm:$0xe]
      %v9408 = vld [vmem:[%s677 + $0x30] sm:$0xe]
      %v9409 = vld [vmem:[%s677 + $0x3c] sm:$0xe]
      %v9410 = vld [vmem:[%s677 + $0x48] sm:$0xe]
      %v9411 = vld [vmem:[%s677 + $0x54] sm:$0xe]
      %v9412 = vld [vmem:[%s677 + $0x60] sm:$0xe]
      %v9413 = vld [vmem:[%s677 + $0x6c] sm:$0xe]
      %v9414 = vld [vmem:[%s677 + $0x78] sm:$0xe]
      %v9415 = vld [vmem:[%s677 + $0x84] sm:$0xe]
      %v9416 = vld [vmem:[%s677 + $0x90] sm:$0xe]
      %v9417 = vld [vmem:[%s677 + $0x9c] sm:$0xe]
      %v9418 = vld [vmem:[%s677 + $0xa8] sm:$0xe]
      %v9419 = vld [vmem:[%s677 + $0xb4] sm:$0xe]
      %v9468 = vrot.slane %v9404, 5
      %v9469 = vrot.slane %v9468, 4
      %v9470 = vrot.slane %v8679, 5
      %v9471 = vsel %vm2150, %v9469, %v9470
      %v9472 = vrot.slane %v9470, 4
      %v9473 = vrot.slane %v8680, 5
      %v9474 = vsel %vm2150, %v9472, %v9473
      %v9475 = vrot.slane %v9405, 5
      %v9476 = vrot.slane %v9475, 4
      %v9477 = vrot.slane %v8682, 5
      %v9478 = vsel %vm2150, %v9476, %v9477
      %v9479 = vrot.slane %v9477, 4
      %v9480 = vrot.slane %v8683, 5
      %v9481 = vsel %vm2150, %v9479, %v9480
      %v9482 = vrot.slane %v9406, 5
      %v9483 = vrot.slane %v9482, 4
      %v9484 = vrot.slane %v8685, 5
      %v9485 = vsel %vm2150, %v9483, %v9484
      %v9486 = vrot.slane %v9484, 4
      %v9487 = vrot.slane %v8686, 5
      %v9488 = vsel %vm2150, %v9486, %v9487
      %v9489 = vrot.slane %v9407, 5
      %v9490 = vrot.slane %v9489, 4
      %v9491 = vrot.slane %v8688, 5
      %v9492 = vsel %vm2150, %v9490, %v9491
      %v9493 = vrot.slane %v9491, 4
      %v9494 = vrot.slane %v8689, 5
      %v9495 = vsel %vm2150, %v9493, %v9494
      %v9496 = vrot.slane %v9408, 5
      %v9497 = vrot.slane %v9496, 4
      %v9498 = vrot.slane %v8691, 5
      %v9499 = vsel %vm2150, %v9497, %v9498
      %v9500 = vrot.slane %v9498, 4
      %v9501 = vrot.slane %v8692, 5
      %v9502 = vsel %vm2150, %v9500, %v9501
      %v9503 = vrot.slane %v9409, 5
      %v9504 = vrot.slane %v9503, 4
      %v9505 = vrot.slane %v8694, 5
      %v9506 = vsel %vm2150, %v9504, %v9505
      %v9507 = vrot.slane %v9505, 4
      %v9508 = vrot.slane %v8695, 5
      %v9509 = vsel %vm2150, %v9507, %v9508
      %v9510 = vrot.slane %v9410, 5
      %v9511 = vrot.slane %v9510, 4
      %v9512 = vrot.slane %v8697, 5
      %v9513 = vsel %vm2150, %v9511, %v9512
      %v9514 = vrot.slane %v9512, 4
      %v9515 = vrot.slane %v8698, 5
      %v9516 = vsel %vm2150, %v9514, %v9515
      %v9517 = vrot.slane %v9411, 5
      %v9518 = vrot.slane %v9517, 4
      %v9519 = vrot.slane %v8700, 5
      %v9520 = vsel %vm2150, %v9518, %v9519
      %v9521 = vrot.slane %v9519, 4
      %v9522 = vrot.slane %v8701, 5
      %v9523 = vsel %vm2150, %v9521, %v9522
      %v9524 = vrot.slane %v9412, 5
      %v9525 = vrot.slane %v9524, 4
      %v9526 = vrot.slane %v8703, 5
      %v9527 = vsel %vm2150, %v9525, %v9526
      %v9528 = vrot.slane %v9526, 4
      %v9529 = vrot.slane %v8704, 5
      %v9530 = vsel %vm2150, %v9528, %v9529
      %v9531 = vrot.slane %v9413, 5
      %v9532 = vrot.slane %v9531, 4
      %v9533 = vrot.slane %v8706, 5
      %v9534 = vsel %vm2150, %v9532, %v9533
      %v9535 = vrot.slane %v9533, 4
      %v9536 = vrot.slane %v8707, 5
      %v9537 = vsel %vm2150, %v9535, %v9536
      %v9538 = vrot.slane %v9414, 5
      %v9539 = vrot.slane %v9538, 4
      %v9540 = vrot.slane %v8709, 5
      %v9541 = vsel %vm2150, %v9539, %v9540
      %v9542 = vrot.slane %v9540, 4
      %v9543 = vrot.slane %v8710, 5
      %v9544 = vsel %vm2150, %v9542, %v9543
      %v9545 = vrot.slane %v9415, 5
      %v9546 = vrot.slane %v9545, 4
      %v9547 = vrot.slane %v8712, 5
      %v9548 = vsel %vm2150, %v9546, %v9547
      %v9549 = vrot.slane %v9547, 4
      %v9550 = vrot.slane %v8713, 5
      %v9551 = vsel %vm2150, %v9549, %v9550
      %v9552 = vrot.slane %v9416, 5
      %v9553 = vrot.slane %v9552, 4
      %v9554 = vrot.slane %v8715, 5
      %v9555 = vsel %vm2150, %v9553, %v9554
      %v9556 = vrot.slane %v9554, 4
      %v9557 = vrot.slane %v8716, 5
      %v9558 = vsel %vm2150, %v9556, %v9557
      %v9559 = vrot.slane %v9417, 5
      %v9560 = vrot.slane %v9559, 4
      %v9561 = vrot.slane %v8718, 5
      %v9562 = vsel %vm2150, %v9560, %v9561
      %v9563 = vrot.slane %v9561, 4
      %v9564 = vrot.slane %v8719, 5
      %v9565 = vsel %vm2150, %v9563, %v9564
      %v9566 = vrot.slane %v9418, 5
      %v9567 = vrot.slane %v9566, 4
      %v9568 = vrot.slane %v8721, 5
      %v9569 = vsel %vm2150, %v9567, %v9568
      %v9570 = vrot.slane %v9568, 4
      %v9571 = vrot.slane %v8722, 5
      %v9572 = vsel %vm2150, %v9570, %v9571
      %v9573 = vrot.slane %v9419, 5
      %v9574 = vrot.slane %v9573, 4
      %v9575 = vrot.slane %v8724, 5
      %v9576 = vsel %vm2150, %v9574, %v9575
      %v9577 = vrot.slane %v9575, 4
      %v9578 = vrot.slane %v8725, 5
      %v9579 = vsel %vm2150, %v9577, %v9578
      %s9580 = scalar_lea.vmem %s3, 10
      %v9581 = vld [vmem:[%s9580] sm:$0x3]
      %v9582 = vunpack.c.l.b16 %v9471
      %v9583 = vunpack.c.l.b16 %v9474
      %v9584 = vunpack.c.l.b16 %v9478
      %v9585 = vunpack.c.l.b16 %v9481
      %v9586 = vunpack.c.l.b16 %v9485
      %v9587 = vunpack.c.l.b16 %v9488
      %v9588 = vunpack.c.l.b16 %v9492
      %v9589 = vunpack.c.l.b16 %v9495
      %v9590 = vunpack.c.l.b16 %v9499
      %v9591 = vunpack.c.l.b16 %v9502
      %v9592 = vunpack.c.l.b16 %v9506
      %v9593 = vunpack.c.l.b16 %v9509
      %v9594 = vunpack.c.l.b16 %v9513
      %v9595 = vunpack.c.l.b16 %v9516
      %v9596 = vunpack.c.l.b16 %v9520
      %v9597 = vunpack.c.l.b16 %v9523
      %v9598 = vunpack.c.l.b16 %v9527
      %v9599 = vunpack.c.l.b16 %v9530
      %v9600 = vunpack.c.l.b16 %v9534
      %v9601 = vunpack.c.l.b16 %v9537
      %v9602 = vunpack.c.l.b16 %v9541
      %v9603 = vunpack.c.l.b16 %v9544
      %v9604 = vunpack.c.l.b16 %v9548
      %v9605 = vunpack.c.l.b16 %v9551
      %v9606 = vunpack.c.l.b16 %v9555
      %v9607 = vunpack.c.l.b16 %v9558
      %v9608 = vunpack.c.l.b16 %v9562
      %v9609 = vunpack.c.l.b16 %v9565
      %v9610 = vunpack.c.l.b16 %v9569
      %v9611 = vunpack.c.l.b16 %v9572
      %v9612 = vunpack.c.l.b16 %v9576
      %v9613 = vunpack.c.l.b16 %v9579
      %v9614 = vpack.c.b16 %v9583, %v9582
      %v9615 = vpack.c.b16 %v9585, %v9584
      %v9616 = vpack.c.b16 %v9587, %v9586
      %v9617 = vpack.c.b16 %v9589, %v9588
      %v9618 = vpack.c.b16 %v9591, %v9590
      %v9619 = vpack.c.b16 %v9593, %v9592
      %v9620 = vpack.c.b16 %v9595, %v9594
      %v9621 = vpack.c.b16 %v9597, %v9596
      %v9622 = vpack.c.b16 %v9599, %v9598
      %v9623 = vpack.c.b16 %v9601, %v9600
      %v9624 = vpack.c.b16 %v9603, %v9602
      %v9625 = vpack.c.b16 %v9605, %v9604
      %v9626 = vpack.c.b16 %v9607, %v9606
      %v9627 = vpack.c.b16 %v9609, %v9608
      %v9628 = vpack.c.b16 %v9611, %v9610
      %v9629 = vpack.c.b16 %v9613, %v9612
      %v9631 = vsel %vm1594, %v9614, 0
      %v9634 = vsel %vm1594, %v9615, 0
      %v9637 = vsel %vm1594, %v9616, 0
      %v9640 = vsel %vm1594, %v9617, 0
      %v9643 = vsel %vm1594, %v9618, 0
      %v9646 = vsel %vm1594, %v9619, 0
      %v9649 = vsel %vm1594, %v9620, 0
      %v9652 = vsel %vm1594, %v9621, 0
      %v9655 = vsel %vm1594, %v9622, 0
      %v9658 = vsel %vm1594, %v9623, 0
      %v9661 = vsel %vm1594, %v9624, 0
      %v9664 = vsel %vm1594, %v9625, 0
      %v9667 = vsel %vm1594, %v9626, 0
      %v9670 = vsel %vm1594, %v9627, 0
      %v9673 = vsel %vm1594, %v9628, 0
      %v9676 = vsel %vm1594, %v9629, 0
      %v9679 = vsel %vm1643, %v9581, 0
      %9681 = vmatprep.subr.bf16.mxu0 0
      %9682 = vmatpush1.bf16.msra.mxu0 0
      %9683 = vmatprep.subr.bf16.mxu0 0
      %9684 = vmatpush1.bf16.msra.mxu0 0
      %9685 = vmatprep.subr.bf16.mxu0 0
      %9686 = vmatpush1.bf16.msra.mxu0 0
      %9687 = vmatprep.subr.bf16.mxu0 0
      %9688 = vmatpush1.bf16.msra.mxu0 0
      %9689 = vmatprep.subr.bf16.mxu0 0
      %9690 = vmatpush1.bf16.msra.mxu0 0
      %9691 = vmatprep.subr.bf16.mxu0 0
      %9692 = vmatpush1.bf16.msra.mxu0 0
      %9693 = vmatprep.subr.bf16.mxu0 0
      %9694 = vmatpush1.bf16.msra.mxu0 0
      %9695 = vmatprep.subr.bf16.mxu0 0
      %9696 = vmatpush1.bf16.msra.mxu0 %v9679
      %9697 = vmatprep.subr.bf16.mxu0 0
      %9698 = vmatpush2.bf16.msra.mxu0 0
      %9699 = vmatprep.subr.bf16.mxu0 0
      %9700 = vmatpush2.bf16.msra.mxu0 0
      %9701 = vmatprep.subr.bf16.mxu0 0
      %9702 = vmatpush2.bf16.msra.mxu0 0
      %9703 = vmatprep.subr.bf16.mxu0 0
      %9704 = vmatpush2.bf16.msra.mxu0 0
      %9705 = vmatprep.subr.bf16.mxu0 0
      %9706 = vmatpush2.bf16.msra.mxu0 0
      %9707 = vmatprep.subr.bf16.mxu0 0
      %9708 = vmatpush2.bf16.msra.mxu0 0
      %9709 = vmatprep.subr.bf16.mxu0 0
      %9710 = vmatpush2.bf16.msra.mxu0 0
      %9711 = vmatprep.subr.bf16.mxu0 0
      %9712 = vmatpush2.bf16.msra.mxu0 0
      %9713 = vmatprep.mubr.bf16.mxu0 0
      %9714 = vmatmul.mubr.bf16.gmra.mxu0 %v9631
      %v9715 = vpop.f32.mrf.mxu0
      %v9716 = vadd.f32 0.0, %v9715
      %v9717 = vpop.f32.mrf.mxu0
      %v9718 = vpop.f32.mrf.mxu0
      %v9719 = vadd.f32 0.0, %v9718
      %v9720 = vpop.f32.mrf.mxu0
      %9721 = vmatprep.mubr.bf16.mxu0 0
      %9722 = vmatmul.mubr.bf16.gmra.mxu0 %v9634
      %v9723 = vpop.f32.mrf.mxu0
      %v9724 = vadd.f32 0.0, %v9723
      %v9725 = vpop.f32.mrf.mxu0
      %v9726 = vpop.f32.mrf.mxu0
      %v9727 = vadd.f32 0.0, %v9726
      %v9728 = vpop.f32.mrf.mxu0
      %9729 = vmatprep.mubr.bf16.mxu0 0
      %9730 = vmatmul.mubr.bf16.gmra.mxu0 %v9637
      %v9731 = vpop.f32.mrf.mxu0
      %v9732 = vadd.f32 0.0, %v9731
      %v9733 = vpop.f32.mrf.mxu0
      %v9734 = vpop.f32.mrf.mxu0
      %v9735 = vadd.f32 0.0, %v9734
      %v9736 = vpop.f32.mrf.mxu0
      %9737 = vmatprep.mubr.bf16.mxu0 0
      %9738 = vmatmul.mubr.bf16.gmra.mxu0 %v9640
      %v9739 = vpop.f32.mrf.mxu0
      %v9740 = vadd.f32 0.0, %v9739
      %v9741 = vpop.f32.mrf.mxu0
      %v9742 = vpop.f32.mrf.mxu0
      %v9743 = vadd.f32 0.0, %v9742
      %v9744 = vpop.f32.mrf.mxu0
      %9745 = vmatprep.mubr.bf16.mxu0 0
      %9746 = vmatmul.mubr.bf16.gmra.mxu0 %v9643
      %v9747 = vpop.f32.mrf.mxu0
      %v9748 = vadd.f32 0.0, %v9747
      %v9749 = vpop.f32.mrf.mxu0
      %v9750 = vpop.f32.mrf.mxu0
      %v9751 = vadd.f32 0.0, %v9750
      %v9752 = vpop.f32.mrf.mxu0
      %9753 = vmatprep.mubr.bf16.mxu0 0
      %9754 = vmatmul.mubr.bf16.gmra.mxu0 %v9646
      %v9755 = vpop.f32.mrf.mxu0
      %v9756 = vadd.f32 0.0, %v9755
      %v9757 = vpop.f32.mrf.mxu0
      %v9758 = vpop.f32.mrf.mxu0
      %v9759 = vadd.f32 0.0, %v9758
      %v9760 = vpop.f32.mrf.mxu0
      %9761 = vmatprep.mubr.bf16.mxu0 0
      %9762 = vmatmul.mubr.bf16.gmra.mxu0 %v9649
      %v9763 = vpop.f32.mrf.mxu0
      %v9764 = vadd.f32 0.0, %v9763
      %v9765 = vpop.f32.mrf.mxu0
      %v9766 = vpop.f32.mrf.mxu0
      %v9767 = vadd.f32 0.0, %v9766
      %v9768 = vpop.f32.mrf.mxu0
      %9769 = vmatprep.mubr.bf16.mxu0 0
      %9770 = vmatmul.mubr.bf16.gmra.mxu0 %v9652
      %v9771 = vpop.f32.mrf.mxu0
      %v9772 = vadd.f32 0.0, %v9771
      %v9773 = vpop.f32.mrf.mxu0
      %v9774 = vpop.f32.mrf.mxu0
      %v9775 = vadd.f32 0.0, %v9774
      %v9776 = vpop.f32.mrf.mxu0
      %9777 = vmatprep.mubr.bf16.mxu0 0
      %9778 = vmatmul.mubr.bf16.gmra.mxu0 %v9655
      %v9779 = vpop.f32.mrf.mxu0
      %v9780 = vadd.f32 0.0, %v9779
      %v9781 = vpop.f32.mrf.mxu0
      %v9782 = vpop.f32.mrf.mxu0
      %v9783 = vadd.f32 0.0, %v9782
      %v9784 = vpop.f32.mrf.mxu0
      %9785 = vmatprep.mubr.bf16.mxu0 0
      %9786 = vmatmul.mubr.bf16.gmra.mxu0 %v9658
      %v9787 = vpop.f32.mrf.mxu0
      %v9788 = vadd.f32 0.0, %v9787
      %v9789 = vpop.f32.mrf.mxu0
      %v9790 = vpop.f32.mrf.mxu0
      %v9791 = vadd.f32 0.0, %v9790
      %v9792 = vpop.f32.mrf.mxu0
      %9793 = vmatprep.mubr.bf16.mxu0 0
      %9794 = vmatmul.mubr.bf16.gmra.mxu0 %v9661
      %v9795 = vpop.f32.mrf.mxu0
      %v9796 = vadd.f32 0.0, %v9795
      %v9797 = vpop.f32.mrf.mxu0
      %v9798 = vpop.f32.mrf.mxu0
      %v9799 = vadd.f32 0.0, %v9798
      %v9800 = vpop.f32.mrf.mxu0
      %9801 = vmatprep.mubr.bf16.mxu0 0
      %9802 = vmatmul.mubr.bf16.gmra.mxu0 %v9664
      %v9803 = vpop.f32.mrf.mxu0
      %v9804 = vadd.f32 0.0, %v9803
      %v9805 = vpop.f32.mrf.mxu0
      %v9806 = vpop.f32.mrf.mxu0
      %v9807 = vadd.f32 0.0, %v9806
      %v9808 = vpop.f32.mrf.mxu0
      %9809 = vmatprep.mubr.bf16.mxu0 0
      %9810 = vmatmul.mubr.bf16.gmra.mxu0 %v9667
      %v9811 = vpop.f32.mrf.mxu0
      %v9812 = vadd.f32 0.0, %v9811
      %v9813 = vpop.f32.mrf.mxu0
      %v9814 = vpop.f32.mrf.mxu0
      %v9815 = vadd.f32 0.0, %v9814
      %v9816 = vpop.f32.mrf.mxu0
      %9817 = vmatprep.mubr.bf16.mxu0 0
      %9818 = vmatmul.mubr.bf16.gmra.mxu0 %v9670
      %v9819 = vpop.f32.mrf.mxu0
      %v9820 = vadd.f32 0.0, %v9819
      %v9821 = vpop.f32.mrf.mxu0
      %v9822 = vpop.f32.mrf.mxu0
      %v9823 = vadd.f32 0.0, %v9822
      %v9824 = vpop.f32.mrf.mxu0
      %9825 = vmatprep.mubr.bf16.mxu0 0
      %9826 = vmatmul.mubr.bf16.gmra.mxu0 %v9673
      %v9827 = vpop.f32.mrf.mxu0
      %v9828 = vadd.f32 0.0, %v9827
      %v9829 = vpop.f32.mrf.mxu0
      %v9830 = vpop.f32.mrf.mxu0
      %v9831 = vadd.f32 0.0, %v9830
      %v9832 = vpop.f32.mrf.mxu0
      %9833 = vmatprep.mubr.bf16.mxu0 0
      %9834 = vmatmul.mubr.bf16.gmra.mxu0 %v9676
      %v9835 = vpop.f32.mrf.mxu0
      %v9836 = vadd.f32 0.0, %v9835
      %v9837 = vpop.f32.mrf.mxu0
      %v9838 = vpop.f32.mrf.mxu0
      %v9839 = vadd.f32 0.0, %v9838
      %v9840 = vpop.f32.mrf.mxu0
      %9841 = vdwg.mxu0
      %v9842 = vadd.f32 %v9372, %v9716
      %v9843 = vadd.f32 %v9373, %v9719
      %v9844 = vadd.f32 %v9374, %v9724
      %v9845 = vadd.f32 %v9375, %v9727
      %v9846 = vadd.f32 %v9376, %v9732
      %v9847 = vadd.f32 %v9377, %v9735
      %v9848 = vadd.f32 %v9378, %v9740
      %v9849 = vadd.f32 %v9379, %v9743
      %v9850 = vadd.f32 %v9380, %v9748
      %v9851 = vadd.f32 %v9381, %v9751
      %v9852 = vadd.f32 %v9382, %v9756
      %v9853 = vadd.f32 %v9383, %v9759
      %v9854 = vadd.f32 %v9384, %v9764
      %v9855 = vadd.f32 %v9385, %v9767
      %v9856 = vadd.f32 %v9386, %v9772
      %v9857 = vadd.f32 %v9387, %v9775
      %v9858 = vadd.f32 %v9388, %v9780
      %v9859 = vadd.f32 %v9389, %v9783
      %v9860 = vadd.f32 %v9390, %v9788
      %v9861 = vadd.f32 %v9391, %v9791
      %v9862 = vadd.f32 %v9392, %v9796
      %v9863 = vadd.f32 %v9393, %v9799
      %v9864 = vadd.f32 %v9394, %v9804
      %v9865 = vadd.f32 %v9395, %v9807
      %v9866 = vadd.f32 %v9396, %v9812
      %v9867 = vadd.f32 %v9397, %v9815
      %v9868 = vadd.f32 %v9398, %v9820
      %v9869 = vadd.f32 %v9399, %v9823
      %v9870 = vadd.f32 %v9400, %v9828
      %v9871 = vadd.f32 %v9401, %v9831
      %v9872 = vadd.f32 %v9402, %v9836
      %v9873 = vadd.f32 %v9403, %v9839
      %v9874 = vld [vmem:[%s796] sm:$0xf]
      %v9875 = vld [vmem:[%s796 + $0x4] sm:$0xf]
      %v9876 = vld [vmem:[%s796 + $0xc] sm:$0xf]
      %v9877 = vld [vmem:[%s796 + $0x10] sm:$0xf]
      %v9878 = vld [vmem:[%s796 + $0x18] sm:$0xf]
      %v9879 = vld [vmem:[%s796 + $0x1c] sm:$0xf]
      %v9880 = vld [vmem:[%s796 + $0x24] sm:$0xf]
      %v9881 = vld [vmem:[%s796 + $0x28] sm:$0xf]
      %v9882 = vld [vmem:[%s796 + $0x30] sm:$0xf]
      %v9883 = vld [vmem:[%s796 + $0x34] sm:$0xf]
      %v9884 = vld [vmem:[%s796 + $0x3c] sm:$0xf]
      %v9885 = vld [vmem:[%s796 + $0x40] sm:$0xf]
      %v9886 = vld [vmem:[%s796 + $0x48] sm:$0xf]
      %v9887 = vld [vmem:[%s796 + $0x4c] sm:$0xf]
      %v9888 = vld [vmem:[%s796 + $0x54] sm:$0xf]
      %v9889 = vld [vmem:[%s796 + $0x58] sm:$0xf]
      %v9890 = vld [vmem:[%s796 + $0x60] sm:$0xf]
      %v9891 = vld [vmem:[%s796 + $0x64] sm:$0xf]
      %v9892 = vld [vmem:[%s796 + $0x6c] sm:$0xf]
      %v9893 = vld [vmem:[%s796 + $0x70] sm:$0xf]
      %v9894 = vld [vmem:[%s796 + $0x78] sm:$0xf]
      %v9895 = vld [vmem:[%s796 + $0x7c] sm:$0xf]
      %v9896 = vld [vmem:[%s796 + $0x84] sm:$0xf]
      %v9897 = vld [vmem:[%s796 + $0x88] sm:$0xf]
      %v9898 = vld [vmem:[%s796 + $0x90] sm:$0xf]
      %v9899 = vld [vmem:[%s796 + $0x94] sm:$0xf]
      %v9900 = vld [vmem:[%s796 + $0x9c] sm:$0xf]
      %v9901 = vld [vmem:[%s796 + $0xa0] sm:$0xf]
      %v9902 = vld [vmem:[%s796 + $0xa8] sm:$0xf]
      %v9903 = vld [vmem:[%s796 + $0xac] sm:$0xf]
      %v9904 = vld [vmem:[%s796 + $0xb4] sm:$0xf]
      %v9905 = vld [vmem:[%s796 + $0xb8] sm:$0xf]
      %s9906 = scalar_lea.vmem %s3, 12
      %v9907 = vld [vmem:[%s9906] sm:$0x3]
      %v9940 = vunpack.c.l.b16 %v9874
      %v9941 = vunpack.c.l.b16 %v9875
      %v9942 = vunpack.c.l.b16 %v9876
      %v9943 = vunpack.c.l.b16 %v9877
      %v9944 = vunpack.c.l.b16 %v9878
      %v9945 = vunpack.c.l.b16 %v9879
      %v9946 = vunpack.c.l.b16 %v9880
      %v9947 = vunpack.c.l.b16 %v9881
      %v9948 = vunpack.c.l.b16 %v9882
      %v9949 = vunpack.c.l.b16 %v9883
      %v9950 = vunpack.c.l.b16 %v9884
      %v9951 = vunpack.c.l.b16 %v9885
      %v9952 = vunpack.c.l.b16 %v9886
      %v9953 = vunpack.c.l.b16 %v9887
      %v9954 = vunpack.c.l.b16 %v9888
      %v9955 = vunpack.c.l.b16 %v9889
      %v9956 = vunpack.c.l.b16 %v9890
      %v9957 = vunpack.c.l.b16 %v9891
      %v9958 = vunpack.c.l.b16 %v9892
      %v9959 = vunpack.c.l.b16 %v9893
      %v9960 = vunpack.c.l.b16 %v9894
      %v9961 = vunpack.c.l.b16 %v9895
      %v9962 = vunpack.c.l.b16 %v9896
      %v9963 = vunpack.c.l.b16 %v9897
      %v9964 = vunpack.c.l.b16 %v9898
      %v9965 = vunpack.c.l.b16 %v9899
      %v9966 = vunpack.c.l.b16 %v9900
      %v9967 = vunpack.c.l.b16 %v9901
      %v9968 = vunpack.c.l.b16 %v9902
      %v9969 = vunpack.c.l.b16 %v9903
      %v9970 = vunpack.c.l.b16 %v9904
      %v9971 = vunpack.c.l.b16 %v9905
      %v9972 = vpack.c.b16 %v9941, %v9940
      %v9973 = vpack.c.b16 %v9943, %v9942
      %v9974 = vpack.c.b16 %v9945, %v9944
      %v9975 = vpack.c.b16 %v9947, %v9946
      %v9976 = vpack.c.b16 %v9949, %v9948
      %v9977 = vpack.c.b16 %v9951, %v9950
      %v9978 = vpack.c.b16 %v9953, %v9952
      %v9979 = vpack.c.b16 %v9955, %v9954
      %v9980 = vpack.c.b16 %v9957, %v9956
      %v9981 = vpack.c.b16 %v9959, %v9958
      %v9982 = vpack.c.b16 %v9961, %v9960
      %v9983 = vpack.c.b16 %v9963, %v9962
      %v9984 = vpack.c.b16 %v9965, %v9964
      %v9985 = vpack.c.b16 %v9967, %v9966
      %v9986 = vpack.c.b16 %v9969, %v9968
      %v9987 = vpack.c.b16 %v9971, %v9970
      %v9989 = vsel %vm1594, %v9972, 0
      %v9992 = vsel %vm1594, %v9973, 0
      %v9995 = vsel %vm1594, %v9974, 0
      %v9998 = vsel %vm1594, %v9975, 0
      %v10001 = vsel %vm1594, %v9976, 0
      %v10004 = vsel %vm1594, %v9977, 0
      %v10007 = vsel %vm1594, %v9978, 0
      %v10010 = vsel %vm1594, %v9979, 0
      %v10013 = vsel %vm1594, %v9980, 0
      %v10016 = vsel %vm1594, %v9981, 0
      %v10019 = vsel %vm1594, %v9982, 0
      %v10022 = vsel %vm1594, %v9983, 0
      %v10025 = vsel %vm1594, %v9984, 0
      %v10028 = vsel %vm1594, %v9985, 0
      %v10031 = vsel %vm1594, %v9986, 0
      %v10034 = vsel %vm1594, %v9987, 0
      %v10037 = vsel %vm1643, %v9907, 0
      %10039 = vmatprep.subr.bf16.mxu0 0
      %10040 = vmatpush1.bf16.msra.mxu0 0
      %10041 = vmatprep.subr.bf16.mxu0 0
      %10042 = vmatpush1.bf16.msra.mxu0 0
      %10043 = vmatprep.subr.bf16.mxu0 0
      %10044 = vmatpush1.bf16.msra.mxu0 0
      %10045 = vmatprep.subr.bf16.mxu0 0
      %10046 = vmatpush1.bf16.msra.mxu0 0
      %10047 = vmatprep.subr.bf16.mxu0 0
      %10048 = vmatpush1.bf16.msra.mxu0 0
      %10049 = vmatprep.subr.bf16.mxu0 0
      %10050 = vmatpush1.bf16.msra.mxu0 0
      %10051 = vmatprep.subr.bf16.mxu0 0
      %10052 = vmatpush1.bf16.msra.mxu0 0
      %10053 = vmatprep.subr.bf16.mxu0 0
      %10054 = vmatpush1.bf16.msra.mxu0 %v10037
      %10055 = vmatprep.subr.bf16.mxu0 0
      %10056 = vmatpush2.bf16.msra.mxu0 0
      %10057 = vmatprep.subr.bf16.mxu0 0
      %10058 = vmatpush2.bf16.msra.mxu0 0
      %10059 = vmatprep.subr.bf16.mxu0 0
      %10060 = vmatpush2.bf16.msra.mxu0 0
      %10061 = vmatprep.subr.bf16.mxu0 0
      %10062 = vmatpush2.bf16.msra.mxu0 0
      %10063 = vmatprep.subr.bf16.mxu0 0
      %10064 = vmatpush2.bf16.msra.mxu0 0
      %10065 = vmatprep.subr.bf16.mxu0 0
      %10066 = vmatpush2.bf16.msra.mxu0 0
      %10067 = vmatprep.subr.bf16.mxu0 0
      %10068 = vmatpush2.bf16.msra.mxu0 0
      %10069 = vmatprep.subr.bf16.mxu0 0
      %10070 = vmatpush2.bf16.msra.mxu0 0
      %10071 = vmatprep.mubr.bf16.mxu0 0
      %10072 = vmatmul.mubr.bf16.gmra.mxu0 %v9989
      %v10073 = vpop.f32.mrf.mxu0
      %v10074 = vadd.f32 0.0, %v10073
      %v10075 = vpop.f32.mrf.mxu0
      %v10076 = vpop.f32.mrf.mxu0
      %v10077 = vadd.f32 0.0, %v10076
      %v10078 = vpop.f32.mrf.mxu0
      %10079 = vmatprep.mubr.bf16.mxu0 0
      %10080 = vmatmul.mubr.bf16.gmra.mxu0 %v9992
      %v10081 = vpop.f32.mrf.mxu0
      %v10082 = vadd.f32 0.0, %v10081
      %v10083 = vpop.f32.mrf.mxu0
      %v10084 = vpop.f32.mrf.mxu0
      %v10085 = vadd.f32 0.0, %v10084
      %v10086 = vpop.f32.mrf.mxu0
      %10087 = vmatprep.mubr.bf16.mxu0 0
      %10088 = vmatmul.mubr.bf16.gmra.mxu0 %v9995
      %v10089 = vpop.f32.mrf.mxu0
      %v10090 = vadd.f32 0.0, %v10089
      %v10091 = vpop.f32.mrf.mxu0
      %v10092 = vpop.f32.mrf.mxu0
      %v10093 = vadd.f32 0.0, %v10092
      %v10094 = vpop.f32.mrf.mxu0
      %10095 = vmatprep.mubr.bf16.mxu0 0
      %10096 = vmatmul.mubr.bf16.gmra.mxu0 %v9998
      %v10097 = vpop.f32.mrf.mxu0
      %v10098 = vadd.f32 0.0, %v10097
      %v10099 = vpop.f32.mrf.mxu0
      %v10100 = vpop.f32.mrf.mxu0
      %v10101 = vadd.f32 0.0, %v10100
      %v10102 = vpop.f32.mrf.mxu0
      %10103 = vmatprep.mubr.bf16.mxu0 0
      %10104 = vmatmul.mubr.bf16.gmra.mxu0 %v10001
      %v10105 = vpop.f32.mrf.mxu0
      %v10106 = vadd.f32 0.0, %v10105
      %v10107 = vpop.f32.mrf.mxu0
      %v10108 = vpop.f32.mrf.mxu0
      %v10109 = vadd.f32 0.0, %v10108
      %v10110 = vpop.f32.mrf.mxu0
      %10111 = vmatprep.mubr.bf16.mxu0 0
      %10112 = vmatmul.mubr.bf16.gmra.mxu0 %v10004
      %v10113 = vpop.f32.mrf.mxu0
      %v10114 = vadd.f32 0.0, %v10113
      %v10115 = vpop.f32.mrf.mxu0
      %v10116 = vpop.f32.mrf.mxu0
      %v10117 = vadd.f32 0.0, %v10116
      %v10118 = vpop.f32.mrf.mxu0
      %10119 = vmatprep.mubr.bf16.mxu0 0
      %10120 = vmatmul.mubr.bf16.gmra.mxu0 %v10007
      %v10121 = vpop.f32.mrf.mxu0
      %v10122 = vadd.f32 0.0, %v10121
      %v10123 = vpop.f32.mrf.mxu0
      %v10124 = vpop.f32.mrf.mxu0
      %v10125 = vadd.f32 0.0, %v10124
      %v10126 = vpop.f32.mrf.mxu0
      %10127 = vmatprep.mubr.bf16.mxu0 0
      %10128 = vmatmul.mubr.bf16.gmra.mxu0 %v10010
      %v10129 = vpop.f32.mrf.mxu0
      %v10130 = vadd.f32 0.0, %v10129
      %v10131 = vpop.f32.mrf.mxu0
      %v10132 = vpop.f32.mrf.mxu0
      %v10133 = vadd.f32 0.0, %v10132
      %v10134 = vpop.f32.mrf.mxu0
      %10135 = vmatprep.mubr.bf16.mxu0 0
      %10136 = vmatmul.mubr.bf16.gmra.mxu0 %v10013
      %v10137 = vpop.f32.mrf.mxu0
      %v10138 = vadd.f32 0.0, %v10137
      %v10139 = vpop.f32.mrf.mxu0
      %v10140 = vpop.f32.mrf.mxu0
      %v10141 = vadd.f32 0.0, %v10140
      %v10142 = vpop.f32.mrf.mxu0
      %10143 = vmatprep.mubr.bf16.mxu0 0
      %10144 = vmatmul.mubr.bf16.gmra.mxu0 %v10016
      %v10145 = vpop.f32.mrf.mxu0
      %v10146 = vadd.f32 0.0, %v10145
      %v10147 = vpop.f32.mrf.mxu0
      %v10148 = vpop.f32.mrf.mxu0
      %v10149 = vadd.f32 0.0, %v10148
      %v10150 = vpop.f32.mrf.mxu0
      %10151 = vmatprep.mubr.bf16.mxu0 0
      %10152 = vmatmul.mubr.bf16.gmra.mxu0 %v10019
      %v10153 = vpop.f32.mrf.mxu0
      %v10154 = vadd.f32 0.0, %v10153
      %v10155 = vpop.f32.mrf.mxu0
      %v10156 = vpop.f32.mrf.mxu0
      %v10157 = vadd.f32 0.0, %v10156
      %v10158 = vpop.f32.mrf.mxu0
      %10159 = vmatprep.mubr.bf16.mxu0 0
      %10160 = vmatmul.mubr.bf16.gmra.mxu0 %v10022
      %v10161 = vpop.f32.mrf.mxu0
      %v10162 = vadd.f32 0.0, %v10161
      %v10163 = vpop.f32.mrf.mxu0
      %v10164 = vpop.f32.mrf.mxu0
      %v10165 = vadd.f32 0.0, %v10164
      %v10166 = vpop.f32.mrf.mxu0
      %10167 = vmatprep.mubr.bf16.mxu0 0
      %10168 = vmatmul.mubr.bf16.gmra.mxu0 %v10025
      %v10169 = vpop.f32.mrf.mxu0
      %v10170 = vadd.f32 0.0, %v10169
      %v10171 = vpop.f32.mrf.mxu0
      %v10172 = vpop.f32.mrf.mxu0
      %v10173 = vadd.f32 0.0, %v10172
      %v10174 = vpop.f32.mrf.mxu0
      %10175 = vmatprep.mubr.bf16.mxu0 0
      %10176 = vmatmul.mubr.bf16.gmra.mxu0 %v10028
      %v10177 = vpop.f32.mrf.mxu0
      %v10178 = vadd.f32 0.0, %v10177
      %v10179 = vpop.f32.mrf.mxu0
      %v10180 = vpop.f32.mrf.mxu0
      %v10181 = vadd.f32 0.0, %v10180
      %v10182 = vpop.f32.mrf.mxu0
      %10183 = vmatprep.mubr.bf16.mxu0 0
      %10184 = vmatmul.mubr.bf16.gmra.mxu0 %v10031
      %v10185 = vpop.f32.mrf.mxu0
      %v10186 = vadd.f32 0.0, %v10185
      %v10187 = vpop.f32.mrf.mxu0
      %v10188 = vpop.f32.mrf.mxu0
      %v10189 = vadd.f32 0.0, %v10188
      %v10190 = vpop.f32.mrf.mxu0
      %10191 = vmatprep.mubr.bf16.mxu0 0
      %10192 = vmatmul.mubr.bf16.gmra.mxu0 %v10034
      %v10193 = vpop.f32.mrf.mxu0
      %v10194 = vadd.f32 0.0, %v10193
      %v10195 = vpop.f32.mrf.mxu0
      %v10196 = vpop.f32.mrf.mxu0
      %v10197 = vadd.f32 0.0, %v10196
      %v10198 = vpop.f32.mrf.mxu0
      %10199 = vdwg.mxu0
      %v10200 = vadd.f32 %v9842, %v10074
      %v10201 = vadd.f32 %v9843, %v10077
      %v10202 = vadd.f32 %v9844, %v10082
      %v10203 = vadd.f32 %v9845, %v10085
      %v10204 = vadd.f32 %v9846, %v10090
      %v10205 = vadd.f32 %v9847, %v10093
      %v10206 = vadd.f32 %v9848, %v10098
      %v10207 = vadd.f32 %v9849, %v10101
      %v10208 = vadd.f32 %v9850, %v10106
      %v10209 = vadd.f32 %v9851, %v10109
      %v10210 = vadd.f32 %v9852, %v10114
      %v10211 = vadd.f32 %v9853, %v10117
      %v10212 = vadd.f32 %v9854, %v10122
      %v10213 = vadd.f32 %v9855, %v10125
      %v10214 = vadd.f32 %v9856, %v10130
      %v10215 = vadd.f32 %v9857, %v10133
      %v10216 = vadd.f32 %v9858, %v10138
      %v10217 = vadd.f32 %v9859, %v10141
      %v10218 = vadd.f32 %v9860, %v10146
      %v10219 = vadd.f32 %v9861, %v10149
      %v10220 = vadd.f32 %v9862, %v10154
      %v10221 = vadd.f32 %v9863, %v10157
      %v10222 = vadd.f32 %v9864, %v10162
      %v10223 = vadd.f32 %v9865, %v10165
      %v10224 = vadd.f32 %v9866, %v10170
      %v10225 = vadd.f32 %v9867, %v10173
      %v10226 = vadd.f32 %v9868, %v10178
      %v10227 = vadd.f32 %v9869, %v10181
      %v10228 = vadd.f32 %v9870, %v10186
      %v10229 = vadd.f32 %v9871, %v10189
      %v10230 = vadd.f32 %v9872, %v10194
      %v10231 = vadd.f32 %v9873, %v10197
      %v10232 = vld [vmem:[%s796] sm:$0xf]
      %v10233 = vld [vmem:[%s796 + $0x4] sm:$0xf]
      %v10234 = vld [vmem:[%s796 + $0x8] sm:$0x1]
      %v10235 = vld [vmem:[%s796 + $0xc] sm:$0xf]
      %v10236 = vld [vmem:[%s796 + $0x10] sm:$0xf]
      %v10237 = vld [vmem:[%s796 + $0x14] sm:$0x1]
      %v10238 = vld [vmem:[%s796 + $0x18] sm:$0xf]
      %v10239 = vld [vmem:[%s796 + $0x1c] sm:$0xf]
      %v10240 = vld [vmem:[%s796 + $0x20] sm:$0x1]
      %v10241 = vld [vmem:[%s796 + $0x24] sm:$0xf]
      %v10242 = vld [vmem:[%s796 + $0x28] sm:$0xf]
      %v10243 = vld [vmem:[%s796 + $0x2c] sm:$0x1]
      %v10244 = vld [vmem:[%s796 + $0x30] sm:$0xf]
      %v10245 = vld [vmem:[%s796 + $0x34] sm:$0xf]
      %v10246 = vld [vmem:[%s796 + $0x38] sm:$0x1]
      %v10247 = vld [vmem:[%s796 + $0x3c] sm:$0xf]
      %v10248 = vld [vmem:[%s796 + $0x40] sm:$0xf]
      %v10249 = vld [vmem:[%s796 + $0x44] sm:$0x1]
      %v10250 = vld [vmem:[%s796 + $0x48] sm:$0xf]
      %v10251 = vld [vmem:[%s796 + $0x4c] sm:$0xf]
      %v10252 = vld [vmem:[%s796 + $0x50] sm:$0x1]
      %v10253 = vld [vmem:[%s796 + $0x54] sm:$0xf]
      %v10254 = vld [vmem:[%s796 + $0x58] sm:$0xf]
      %v10255 = vld [vmem:[%s796 + $0x5c] sm:$0x1]
      %v10256 = vld [vmem:[%s796 + $0x60] sm:$0xf]
      %v10257 = vld [vmem:[%s796 + $0x64] sm:$0xf]
      %v10258 = vld [vmem:[%s796 + $0x68] sm:$0x1]
      %v10259 = vld [vmem:[%s796 + $0x6c] sm:$0xf]
      %v10260 = vld [vmem:[%s796 + $0x70] sm:$0xf]
      %v10261 = vld [vmem:[%s796 + $0x74] sm:$0x1]
      %v10262 = vld [vmem:[%s796 + $0x78] sm:$0xf]
      %v10263 = vld [vmem:[%s796 + $0x7c] sm:$0xf]
      %v10264 = vld [vmem:[%s796 + $0x80] sm:$0x1]
      %v10265 = vld [vmem:[%s796 + $0x84] sm:$0xf]
      %v10266 = vld [vmem:[%s796 + $0x88] sm:$0xf]
      %v10267 = vld [vmem:[%s796 + $0x8c] sm:$0x1]
      %v10268 = vld [vmem:[%s796 + $0x90] sm:$0xf]
      %v10269 = vld [vmem:[%s796 + $0x94] sm:$0xf]
      %v10270 = vld [vmem:[%s796 + $0x98] sm:$0x1]
      %v10271 = vld [vmem:[%s796 + $0x9c] sm:$0xf]
      %v10272 = vld [vmem:[%s796 + $0xa0] sm:$0xf]
      %v10273 = vld [vmem:[%s796 + $0xa4] sm:$0x1]
      %v10274 = vld [vmem:[%s796 + $0xa8] sm:$0xf]
      %v10275 = vld [vmem:[%s796 + $0xac] sm:$0xf]
      %v10276 = vld [vmem:[%s796 + $0xb0] sm:$0x1]
      %v10277 = vld [vmem:[%s796 + $0xb4] sm:$0xf]
      %v10278 = vld [vmem:[%s796 + $0xb8] sm:$0xf]
      %v10279 = vld [vmem:[%s796 + $0xbc] sm:$0x1]
      %v10281 = vshrl.u32 %v10232, 16
      %v10283 = vrot.slane %v10281, 4
      %v10284 = vshll.u32 %v10232, 16
      %v10286 = vrot.slane %v10284, 5
      %v10287 = vor.u32 %v10283, %v10286
      %v10288 = vrot.slane %v10287, 4
      %v10290 = vshll.u32 %v10233, 16
      %v10292 = vrot.slane %v10290, 5
      %v10293 = vsel %vm1159, %v10288, %v10292
      %v10294 = vshrl.u32 %v10233, 16
      %v10296 = vrot.slane %v10294, 4
      %v10297 = vor.u32 %v10296, %v10292
      %v10298 = vrot.slane %v10297, 4
      %v10300 = vshll.u32 %v10234, 16
      %v10302 = vrot.slane %v10300, 5
      %v10303 = vsel %vm1159, %v10298, %v10302
      %v10305 = vshrl.u32 %v10235, 16
      %v10307 = vrot.slane %v10305, 4
      %v10308 = vshll.u32 %v10235, 16
      %v10310 = vrot.slane %v10308, 5
      %v10311 = vor.u32 %v10307, %v10310
      %v10312 = vrot.slane %v10311, 4
      %v10314 = vshll.u32 %v10236, 16
      %v10316 = vrot.slane %v10314, 5
      %v10317 = vsel %vm1159, %v10312, %v10316
      %v10318 = vshrl.u32 %v10236, 16
      %v10320 = vrot.slane %v10318, 4
      %v10321 = vor.u32 %v10320, %v10316
      %v10322 = vrot.slane %v10321, 4
      %v10324 = vshll.u32 %v10237, 16
      %v10326 = vrot.slane %v10324, 5
      %v10327 = vsel %vm1159, %v10322, %v10326
      %v10329 = vshrl.u32 %v10238, 16
      %v10331 = vrot.slane %v10329, 4
      %v10332 = vshll.u32 %v10238, 16
      %v10334 = vrot.slane %v10332, 5
      %v10335 = vor.u32 %v10331, %v10334
      %v10336 = vrot.slane %v10335, 4
      %v10338 = vshll.u32 %v10239, 16
      %v10340 = vrot.slane %v10338, 5
      %v10341 = vsel %vm1159, %v10336, %v10340
      %v10342 = vshrl.u32 %v10239, 16
      %v10344 = vrot.slane %v10342, 4
      %v10345 = vor.u32 %v10344, %v10340
      %v10346 = vrot.slane %v10345, 4
      %v10348 = vshll.u32 %v10240, 16
      %v10350 = vrot.slane %v10348, 5
      %v10351 = vsel %vm1159, %v10346, %v10350
      %v10353 = vshrl.u32 %v10241, 16
      %v10355 = vrot.slane %v10353, 4
      %v10356 = vshll.u32 %v10241, 16
      %v10358 = vrot.slane %v10356, 5
      %v10359 = vor.u32 %v10355, %v10358
      %v10360 = vrot.slane %v10359, 4
      %v10362 = vshll.u32 %v10242, 16
      %v10364 = vrot.slane %v10362, 5
      %v10365 = vsel %vm1159, %v10360, %v10364
      %v10366 = vshrl.u32 %v10242, 16
      %v10368 = vrot.slane %v10366, 4
      %v10369 = vor.u32 %v10368, %v10364
      %v10370 = vrot.slane %v10369, 4
      %v10372 = vshll.u32 %v10243, 16
      %v10374 = vrot.slane %v10372, 5
      %v10375 = vsel %vm1159, %v10370, %v10374
      %v10377 = vshrl.u32 %v10244, 16
      %v10379 = vrot.slane %v10377, 4
      %v10380 = vshll.u32 %v10244, 16
      %v10382 = vrot.slane %v10380, 5
      %v10383 = vor.u32 %v10379, %v10382
      %v10384 = vrot.slane %v10383, 4
      %v10386 = vshll.u32 %v10245, 16
      %v10388 = vrot.slane %v10386, 5
      %v10389 = vsel %vm1159, %v10384, %v10388
      %v10390 = vshrl.u32 %v10245, 16
      %v10392 = vrot.slane %v10390, 4
      %v10393 = vor.u32 %v10392, %v10388
      %v10394 = vrot.slane %v10393, 4
      %v10396 = vshll.u32 %v10246, 16
      %v10398 = vrot.slane %v10396, 5
      %v10399 = vsel %vm1159, %v10394, %v10398
      %v10401 = vshrl.u32 %v10247, 16
      %v10403 = vrot.slane %v10401, 4
      %v10404 = vshll.u32 %v10247, 16
      %v10406 = vrot.slane %v10404, 5
      %v10407 = vor.u32 %v10403, %v10406
      %v10408 = vrot.slane %v10407, 4
      %v10410 = vshll.u32 %v10248, 16
      %v10412 = vrot.slane %v10410, 5
      %v10413 = vsel %vm1159, %v10408, %v10412
      %v10414 = vshrl.u32 %v10248, 16
      %v10416 = vrot.slane %v10414, 4
      %v10417 = vor.u32 %v10416, %v10412
      %v10418 = vrot.slane %v10417, 4
      %v10420 = vshll.u32 %v10249, 16
      %v10422 = vrot.slane %v10420, 5
      %v10423 = vsel %vm1159, %v10418, %v10422
      %v10425 = vshrl.u32 %v10250, 16
      %v10427 = vrot.slane %v10425, 4
      %v10428 = vshll.u32 %v10250, 16
      %v10430 = vrot.slane %v10428, 5
      %v10431 = vor.u32 %v10427, %v10430
      %v10432 = vrot.slane %v10431, 4
      %v10434 = vshll.u32 %v10251, 16
      %v10436 = vrot.slane %v10434, 5
      %v10437 = vsel %vm1159, %v10432, %v10436
      %v10438 = vshrl.u32 %v10251, 16
      %v10440 = vrot.slane %v10438, 4
      %v10441 = vor.u32 %v10440, %v10436
      %v10442 = vrot.slane %v10441, 4
      %v10444 = vshll.u32 %v10252, 16
      %v10446 = vrot.slane %v10444, 5
      %v10447 = vsel %vm1159, %v10442, %v10446
      %v10449 = vshrl.u32 %v10253, 16
      %v10451 = vrot.slane %v10449, 4
      %v10452 = vshll.u32 %v10253, 16
      %v10454 = vrot.slane %v10452, 5
      %v10455 = vor.u32 %v10451, %v10454
      %v10456 = vrot.slane %v10455, 4
      %v10458 = vshll.u32 %v10254, 16
      %v10460 = vrot.slane %v10458, 5
      %v10461 = vsel %vm1159, %v10456, %v10460
      %v10462 = vshrl.u32 %v10254, 16
      %v10464 = vrot.slane %v10462, 4
      %v10465 = vor.u32 %v10464, %v10460
      %v10466 = vrot.slane %v10465, 4
      %v10468 = vshll.u32 %v10255, 16
      %v10470 = vrot.slane %v10468, 5
      %v10471 = vsel %vm1159, %v10466, %v10470
      %v10473 = vshrl.u32 %v10256, 16
      %v10475 = vrot.slane %v10473, 4
      %v10476 = vshll.u32 %v10256, 16
      %v10478 = vrot.slane %v10476, 5
      %v10479 = vor.u32 %v10475, %v10478
      %v10480 = vrot.slane %v10479, 4
      %v10482 = vshll.u32 %v10257, 16
      %v10484 = vrot.slane %v10482, 5
      %v10485 = vsel %vm1159, %v10480, %v10484
      %v10486 = vshrl.u32 %v10257, 16
      %v10488 = vrot.slane %v10486, 4
      %v10489 = vor.u32 %v10488, %v10484
      %v10490 = vrot.slane %v10489, 4
      %v10492 = vshll.u32 %v10258, 16
      %v10494 = vrot.slane %v10492, 5
      %v10495 = vsel %vm1159, %v10490, %v10494
      %v10497 = vshrl.u32 %v10259, 16
      %v10499 = vrot.slane %v10497, 4
      %v10500 = vshll.u32 %v10259, 16
      %v10502 = vrot.slane %v10500, 5
      %v10503 = vor.u32 %v10499, %v10502
      %v10504 = vrot.slane %v10503, 4
      %v10506 = vshll.u32 %v10260, 16
      %v10508 = vrot.slane %v10506, 5
      %v10509 = vsel %vm1159, %v10504, %v10508
      %v10510 = vshrl.u32 %v10260, 16
      %v10512 = vrot.slane %v10510, 4
      %v10513 = vor.u32 %v10512, %v10508
      %v10514 = vrot.slane %v10513, 4
      %v10516 = vshll.u32 %v10261, 16
      %v10518 = vrot.slane %v10516, 5
      %v10519 = vsel %vm1159, %v10514, %v10518
      %v10521 = vshrl.u32 %v10262, 16
      %v10523 = vrot.slane %v10521, 4
      %v10524 = vshll.u32 %v10262, 16
      %v10526 = vrot.slane %v10524, 5
      %v10527 = vor.u32 %v10523, %v10526
      %v10528 = vrot.slane %v10527, 4
      %v10530 = vshll.u32 %v10263, 16
      %v10532 = vrot.slane %v10530, 5
      %v10533 = vsel %vm1159, %v10528, %v10532
      %v10534 = vshrl.u32 %v10263, 16
      %v10536 = vrot.slane %v10534, 4
      %v10537 = vor.u32 %v10536, %v10532
      %v10538 = vrot.slane %v10537, 4
      %v10540 = vshll.u32 %v10264, 16
      %v10542 = vrot.slane %v10540, 5
      %v10543 = vsel %vm1159, %v10538, %v10542
      %v10545 = vshrl.u32 %v10265, 16
      %v10547 = vrot.slane %v10545, 4
      %v10548 = vshll.u32 %v10265, 16
      %v10550 = vrot.slane %v10548, 5
      %v10551 = vor.u32 %v10547, %v10550
      %v10552 = vrot.slane %v10551, 4
      %v10554 = vshll.u32 %v10266, 16
      %v10556 = vrot.slane %v10554, 5
      %v10557 = vsel %vm1159, %v10552, %v10556
      %v10558 = vshrl.u32 %v10266, 16
      %v10560 = vrot.slane %v10558, 4
      %v10561 = vor.u32 %v10560, %v10556
      %v10562 = vrot.slane %v10561, 4
      %v10564 = vshll.u32 %v10267, 16
      %v10566 = vrot.slane %v10564, 5
      %v10567 = vsel %vm1159, %v10562, %v10566
      %v10569 = vshrl.u32 %v10268, 16
      %v10571 = vrot.slane %v10569, 4
      %v10572 = vshll.u32 %v10268, 16
      %v10574 = vrot.slane %v10572, 5
      %v10575 = vor.u32 %v10571, %v10574
      %v10576 = vrot.slane %v10575, 4
      %v10578 = vshll.u32 %v10269, 16
      %v10580 = vrot.slane %v10578, 5
      %v10581 = vsel %vm1159, %v10576, %v10580
      %v10582 = vshrl.u32 %v10269, 16
      %v10584 = vrot.slane %v10582, 4
      %v10585 = vor.u32 %v10584, %v10580
      %v10586 = vrot.slane %v10585, 4
      %v10588 = vshll.u32 %v10270, 16
      %v10590 = vrot.slane %v10588, 5
      %v10591 = vsel %vm1159, %v10586, %v10590
      %v10593 = vshrl.u32 %v10271, 16
      %v10595 = vrot.slane %v10593, 4
      %v10596 = vshll.u32 %v10271, 16
      %v10598 = vrot.slane %v10596, 5
      %v10599 = vor.u32 %v10595, %v10598
      %v10600 = vrot.slane %v10599, 4
      %v10602 = vshll.u32 %v10272, 16
      %v10604 = vrot.slane %v10602, 5
      %v10605 = vsel %vm1159, %v10600, %v10604
      %v10606 = vshrl.u32 %v10272, 16
      %v10608 = vrot.slane %v10606, 4
      %v10609 = vor.u32 %v10608, %v10604
      %v10610 = vrot.slane %v10609, 4
      %v10612 = vshll.u32 %v10273, 16
      %v10614 = vrot.slane %v10612, 5
      %v10615 = vsel %vm1159, %v10610, %v10614
      %v10617 = vshrl.u32 %v10274, 16
      %v10619 = vrot.slane %v10617, 4
      %v10620 = vshll.u32 %v10274, 16
      %v10622 = vrot.slane %v10620, 5
      %v10623 = vor.u32 %v10619, %v10622
      %v10624 = vrot.slane %v10623, 4
      %v10626 = vshll.u32 %v10275, 16
      %v10628 = vrot.slane %v10626, 5
      %v10629 = vsel %vm1159, %v10624, %v10628
      %v10630 = vshrl.u32 %v10275, 16
      %v10632 = vrot.slane %v10630, 4
      %v10633 = vor.u32 %v10632, %v10628
      %v10634 = vrot.slane %v10633, 4
      %v10636 = vshll.u32 %v10276, 16
      %v10638 = vrot.slane %v10636, 5
      %v10639 = vsel %vm1159, %v10634, %v10638
      %v10641 = vshrl.u32 %v10277, 16
      %v10643 = vrot.slane %v10641, 4
      %v10644 = vshll.u32 %v10277, 16
      %v10646 = vrot.slane %v10644, 5
      %v10647 = vor.u32 %v10643, %v10646
      %v10648 = vrot.slane %v10647, 4
      %v10650 = vshll.u32 %v10278, 16
      %v10652 = vrot.slane %v10650, 5
      %v10653 = vsel %vm1159, %v10648, %v10652
      %v10654 = vshrl.u32 %v10278, 16
      %v10656 = vrot.slane %v10654, 4
      %v10657 = vor.u32 %v10656, %v10652
      %v10658 = vrot.slane %v10657, 4
      %v10660 = vshll.u32 %v10279, 16
      %v10662 = vrot.slane %v10660, 5
      %v10663 = vsel %vm1159, %v10658, %v10662
      %s10664 = scalar_lea.vmem %s3, 14
      %v10665 = vld [vmem:[%s10664] sm:$0x3]
      %v10666 = vunpack.c.l.b16 %v10293
      %v10667 = vunpack.c.l.b16 %v10303
      %v10668 = vunpack.c.l.b16 %v10317
      %v10669 = vunpack.c.l.b16 %v10327
      %v10670 = vunpack.c.l.b16 %v10341
      %v10671 = vunpack.c.l.b16 %v10351
      %v10672 = vunpack.c.l.b16 %v10365
      %v10673 = vunpack.c.l.b16 %v10375
      %v10674 = vunpack.c.l.b16 %v10389
      %v10675 = vunpack.c.l.b16 %v10399
      %v10676 = vunpack.c.l.b16 %v10413
      %v10677 = vunpack.c.l.b16 %v10423
      %v10678 = vunpack.c.l.b16 %v10437
      %v10679 = vunpack.c.l.b16 %v10447
      %v10680 = vunpack.c.l.b16 %v10461
      %v10681 = vunpack.c.l.b16 %v10471
      %v10682 = vunpack.c.l.b16 %v10485
      %v10683 = vunpack.c.l.b16 %v10495
      %v10684 = vunpack.c.l.b16 %v10509
      %v10685 = vunpack.c.l.b16 %v10519
      %v10686 = vunpack.c.l.b16 %v10533
      %v10687 = vunpack.c.l.b16 %v10543
      %v10688 = vunpack.c.l.b16 %v10557
      %v10689 = vunpack.c.l.b16 %v10567
      %v10690 = vunpack.c.l.b16 %v10581
      %v10691 = vunpack.c.l.b16 %v10591
      %v10692 = vunpack.c.l.b16 %v10605
      %v10693 = vunpack.c.l.b16 %v10615
      %v10694 = vunpack.c.l.b16 %v10629
      %v10695 = vunpack.c.l.b16 %v10639
      %v10696 = vunpack.c.l.b16 %v10653
      %v10697 = vunpack.c.l.b16 %v10663
      %v10698 = vpack.c.b16 %v10667, %v10666
      %v10699 = vpack.c.b16 %v10669, %v10668
      %v10700 = vpack.c.b16 %v10671, %v10670
      %v10701 = vpack.c.b16 %v10673, %v10672
      %v10702 = vpack.c.b16 %v10675, %v10674
      %v10703 = vpack.c.b16 %v10677, %v10676
      %v10704 = vpack.c.b16 %v10679, %v10678
      %v10705 = vpack.c.b16 %v10681, %v10680
      %v10706 = vpack.c.b16 %v10683, %v10682
      %v10707 = vpack.c.b16 %v10685, %v10684
      %v10708 = vpack.c.b16 %v10687, %v10686
      %v10709 = vpack.c.b16 %v10689, %v10688
      %v10710 = vpack.c.b16 %v10691, %v10690
      %v10711 = vpack.c.b16 %v10693, %v10692
      %v10712 = vpack.c.b16 %v10695, %v10694
      %v10713 = vpack.c.b16 %v10697, %v10696
      %v10715 = vsel %vm1594, %v10698, 0
      %v10718 = vsel %vm1594, %v10699, 0
      %v10721 = vsel %vm1594, %v10700, 0
      %v10724 = vsel %vm1594, %v10701, 0
      %v10727 = vsel %vm1594, %v10702, 0
      %v10730 = vsel %vm1594, %v10703, 0
      %v10733 = vsel %vm1594, %v10704, 0
      %v10736 = vsel %vm1594, %v10705, 0
      %v10739 = vsel %vm1594, %v10706, 0
      %v10742 = vsel %vm1594, %v10707, 0
      %v10745 = vsel %vm1594, %v10708, 0
      %v10748 = vsel %vm1594, %v10709, 0
      %v10751 = vsel %vm1594, %v10710, 0
      %v10754 = vsel %vm1594, %v10711, 0
      %v10757 = vsel %vm1594, %v10712, 0
      %v10760 = vsel %vm1594, %v10713, 0
      %v10763 = vsel %vm1643, %v10665, 0
      %10765 = vmatprep.subr.bf16.mxu0 0
      %10766 = vmatpush1.bf16.msra.mxu0 0
      %10767 = vmatprep.subr.bf16.mxu0 0
      %10768 = vmatpush1.bf16.msra.mxu0 0
      %10769 = vmatprep.subr.bf16.mxu0 0
      %10770 = vmatpush1.bf16.msra.mxu0 0
      %10771 = vmatprep.subr.bf16.mxu0 0
      %10772 = vmatpush1.bf16.msra.mxu0 0
      %10773 = vmatprep.subr.bf16.mxu0 0
      %10774 = vmatpush1.bf16.msra.mxu0 0
      %10775 = vmatprep.subr.bf16.mxu0 0
      %10776 = vmatpush1.bf16.msra.mxu0 0
      %10777 = vmatprep.subr.bf16.mxu0 0
      %10778 = vmatpush1.bf16.msra.mxu0 0
      %10779 = vmatprep.subr.bf16.mxu0 0
      %10780 = vmatpush1.bf16.msra.mxu0 %v10763
      %10781 = vmatprep.subr.bf16.mxu0 0
      %10782 = vmatpush2.bf16.msra.mxu0 0
      %10783 = vmatprep.subr.bf16.mxu0 0
      %10784 = vmatpush2.bf16.msra.mxu0 0
      %10785 = vmatprep.subr.bf16.mxu0 0
      %10786 = vmatpush2.bf16.msra.mxu0 0
      %10787 = vmatprep.subr.bf16.mxu0 0
      %10788 = vmatpush2.bf16.msra.mxu0 0
      %10789 = vmatprep.subr.bf16.mxu0 0
      %10790 = vmatpush2.bf16.msra.mxu0 0
      %10791 = vmatprep.subr.bf16.mxu0 0
      %10792 = vmatpush2.bf16.msra.mxu0 0
      %10793 = vmatprep.subr.bf16.mxu0 0
      %10794 = vmatpush2.bf16.msra.mxu0 0
      %10795 = vmatprep.subr.bf16.mxu0 0
      %10796 = vmatpush2.bf16.msra.mxu0 0
      %10797 = vmatprep.mubr.bf16.mxu0 0
      %10798 = vmatmul.mubr.bf16.gmra.mxu0 %v10715
      %v10799 = vpop.f32.mrf.mxu0
      %v10800 = vadd.f32 0.0, %v10799
      %v10801 = vpop.f32.mrf.mxu0
      %v10802 = vpop.f32.mrf.mxu0
      %v10803 = vadd.f32 0.0, %v10802
      %v10804 = vpop.f32.mrf.mxu0
      %10805 = vmatprep.mubr.bf16.mxu0 0
      %10806 = vmatmul.mubr.bf16.gmra.mxu0 %v10718
      %v10807 = vpop.f32.mrf.mxu0
      %v10808 = vadd.f32 0.0, %v10807
      %v10809 = vpop.f32.mrf.mxu0
      %v10810 = vpop.f32.mrf.mxu0
      %v10811 = vadd.f32 0.0, %v10810
      %v10812 = vpop.f32.mrf.mxu0
      %10813 = vmatprep.mubr.bf16.mxu0 0
      %10814 = vmatmul.mubr.bf16.gmra.mxu0 %v10721
      %v10815 = vpop.f32.mrf.mxu0
      %v10816 = vadd.f32 0.0, %v10815
      %v10817 = vpop.f32.mrf.mxu0
      %v10818 = vpop.f32.mrf.mxu0
      %v10819 = vadd.f32 0.0, %v10818
      %v10820 = vpop.f32.mrf.mxu0
      %10821 = vmatprep.mubr.bf16.mxu0 0
      %10822 = vmatmul.mubr.bf16.gmra.mxu0 %v10724
      %v10823 = vpop.f32.mrf.mxu0
      %v10824 = vadd.f32 0.0, %v10823
      %v10825 = vpop.f32.mrf.mxu0
      %v10826 = vpop.f32.mrf.mxu0
      %v10827 = vadd.f32 0.0, %v10826
      %v10828 = vpop.f32.mrf.mxu0
      %10829 = vmatprep.mubr.bf16.mxu0 0
      %10830 = vmatmul.mubr.bf16.gmra.mxu0 %v10727
      %v10831 = vpop.f32.mrf.mxu0
      %v10832 = vadd.f32 0.0, %v10831
      %v10833 = vpop.f32.mrf.mxu0
      %v10834 = vpop.f32.mrf.mxu0
      %v10835 = vadd.f32 0.0, %v10834
      %v10836 = vpop.f32.mrf.mxu0
      %10837 = vmatprep.mubr.bf16.mxu0 0
      %10838 = vmatmul.mubr.bf16.gmra.mxu0 %v10730
      %v10839 = vpop.f32.mrf.mxu0
      %v10840 = vadd.f32 0.0, %v10839
      %v10841 = vpop.f32.mrf.mxu0
      %v10842 = vpop.f32.mrf.mxu0
      %v10843 = vadd.f32 0.0, %v10842
      %v10844 = vpop.f32.mrf.mxu0
      %10845 = vmatprep.mubr.bf16.mxu0 0
      %10846 = vmatmul.mubr.bf16.gmra.mxu0 %v10733
      %v10847 = vpop.f32.mrf.mxu0
      %v10848 = vadd.f32 0.0, %v10847
      %v10849 = vpop.f32.mrf.mxu0
      %v10850 = vpop.f32.mrf.mxu0
      %v10851 = vadd.f32 0.0, %v10850
      %v10852 = vpop.f32.mrf.mxu0
      %10853 = vmatprep.mubr.bf16.mxu0 0
      %10854 = vmatmul.mubr.bf16.gmra.mxu0 %v10736
      %v10855 = vpop.f32.mrf.mxu0
      %v10856 = vadd.f32 0.0, %v10855
      %v10857 = vpop.f32.mrf.mxu0
      %v10858 = vpop.f32.mrf.mxu0
      %v10859 = vadd.f32 0.0, %v10858
      %v10860 = vpop.f32.mrf.mxu0
      %10861 = vmatprep.mubr.bf16.mxu0 0
      %10862 = vmatmul.mubr.bf16.gmra.mxu0 %v10739
      %v10863 = vpop.f32.mrf.mxu0
      %v10864 = vadd.f32 0.0, %v10863
      %v10865 = vpop.f32.mrf.mxu0
      %v10866 = vpop.f32.mrf.mxu0
      %v10867 = vadd.f32 0.0, %v10866
      %v10868 = vpop.f32.mrf.mxu0
      %10869 = vmatprep.mubr.bf16.mxu0 0
      %10870 = vmatmul.mubr.bf16.gmra.mxu0 %v10742
      %v10871 = vpop.f32.mrf.mxu0
      %v10872 = vadd.f32 0.0, %v10871
      %v10873 = vpop.f32.mrf.mxu0
      %v10874 = vpop.f32.mrf.mxu0
      %v10875 = vadd.f32 0.0, %v10874
      %v10876 = vpop.f32.mrf.mxu0
      %10877 = vmatprep.mubr.bf16.mxu0 0
      %10878 = vmatmul.mubr.bf16.gmra.mxu0 %v10745
      %v10879 = vpop.f32.mrf.mxu0
      %v10880 = vadd.f32 0.0, %v10879
      %v10881 = vpop.f32.mrf.mxu0
      %v10882 = vpop.f32.mrf.mxu0
      %v10883 = vadd.f32 0.0, %v10882
      %v10884 = vpop.f32.mrf.mxu0
      %10885 = vmatprep.mubr.bf16.mxu0 0
      %10886 = vmatmul.mubr.bf16.gmra.mxu0 %v10748
      %v10887 = vpop.f32.mrf.mxu0
      %v10888 = vadd.f32 0.0, %v10887
      %v10889 = vpop.f32.mrf.mxu0
      %v10890 = vpop.f32.mrf.mxu0
      %v10891 = vadd.f32 0.0, %v10890
      %v10892 = vpop.f32.mrf.mxu0
      %10893 = vmatprep.mubr.bf16.mxu0 0
      %10894 = vmatmul.mubr.bf16.gmra.mxu0 %v10751
      %v10895 = vpop.f32.mrf.mxu0
      %v10896 = vadd.f32 0.0, %v10895
      %v10897 = vpop.f32.mrf.mxu0
      %v10898 = vpop.f32.mrf.mxu0
      %v10899 = vadd.f32 0.0, %v10898
      %v10900 = vpop.f32.mrf.mxu0
      %10901 = vmatprep.mubr.bf16.mxu0 0
      %10902 = vmatmul.mubr.bf16.gmra.mxu0 %v10754
      %v10903 = vpop.f32.mrf.mxu0
      %v10904 = vadd.f32 0.0, %v10903
      %v10905 = vpop.f32.mrf.mxu0
      %v10906 = vpop.f32.mrf.mxu0
      %v10907 = vadd.f32 0.0, %v10906
      %v10908 = vpop.f32.mrf.mxu0
      %10909 = vmatprep.mubr.bf16.mxu0 0
      %10910 = vmatmul.mubr.bf16.gmra.mxu0 %v10757
      %v10911 = vpop.f32.mrf.mxu0
      %v10912 = vadd.f32 0.0, %v10911
      %v10913 = vpop.f32.mrf.mxu0
      %v10914 = vpop.f32.mrf.mxu0
      %v10915 = vadd.f32 0.0, %v10914
      %v10916 = vpop.f32.mrf.mxu0
      %10917 = vmatprep.mubr.bf16.mxu0 0
      %10918 = vmatmul.mubr.bf16.gmra.mxu0 %v10760
      %v10919 = vpop.f32.mrf.mxu0
      %v10920 = vadd.f32 0.0, %v10919
      %v10921 = vpop.f32.mrf.mxu0
      %v10922 = vpop.f32.mrf.mxu0
      %v10923 = vadd.f32 0.0, %v10922
      %v10924 = vpop.f32.mrf.mxu0
      %10925 = vdwg.mxu0
      %v10926 = vadd.f32 %v10200, %v10800
      %v10927 = vadd.f32 %v10201, %v10803
      %v10928 = vadd.f32 %v10202, %v10808
      %v10929 = vadd.f32 %v10203, %v10811
      %v10930 = vadd.f32 %v10204, %v10816
      %v10931 = vadd.f32 %v10205, %v10819
      %v10932 = vadd.f32 %v10206, %v10824
      %v10933 = vadd.f32 %v10207, %v10827
      %v10934 = vadd.f32 %v10208, %v10832
      %v10935 = vadd.f32 %v10209, %v10835
      %v10936 = vadd.f32 %v10210, %v10840
      %v10937 = vadd.f32 %v10211, %v10843
      %v10938 = vadd.f32 %v10212, %v10848
      %v10939 = vadd.f32 %v10213, %v10851
      %v10940 = vadd.f32 %v10214, %v10856
      %v10941 = vadd.f32 %v10215, %v10859
      %v10942 = vadd.f32 %v10216, %v10864
      %v10943 = vadd.f32 %v10217, %v10867
      %v10944 = vadd.f32 %v10218, %v10872
      %v10945 = vadd.f32 %v10219, %v10875
      %v10946 = vadd.f32 %v10220, %v10880
      %v10947 = vadd.f32 %v10221, %v10883
      %v10948 = vadd.f32 %v10222, %v10888
      %v10949 = vadd.f32 %v10223, %v10891
      %v10950 = vadd.f32 %v10224, %v10896
      %v10951 = vadd.f32 %v10225, %v10899
      %v10952 = vadd.f32 %v10226, %v10904
      %v10953 = vadd.f32 %v10227, %v10907
      %v10954 = vadd.f32 %v10228, %v10912
      %v10955 = vadd.f32 %v10229, %v10915
      %v10956 = vadd.f32 %v10230, %v10920
      %v10957 = vadd.f32 %v10231, %v10923
      %v10958 = vld [vmem:[%s796] sm:$0xe]
      %v10959 = vld [vmem:[%s796 + $0xc] sm:$0xe]
      %v10960 = vld [vmem:[%s796 + $0x18] sm:$0xe]
      %v10961 = vld [vmem:[%s796 + $0x24] sm:$0xe]
      %v10962 = vld [vmem:[%s796 + $0x30] sm:$0xe]
      %v10963 = vld [vmem:[%s796 + $0x3c] sm:$0xe]
      %v10964 = vld [vmem:[%s796 + $0x48] sm:$0xe]
      %v10965 = vld [vmem:[%s796 + $0x54] sm:$0xe]
      %v10966 = vld [vmem:[%s796 + $0x60] sm:$0xe]
      %v10967 = vld [vmem:[%s796 + $0x6c] sm:$0xe]
      %v10968 = vld [vmem:[%s796 + $0x78] sm:$0xe]
      %v10969 = vld [vmem:[%s796 + $0x84] sm:$0xe]
      %v10970 = vld [vmem:[%s796 + $0x90] sm:$0xe]
      %v10971 = vld [vmem:[%s796 + $0x9c] sm:$0xe]
      %v10972 = vld [vmem:[%s796 + $0xa8] sm:$0xe]
      %v10973 = vld [vmem:[%s796 + $0xb4] sm:$0xe]
      %v11022 = vrot.slane %v10958, 5
      %v11023 = vrot.slane %v11022, 4
      %v11024 = vrot.slane %v10233, 5
      %v11025 = vsel %vm2150, %v11023, %v11024
      %v11026 = vrot.slane %v11024, 4
      %v11027 = vrot.slane %v10234, 5
      %v11028 = vsel %vm2150, %v11026, %v11027
      %v11029 = vrot.slane %v10959, 5
      %v11030 = vrot.slane %v11029, 4
      %v11031 = vrot.slane %v10236, 5
      %v11032 = vsel %vm2150, %v11030, %v11031
      %v11033 = vrot.slane %v11031, 4
      %v11034 = vrot.slane %v10237, 5
      %v11035 = vsel %vm2150, %v11033, %v11034
      %v11036 = vrot.slane %v10960, 5
      %v11037 = vrot.slane %v11036, 4
      %v11038 = vrot.slane %v10239, 5
      %v11039 = vsel %vm2150, %v11037, %v11038
      %v11040 = vrot.slane %v11038, 4
      %v11041 = vrot.slane %v10240, 5
      %v11042 = vsel %vm2150, %v11040, %v11041
      %v11043 = vrot.slane %v10961, 5
      %v11044 = vrot.slane %v11043, 4
      %v11045 = vrot.slane %v10242, 5
      %v11046 = vsel %vm2150, %v11044, %v11045
      %v11047 = vrot.slane %v11045, 4
      %v11048 = vrot.slane %v10243, 5
      %v11049 = vsel %vm2150, %v11047, %v11048
      %v11050 = vrot.slane %v10962, 5
      %v11051 = vrot.slane %v11050, 4
      %v11052 = vrot.slane %v10245, 5
      %v11053 = vsel %vm2150, %v11051, %v11052
      %v11054 = vrot.slane %v11052, 4
      %v11055 = vrot.slane %v10246, 5
      %v11056 = vsel %vm2150, %v11054, %v11055
      %v11057 = vrot.slane %v10963, 5
      %v11058 = vrot.slane %v11057, 4
      %v11059 = vrot.slane %v10248, 5
      %v11060 = vsel %vm2150, %v11058, %v11059
      %v11061 = vrot.slane %v11059, 4
      %v11062 = vrot.slane %v10249, 5
      %v11063 = vsel %vm2150, %v11061, %v11062
      %v11064 = vrot.slane %v10964, 5
      %v11065 = vrot.slane %v11064, 4
      %v11066 = vrot.slane %v10251, 5
      %v11067 = vsel %vm2150, %v11065, %v11066
      %v11068 = vrot.slane %v11066, 4
      %v11069 = vrot.slane %v10252, 5
      %v11070 = vsel %vm2150, %v11068, %v11069
      %v11071 = vrot.slane %v10965, 5
      %v11072 = vrot.slane %v11071, 4
      %v11073 = vrot.slane %v10254, 5
      %v11074 = vsel %vm2150, %v11072, %v11073
      %v11075 = vrot.slane %v11073, 4
      %v11076 = vrot.slane %v10255, 5
      %v11077 = vsel %vm2150, %v11075, %v11076
      %v11078 = vrot.slane %v10966, 5
      %v11079 = vrot.slane %v11078, 4
      %v11080 = vrot.slane %v10257, 5
      %v11081 = vsel %vm2150, %v11079, %v11080
      %v11082 = vrot.slane %v11080, 4
      %v11083 = vrot.slane %v10258, 5
      %v11084 = vsel %vm2150, %v11082, %v11083
      %v11085 = vrot.slane %v10967, 5
      %v11086 = vrot.slane %v11085, 4
      %v11087 = vrot.slane %v10260, 5
      %v11088 = vsel %vm2150, %v11086, %v11087
      %v11089 = vrot.slane %v11087, 4
      %v11090 = vrot.slane %v10261, 5
      %v11091 = vsel %vm2150, %v11089, %v11090
      %v11092 = vrot.slane %v10968, 5
      %v11093 = vrot.slane %v11092, 4
      %v11094 = vrot.slane %v10263, 5
      %v11095 = vsel %vm2150, %v11093, %v11094
      %v11096 = vrot.slane %v11094, 4
      %v11097 = vrot.slane %v10264, 5
      %v11098 = vsel %vm2150, %v11096, %v11097
      %v11099 = vrot.slane %v10969, 5
      %v11100 = vrot.slane %v11099, 4
      %v11101 = vrot.slane %v10266, 5
      %v11102 = vsel %vm2150, %v11100, %v11101
      %v11103 = vrot.slane %v11101, 4
      %v11104 = vrot.slane %v10267, 5
      %v11105 = vsel %vm2150, %v11103, %v11104
      %v11106 = vrot.slane %v10970, 5
      %v11107 = vrot.slane %v11106, 4
      %v11108 = vrot.slane %v10269, 5
      %v11109 = vsel %vm2150, %v11107, %v11108
      %v11110 = vrot.slane %v11108, 4
      %v11111 = vrot.slane %v10270, 5
      %v11112 = vsel %vm2150, %v11110, %v11111
      %v11113 = vrot.slane %v10971, 5
      %v11114 = vrot.slane %v11113, 4
      %v11115 = vrot.slane %v10272, 5
      %v11116 = vsel %vm2150, %v11114, %v11115
      %v11117 = vrot.slane %v11115, 4
      %v11118 = vrot.slane %v10273, 5
      %v11119 = vsel %vm2150, %v11117, %v11118
      %v11120 = vrot.slane %v10972, 5
      %v11121 = vrot.slane %v11120, 4
      %v11122 = vrot.slane %v10275, 5
      %v11123 = vsel %vm2150, %v11121, %v11122
      %v11124 = vrot.slane %v11122, 4
      %v11125 = vrot.slane %v10276, 5
      %v11126 = vsel %vm2150, %v11124, %v11125
      %v11127 = vrot.slane %v10973, 5
      %v11128 = vrot.slane %v11127, 4
      %v11129 = vrot.slane %v10278, 5
      %v11130 = vsel %vm2150, %v11128, %v11129
      %v11131 = vrot.slane %v11129, 4
      %v11132 = vrot.slane %v10279, 5
      %v11133 = vsel %vm2150, %v11131, %v11132
      %s11134 = scalar_lea.vmem %s3, 16
      %v11135 = vld [vmem:[%s11134] sm:$0x3]
      %v11136 = vunpack.c.l.b16 %v11025
      %v11137 = vunpack.c.l.b16 %v11028
      %v11138 = vunpack.c.l.b16 %v11032
      %v11139 = vunpack.c.l.b16 %v11035
      %v11140 = vunpack.c.l.b16 %v11039
      %v11141 = vunpack.c.l.b16 %v11042
      %v11142 = vunpack.c.l.b16 %v11046
      %v11143 = vunpack.c.l.b16 %v11049
      %v11144 = vunpack.c.l.b16 %v11053
      %v11145 = vunpack.c.l.b16 %v11056
      %v11146 = vunpack.c.l.b16 %v11060
      %v11147 = vunpack.c.l.b16 %v11063
      %v11148 = vunpack.c.l.b16 %v11067
      %v11149 = vunpack.c.l.b16 %v11070
      %v11150 = vunpack.c.l.b16 %v11074
      %v11151 = vunpack.c.l.b16 %v11077
      %v11152 = vunpack.c.l.b16 %v11081
      %v11153 = vunpack.c.l.b16 %v11084
      %v11154 = vunpack.c.l.b16 %v11088
      %v11155 = vunpack.c.l.b16 %v11091
      %v11156 = vunpack.c.l.b16 %v11095
      %v11157 = vunpack.c.l.b16 %v11098
      %v11158 = vunpack.c.l.b16 %v11102
      %v11159 = vunpack.c.l.b16 %v11105
      %v11160 = vunpack.c.l.b16 %v11109
      %v11161 = vunpack.c.l.b16 %v11112
      %v11162 = vunpack.c.l.b16 %v11116
      %v11163 = vunpack.c.l.b16 %v11119
      %v11164 = vunpack.c.l.b16 %v11123
      %v11165 = vunpack.c.l.b16 %v11126
      %v11166 = vunpack.c.l.b16 %v11130
      %v11167 = vunpack.c.l.b16 %v11133
      %v11168 = vpack.c.b16 %v11137, %v11136
      %v11169 = vpack.c.b16 %v11139, %v11138
      %v11170 = vpack.c.b16 %v11141, %v11140
      %v11171 = vpack.c.b16 %v11143, %v11142
      %v11172 = vpack.c.b16 %v11145, %v11144
      %v11173 = vpack.c.b16 %v11147, %v11146
      %v11174 = vpack.c.b16 %v11149, %v11148
      %v11175 = vpack.c.b16 %v11151, %v11150
      %v11176 = vpack.c.b16 %v11153, %v11152
      %v11177 = vpack.c.b16 %v11155, %v11154
      %v11178 = vpack.c.b16 %v11157, %v11156
      %v11179 = vpack.c.b16 %v11159, %v11158
      %v11180 = vpack.c.b16 %v11161, %v11160
      %v11181 = vpack.c.b16 %v11163, %v11162
      %v11182 = vpack.c.b16 %v11165, %v11164
      %v11183 = vpack.c.b16 %v11167, %v11166
      %v11185 = vsel %vm1594, %v11168, 0
      %v11188 = vsel %vm1594, %v11169, 0
      %v11191 = vsel %vm1594, %v11170, 0
      %v11194 = vsel %vm1594, %v11171, 0
      %v11197 = vsel %vm1594, %v11172, 0
      %v11200 = vsel %vm1594, %v11173, 0
      %v11203 = vsel %vm1594, %v11174, 0
      %v11206 = vsel %vm1594, %v11175, 0
      %v11209 = vsel %vm1594, %v11176, 0
      %v11212 = vsel %vm1594, %v11177, 0
      %v11215 = vsel %vm1594, %v11178, 0
      %v11218 = vsel %vm1594, %v11179, 0
      %v11221 = vsel %vm1594, %v11180, 0
      %v11224 = vsel %vm1594, %v11181, 0
      %v11227 = vsel %vm1594, %v11182, 0
      %v11230 = vsel %vm1594, %v11183, 0
      %v11233 = vsel %vm1643, %v11135, 0
      %11235 = vmatprep.subr.bf16.mxu0 0
      %11236 = vmatpush1.bf16.msra.mxu0 0
      %11237 = vmatprep.subr.bf16.mxu0 0
      %11238 = vmatpush1.bf16.msra.mxu0 0
      %11239 = vmatprep.subr.bf16.mxu0 0
      %11240 = vmatpush1.bf16.msra.mxu0 0
      %11241 = vmatprep.subr.bf16.mxu0 0
      %11242 = vmatpush1.bf16.msra.mxu0 0
      %11243 = vmatprep.subr.bf16.mxu0 0
      %11244 = vmatpush1.bf16.msra.mxu0 0
      %11245 = vmatprep.subr.bf16.mxu0 0
      %11246 = vmatpush1.bf16.msra.mxu0 0
      %11247 = vmatprep.subr.bf16.mxu0 0
      %11248 = vmatpush1.bf16.msra.mxu0 0
      %11249 = vmatprep.subr.bf16.mxu0 0
      %11250 = vmatpush1.bf16.msra.mxu0 %v11233
      %11251 = vmatprep.subr.bf16.mxu0 0
      %11252 = vmatpush2.bf16.msra.mxu0 0
      %11253 = vmatprep.subr.bf16.mxu0 0
      %11254 = vmatpush2.bf16.msra.mxu0 0
      %11255 = vmatprep.subr.bf16.mxu0 0
      %11256 = vmatpush2.bf16.msra.mxu0 0
      %11257 = vmatprep.subr.bf16.mxu0 0
      %11258 = vmatpush2.bf16.msra.mxu0 0
      %11259 = vmatprep.subr.bf16.mxu0 0
      %11260 = vmatpush2.bf16.msra.mxu0 0
      %11261 = vmatprep.subr.bf16.mxu0 0
      %11262 = vmatpush2.bf16.msra.mxu0 0
      %11263 = vmatprep.subr.bf16.mxu0 0
      %11264 = vmatpush2.bf16.msra.mxu0 0
      %11265 = vmatprep.subr.bf16.mxu0 0
      %11266 = vmatpush2.bf16.msra.mxu0 0
      %11267 = vmatprep.mubr.bf16.mxu0 0
      %11268 = vmatmul.mubr.bf16.gmra.mxu0 %v11185
      %v11269 = vpop.f32.mrf.mxu0
      %v11270 = vadd.f32 0.0, %v11269
      %v11271 = vpop.f32.mrf.mxu0
      %v11272 = vpop.f32.mrf.mxu0
      %v11273 = vadd.f32 0.0, %v11272
      %v11274 = vpop.f32.mrf.mxu0
      %11275 = vmatprep.mubr.bf16.mxu0 0
      %11276 = vmatmul.mubr.bf16.gmra.mxu0 %v11188
      %v11277 = vpop.f32.mrf.mxu0
      %v11278 = vadd.f32 0.0, %v11277
      %v11279 = vpop.f32.mrf.mxu0
      %v11280 = vpop.f32.mrf.mxu0
      %v11281 = vadd.f32 0.0, %v11280
      %v11282 = vpop.f32.mrf.mxu0
      %11283 = vmatprep.mubr.bf16.mxu0 0
      %11284 = vmatmul.mubr.bf16.gmra.mxu0 %v11191
      %v11285 = vpop.f32.mrf.mxu0
      %v11286 = vadd.f32 0.0, %v11285
      %v11287 = vpop.f32.mrf.mxu0
      %v11288 = vpop.f32.mrf.mxu0
      %v11289 = vadd.f32 0.0, %v11288
      %v11290 = vpop.f32.mrf.mxu0
      %11291 = vmatprep.mubr.bf16.mxu0 0
      %11292 = vmatmul.mubr.bf16.gmra.mxu0 %v11194
      %v11293 = vpop.f32.mrf.mxu0
      %v11294 = vadd.f32 0.0, %v11293
      %v11295 = vpop.f32.mrf.mxu0
      %v11296 = vpop.f32.mrf.mxu0
      %v11297 = vadd.f32 0.0, %v11296
      %v11298 = vpop.f32.mrf.mxu0
      %11299 = vmatprep.mubr.bf16.mxu0 0
      %11300 = vmatmul.mubr.bf16.gmra.mxu0 %v11197
      %v11301 = vpop.f32.mrf.mxu0
      %v11302 = vadd.f32 0.0, %v11301
      %v11303 = vpop.f32.mrf.mxu0
      %v11304 = vpop.f32.mrf.mxu0
      %v11305 = vadd.f32 0.0, %v11304
      %v11306 = vpop.f32.mrf.mxu0
      %11307 = vmatprep.mubr.bf16.mxu0 0
      %11308 = vmatmul.mubr.bf16.gmra.mxu0 %v11200
      %v11309 = vpop.f32.mrf.mxu0
      %v11310 = vadd.f32 0.0, %v11309
      %v11311 = vpop.f32.mrf.mxu0
      %v11312 = vpop.f32.mrf.mxu0
      %v11313 = vadd.f32 0.0, %v11312
      %v11314 = vpop.f32.mrf.mxu0
      %11315 = vmatprep.mubr.bf16.mxu0 0
      %11316 = vmatmul.mubr.bf16.gmra.mxu0 %v11203
      %v11317 = vpop.f32.mrf.mxu0
      %v11318 = vadd.f32 0.0, %v11317
      %v11319 = vpop.f32.mrf.mxu0
      %v11320 = vpop.f32.mrf.mxu0
      %v11321 = vadd.f32 0.0, %v11320
      %v11322 = vpop.f32.mrf.mxu0
      %11323 = vmatprep.mubr.bf16.mxu0 0
      %11324 = vmatmul.mubr.bf16.gmra.mxu0 %v11206
      %v11325 = vpop.f32.mrf.mxu0
      %v11326 = vadd.f32 0.0, %v11325
      %v11327 = vpop.f32.mrf.mxu0
      %v11328 = vpop.f32.mrf.mxu0
      %v11329 = vadd.f32 0.0, %v11328
      %v11330 = vpop.f32.mrf.mxu0
      %11331 = vmatprep.mubr.bf16.mxu0 0
      %11332 = vmatmul.mubr.bf16.gmra.mxu0 %v11209
      %v11333 = vpop.f32.mrf.mxu0
      %v11334 = vadd.f32 0.0, %v11333
      %v11335 = vpop.f32.mrf.mxu0
      %v11336 = vpop.f32.mrf.mxu0
      %v11337 = vadd.f32 0.0, %v11336
      %v11338 = vpop.f32.mrf.mxu0
      %11339 = vmatprep.mubr.bf16.mxu0 0
      %11340 = vmatmul.mubr.bf16.gmra.mxu0 %v11212
      %v11341 = vpop.f32.mrf.mxu0
      %v11342 = vadd.f32 0.0, %v11341
      %v11343 = vpop.f32.mrf.mxu0
      %v11344 = vpop.f32.mrf.mxu0
      %v11345 = vadd.f32 0.0, %v11344
      %v11346 = vpop.f32.mrf.mxu0
      %11347 = vmatprep.mubr.bf16.mxu0 0
      %11348 = vmatmul.mubr.bf16.gmra.mxu0 %v11215
      %v11349 = vpop.f32.mrf.mxu0
      %v11350 = vadd.f32 0.0, %v11349
      %v11351 = vpop.f32.mrf.mxu0
      %v11352 = vpop.f32.mrf.mxu0
      %v11353 = vadd.f32 0.0, %v11352
      %v11354 = vpop.f32.mrf.mxu0
      %11355 = vmatprep.mubr.bf16.mxu0 0
      %11356 = vmatmul.mubr.bf16.gmra.mxu0 %v11218
      %v11357 = vpop.f32.mrf.mxu0
      %v11358 = vadd.f32 0.0, %v11357
      %v11359 = vpop.f32.mrf.mxu0
      %v11360 = vpop.f32.mrf.mxu0
      %v11361 = vadd.f32 0.0, %v11360
      %v11362 = vpop.f32.mrf.mxu0
      %11363 = vmatprep.mubr.bf16.mxu0 0
      %11364 = vmatmul.mubr.bf16.gmra.mxu0 %v11221
      %v11365 = vpop.f32.mrf.mxu0
      %v11366 = vadd.f32 0.0, %v11365
      %v11367 = vpop.f32.mrf.mxu0
      %v11368 = vpop.f32.mrf.mxu0
      %v11369 = vadd.f32 0.0, %v11368
      %v11370 = vpop.f32.mrf.mxu0
      %11371 = vmatprep.mubr.bf16.mxu0 0
      %11372 = vmatmul.mubr.bf16.gmra.mxu0 %v11224
      %v11373 = vpop.f32.mrf.mxu0
      %v11374 = vadd.f32 0.0, %v11373
      %v11375 = vpop.f32.mrf.mxu0
      %v11376 = vpop.f32.mrf.mxu0
      %v11377 = vadd.f32 0.0, %v11376
      %v11378 = vpop.f32.mrf.mxu0
      %11379 = vmatprep.mubr.bf16.mxu0 0
      %11380 = vmatmul.mubr.bf16.gmra.mxu0 %v11227
      %v11381 = vpop.f32.mrf.mxu0
      %v11382 = vadd.f32 0.0, %v11381
      %v11383 = vpop.f32.mrf.mxu0
      %v11384 = vpop.f32.mrf.mxu0
      %v11385 = vadd.f32 0.0, %v11384
      %v11386 = vpop.f32.mrf.mxu0
      %11387 = vmatprep.mubr.bf16.mxu0 0
      %11388 = vmatmul.mubr.bf16.gmra.mxu0 %v11230
      %v11389 = vpop.f32.mrf.mxu0
      %v11390 = vadd.f32 0.0, %v11389
      %v11391 = vpop.f32.mrf.mxu0
      %v11392 = vpop.f32.mrf.mxu0
      %v11393 = vadd.f32 0.0, %v11392
      %v11394 = vpop.f32.mrf.mxu0
      %11395 = vdwg.mxu0
      %v11396 = vadd.f32 %v10926, %v11270
      %v11397 = vadd.f32 %v10927, %v11273
      %v11398 = vadd.f32 %v10928, %v11278
      %v11399 = vadd.f32 %v10929, %v11281
      %v11400 = vadd.f32 %v10930, %v11286
      %v11401 = vadd.f32 %v10931, %v11289
      %v11402 = vadd.f32 %v10932, %v11294
      %v11403 = vadd.f32 %v10933, %v11297
      %v11404 = vadd.f32 %v10934, %v11302
      %v11405 = vadd.f32 %v10935, %v11305
      %v11406 = vadd.f32 %v10936, %v11310
      %v11407 = vadd.f32 %v10937, %v11313
      %v11408 = vadd.f32 %v10938, %v11318
      %v11409 = vadd.f32 %v10939, %v11321
      %v11410 = vadd.f32 %v10940, %v11326
      %v11411 = vadd.f32 %v10941, %v11329
      %v11412 = vadd.f32 %v10942, %v11334
      %v11413 = vadd.f32 %v10943, %v11337
      %v11414 = vadd.f32 %v10944, %v11342
      %v11415 = vadd.f32 %v10945, %v11345
      %v11416 = vadd.f32 %v10946, %v11350
      %v11417 = vadd.f32 %v10947, %v11353
      %v11418 = vadd.f32 %v10948, %v11358
      %v11419 = vadd.f32 %v10949, %v11361
      %v11420 = vadd.f32 %v10950, %v11366
      %v11421 = vadd.f32 %v10951, %v11369
      %v11422 = vadd.f32 %v10952, %v11374
      %v11423 = vadd.f32 %v10953, %v11377
      %v11424 = vadd.f32 %v10954, %v11382
      %v11425 = vadd.f32 %v10955, %v11385
      %v11426 = vadd.f32 %v10956, %v11390
      %v11427 = vadd.f32 %v10957, %v11393
      %v11428 = vld [vmem:[%s4] sm:$0x1]
      %v11430 = vlaneseq
      %v11431 = vshrl.u32 %v11430, 7
      %v11432 = vsub.s32 0, %v11431
      %v11433 = vrot.slane %v11428, %v11432
      %v11435 = vadd.f32 %v11396, %v11433
      %v11436 = vadd.f32 %v11397, %v11433
      %v11437 = vadd.f32 %v11398, %v11433
      %v11438 = vadd.f32 %v11399, %v11433
      %v11439 = vadd.f32 %v11400, %v11433
      %v11440 = vadd.f32 %v11401, %v11433
      %v11441 = vadd.f32 %v11402, %v11433
      %v11442 = vadd.f32 %v11403, %v11433
      %v11443 = vadd.f32 %v11404, %v11433
      %v11444 = vadd.f32 %v11405, %v11433
      %v11445 = vadd.f32 %v11406, %v11433
      %v11446 = vadd.f32 %v11407, %v11433
      %v11447 = vadd.f32 %v11408, %v11433
      %v11448 = vadd.f32 %v11409, %v11433
      %v11449 = vadd.f32 %v11410, %v11433
      %v11450 = vadd.f32 %v11411, %v11433
      %v11451 = vadd.f32 %v11412, %v11433
      %v11452 = vadd.f32 %v11413, %v11433
      %v11453 = vadd.f32 %v11414, %v11433
      %v11454 = vadd.f32 %v11415, %v11433
      %v11455 = vadd.f32 %v11416, %v11433
      %v11456 = vadd.f32 %v11417, %v11433
      %v11457 = vadd.f32 %v11418, %v11433
      %v11458 = vadd.f32 %v11419, %v11433
      %v11459 = vadd.f32 %v11420, %v11433
      %v11460 = vadd.f32 %v11421, %v11433
      %v11461 = vadd.f32 %v11422, %v11433
      %v11462 = vadd.f32 %v11423, %v11433
      %v11463 = vadd.f32 %v11424, %v11433
      %v11464 = vadd.f32 %v11425, %v11433
      %v11465 = vadd.f32 %v11426, %v11433
      %v11466 = vadd.f32 %v11427, %v11433
      %11467 = vst.msk [vmem:[#allocation3] sm:$0xff] %vm1594, %v11435
      %11468 = vst.msk [vmem:[#allocation3 + $0x8] sm:$0xff] %vm1594, %v11436
      %11469 = vst.msk [vmem:[#allocation3 + $0x10] sm:$0xff] %vm1594, %v11437
      %11470 = vst.msk [vmem:[#allocation3 + $0x18] sm:$0xff] %vm1594, %v11438
      %11471 = vst.msk [vmem:[#allocation3 + $0x20] sm:$0xff] %vm1594, %v11439
      %11472 = vst.msk [vmem:[#allocation3 + $0x28] sm:$0xff] %vm1594, %v11440
      %11473 = vst.msk [vmem:[#allocation3 + $0x30] sm:$0xff] %vm1594, %v11441
      %11474 = vst.msk [vmem:[#allocation3 + $0x38] sm:$0xff] %vm1594, %v11442
      %11475 = vst.msk [vmem:[#allocation3 + $0x40] sm:$0xff] %vm1594, %v11443
      %11476 = vst.msk [vmem:[#allocation3 + $0x48] sm:$0xff] %vm1594, %v11444
      %11477 = vst.msk [vmem:[#allocation3 + $0x50] sm:$0xff] %vm1594, %v11445
      %11478 = vst.msk [vmem:[#allocation3 + $0x58] sm:$0xff] %vm1594, %v11446
      %11479 = vst.msk [vmem:[#allocation3 + $0x60] sm:$0xff] %vm1594, %v11447
      %11480 = vst.msk [vmem:[#allocation3 + $0x68] sm:$0xff] %vm1594, %v11448
      %11481 = vst.msk [vmem:[#allocation3 + $0x70] sm:$0xff] %vm1594, %v11449
      %11482 = vst.msk [vmem:[#allocation3 + $0x78] sm:$0xff] %vm1594, %v11450
      %11483 = vst.msk [vmem:[#allocation3 + $0x80] sm:$0xff] %vm1594, %v11451
      %11484 = vst.msk [vmem:[#allocation3 + $0x88] sm:$0xff] %vm1594, %v11452
      %11485 = vst.msk [vmem:[#allocation3 + $0x90] sm:$0xff] %vm1594, %v11453
      %11486 = vst.msk [vmem:[#allocation3 + $0x98] sm:$0xff] %vm1594, %v11454
      %11487 = vst.msk [vmem:[#allocation3 + $0xa0] sm:$0xff] %vm1594, %v11455
      %11488 = vst.msk [vmem:[#allocation3 + $0xa8] sm:$0xff] %vm1594, %v11456
      %11489 = vst.msk [vmem:[#allocation3 + $0xb0] sm:$0xff] %vm1594, %v11457
      %11490 = vst.msk [vmem:[#allocation3 + $0xb8] sm:$0xff] %vm1594, %v11458
      %11491 = vst.msk [vmem:[#allocation3 + $0xc0] sm:$0xff] %vm1594, %v11459
      %11492 = vst.msk [vmem:[#allocation3 + $0xc8] sm:$0xff] %vm1594, %v11460
      %11493 = vst.msk [vmem:[#allocation3 + $0xd0] sm:$0xff] %vm1594, %v11461
      %11494 = vst.msk [vmem:[#allocation3 + $0xd8] sm:$0xff] %vm1594, %v11462
      %11495 = vst.msk [vmem:[#allocation3 + $0xe0] sm:$0xff] %vm1594, %v11463
      %11496 = vst.msk [vmem:[#allocation3 + $0xe8] sm:$0xff] %vm1594, %v11464
      %11497 = vst.msk [vmem:[#allocation3 + $0xf0] sm:$0xff] %vm1594, %v11465
      %11498 = vst.msk [vmem:[#allocation3 + $0xf8] sm:$0xff] %vm1594, %v11466
      %v11499 = vsel %vm1594, %v11435, 0.0
      %v11500 = vsel %vm1594, %v11436, 0.0
      %v11501 = vadd.f32 %v11499, %v11500
      %v11502 = vsel %vm1594, %v11437, 0.0
      %v11503 = vadd.f32 %v11501, %v11502
      %v11504 = vsel %vm1594, %v11438, 0.0
      %v11505 = vadd.f32 %v11503, %v11504
      %v11506 = vsel %vm1594, %v11439, 0.0
      %v11507 = vadd.f32 %v11505, %v11506
      %v11508 = vsel %vm1594, %v11440, 0.0
      %v11509 = vadd.f32 %v11507, %v11508
      %v11510 = vsel %vm1594, %v11441, 0.0
      %v11511 = vadd.f32 %v11509, %v11510
      %v11512 = vsel %vm1594, %v11442, 0.0
      %v11513 = vadd.f32 %v11511, %v11512
      %v11514 = vsel %vm1594, %v11443, 0.0
      %v11515 = vadd.f32 %v11513, %v11514
      %v11516 = vsel %vm1594, %v11444, 0.0
      %v11517 = vadd.f32 %v11515, %v11516
      %v11518 = vsel %vm1594, %v11445, 0.0
      %v11519 = vadd.f32 %v11517, %v11518
      %v11520 = vsel %vm1594, %v11446, 0.0
      %v11521 = vadd.f32 %v11519, %v11520
      %v11522 = vsel %vm1594, %v11447, 0.0
      %v11523 = vadd.f32 %v11521, %v11522
      %v11524 = vsel %vm1594, %v11448, 0.0
      %v11525 = vadd.f32 %v11523, %v11524
      %v11526 = vsel %vm1594, %v11449, 0.0
      %v11527 = vadd.f32 %v11525, %v11526
      %v11528 = vsel %vm1594, %v11450, 0.0
      %v11529 = vadd.f32 %v11527, %v11528
      %v11530 = vsel %vm1594, %v11451, 0.0
      %v11531 = vadd.f32 %v11529, %v11530
      %v11532 = vsel %vm1594, %v11452, 0.0
      %v11533 = vadd.f32 %v11531, %v11532
      %v11534 = vsel %vm1594, %v11453, 0.0
      %v11535 = vadd.f32 %v11533, %v11534
      %v11536 = vsel %vm1594, %v11454, 0.0
      %v11537 = vadd.f32 %v11535, %v11536
      %v11538 = vsel %vm1594, %v11455, 0.0
      %v11539 = vadd.f32 %v11537, %v11538
      %v11540 = vsel %vm1594, %v11456, 0.0
      %v11541 = vadd.f32 %v11539, %v11540
      %v11542 = vsel %vm1594, %v11457, 0.0
      %v11543 = vadd.f32 %v11541, %v11542
      %v11544 = vsel %vm1594, %v11458, 0.0
      %v11545 = vadd.f32 %v11543, %v11544
      %v11546 = vsel %vm1594, %v11459, 0.0
      %v11547 = vadd.f32 %v11545, %v11546
      %v11548 = vsel %vm1594, %v11460, 0.0
      %v11549 = vadd.f32 %v11547, %v11548
      %v11550 = vsel %vm1594, %v11461, 0.0
      %v11551 = vadd.f32 %v11549, %v11550
      %v11552 = vsel %vm1594, %v11462, 0.0
      %v11553 = vadd.f32 %v11551, %v11552
      %v11554 = vsel %vm1594, %v11463, 0.0
      %v11555 = vadd.f32 %v11553, %v11554
      %v11556 = vsel %vm1594, %v11464, 0.0
      %v11557 = vadd.f32 %v11555, %v11556
      %v11558 = vsel %vm1594, %v11465, 0.0
      %v11559 = vadd.f32 %v11557, %v11558
      %v11560 = vsel %vm1594, %v11466, 0.0
      %v11561 = vadd.f32 %v11559, %v11560
      %v11562 = vrot.slane %v11561, 4
      %v11563 = vadd.f32 %v11561, %v11562
      %v11564 = vrot.slane %v11563, 2
      %v11565 = vadd.f32 %v11563, %v11564
      %v11566 = vrot.slane %v11565, 1
      %v11567 = vadd.f32 %v11565, %v11566
      %v11568 = vadd.f32 %v11567, 0.0
      %v11569 = vmul.f32 %v11435, %v11435
      %v11570 = vmul.f32 %v11436, %v11436
      %v11571 = vmul.f32 %v11437, %v11437
      %v11572 = vmul.f32 %v11438, %v11438
      %v11573 = vmul.f32 %v11439, %v11439
      %v11574 = vmul.f32 %v11440, %v11440
      %v11575 = vmul.f32 %v11441, %v11441
      %v11576 = vmul.f32 %v11442, %v11442
      %v11577 = vmul.f32 %v11443, %v11443
      %v11578 = vmul.f32 %v11444, %v11444
      %v11579 = vmul.f32 %v11445, %v11445
      %v11580 = vmul.f32 %v11446, %v11446
      %v11581 = vmul.f32 %v11447, %v11447
      %v11582 = vmul.f32 %v11448, %v11448
      %v11583 = vmul.f32 %v11449, %v11449
      %v11584 = vmul.f32 %v11450, %v11450
      %v11585 = vmul.f32 %v11451, %v11451
      %v11586 = vmul.f32 %v11452, %v11452
      %v11587 = vmul.f32 %v11453, %v11453
      %v11588 = vmul.f32 %v11454, %v11454
      %v11589 = vmul.f32 %v11455, %v11455
      %v11590 = vmul.f32 %v11456, %v11456
      %v11591 = vmul.f32 %v11457, %v11457
      %v11592 = vmul.f32 %v11458, %v11458
      %v11593 = vmul.f32 %v11459, %v11459
      %v11594 = vmul.f32 %v11460, %v11460
      %v11595 = vmul.f32 %v11461, %v11461
      %v11596 = vmul.f32 %v11462, %v11462
      %v11597 = vmul.f32 %v11463, %v11463
      %v11598 = vmul.f32 %v11464, %v11464
      %v11599 = vmul.f32 %v11465, %v11465
      %v11600 = vmul.f32 %v11466, %v11466
      %v11601 = vsel %vm1594, %v11569, 0.0
      %v11602 = vsel %vm1594, %v11570, 0.0
      %v11603 = vadd.f32 %v11601, %v11602
      %v11604 = vsel %vm1594, %v11571, 0.0
      %v11605 = vadd.f32 %v11603, %v11604
      %v11606 = vsel %vm1594, %v11572, 0.0
      %v11607 = vadd.f32 %v11605, %v11606
      %v11608 = vsel %vm1594, %v11573, 0.0
      %v11609 = vadd.f32 %v11607, %v11608
      %v11610 = vsel %vm1594, %v11574, 0.0
      %v11611 = vadd.f32 %v11609, %v11610
      %v11612 = vsel %vm1594, %v11575, 0.0
      %v11613 = vadd.f32 %v11611, %v11612
      %v11614 = vsel %vm1594, %v11576, 0.0
      %v11615 = vadd.f32 %v11613, %v11614
      %v11616 = vsel %vm1594, %v11577, 0.0
      %v11617 = vadd.f32 %v11615, %v11616
      %v11618 = vsel %vm1594, %v11578, 0.0
      %v11619 = vadd.f32 %v11617, %v11618
      %v11620 = vsel %vm1594, %v11579, 0.0
      %v11621 = vadd.f32 %v11619, %v11620
      %v11622 = vsel %vm1594, %v11580, 0.0
      %v11623 = vadd.f32 %v11621, %v11622
      %v11624 = vsel %vm1594, %v11581, 0.0
      %v11625 = vadd.f32 %v11623, %v11624
      %v11626 = vsel %vm1594, %v11582, 0.0
      %v11627 = vadd.f32 %v11625, %v11626
      %v11628 = vsel %vm1594, %v11583, 0.0
      %v11629 = vadd.f32 %v11627, %v11628
      %v11630 = vsel %vm1594, %v11584, 0.0
      %v11631 = vadd.f32 %v11629, %v11630
      %v11632 = vsel %vm1594, %v11585, 0.0
      %v11633 = vadd.f32 %v11631, %v11632
      %v11634 = vsel %vm1594, %v11586, 0.0
      %v11635 = vadd.f32 %v11633, %v11634
      %v11636 = vsel %vm1594, %v11587, 0.0
      %v11637 = vadd.f32 %v11635, %v11636
      %v11638 = vsel %vm1594, %v11588, 0.0
      %v11639 = vadd.f32 %v11637, %v11638
      %v11640 = vsel %vm1594, %v11589, 0.0
      %v11641 = vadd.f32 %v11639, %v11640
      %v11642 = vsel %vm1594, %v11590, 0.0
      %v11643 = vadd.f32 %v11641, %v11642
      %v11644 = vsel %vm1594, %v11591, 0.0
      %v11645 = vadd.f32 %v11643, %v11644
      %v11646 = vsel %vm1594, %v11592, 0.0
      %v11647 = vadd.f32 %v11645, %v11646
      %v11648 = vsel %vm1594, %v11593, 0.0
      %v11649 = vadd.f32 %v11647, %v11648
      %v11650 = vsel %vm1594, %v11594, 0.0
      %v11651 = vadd.f32 %v11649, %v11650
      %v11652 = vsel %vm1594, %v11595, 0.0
      %v11653 = vadd.f32 %v11651, %v11652
      %v11654 = vsel %vm1594, %v11596, 0.0
      %v11655 = vadd.f32 %v11653, %v11654
      %v11656 = vsel %vm1594, %v11597, 0.0
      %v11657 = vadd.f32 %v11655, %v11656
      %v11658 = vsel %vm1594, %v11598, 0.0
      %v11659 = vadd.f32 %v11657, %v11658
      %v11660 = vsel %vm1594, %v11599, 0.0
      %v11661 = vadd.f32 %v11659, %v11660
      %v11662 = vsel %vm1594, %v11600, 0.0
      %v11663 = vadd.f32 %v11661, %v11662
      %v11664 = vrot.slane %v11663, 4
      %v11665 = vadd.f32 %v11663, %v11664
      %v11666 = vrot.slane %v11665, 2
      %v11667 = vadd.f32 %v11665, %v11666
      %v11668 = vrot.slane %v11667, 1
      %v11669 = vadd.f32 %v11667, %v11668
      %v11670 = vadd.f32 %v11669, 0.0
      %v11671 = vmul.f32 %v11568, 0.00390625
      %v11672 = vmul.f32 %v11670, 0.00390625
      %v11673 = vmul.f32 %v11671, %v11671
      %v11674 = vsub.f32 %v11672, %v11673
      %v11675 = vmax.f32 %v11674, 0.0
      %v11676 = vadd.f32 %v11675, 1e-05
      %v11677 = vrsqrt.pop %v11676
      %v11678 = vld [vmem:[#allocation3] sm:$0xff]
      %v11679 = vld [vmem:[#allocation3 + $0x8] sm:$0xff]
      %v11680 = vld [vmem:[#allocation3 + $0x10] sm:$0xff]
      %v11681 = vld [vmem:[#allocation3 + $0x18] sm:$0xff]
      %v11682 = vld [vmem:[#allocation3 + $0x20] sm:$0xff]
      %v11683 = vld [vmem:[#allocation3 + $0x28] sm:$0xff]
      %v11684 = vld [vmem:[#allocation3 + $0x30] sm:$0xff]
      %v11685 = vld [vmem:[#allocation3 + $0x38] sm:$0xff]
      %v11686 = vld [vmem:[#allocation3 + $0x40] sm:$0xff]
      %v11687 = vld [vmem:[#allocation3 + $0x48] sm:$0xff]
      %v11688 = vld [vmem:[#allocation3 + $0x50] sm:$0xff]
      %v11689 = vld [vmem:[#allocation3 + $0x58] sm:$0xff]
      %v11690 = vld [vmem:[#allocation3 + $0x60] sm:$0xff]
      %v11691 = vld [vmem:[#allocation3 + $0x68] sm:$0xff]
      %v11692 = vld [vmem:[#allocation3 + $0x70] sm:$0xff]
      %v11693 = vld [vmem:[#allocation3 + $0x78] sm:$0xff]
      %v11694 = vld [vmem:[#allocation3 + $0x80] sm:$0xff]
      %v11695 = vld [vmem:[#allocation3 + $0x88] sm:$0xff]
      %v11696 = vld [vmem:[#allocation3 + $0x90] sm:$0xff]
      %v11697 = vld [vmem:[#allocation3 + $0x98] sm:$0xff]
      %v11698 = vld [vmem:[#allocation3 + $0xa0] sm:$0xff]
      %v11699 = vld [vmem:[#allocation3 + $0xa8] sm:$0xff]
      %v11700 = vld [vmem:[#allocation3 + $0xb0] sm:$0xff]
      %v11701 = vld [vmem:[#allocation3 + $0xb8] sm:$0xff]
      %v11702 = vld [vmem:[#allocation3 + $0xc0] sm:$0xff]
      %v11703 = vld [vmem:[#allocation3 + $0xc8] sm:$0xff]
      %v11704 = vld [vmem:[#allocation3 + $0xd0] sm:$0xff]
      %v11705 = vld [vmem:[#allocation3 + $0xd8] sm:$0xff]
      %v11706 = vld [vmem:[#allocation3 + $0xe0] sm:$0xff]
      %v11707 = vld [vmem:[#allocation3 + $0xe8] sm:$0xff]
      %v11708 = vld [vmem:[#allocation3 + $0xf0] sm:$0xff]
      %v11709 = vld [vmem:[#allocation3 + $0xf8] sm:$0xff]
      %v11710 = vsub.f32 %v11678, %v11671
      %v11711 = vsub.f32 %v11679, %v11671
      %v11712 = vsub.f32 %v11680, %v11671
      %v11713 = vsub.f32 %v11681, %v11671
      %v11714 = vsub.f32 %v11682, %v11671
      %v11715 = vsub.f32 %v11683, %v11671
      %v11716 = vsub.f32 %v11684, %v11671
      %v11717 = vsub.f32 %v11685, %v11671
      %v11718 = vsub.f32 %v11686, %v11671
      %v11719 = vsub.f32 %v11687, %v11671
      %v11720 = vsub.f32 %v11688, %v11671
      %v11721 = vsub.f32 %v11689, %v11671
      %v11722 = vsub.f32 %v11690, %v11671
      %v11723 = vsub.f32 %v11691, %v11671
      %v11724 = vsub.f32 %v11692, %v11671
      %v11725 = vsub.f32 %v11693, %v11671
      %v11726 = vsub.f32 %v11694, %v11671
      %v11727 = vsub.f32 %v11695, %v11671
      %v11728 = vsub.f32 %v11696, %v11671
      %v11729 = vsub.f32 %v11697, %v11671
      %v11730 = vsub.f32 %v11698, %v11671
      %v11731 = vsub.f32 %v11699, %v11671
      %v11732 = vsub.f32 %v11700, %v11671
      %v11733 = vsub.f32 %v11701, %v11671
      %v11734 = vsub.f32 %v11702, %v11671
      %v11735 = vsub.f32 %v11703, %v11671
      %v11736 = vsub.f32 %v11704, %v11671
      %v11737 = vsub.f32 %v11705, %v11671
      %v11738 = vsub.f32 %v11706, %v11671
      %v11739 = vsub.f32 %v11707, %v11671
      %v11740 = vsub.f32 %v11708, %v11671
      %v11741 = vsub.f32 %v11709, %v11671
      %v11742 = vmul.f32 %v11710, %v11677
      %v11743 = vmul.f32 %v11711, %v11677
      %v11744 = vmul.f32 %v11712, %v11677
      %v11745 = vmul.f32 %v11713, %v11677
      %v11746 = vmul.f32 %v11714, %v11677
      %v11747 = vmul.f32 %v11715, %v11677
      %v11748 = vmul.f32 %v11716, %v11677
      %v11749 = vmul.f32 %v11717, %v11677
      %v11750 = vmul.f32 %v11718, %v11677
      %v11751 = vmul.f32 %v11719, %v11677
      %v11752 = vmul.f32 %v11720, %v11677
      %v11753 = vmul.f32 %v11721, %v11677
      %v11754 = vmul.f32 %v11722, %v11677
      %v11755 = vmul.f32 %v11723, %v11677
      %v11756 = vmul.f32 %v11724, %v11677
      %v11757 = vmul.f32 %v11725, %v11677
      %v11758 = vmul.f32 %v11726, %v11677
      %v11759 = vmul.f32 %v11727, %v11677
      %v11760 = vmul.f32 %v11728, %v11677
      %v11761 = vmul.f32 %v11729, %v11677
      %v11762 = vmul.f32 %v11730, %v11677
      %v11763 = vmul.f32 %v11731, %v11677
      %v11764 = vmul.f32 %v11732, %v11677
      %v11765 = vmul.f32 %v11733, %v11677
      %v11766 = vmul.f32 %v11734, %v11677
      %v11767 = vmul.f32 %v11735, %v11677
      %v11768 = vmul.f32 %v11736, %v11677
      %v11769 = vmul.f32 %v11737, %v11677
      %v11770 = vmul.f32 %v11738, %v11677
      %v11771 = vmul.f32 %v11739, %v11677
      %v11772 = vmul.f32 %v11740, %v11677
      %v11773 = vmul.f32 %v11741, %v11677
      %v11774 = vld [vmem:[%s219] sm:$0xff]
      %v11775 = vld [vmem:[%s219 + $0x8] sm:$0xff]
      %v11776 = vld [vmem:[%s219 + $0x10] sm:$0xff]
      %v11777 = vld [vmem:[%s219 + $0x18] sm:$0xff]
      %v11778 = vld [vmem:[%s219 + $0x20] sm:$0xff]
      %v11779 = vld [vmem:[%s219 + $0x28] sm:$0xff]
      %v11780 = vld [vmem:[%s219 + $0x30] sm:$0xff]
      %v11781 = vld [vmem:[%s219 + $0x38] sm:$0xff]
      %v11782 = vld [vmem:[%s219 + $0x40] sm:$0xff]
      %v11783 = vld [vmem:[%s219 + $0x48] sm:$0xff]
      %v11784 = vld [vmem:[%s219 + $0x50] sm:$0xff]
      %v11785 = vld [vmem:[%s219 + $0x58] sm:$0xff]
      %v11786 = vld [vmem:[%s219 + $0x60] sm:$0xff]
      %v11787 = vld [vmem:[%s219 + $0x68] sm:$0xff]
      %v11788 = vld [vmem:[%s219 + $0x70] sm:$0xff]
      %v11789 = vld [vmem:[%s219 + $0x78] sm:$0xff]
      %v11790 = vld [vmem:[%s219 + $0x80] sm:$0xff]
      %v11791 = vld [vmem:[%s219 + $0x88] sm:$0xff]
      %v11792 = vld [vmem:[%s219 + $0x90] sm:$0xff]
      %v11793 = vld [vmem:[%s219 + $0x98] sm:$0xff]
      %v11794 = vld [vmem:[%s219 + $0xa0] sm:$0xff]
      %v11795 = vld [vmem:[%s219 + $0xa8] sm:$0xff]
      %v11796 = vld [vmem:[%s219 + $0xb0] sm:$0xff]
      %v11797 = vld [vmem:[%s219 + $0xb8] sm:$0xff]
      %v11798 = vld [vmem:[%s219 + $0xc0] sm:$0xff]
      %v11799 = vld [vmem:[%s219 + $0xc8] sm:$0xff]
      %v11800 = vld [vmem:[%s219 + $0xd0] sm:$0xff]
      %v11801 = vld [vmem:[%s219 + $0xd8] sm:$0xff]
      %v11802 = vld [vmem:[%s219 + $0xe0] sm:$0xff]
      %v11803 = vld [vmem:[%s219 + $0xe8] sm:$0xff]
      %v11804 = vld [vmem:[%s219 + $0xf0] sm:$0xff]
      %v11805 = vld [vmem:[%s219 + $0xf8] sm:$0xff]
      %v11806 = vadd.f32 %v11774, %v11742
      %v11807 = vadd.f32 %v11775, %v11743
      %v11808 = vadd.f32 %v11776, %v11744
      %v11809 = vadd.f32 %v11777, %v11745
      %v11810 = vadd.f32 %v11778, %v11746
      %v11811 = vadd.f32 %v11779, %v11747
      %v11812 = vadd.f32 %v11780, %v11748
      %v11813 = vadd.f32 %v11781, %v11749
      %v11814 = vadd.f32 %v11782, %v11750
      %v11815 = vadd.f32 %v11783, %v11751
      %v11816 = vadd.f32 %v11784, %v11752
      %v11817 = vadd.f32 %v11785, %v11753
      %v11818 = vadd.f32 %v11786, %v11754
      %v11819 = vadd.f32 %v11787, %v11755
      %v11820 = vadd.f32 %v11788, %v11756
      %v11821 = vadd.f32 %v11789, %v11757
      %v11822 = vadd.f32 %v11790, %v11758
      %v11823 = vadd.f32 %v11791, %v11759
      %v11824 = vadd.f32 %v11792, %v11760
      %v11825 = vadd.f32 %v11793, %v11761
      %v11826 = vadd.f32 %v11794, %v11762
      %v11827 = vadd.f32 %v11795, %v11763
      %v11828 = vadd.f32 %v11796, %v11764
      %v11829 = vadd.f32 %v11797, %v11765
      %v11830 = vadd.f32 %v11798, %v11766
      %v11831 = vadd.f32 %v11799, %v11767
      %v11832 = vadd.f32 %v11800, %v11768
      %v11833 = vadd.f32 %v11801, %v11769
      %v11834 = vadd.f32 %v11802, %v11770
      %v11835 = vadd.f32 %v11803, %v11771
      %v11836 = vadd.f32 %v11804, %v11772
      %v11837 = vadd.f32 %v11805, %v11773
      %11838 = vst.msk [vmem:[%s224] sm:$0xff] %vm1594, %v11806
      %11839 = vst.msk [vmem:[%s224 + $0x8] sm:$0xff] %vm1594, %v11807
      %11840 = vst.msk [vmem:[%s224 + $0x10] sm:$0xff] %vm1594, %v11808
      %11841 = vst.msk [vmem:[%s224 + $0x18] sm:$0xff] %vm1594, %v11809
      %11842 = vst.msk [vmem:[%s224 + $0x20] sm:$0xff] %vm1594, %v11810
      %11843 = vst.msk [vmem:[%s224 + $0x28] sm:$0xff] %vm1594, %v11811
      %11844 = vst.msk [vmem:[%s224 + $0x30] sm:$0xff] %vm1594, %v11812
      %11845 = vst.msk [vmem:[%s224 + $0x38] sm:$0xff] %vm1594, %v11813
      %11846 = vst.msk [vmem:[%s224 + $0x40] sm:$0xff] %vm1594, %v11814
      %11847 = vst.msk [vmem:[%s224 + $0x48] sm:$0xff] %vm1594, %v11815
      %11848 = vst.msk [vmem:[%s224 + $0x50] sm:$0xff] %vm1594, %v11816
      %11849 = vst.msk [vmem:[%s224 + $0x58] sm:$0xff] %vm1594, %v11817
      %11850 = vst.msk [vmem:[%s224 + $0x60] sm:$0xff] %vm1594, %v11818
      %11851 = vst.msk [vmem:[%s224 + $0x68] sm:$0xff] %vm1594, %v11819
      %11852 = vst.msk [vmem:[%s224 + $0x70] sm:$0xff] %vm1594, %v11820
      %11853 = vst.msk [vmem:[%s224 + $0x78] sm:$0xff] %vm1594, %v11821
      %11854 = vst.msk [vmem:[%s224 + $0x80] sm:$0xff] %vm1594, %v11822
      %11855 = vst.msk [vmem:[%s224 + $0x88] sm:$0xff] %vm1594, %v11823
      %11856 = vst.msk [vmem:[%s224 + $0x90] sm:$0xff] %vm1594, %v11824
      %11857 = vst.msk [vmem:[%s224 + $0x98] sm:$0xff] %vm1594, %v11825
      %11858 = vst.msk [vmem:[%s224 + $0xa0] sm:$0xff] %vm1594, %v11826
      %11859 = vst.msk [vmem:[%s224 + $0xa8] sm:$0xff] %vm1594, %v11827
      %11860 = vst.msk [vmem:[%s224 + $0xb0] sm:$0xff] %vm1594, %v11828
      %11861 = vst.msk [vmem:[%s224 + $0xb8] sm:$0xff] %vm1594, %v11829
      %11862 = vst.msk [vmem:[%s224 + $0xc0] sm:$0xff] %vm1594, %v11830
      %11863 = vst.msk [vmem:[%s224 + $0xc8] sm:$0xff] %vm1594, %v11831
      %11864 = vst.msk [vmem:[%s224 + $0xd0] sm:$0xff] %vm1594, %v11832
      %11865 = vst.msk [vmem:[%s224 + $0xd8] sm:$0xff] %vm1594, %v11833
      %11866 = vst.msk [vmem:[%s224 + $0xe0] sm:$0xff] %vm1594, %v11834
      %11867 = vst.msk [vmem:[%s224 + $0xe8] sm:$0xff] %vm1594, %v11835
      %11868 = vst.msk [vmem:[%s224 + $0xf0] sm:$0xff] %vm1594, %v11836
      %11869 = vst.msk [vmem:[%s224 + $0xf8] sm:$0xff] %vm1594, %v11837
      %p11870 = scmp.lt.s32.totalorder %s16, 1
      %s11871 = scalar_select %p11870, %s16, 1
      %s11872 = smul.addr %s11871, 32
      %s11873 = smul.addr %s11872, 8
      %s11874 = scalar_lea.vmem %s5, %s11873
      // Predicated region
      $region41: #{tpu_custom_call.1} parent=39 // pred_check
        %p11875 = pneg %p144
      $region42: #{tpu_custom_call.1} parent=39 // pred_check_branch
        %11877 = sbr.rel (%p11875) target = $region44
      $region43: #{tpu_custom_call.1} parent=39 // pred_region
        _
      $region44: #{tpu_custom_call.1} parent=39 // pred_fallthru
        _
    $region40: #{tpu_custom_call.1} parent=5 // pred_fallthru
      _
    %p11878 = scmp.le.s32.totalorder 2, %s11
    // Predicated region
    $region45: #{tpu_custom_call.1} parent=5 // pred_check
      %p11879 = pneg %p11878
    $region46: #{tpu_custom_call.1} parent=5 // pred_check_branch
      %11881 = sbr.rel (%p11879) target = $region48
    $region47: #{tpu_custom_call.1} parent=5 // pred_region
      %s11882 = ssub.s32 %s11, 2
      // Predicated region
      $region49: #{tpu_custom_call.1} parent=47 // pred_check
        %p11883 = pneg %p150
      $region50: #{tpu_custom_call.1} parent=47 // pred_check_branch
        %11885 = sbr.rel (%p11883) target = $region52
      $region51: #{tpu_custom_call.1} parent=47 // pred_region
        %p11886 = scmp.lt.s32.totalorder %s17, 1
        %s11887 = scalar_select %p11886, %s17, 1
        %s11888 = smul.addr %s11887, 32
        %s11889 = smul.addr %s11888, 8
        %s11890 = scalar_lea.vmem %s5, %s11889
      $region52: #{tpu_custom_call.1} parent=47 // pred_fallthru
        _
    $region48: #{tpu_custom_call.1} parent=5 // pred_fallthru
      _
  $region6: #{tpu_custom_call.1} parent=0 // loop_footer
    %s15 = sadd.s32 1, %s11
  $region7: #{tpu_custom_call.1} parent=0 // loop_footer_branch
    %10 = sbr.rel target = $region3
  $region8: #{tpu_custom_call.1} parent=0 // loop_exit
    _

</llo_original>
